<compile_context>
chip_gen: v7x
topology: tpu7x:2x2x1
jax: 0.10.0
libtpu: 0.0.40
codegen_flags: <defaults>
</compile_context>

<pallas_src>
import math

import jax
import jax.numpy as jnp
from jax import lax
from jax.experimental import pallas as pl
from jax.experimental.pallas import tpu as pltpu

_SQRT2 = math.sqrt(2.0)
_EPS = 1e-5  # torch.nn.GroupNorm default eps


def _round_up(x, m):
    return ((x + m - 1) // m) * m


def _erf(x):
    # Abramowitz & Stegun 7.1.26 polynomial (max abs err ~1.5e-7). Built from
    # exp/abs/mul only, which lower cleanly in Mosaic (exact lax.erf is not
    # guaranteed to).
    a1, a2, a3, a4, a5 = 0.254829592, -0.284496736, 1.421413741, -1.453152027, 1.061405429
    p = 0.3275911
    s = jnp.where(x >= 0.0, 1.0, -1.0)
    ax = jnp.abs(x)
    t = 1.0 / (1.0 + p * ax)
    poly = ((((a5 * t + a4) * t + a3) * t + a2) * t + a1) * t
    return s * (1.0 - poly * jnp.exp(-ax * ax))


def _gelu(x):
    # matches torch.nn.GELU() (exact erf form) up to ~1e-7
    return 0.5 * x * (1.0 + _erf(x / _SQRT2))


def _make_kernel(H, W, C, C_pad, focal_level, focal_window, focal_factor, eps):
    L = focal_level
    HW = H * W
    pads = [(focal_factor * l + focal_window) // 2 for l in range(L)]
    pm = max(pads) if pads else 0
    f32 = jnp.float32
    bf16 = jnp.bfloat16
    inv_n = 1.0 / float(C * HW)  # GroupNorm divisor over REAL elements only

    def kernel(x_ref, gn1w, gn1b, wf, bff, *rest):
        focal_w = rest[:L]
        (hw_w, hw_b, powt, pob, gn2w, gn2b, g1, g2, out_ref, zp_ref) = rest[L:]

        x = x_ref[0].astype(f32)                       # (C, HW) channel-major, lane-dense

        # ---- pre_norm: GroupNorm(1, C) -- single-pass stats (sum, sum-sq) ----
        s1 = jnp.sum(x)
        s2 = jnp.sum(x * x)
        mu = s1 * inv_n
        var = s2 * inv_n - mu * mu
        xn = (x - mu) * lax.rsqrt(var + eps)
        xn = xn * gn1w[...] + gn1b[...]                # (C,1) per-channel affine

        # ---- fused proj_in: (C,HW)^T @ (C,Nf) -> (HW, Nf), Nf padded to 128k --
        r = lax.dot_general(xn.astype(bf16), wf[...],
                            (((0,), (0,)), ((), ())),   # contract channel dims (trans_a)
                            preferred_element_type=f32) + bff[...]
        q = r[:, :C_pad]                               # (HW, C_pad); padded lanes are 0
        z = r[:, C_pad:2 * C_pad].reshape(H, W, C_pad)
        g = r[:, 2 * C_pad:2 * C_pad + L + 1].reshape(H, W, L + 1)

        # ---- hierarchical focal contexts: depthwise conv + GELU, gated sum ----
        # persistent spatially-padded scratch; border stays zero, interior is
        # rewritten each level (no per-level concatenate copies).
        zp_ref[...] = jnp.zeros_like(zp_ref)
        z_cur = jnp.zeros((H, W, C_pad), f32)
        for l in range(L):
            k = focal_factor * l + focal_window
            off = pm - (k // 2)
            zp_ref[pm:pm + H, pm:pm + W, :] = z
            wl = focal_w[l][...]                       # (k, k, C_pad)
            acc = jnp.zeros((H, W, C_pad), f32)
            for dy in range(k):
                for dx in range(k):
                    acc = acc + (zp_ref[off + dy:off + dy + H,
                                        off + dx:off + dx + W, :]
                                 * wl[dy:dy + 1, dx:dx + 1, :])
            z = _gelu(acc)
            z_cur = z_cur + z * g[:, :, l:l + 1]

        # ---- global context level ----
        ctx = jnp.mean(z, axis=(0, 1), keepdims=True)  # (1, 1, C_pad)
        z_cur = z_cur + _gelu(ctx) * g[:, :, L:L + 1]

        # ---- h (1x1 conv) -> modulator, modulate q, proj_out (channel-major) --
        mod = jnp.dot(z_cur.reshape(HW, C_pad).astype(bf16), hw_w[...],
                      preferred_element_type=f32) + hw_b[...]
        y = q * mod                                    # (HW, C_pad)
        # proj_out with pre-transposed weight -> result directly in (C, HW)
        y_cm = lax.dot_general(powt[...], y.astype(bf16),
                               (((1,), (1,)), ((), ())),  # contract channel dims (trans_b)
                               preferred_element_type=f32) + pob[...]
        # Dropout(p=0) and DropPath(p=0) are identities (inference semantics).

        # ---- residual 1 with layer-scale gamma_1 ----
        x1 = x + g1[...] * y_cm                        # (C, HW)

        # ---- post_norm + layer-scale gamma_2 residual (mlp = nn.Identity) ----
        t1 = jnp.sum(x1)
        t2 = jnp.sum(x1 * x1)
        mu2 = t1 * inv_n
        var2 = t2 * inv_n - mu2 * mu2
        x1n = (x1 - mu2) * lax.rsqrt(var2 + eps)
        x1n = x1n * gn2w[...] + gn2b[...]
        out = x1 + g2[...] * x1n

        out_ref[0] = out.astype(out_ref.dtype)

    return kernel


def pack_params(params, *, channels, focal_window, focal_level, focal_factor):
    """One-time parameter packing (outside the hot path): fuse proj_in, zero-pad
    channels to a multiple of 128, pre-transpose proj_out, cast MXU weights bf16."""
    C = channels
    L = focal_level
    C_pad = _round_up(C, 128)
    Nf = 2 * C_pad + 128  # q | z | gates, each block padded to a full 128-lane group
    f32 = jnp.float32
    bf16 = jnp.bfloat16

    def col(v):  # per-channel vector -> (C, 1) column for channel-major broadcast
        return jnp.asarray(v, f32).reshape(C, 1)

    wf = jnp.zeros((C, Nf), f32)
    wf = wf.at[:, :C].set(jnp.asarray(params["wq"], f32))
    wf = wf.at[:, C_pad:C_pad + C].set(jnp.asarray(params["wz"], f32))
    wf = wf.at[:, 2 * C_pad:2 * C_pad + L + 1].set(jnp.asarray(params["wg"], f32))
    bfv = jnp.zeros((1, Nf), f32)
    bfv = bfv.at[0, :C].set(jnp.asarray(params["bq"], f32).reshape(C))
    bfv = bfv.at[0, C_pad:C_pad + C].set(jnp.asarray(params["bz"], f32).reshape(C))
    bfv = bfv.at[0, 2 * C_pad:2 * C_pad + L + 1].set(
        jnp.asarray(params["bg"], f32).reshape(L + 1))

    focal_w = []
    for l in range(L):
        k = focal_factor * l + focal_window
        w = jnp.asarray(params["focal_w"][l], f32)                    # (k, k, C)
        focal_w.append(jnp.zeros((k, k, C_pad), f32).at[:, :, :C].set(w))

    h_w = jnp.zeros((C_pad, C_pad), f32).at[:C, :C].set(jnp.asarray(params["h_w"], f32))
    h_b = jnp.zeros((1, C_pad), f32).at[0, :C].set(
        jnp.asarray(params["h_b"], f32).reshape(C))
    # proj_out weight, pre-transposed + input-dim padded: (C_out_real, C_in_pad)
    po_wT = jnp.zeros((C, C_pad), f32).at[:, :C].set(jnp.asarray(params["po_w"], f32).T)

    return {
        "gn1_w": col(params["gn1_w"]), "gn1_b": col(params["gn1_b"]),
        "wf": wf.astype(bf16), "bf": bfv,
        "focal_w": focal_w,
        "h_w": h_w.astype(bf16), "h_b": h_b,
        "po_wT": po_wT.astype(bf16), "po_b": col(params["po_b"]),
        "gn2_w": col(params["gn2_w"]), "gn2_b": col(params["gn2_b"]),
        "gamma_1": col(params["gamma_1"]), "gamma_2": col(params["gamma_2"]),
    }


def focalnet_block_forward(x_nchw, packed, *, focal_window, focal_level, focal_factor,
                           eps=_EPS):
    """x_nchw: (B, C, H, W) float32 — same convention as the PyTorch module."""
    B, C, H, W = x_nchw.shape
    L = focal_level
    HW = H * W
    C_pad = _round_up(C, 128)
    pads = [(focal_factor * l + focal_window) // 2 for l in range(L)]
    pm = max(pads) if pads else 0

    x2 = x_nchw.reshape(B, C, HW)  # free row-major reshape, no transpose

    ordered = [
        packed["gn1_w"], packed["gn1_b"], packed["wf"], packed["bf"],
        *packed["focal_w"],
        packed["h_w"], packed["h_b"], packed["po_wT"], packed["po_b"],
        packed["gn2_w"], packed["gn2_b"], packed["gamma_1"], packed["gamma_2"],
    ]

    def rep_spec(arr):
        nd = arr.ndim
        # TODO(synk): use pipeline_mode=pl.Buffered(1) for these constant-index
        # params once single-buffering is uniformly supported.
        return pl.BlockSpec(arr.shape, lambda b, nd=nd: (0,) * nd)

    in_specs = [pl.BlockSpec((1, C, HW), lambda b: (b, 0, 0))] + \
               [rep_spec(a) for a in ordered]
    out_spec = pl.BlockSpec((1, C, HW), lambda b: (b, 0, 0))

    # VMEM budget: live (HW, C_pad) f32 intermediates + fused proj_in result +
    # padded-conv scratch + double-buffered I/O blocks, with 2x headroom.
    nf = packed["wf"].shape[1]
    est = 4 * (14 * HW * C_pad + HW * nf + (H + 2 * pm) * (W + 2 * pm) * C_pad
               + 4 * C * HW) + (2 << 20)
    vmem_limit = int(min(100 * 2 ** 20, max(32 * 2 ** 20, 2 * est)))

    kernel = _make_kernel(H, W, C, C_pad, L, focal_window, focal_factor, eps)
    out = pl.pallas_call(
        kernel,
        out_shape=jax.ShapeDtypeStruct((B, C, HW), x_nchw.dtype),
        grid_spec=pltpu.PrefetchScalarGridSpec(
            num_scalar_prefetch=0,
            grid=(B,),
            in_specs=in_specs,
            out_specs=out_spec,
            scratch_shapes=[pltpu.VMEM((H + 2 * pm, W + 2 * pm, C_pad), jnp.float32)],
        ),
        compiler_params=pltpu.CompilerParams(
            dimension_semantics=("parallel",),
            vmem_limit_bytes=vmem_limit,
        ),
    )(x2, *ordered)
    # TODO(synk): add spatial (H) tiling + grid-carried GroupNorm stats for
    # configs whose per-sample footprint exceeds v7x's 64 MiB VMEM per core.
    return out.reshape(B, C, H, W)  # free reshape back to NCHW


def init_params(key, C, focal_window, focal_level, focal_factor, layer_scale=1e-4):
    ks = jax.random.split(key, 16)

    def rnd(k, shape, scale=0.02):
        return scale * jax.random.normal(k, shape, jnp.float32)

    return {
        "gn1_w": jnp.ones((1, C), jnp.float32),
        "gn1_b": jnp.zeros((1, C), jnp.float32),
        "wq": rnd(ks[0], (C, C)), "bq": rnd(ks[1], (1, C)),
        "wz": rnd(ks[2], (C, C)), "bz": rnd(ks[3], (1, C)),
        "wg": rnd(ks[4], (C, focal_level + 1)), "bg": rnd(ks[5], (1, focal_level + 1)),
        "focal_w": [rnd(ks[6 + l], (focal_factor * l + focal_window,
                                    focal_factor * l + focal_window, C), 0.1)
                    for l in range(focal_level)],
        "h_w": rnd(ks[10], (C, C)), "h_b": rnd(ks[11], (1, C)),
        "po_w": rnd(ks[12], (C, C)), "po_b": rnd(ks[13], (1, C)),
        "gn2_w": jnp.ones((1, C), jnp.float32),
        "gn2_b": jnp.zeros((1, C), jnp.float32),
        "gamma_1": jnp.full((1, C), layer_scale, jnp.float32),
        "gamma_2": jnp.full((1, C), layer_scale, jnp.float32),
    }


def reference_forward(x_nchw, params, *, focal_window, focal_level, focal_factor, eps=_EPS):
    """Pure-JAX reference mirroring the PyTorch module (exact erf GELU)."""
    from jax.scipy.special import erf as erf_exact

    def gelu(v):
        return 0.5 * v * (1.0 + erf_exact(v / _SQRT2))

    def groupnorm(v):  # (B, H, W, C), GroupNorm(1, C): normalize over (H, W, C)
        mu = jnp.mean(v, axis=(1, 2, 3), keepdims=True)
        var = jnp.mean((v - mu) ** 2, axis=(1, 2, 3), keepdims=True)
        return (v - mu) / jnp.sqrt(var + eps)

    B, C, H, W = x_nchw.shape
    L = focal_level
    x = jnp.transpose(x_nchw, (0, 2, 3, 1))
    xn = groupnorm(x) * params["gn1_w"].reshape(1, 1, 1, C) + params["gn1_b"].reshape(1, 1, 1, C)
    q = xn @ params["wq"] + params["bq"].reshape(1, 1, 1, C)
    z = xn @ params["wz"] + params["bz"].reshape(1, 1, 1, C)
    g = xn @ params["wg"] + params["bg"].reshape(1, 1, 1, L + 1)
    z_cur = jnp.zeros_like(z)
    for l in range(L):
        k = focal_factor * l + focal_window
        w = params["focal_w"][l].reshape(k, k, 1, C)
        z = jax.lax.conv_general_dilated(
            z, w, window_strides=(1, 1), padding=[(k // 2, k // 2)] * 2,
            dimension_numbers=("NHWC", "HWIO", "NHWC"), feature_group_count=C)
        z = gelu(z)
        z_cur = z_cur + z * g[..., l:l + 1]
    ctx = jnp.mean(z, axis=(1, 2), keepdims=True)
    z_cur = z_cur + gelu(ctx) * g[..., L:L + 1]
    mod = z_cur @ params["h_w"] + params["h_b"].reshape(1, 1, 1, C)
    y = q * mod
    y = y @ params["po_w"] + params["po_b"].reshape(1, 1, 1, C)
    x1 = x + params["gamma_1"].reshape(1, 1, 1, C) * y
    x1n = groupnorm(x1) * params["gn2_w"].reshape(1, 1, 1, C) + params["gn2_b"].reshape(1, 1, 1, C)
    out = x1 + params["gamma_2"].reshape(1, 1, 1, C) * x1n
    return jnp.transpose(out, (0, 3, 1, 2))


if __name__ == "__main__":
    key = jax.random.PRNGKey(0)
    kp, kx = jax.random.split(key)

    B, C, H, W = 2, 32, 16, 16
    focal_window, focal_level, focal_factor = 3, 2, 2

    params = init_params(kp, C, focal_window, focal_level, focal_factor)
    packed = pack_params(params, channels=C, focal_window=focal_window,
                         focal_level=focal_level, focal_factor=focal_factor)
    x = jax.random.normal(kx, (B, C, H, W), jnp.float32)  # NCHW like PyTorch

    out = focalnet_block_forward(x, packed, focal_window=focal_window,
                                 focal_level=focal_level, focal_factor=focal_factor)
    out = jax.block_until_ready(out)

    ref = reference_forward(x, params, focal_window=focal_window,
                            focal_level=focal_level, focal_factor=focal_factor)
    assert out.shape == (B, C, H, W)
    max_err = float(jnp.max(jnp.abs(out - ref)))
    assert jnp.allclose(out, ref, rtol=1e-3, atol=1e-4), max_err

    print("KERNEL_OK")
</pallas_src>

<mosaic_0001>
module attributes {stable_mosaic.version = 11 : i64} {
  func.func @kernel(%arg0: i32, %arg1: memref<1x32x256xf32, #tpu.memory_space<vmem>>, %arg2: memref<32x1xf32, #tpu.memory_space<vmem>>, %arg3: memref<32x1xf32, #tpu.memory_space<vmem>>, %arg4: memref<32x384xbf16, #tpu.memory_space<vmem>>, %arg5: memref<1x384xf32, #tpu.memory_space<vmem>>, %arg6: memref<3x3x128xf32, #tpu.memory_space<vmem>>, %arg7: memref<5x5x128xf32, #tpu.memory_space<vmem>>, %arg8: memref<128x128xbf16, #tpu.memory_space<vmem>>, %arg9: memref<1x128xf32, #tpu.memory_space<vmem>>, %arg10: memref<32x128xbf16, #tpu.memory_space<vmem>>, %arg11: memref<32x1xf32, #tpu.memory_space<vmem>>, %arg12: memref<32x1xf32, #tpu.memory_space<vmem>>, %arg13: memref<32x1xf32, #tpu.memory_space<vmem>>, %arg14: memref<32x1xf32, #tpu.memory_space<vmem>>, %arg15: memref<32x1xf32, #tpu.memory_space<vmem>>, %arg16: memref<1x32x256xf32, #tpu.memory_space<vmem>>, %arg17: memref<20x20x128xf32, #tpu.memory_space<vmem>>) attributes {dimension_semantics = [#tpu.dimension_semantics<parallel>], iteration_bounds = array<i64: 2>, scalar_prefetch = 0 : i64, scratch_operands = 1 : i64, tpu.core_type = #tpu.core_type<tc>, window_params = [{transform_indices = @transform_0, window_bounds = array<i64: 1, 32, 256>}, {pipeline_mode = #tpu.pipeline_mode<synchronous>, transform_indices = @transform_1, window_bounds = array<i64: 32, 1>}, {pipeline_mode = #tpu.pipeline_mode<synchronous>, transform_indices = @transform_2, window_bounds = array<i64: 32, 1>}, {pipeline_mode = #tpu.pipeline_mode<synchronous>, transform_indices = @transform_3, window_bounds = array<i64: 32, 384>}, {pipeline_mode = #tpu.pipeline_mode<synchronous>, transform_indices = @transform_4, window_bounds = array<i64: 1, 384>}, {pipeline_mode = #tpu.pipeline_mode<synchronous>, transform_indices = @transform_5, window_bounds = array<i64: 3, 3, 128>}, {pipeline_mode = #tpu.pipeline_mode<synchronous>, transform_indices = @transform_6, window_bounds = array<i64: 5, 5, 128>}, {pipeline_mode = #tpu.pipeline_mode<synchronous>, transform_indices = @transform_7, window_bounds = array<i64: 128, 128>}, {pipeline_mode = #tpu.pipeline_mode<synchronous>, transform_indices = @transform_8, window_bounds = array<i64: 1, 128>}, {pipeline_mode = #tpu.pipeline_mode<synchronous>, transform_indices = @transform_9, window_bounds = array<i64: 32, 128>}, {pipeline_mode = #tpu.pipeline_mode<synchronous>, transform_indices = @transform_10, window_bounds = array<i64: 32, 1>}, {pipeline_mode = #tpu.pipeline_mode<synchronous>, transform_indices = @transform_11, window_bounds = array<i64: 32, 1>}, {pipeline_mode = #tpu.pipeline_mode<synchronous>, transform_indices = @transform_12, window_bounds = array<i64: 32, 1>}, {pipeline_mode = #tpu.pipeline_mode<synchronous>, transform_indices = @transform_13, window_bounds = array<i64: 32, 1>}, {pipeline_mode = #tpu.pipeline_mode<synchronous>, transform_indices = @transform_14, window_bounds = array<i64: 32, 1>}, {transform_indices = @transform_15, window_bounds = array<i64: 1, 32, 256>}]} {
    %c0 = arith.constant 0 : index
    %c0_0 = arith.constant 0 : index
    %c0_1 = arith.constant 0 : index
    %0 = vector.load %arg1[%c0, %c0_0, %c0_1] : memref<1x32x256xf32, #tpu.memory_space<vmem>>, vector<1x32x256xf32>
    %1 = vector.shape_cast %0 : vector<1x32x256xf32> to vector<32x256xf32>
    %2 = vector.shape_cast %1 : vector<32x256xf32> to vector<1x32x256xf32>
    %cst = arith.constant dense<0.000000e+00> : vector<1xf32>
    %3 = vector.multi_reduction <add>, %2, %cst [1, 2] : vector<1x32x256xf32> to vector<1xf32>
    %4 = vector.shape_cast %3 : vector<1xf32> to vector<1x1x1xf32>
    %5 = vector.extract %4[0, 0, 0] : f32 from vector<1x1x1xf32>
    %6 = arith.mulf %1, %1 : vector<32x256xf32>
    %7 = vector.shape_cast %6 : vector<32x256xf32> to vector<1x32x256xf32>
    %cst_2 = arith.constant dense<0.000000e+00> : vector<1xf32>
    %8 = vector.multi_reduction <add>, %7, %cst_2 [1, 2] : vector<1x32x256xf32> to vector<1xf32>
    %9 = vector.shape_cast %8 : vector<1xf32> to vector<1x1x1xf32>
    %10 = vector.extract %9[0, 0, 0] : f32 from vector<1x1x1xf32>
    %cst_3 = arith.constant 1.22070313E-4 : f32
    %11 = arith.mulf %5, %cst_3 : f32
    %cst_4 = arith.constant 1.22070313E-4 : f32
    %12 = arith.mulf %10, %cst_4 : f32
    %13 = arith.mulf %11, %11 : f32
    %14 = arith.subf %12, %13 : f32
    %15 = vector.broadcast %11 : f32 to vector<32x256xf32>
    %16 = arith.subf %1, %15 : vector<32x256xf32>
    %cst_5 = arith.constant 9.99999974E-6 : f32
    %17 = arith.addf %14, %cst_5 : f32
    %18 = math.rsqrt %17 : f32
    %19 = vector.broadcast %18 : f32 to vector<32x256xf32>
    %20 = arith.mulf %16, %19 : vector<32x256xf32>
    %c0_6 = arith.constant 0 : index
    %c0_7 = arith.constant 0 : index
    %21 = vector.load %arg2[%c0_6, %c0_7] : memref<32x1xf32, #tpu.memory_space<vmem>>, vector<32x1xf32>
    %22 = vector.broadcast %21 : vector<32x1xf32> to vector<32x256xf32>
    %23 = arith.mulf %20, %22 : vector<32x256xf32>
    %c0_8 = arith.constant 0 : index
    %c0_9 = arith.constant 0 : index
    %24 = vector.load %arg3[%c0_8, %c0_9] : memref<32x1xf32, #tpu.memory_space<vmem>>, vector<32x1xf32>
    %25 = vector.broadcast %24 : vector<32x1xf32> to vector<32x256xf32>
    %26 = arith.addf %23, %25 : vector<32x256xf32>
    %27 = arith.truncf %26 : vector<32x256xf32> to vector<32x256xbf16>
    %c0_10 = arith.constant 0 : index
    %c0_11 = arith.constant 0 : index
    %28 = vector.load %arg4[%c0_10, %c0_11] : memref<32x384xbf16, #tpu.memory_space<vmem>>, vector<32x384xbf16>
    %cst_12 = arith.constant dense<0.000000e+00> : vector<256x384xf32>
    %29 = tpu.matmul %27, %28, %cst_12 {dimension_numbers = #tpu.dot_dimension_numbers<[0], [0], [1], [1], [0, 1, 1, 1], [], []>} : vector<32x256xbf16>, vector<32x384xbf16>, vector<256x384xf32> -> vector<256x384xf32>
    %c0_13 = arith.constant 0 : index
    %c0_14 = arith.constant 0 : index
    %30 = vector.load %arg5[%c0_13, %c0_14] : memref<1x384xf32, #tpu.memory_space<vmem>>, vector<1x384xf32>
    %31 = vector.broadcast %30 : vector<1x384xf32> to vector<256x384xf32>
    %32 = arith.addf %29, %31 : vector<256x384xf32>
    %33 = vector.extract_strided_slice %32 {offsets = [0, 0], sizes = [256, 128], strides = [1, 1]} : vector<256x384xf32> to vector<256x128xf32>
    %34 = vector.extract_strided_slice %32 {offsets = [0, 128], sizes = [256, 128], strides = [1, 1]} : vector<256x384xf32> to vector<256x128xf32>
    %35 = vector.shape_cast %34 : vector<256x128xf32> to vector<16x16x128xf32>
    %36 = vector.extract_strided_slice %32 {offsets = [0, 256], sizes = [256, 3], strides = [1, 1]} : vector<256x384xf32> to vector<256x3xf32>
    %37 = vector.shape_cast %36 : vector<256x3xf32> to vector<16x16x3xf32>
    %cst_15 = arith.constant 0.000000e+00 : f32
    %38 = vector.broadcast %cst_15 : f32 to vector<20x20x128xf32>
    %c0_16 = arith.constant 0 : index
    %c0_17 = arith.constant 0 : index
    %c0_18 = arith.constant 0 : index
    %39 = vector.load %arg17[%c0_16, %c0_17, %c0_18] : memref<20x20x128xf32, #tpu.memory_space<vmem>>, vector<20x20x128xf32>
    tpu.vector_store %arg17[%c0_16, %c0_17, %c0_18], %38 {strides = array<i32>} : memref<20x20x128xf32, #tpu.memory_space<vmem>>, vector<20x20x128xf32>,
    %cst_19 = arith.constant 0.000000e+00 : f32
    %40 = vector.broadcast %cst_19 : f32 to vector<16x16x128xf32>
    %c2 = arith.constant 2 : index
    %c2_20 = arith.constant 2 : index
    %c0_21 = arith.constant 0 : index
    %41 = vector.load %arg17[%c2, %c2_20, %c0_21] : memref<20x20x128xf32, #tpu.memory_space<vmem>>, vector<16x16x128xf32>
    tpu.vector_store %arg17[%c2, %c2_20, %c0_21], %35 {strides = array<i32>} : memref<20x20x128xf32, #tpu.memory_space<vmem>>, vector<16x16x128xf32>,
    %c0_22 = arith.constant 0 : index
    %c0_23 = arith.constant 0 : index
    %c0_24 = arith.constant 0 : index
    %42 = vector.load %arg6[%c0_22, %c0_23, %c0_24] : memref<3x3x128xf32, #tpu.memory_space<vmem>>, vector<3x3x128xf32>
    %cst_25 = arith.constant 0.000000e+00 : f32
    %43 = vector.broadcast %cst_25 : f32 to vector<16x16x128xf32>
    %c1 = arith.constant 1 : index
    %c1_26 = arith.constant 1 : index
    %c0_27 = arith.constant 0 : index
    %44 = vector.load %arg17[%c1, %c1_26, %c0_27] : memref<20x20x128xf32, #tpu.memory_space<vmem>>, vector<16x16x128xf32>
    %45 = vector.extract_strided_slice %42 {offsets = [0, 0, 0], sizes = [1, 1, 128], strides = [1, 1, 1]} : vector<3x3x128xf32> to vector<1x1x128xf32>
    %46 = vector.broadcast %45 : vector<1x1x128xf32> to vector<16x16x128xf32>
    %47 = arith.mulf %44, %46 : vector<16x16x128xf32>
    %48 = arith.addf %43, %47 : vector<16x16x128xf32>
    %c1_28 = arith.constant 1 : index
    %c2_29 = arith.constant 2 : index
    %c0_30 = arith.constant 0 : index
    %49 = vector.load %arg17[%c1_28, %c2_29, %c0_30] : memref<20x20x128xf32, #tpu.memory_space<vmem>>, vector<16x16x128xf32>
    %50 = vector.extract_strided_slice %42 {offsets = [0, 1, 0], sizes = [1, 1, 128], strides = [1, 1, 1]} : vector<3x3x128xf32> to vector<1x1x128xf32>
    %51 = vector.broadcast %50 : vector<1x1x128xf32> to vector<16x16x128xf32>
    %52 = arith.mulf %49, %51 : vector<16x16x128xf32>
    %53 = arith.addf %48, %52 : vector<16x16x128xf32>
    %c1_31 = arith.constant 1 : index
    %c3 = arith.constant 3 : index
    %c0_32 = arith.constant 0 : index
    %54 = vector.load %arg17[%c1_31, %c3, %c0_32] : memref<20x20x128xf32, #tpu.memory_space<vmem>>, vector<16x16x128xf32>
    %55 = vector.extract_strided_slice %42 {offsets = [0, 2, 0], sizes = [1, 1, 128], strides = [1, 1, 1]} : vector<3x3x128xf32> to vector<1x1x128xf32>
    %56 = vector.broadcast %55 : vector<1x1x128xf32> to vector<16x16x128xf32>
    %57 = arith.mulf %54, %56 : vector<16x16x128xf32>
    %58 = arith.addf %53, %57 : vector<16x16x128xf32>
    %c2_33 = arith.constant 2 : index
    %c1_34 = arith.constant 1 : index
    %c0_35 = arith.constant 0 : index
    %59 = vector.load %arg17[%c2_33, %c1_34, %c0_35] : memref<20x20x128xf32, #tpu.memory_space<vmem>>, vector<16x16x128xf32>
    %60 = vector.extract_strided_slice %42 {offsets = [1, 0, 0], sizes = [1, 1, 128], strides = [1, 1, 1]} : vector<3x3x128xf32> to vector<1x1x128xf32>
    %61 = vector.broadcast %60 : vector<1x1x128xf32> to vector<16x16x128xf32>
    %62 = arith.mulf %59, %61 : vector<16x16x128xf32>
    %63 = arith.addf %58, %62 : vector<16x16x128xf32>
    %c2_36 = arith.constant 2 : index
    %c2_37 = arith.constant 2 : index
    %c0_38 = arith.constant 0 : index
    %64 = vector.load %arg17[%c2_36, %c2_37, %c0_38] : memref<20x20x128xf32, #tpu.memory_space<vmem>>, vector<16x16x128xf32>
    %65 = vector.extract_strided_slice %42 {offsets = [1, 1, 0], sizes = [1, 1, 128], strides = [1, 1, 1]} : vector<3x3x128xf32> to vector<1x1x128xf32>
    %66 = vector.broadcast %65 : vector<1x1x128xf32> to vector<16x16x128xf32>
    %67 = arith.mulf %64, %66 : vector<16x16x128xf32>
    %68 = arith.addf %63, %67 : vector<16x16x128xf32>
    %c2_39 = arith.constant 2 : index
    %c3_40 = arith.constant 3 : index
    %c0_41 = arith.constant 0 : index
    %69 = vector.load %arg17[%c2_39, %c3_40, %c0_41] : memref<20x20x128xf32, #tpu.memory_space<vmem>>, vector<16x16x128xf32>
    %70 = vector.extract_strided_slice %42 {offsets = [1, 2, 0], sizes = [1, 1, 128], strides = [1, 1, 1]} : vector<3x3x128xf32> to vector<1x1x128xf32>
    %71 = vector.broadcast %70 : vector<1x1x128xf32> to vector<16x16x128xf32>
    %72 = arith.mulf %69, %71 : vector<16x16x128xf32>
    %73 = arith.addf %68, %72 : vector<16x16x128xf32>
    %c3_42 = arith.constant 3 : index
    %c1_43 = arith.constant 1 : index
    %c0_44 = arith.constant 0 : index
    %74 = vector.load %arg17[%c3_42, %c1_43, %c0_44] : memref<20x20x128xf32, #tpu.memory_space<vmem>>, vector<16x16x128xf32>
    %75 = vector.extract_strided_slice %42 {offsets = [2, 0, 0], sizes = [1, 1, 128], strides = [1, 1, 1]} : vector<3x3x128xf32> to vector<1x1x128xf32>
    %76 = vector.broadcast %75 : vector<1x1x128xf32> to vector<16x16x128xf32>
    %77 = arith.mulf %74, %76 : vector<16x16x128xf32>
    %78 = arith.addf %73, %77 : vector<16x16x128xf32>
    %c3_45 = arith.constant 3 : index
    %c2_46 = arith.constant 2 : index
    %c0_47 = arith.constant 0 : index
    %79 = vector.load %arg17[%c3_45, %c2_46, %c0_47] : memref<20x20x128xf32, #tpu.memory_space<vmem>>, vector<16x16x128xf32>
    %80 = vector.extract_strided_slice %42 {offsets = [2, 1, 0], sizes = [1, 1, 128], strides = [1, 1, 1]} : vector<3x3x128xf32> to vector<1x1x128xf32>
    %81 = vector.broadcast %80 : vector<1x1x128xf32> to vector<16x16x128xf32>
    %82 = arith.mulf %79, %81 : vector<16x16x128xf32>
    %83 = arith.addf %78, %82 : vector<16x16x128xf32>
    %c3_48 = arith.constant 3 : index
    %c3_49 = arith.constant 3 : index
    %c0_50 = arith.constant 0 : index
    %84 = vector.load %arg17[%c3_48, %c3_49, %c0_50] : memref<20x20x128xf32, #tpu.memory_space<vmem>>, vector<16x16x128xf32>
    %85 = vector.extract_strided_slice %42 {offsets = [2, 2, 0], sizes = [1, 1, 128], strides = [1, 1, 1]} : vector<3x3x128xf32> to vector<1x1x128xf32>
    %86 = vector.broadcast %85 : vector<1x1x128xf32> to vector<16x16x128xf32>
    %87 = arith.mulf %84, %86 : vector<16x16x128xf32>
    %88 = arith.addf %83, %87 : vector<16x16x128xf32>
    %cst_51 = arith.constant 5.000000e-01 : f32
    %89 = vector.broadcast %cst_51 : f32 to vector<16x16x128xf32>
    %90 = arith.mulf %89, %88 : vector<16x16x128xf32>
    %cst_52 = arith.constant 1.41421354 : f32
    %91 = vector.broadcast %cst_52 : f32 to vector<16x16x128xf32>
    %92 = arith.divf %88, %91 : vector<16x16x128xf32>
    %cst_53 = arith.constant 0.000000e+00 : f32
    %93 = vector.broadcast %cst_53 : f32 to vector<16x16x128xf32>
    %94 = arith.cmpf oge, %92, %93 : vector<16x16x128xf32>
    %cst_54 = arith.constant 1.000000e+00 : f32
    %cst_55 = arith.constant -1.000000e+00 : f32
    %95 = vector.broadcast %cst_54 : f32 to vector<16x16x128xf32>
    %96 = vector.broadcast %cst_55 : f32 to vector<16x16x128xf32>
    %97 = arith.select %94, %95, %96 : vector<16x16x128xi1>, vector<16x16x128xf32>
    %98 = math.absf %92 : vector<16x16x128xf32>
    %cst_56 = arith.constant 0.327591091 : f32
    %99 = vector.broadcast %cst_56 : f32 to vector<16x16x128xf32>
    %100 = arith.mulf %99, %98 : vector<16x16x128xf32>
    %cst_57 = arith.constant 1.000000e+00 : f32
    %101 = vector.broadcast %cst_57 : f32 to vector<16x16x128xf32>
    %102 = arith.addf %101, %100 : vector<16x16x128xf32>
    %cst_58 = arith.constant 1.000000e+00 : f32
    %103 = vector.broadcast %cst_58 : f32 to vector<16x16x128xf32>
    %104 = arith.divf %103, %102 : vector<16x16x128xf32>
    %cst_59 = arith.constant 1.06140542 : f32
    %105 = vector.broadcast %cst_59 : f32 to vector<16x16x128xf32>
    %106 = arith.mulf %105, %104 : vector<16x16x128xf32>
    %cst_60 = arith.constant -1.45315206 : f32
    %107 = vector.broadcast %cst_60 : f32 to vector<16x16x128xf32>
    %108 = arith.addf %106, %107 : vector<16x16x128xf32>
    %109 = arith.mulf %108, %104 : vector<16x16x128xf32>
    %cst_61 = arith.constant 1.42141378 : f32
    %110 = vector.broadcast %cst_61 : f32 to vector<16x16x128xf32>
    %111 = arith.addf %109, %110 : vector<16x16x128xf32>
    %112 = arith.mulf %111, %104 : vector<16x16x128xf32>
    %cst_62 = arith.constant -0.284496725 : f32
    %113 = vector.broadcast %cst_62 : f32 to vector<16x16x128xf32>
    %114 = arith.addf %112, %113 : vector<16x16x128xf32>
    %115 = arith.mulf %114, %104 : vector<16x16x128xf32>
    %cst_63 = arith.constant 0.254829586 : f32
    %116 = vector.broadcast %cst_63 : f32 to vector<16x16x128xf32>
    %117 = arith.addf %115, %116 : vector<16x16x128xf32>
    %118 = arith.mulf %117, %104 : vector<16x16x128xf32>
    %cst_64 = arith.constant 0.000000e+00 : f32
    %119 = vector.broadcast %cst_64 : f32 to vector<16x16x128xf32>
    %120 = arith.subf %119, %98 : vector<16x16x128xf32>
    %121 = arith.mulf %120, %98 : vector<16x16x128xf32>
    %122 = math.exp %121 : vector<16x16x128xf32>
    %123 = arith.mulf %118, %122 : vector<16x16x128xf32>
    %cst_65 = arith.constant 1.000000e+00 : f32
    %124 = vector.broadcast %cst_65 : f32 to vector<16x16x128xf32>
    %125 = arith.subf %124, %123 : vector<16x16x128xf32>
    %126 = arith.mulf %97, %125 : vector<16x16x128xf32>
    %cst_66 = arith.constant 1.000000e+00 : f32
    %127 = vector.broadcast %cst_66 : f32 to vector<16x16x128xf32>
    %128 = arith.addf %127, %126 : vector<16x16x128xf32>
    %129 = arith.mulf %90, %128 : vector<16x16x128xf32>
    %130 = vector.extract_strided_slice %37 {offsets = [0, 0, 0], sizes = [16, 16, 1], strides = [1, 1, 1]} : vector<16x16x3xf32> to vector<16x16x1xf32>
    %131 = vector.broadcast %130 : vector<16x16x1xf32> to vector<16x16x128xf32>
    %132 = arith.mulf %129, %131 : vector<16x16x128xf32>
    %133 = arith.addf %40, %132 : vector<16x16x128xf32>
    %c2_67 = arith.constant 2 : index
    %c2_68 = arith.constant 2 : index
    %c0_69 = arith.constant 0 : index
    %134 = vector.load %arg17[%c2_67, %c2_68, %c0_69] : memref<20x20x128xf32, #tpu.memory_space<vmem>>, vector<16x16x128xf32>
    tpu.vector_store %arg17[%c2_67, %c2_68, %c0_69], %129 {strides = array<i32>} : memref<20x20x128xf32, #tpu.memory_space<vmem>>, vector<16x16x128xf32>,
    %c0_70 = arith.constant 0 : index
    %c0_71 = arith.constant 0 : index
    %c0_72 = arith.constant 0 : index
    %135 = vector.load %arg7[%c0_70, %c0_71, %c0_72] : memref<5x5x128xf32, #tpu.memory_space<vmem>>, vector<5x5x128xf32>
    %cst_73 = arith.constant 0.000000e+00 : f32
    %136 = vector.broadcast %cst_73 : f32 to vector<16x16x128xf32>
    %c0_74 = arith.constant 0 : index
    %c0_75 = arith.constant 0 : index
    %c0_76 = arith.constant 0 : index
    %137 = vector.load %arg17[%c0_74, %c0_75, %c0_76] : memref<20x20x128xf32, #tpu.memory_space<vmem>>, vector<16x16x128xf32>
    %138 = vector.extract_strided_slice %135 {offsets = [0, 0, 0], sizes = [1, 1, 128], strides = [1, 1, 1]} : vector<5x5x128xf32> to vector<1x1x128xf32>
    %139 = vector.broadcast %138 : vector<1x1x128xf32> to vector<16x16x128xf32>
    %140 = arith.mulf %137, %139 : vector<16x16x128xf32>
    %141 = arith.addf %136, %140 : vector<16x16x128xf32>
    %c0_77 = arith.constant 0 : index
    %c1_78 = arith.constant 1 : index
    %c0_79 = arith.constant 0 : index
    %142 = vector.load %arg17[%c0_77, %c1_78, %c0_79] : memref<20x20x128xf32, #tpu.memory_space<vmem>>, vector<16x16x128xf32>
    %143 = vector.extract_strided_slice %135 {offsets = [0, 1, 0], sizes = [1, 1, 128], strides = [1, 1, 1]} : vector<5x5x128xf32> to vector<1x1x128xf32>
    %144 = vector.broadcast %143 : vector<1x1x128xf32> to vector<16x16x128xf32>
    %145 = arith.mulf %142, %144 : vector<16x16x128xf32>
    %146 = arith.addf %141, %145 : vector<16x16x128xf32>
    %c0_80 = arith.constant 0 : index
    %c2_81 = arith.constant 2 : index
    %c0_82 = arith.constant 0 : index
    %147 = vector.load %arg17[%c0_80, %c2_81, %c0_82] : memref<20x20x128xf32, #tpu.memory_space<vmem>>, vector<16x16x128xf32>
    %148 = vector.extract_strided_slice %135 {offsets = [0, 2, 0], sizes = [1, 1, 128], strides = [1, 1, 1]} : vector<5x5x128xf32> to vector<1x1x128xf32>
    %149 = vector.broadcast %148 : vector<1x1x128xf32> to vector<16x16x128xf32>
    %150 = arith.mulf %147, %149 : vector<16x16x128xf32>
    %151 = arith.addf %146, %150 : vector<16x16x128xf32>
    %c0_83 = arith.constant 0 : index
    %c3_84 = arith.constant 3 : index
    %c0_85 = arith.constant 0 : index
    %152 = vector.load %arg17[%c0_83, %c3_84, %c0_85] : memref<20x20x128xf32, #tpu.memory_space<vmem>>, vector<16x16x128xf32>
    %153 = vector.extract_strided_slice %135 {offsets = [0, 3, 0], sizes = [1, 1, 128], strides = [1, 1, 1]} : vector<5x5x128xf32> to vector<1x1x128xf32>
    %154 = vector.broadcast %153 : vector<1x1x128xf32> to vector<16x16x128xf32>
    %155 = arith.mulf %152, %154 : vector<16x16x128xf32>
    %156 = arith.addf %151, %155 : vector<16x16x128xf32>
    %c0_86 = arith.constant 0 : index
    %c4 = arith.constant 4 : index
    %c0_87 = arith.constant 0 : index
    %157 = vector.load %arg17[%c0_86, %c4, %c0_87] : memref<20x20x128xf32, #tpu.memory_space<vmem>>, vector<16x16x128xf32>
    %158 = vector.extract_strided_slice %135 {offsets = [0, 4, 0], sizes = [1, 1, 128], strides = [1, 1, 1]} : vector<5x5x128xf32> to vector<1x1x128xf32>
    %159 = vector.broadcast %158 : vector<1x1x128xf32> to vector<16x16x128xf32>
    %160 = arith.mulf %157, %159 : vector<16x16x128xf32>
    %161 = arith.addf %156, %160 : vector<16x16x128xf32>
    %c1_88 = arith.constant 1 : index
    %c0_89 = arith.constant 0 : index
    %c0_90 = arith.constant 0 : index
    %162 = vector.load %arg17[%c1_88, %c0_89, %c0_90] : memref<20x20x128xf32, #tpu.memory_space<vmem>>, vector<16x16x128xf32>
    %163 = vector.extract_strided_slice %135 {offsets = [1, 0, 0], sizes = [1, 1, 128], strides = [1, 1, 1]} : vector<5x5x128xf32> to vector<1x1x128xf32>
    %164 = vector.broadcast %163 : vector<1x1x128xf32> to vector<16x16x128xf32>
    %165 = arith.mulf %162, %164 : vector<16x16x128xf32>
    %166 = arith.addf %161, %165 : vector<16x16x128xf32>
    %c1_91 = arith.constant 1 : index
    %c1_92 = arith.constant 1 : index
    %c0_93 = arith.constant 0 : index
    %167 = vector.load %arg17[%c1_91, %c1_92, %c0_93] : memref<20x20x128xf32, #tpu.memory_space<vmem>>, vector<16x16x128xf32>
    %168 = vector.extract_strided_slice %135 {offsets = [1, 1, 0], sizes = [1, 1, 128], strides = [1, 1, 1]} : vector<5x5x128xf32> to vector<1x1x128xf32>
    %169 = vector.broadcast %168 : vector<1x1x128xf32> to vector<16x16x128xf32>
    %170 = arith.mulf %167, %169 : vector<16x16x128xf32>
    %171 = arith.addf %166, %170 : vector<16x16x128xf32>
    %c1_94 = arith.constant 1 : index
    %c2_95 = arith.constant 2 : index
    %c0_96 = arith.constant 0 : index
    %172 = vector.load %arg17[%c1_94, %c2_95, %c0_96] : memref<20x20x128xf32, #tpu.memory_space<vmem>>, vector<16x16x128xf32>
    %173 = vector.extract_strided_slice %135 {offsets = [1, 2, 0], sizes = [1, 1, 128], strides = [1, 1, 1]} : vector<5x5x128xf32> to vector<1x1x128xf32>
    %174 = vector.broadcast %173 : vector<1x1x128xf32> to vector<16x16x128xf32>
    %175 = arith.mulf %172, %174 : vector<16x16x128xf32>
    %176 = arith.addf %171, %175 : vector<16x16x128xf32>
    %c1_97 = arith.constant 1 : index
    %c3_98 = arith.constant 3 : index
    %c0_99 = arith.constant 0 : index
    %177 = vector.load %arg17[%c1_97, %c3_98, %c0_99] : memref<20x20x128xf32, #tpu.memory_space<vmem>>, vector<16x16x128xf32>
    %178 = vector.extract_strided_slice %135 {offsets = [1, 3, 0], sizes = [1, 1, 128], strides = [1, 1, 1]} : vector<5x5x128xf32> to vector<1x1x128xf32>
    %179 = vector.broadcast %178 : vector<1x1x128xf32> to vector<16x16x128xf32>
    %180 = arith.mulf %177, %179 : vector<16x16x128xf32>
    %181 = arith.addf %176, %180 : vector<16x16x128xf32>
    %c1_100 = arith.constant 1 : index
    %c4_101 = arith.constant 4 : index
    %c0_102 = arith.constant 0 : index
    %182 = vector.load %arg17[%c1_100, %c4_101, %c0_102] : memref<20x20x128xf32, #tpu.memory_space<vmem>>, vector<16x16x128xf32>
    %183 = vector.extract_strided_slice %135 {offsets = [1, 4, 0], sizes = [1, 1, 128], strides = [1, 1, 1]} : vector<5x5x128xf32> to vector<1x1x128xf32>
    %184 = vector.broadcast %183 : vector<1x1x128xf32> to vector<16x16x128xf32>
    %185 = arith.mulf %182, %184 : vector<16x16x128xf32>
    %186 = arith.addf %181, %185 : vector<16x16x128xf32>
    %c2_103 = arith.constant 2 : index
    %c0_104 = arith.constant 0 : index
    %c0_105 = arith.constant 0 : index
    %187 = vector.load %arg17[%c2_103, %c0_104, %c0_105] : memref<20x20x128xf32, #tpu.memory_space<vmem>>, vector<16x16x128xf32>
    %188 = vector.extract_strided_slice %135 {offsets = [2, 0, 0], sizes = [1, 1, 128], strides = [1, 1, 1]} : vector<5x5x128xf32> to vector<1x1x128xf32>
    %189 = vector.broadcast %188 : vector<1x1x128xf32> to vector<16x16x128xf32>
    %190 = arith.mulf %187, %189 : vector<16x16x128xf32>
    %191 = arith.addf %186, %190 : vector<16x16x128xf32>
    %c2_106 = arith.constant 2 : index
    %c1_107 = arith.constant 1 : index
    %c0_108 = arith.constant 0 : index
    %192 = vector.load %arg17[%c2_106, %c1_107, %c0_108] : memref<20x20x128xf32, #tpu.memory_space<vmem>>, vector<16x16x128xf32>
    %193 = vector.extract_strided_slice %135 {offsets = [2, 1, 0], sizes = [1, 1, 128], strides = [1, 1, 1]} : vector<5x5x128xf32> to vector<1x1x128xf32>
    %194 = vector.broadcast %193 : vector<1x1x128xf32> to vector<16x16x128xf32>
    %195 = arith.mulf %192, %194 : vector<16x16x128xf32>
    %196 = arith.addf %191, %195 : vector<16x16x128xf32>
    %c2_109 = arith.constant 2 : index
    %c2_110 = arith.constant 2 : index
    %c0_111 = arith.constant 0 : index
    %197 = vector.load %arg17[%c2_109, %c2_110, %c0_111] : memref<20x20x128xf32, #tpu.memory_space<vmem>>, vector<16x16x128xf32>
    %198 = vector.extract_strided_slice %135 {offsets = [2, 2, 0], sizes = [1, 1, 128], strides = [1, 1, 1]} : vector<5x5x128xf32> to vector<1x1x128xf32>
    %199 = vector.broadcast %198 : vector<1x1x128xf32> to vector<16x16x128xf32>
    %200 = arith.mulf %197, %199 : vector<16x16x128xf32>
    %201 = arith.addf %196, %200 : vector<16x16x128xf32>
    %c2_112 = arith.constant 2 : index
    %c3_113 = arith.constant 3 : index
    %c0_114 = arith.constant 0 : index
    %202 = vector.load %arg17[%c2_112, %c3_113, %c0_114] : memref<20x20x128xf32, #tpu.memory_space<vmem>>, vector<16x16x128xf32>
    %203 = vector.extract_strided_slice %135 {offsets = [2, 3, 0], sizes = [1, 1, 128], strides = [1, 1, 1]} : vector<5x5x128xf32> to vector<1x1x128xf32>
    %204 = vector.broadcast %203 : vector<1x1x128xf32> to vector<16x16x128xf32>
    %205 = arith.mulf %202, %204 : vector<16x16x128xf32>
    %206 = arith.addf %201, %205 : vector<16x16x128xf32>
    %c2_115 = arith.constant 2 : index
    %c4_116 = arith.constant 4 : index
    %c0_117 = arith.constant 0 : index
    %207 = vector.load %arg17[%c2_115, %c4_116, %c0_117] : memref<20x20x128xf32, #tpu.memory_space<vmem>>, vector<16x16x128xf32>
    %208 = vector.extract_strided_slice %135 {offsets = [2, 4, 0], sizes = [1, 1, 128], strides = [1, 1, 1]} : vector<5x5x128xf32> to vector<1x1x128xf32>
    %209 = vector.broadcast %208 : vector<1x1x128xf32> to vector<16x16x128xf32>
    %210 = arith.mulf %207, %209 : vector<16x16x128xf32>
    %211 = arith.addf %206, %210 : vector<16x16x128xf32>
    %c3_118 = arith.constant 3 : index
    %c0_119 = arith.constant 0 : index
    %c0_120 = arith.constant 0 : index
    %212 = vector.load %arg17[%c3_118, %c0_119, %c0_120] : memref<20x20x128xf32, #tpu.memory_space<vmem>>, vector<16x16x128xf32>
    %213 = vector.extract_strided_slice %135 {offsets = [3, 0, 0], sizes = [1, 1, 128], strides = [1, 1, 1]} : vector<5x5x128xf32> to vector<1x1x128xf32>
    %214 = vector.broadcast %213 : vector<1x1x128xf32> to vector<16x16x128xf32>
    %215 = arith.mulf %212, %214 : vector<16x16x128xf32>
    %216 = arith.addf %211, %215 : vector<16x16x128xf32>
    %c3_121 = arith.constant 3 : index
    %c1_122 = arith.constant 1 : index
    %c0_123 = arith.constant 0 : index
    %217 = vector.load %arg17[%c3_121, %c1_122, %c0_123] : memref<20x20x128xf32, #tpu.memory_space<vmem>>, vector<16x16x128xf32>
    %218 = vector.extract_strided_slice %135 {offsets = [3, 1, 0], sizes = [1, 1, 128], strides = [1, 1, 1]} : vector<5x5x128xf32> to vector<1x1x128xf32>
    %219 = vector.broadcast %218 : vector<1x1x128xf32> to vector<16x16x128xf32>
    %220 = arith.mulf %217, %219 : vector<16x16x128xf32>
    %221 = arith.addf %216, %220 : vector<16x16x128xf32>
    %c3_124 = arith.constant 3 : index
    %c2_125 = arith.constant 2 : index
    %c0_126 = arith.constant 0 : index
    %222 = vector.load %arg17[%c3_124, %c2_125, %c0_126] : memref<20x20x128xf32, #tpu.memory_space<vmem>>, vector<16x16x128xf32>
    %223 = vector.extract_strided_slice %135 {offsets = [3, 2, 0], sizes = [1, 1, 128], strides = [1, 1, 1]} : vector<5x5x128xf32> to vector<1x1x128xf32>
    %224 = vector.broadcast %223 : vector<1x1x128xf32> to vector<16x16x128xf32>
    %225 = arith.mulf %222, %224 : vector<16x16x128xf32>
    %226 = arith.addf %221, %225 : vector<16x16x128xf32>
    %c3_127 = arith.constant 3 : index
    %c3_128 = arith.constant 3 : index
    %c0_129 = arith.constant 0 : index
    %227 = vector.load %arg17[%c3_127, %c3_128, %c0_129] : memref<20x20x128xf32, #tpu.memory_space<vmem>>, vector<16x16x128xf32>
    %228 = vector.extract_strided_slice %135 {offsets = [3, 3, 0], sizes = [1, 1, 128], strides = [1, 1, 1]} : vector<5x5x128xf32> to vector<1x1x128xf32>
    %229 = vector.broadcast %228 : vector<1x1x128xf32> to vector<16x16x128xf32>
    %230 = arith.mulf %227, %229 : vector<16x16x128xf32>
    %231 = arith.addf %226, %230 : vector<16x16x128xf32>
    %c3_130 = arith.constant 3 : index
    %c4_131 = arith.constant 4 : index
    %c0_132 = arith.constant 0 : index
    %232 = vector.load %arg17[%c3_130, %c4_131, %c0_132] : memref<20x20x128xf32, #tpu.memory_space<vmem>>, vector<16x16x128xf32>
    %233 = vector.extract_strided_slice %135 {offsets = [3, 4, 0], sizes = [1, 1, 128], strides = [1, 1, 1]} : vector<5x5x128xf32> to vector<1x1x128xf32>
    %234 = vector.broadcast %233 : vector<1x1x128xf32> to vector<16x16x128xf32>
    %235 = arith.mulf %232, %234 : vector<16x16x128xf32>
    %236 = arith.addf %231, %235 : vector<16x16x128xf32>
    %c4_133 = arith.constant 4 : index
    %c0_134 = arith.constant 0 : index
    %c0_135 = arith.constant 0 : index
    %237 = vector.load %arg17[%c4_133, %c0_134, %c0_135] : memref<20x20x128xf32, #tpu.memory_space<vmem>>, vector<16x16x128xf32>
    %238 = vector.extract_strided_slice %135 {offsets = [4, 0, 0], sizes = [1, 1, 128], strides = [1, 1, 1]} : vector<5x5x128xf32> to vector<1x1x128xf32>
    %239 = vector.broadcast %238 : vector<1x1x128xf32> to vector<16x16x128xf32>
    %240 = arith.mulf %237, %239 : vector<16x16x128xf32>
    %241 = arith.addf %236, %240 : vector<16x16x128xf32>
    %c4_136 = arith.constant 4 : index
    %c1_137 = arith.constant 1 : index
    %c0_138 = arith.constant 0 : index
    %242 = vector.load %arg17[%c4_136, %c1_137, %c0_138] : memref<20x20x128xf32, #tpu.memory_space<vmem>>, vector<16x16x128xf32>
    %243 = vector.extract_strided_slice %135 {offsets = [4, 1, 0], sizes = [1, 1, 128], strides = [1, 1, 1]} : vector<5x5x128xf32> to vector<1x1x128xf32>
    %244 = vector.broadcast %243 : vector<1x1x128xf32> to vector<16x16x128xf32>
    %245 = arith.mulf %242, %244 : vector<16x16x128xf32>
    %246 = arith.addf %241, %245 : vector<16x16x128xf32>
    %c4_139 = arith.constant 4 : index
    %c2_140 = arith.constant 2 : index
    %c0_141 = arith.constant 0 : index
    %247 = vector.load %arg17[%c4_139, %c2_140, %c0_141] : memref<20x20x128xf32, #tpu.memory_space<vmem>>, vector<16x16x128xf32>
    %248 = vector.extract_strided_slice %135 {offsets = [4, 2, 0], sizes = [1, 1, 128], strides = [1, 1, 1]} : vector<5x5x128xf32> to vector<1x1x128xf32>
    %249 = vector.broadcast %248 : vector<1x1x128xf32> to vector<16x16x128xf32>
    %250 = arith.mulf %247, %249 : vector<16x16x128xf32>
    %251 = arith.addf %246, %250 : vector<16x16x128xf32>
    %c4_142 = arith.constant 4 : index
    %c3_143 = arith.constant 3 : index
    %c0_144 = arith.constant 0 : index
    %252 = vector.load %arg17[%c4_142, %c3_143, %c0_144] : memref<20x20x128xf32, #tpu.memory_space<vmem>>, vector<16x16x128xf32>
    %253 = vector.extract_strided_slice %135 {offsets = [4, 3, 0], sizes = [1, 1, 128], strides = [1, 1, 1]} : vector<5x5x128xf32> to vector<1x1x128xf32>
    %254 = vector.broadcast %253 : vector<1x1x128xf32> to vector<16x16x128xf32>
    %255 = arith.mulf %252, %254 : vector<16x16x128xf32>
    %256 = arith.addf %251, %255 : vector<16x16x128xf32>
    %c4_145 = arith.constant 4 : index
    %c4_146 = arith.constant 4 : index
    %c0_147 = arith.constant 0 : index
    %257 = vector.load %arg17[%c4_145, %c4_146, %c0_147] : memref<20x20x128xf32, #tpu.memory_space<vmem>>, vector<16x16x128xf32>
    %258 = vector.extract_strided_slice %135 {offsets = [4, 4, 0], sizes = [1, 1, 128], strides = [1, 1, 1]} : vector<5x5x128xf32> to vector<1x1x128xf32>
    %259 = vector.broadcast %258 : vector<1x1x128xf32> to vector<16x16x128xf32>
    %260 = arith.mulf %257, %259 : vector<16x16x128xf32>
    %261 = arith.addf %256, %260 : vector<16x16x128xf32>
    %cst_148 = arith.constant 5.000000e-01 : f32
    %262 = vector.broadcast %cst_148 : f32 to vector<16x16x128xf32>
    %263 = arith.mulf %262, %261 : vector<16x16x128xf32>
    %cst_149 = arith.constant 1.41421354 : f32
    %264 = vector.broadcast %cst_149 : f32 to vector<16x16x128xf32>
    %265 = arith.divf %261, %264 : vector<16x16x128xf32>
    %cst_150 = arith.constant 0.000000e+00 : f32
    %266 = vector.broadcast %cst_150 : f32 to vector<16x16x128xf32>
    %267 = arith.cmpf oge, %265, %266 : vector<16x16x128xf32>
    %cst_151 = arith.constant 1.000000e+00 : f32
    %cst_152 = arith.constant -1.000000e+00 : f32
    %268 = vector.broadcast %cst_151 : f32 to vector<16x16x128xf32>
    %269 = vector.broadcast %cst_152 : f32 to vector<16x16x128xf32>
    %270 = arith.select %267, %268, %269 : vector<16x16x128xi1>, vector<16x16x128xf32>
    %271 = math.absf %265 : vector<16x16x128xf32>
    %cst_153 = arith.constant 0.327591091 : f32
    %272 = vector.broadcast %cst_153 : f32 to vector<16x16x128xf32>
    %273 = arith.mulf %272, %271 : vector<16x16x128xf32>
    %cst_154 = arith.constant 1.000000e+00 : f32
    %274 = vector.broadcast %cst_154 : f32 to vector<16x16x128xf32>
    %275 = arith.addf %274, %273 : vector<16x16x128xf32>
    %cst_155 = arith.constant 1.000000e+00 : f32
    %276 = vector.broadcast %cst_155 : f32 to vector<16x16x128xf32>
    %277 = arith.divf %276, %275 : vector<16x16x128xf32>
    %cst_156 = arith.constant 1.06140542 : f32
    %278 = vector.broadcast %cst_156 : f32 to vector<16x16x128xf32>
    %279 = arith.mulf %278, %277 : vector<16x16x128xf32>
    %cst_157 = arith.constant -1.45315206 : f32
    %280 = vector.broadcast %cst_157 : f32 to vector<16x16x128xf32>
    %281 = arith.addf %279, %280 : vector<16x16x128xf32>
    %282 = arith.mulf %281, %277 : vector<16x16x128xf32>
    %cst_158 = arith.constant 1.42141378 : f32
    %283 = vector.broadcast %cst_158 : f32 to vector<16x16x128xf32>
    %284 = arith.addf %282, %283 : vector<16x16x128xf32>
    %285 = arith.mulf %284, %277 : vector<16x16x128xf32>
    %cst_159 = arith.constant -0.284496725 : f32
    %286 = vector.broadcast %cst_159 : f32 to vector<16x16x128xf32>
    %287 = arith.addf %285, %286 : vector<16x16x128xf32>
    %288 = arith.mulf %287, %277 : vector<16x16x128xf32>
    %cst_160 = arith.constant 0.254829586 : f32
    %289 = vector.broadcast %cst_160 : f32 to vector<16x16x128xf32>
    %290 = arith.addf %288, %289 : vector<16x16x128xf32>
    %291 = arith.mulf %290, %277 : vector<16x16x128xf32>
    %cst_161 = arith.constant 0.000000e+00 : f32
    %292 = vector.broadcast %cst_161 : f32 to vector<16x16x128xf32>
    %293 = arith.subf %292, %271 : vector<16x16x128xf32>
    %294 = arith.mulf %293, %271 : vector<16x16x128xf32>
    %295 = math.exp %294 : vector<16x16x128xf32>
    %296 = arith.mulf %291, %295 : vector<16x16x128xf32>
    %cst_162 = arith.constant 1.000000e+00 : f32
    %297 = vector.broadcast %cst_162 : f32 to vector<16x16x128xf32>
    %298 = arith.subf %297, %296 : vector<16x16x128xf32>
    %299 = arith.mulf %270, %298 : vector<16x16x128xf32>
    %cst_163 = arith.constant 1.000000e+00 : f32
    %300 = vector.broadcast %cst_163 : f32 to vector<16x16x128xf32>
    %301 = arith.addf %300, %299 : vector<16x16x128xf32>
    %302 = arith.mulf %263, %301 : vector<16x16x128xf32>
    %303 = vector.extract_strided_slice %37 {offsets = [0, 0, 1], sizes = [16, 16, 1], strides = [1, 1, 1]} : vector<16x16x3xf32> to vector<16x16x1xf32>
    %304 = vector.broadcast %303 : vector<16x16x1xf32> to vector<16x16x128xf32>
    %305 = arith.mulf %302, %304 : vector<16x16x128xf32>
    %306 = arith.addf %133, %305 : vector<16x16x128xf32>
    %cst_164 = arith.constant dense<0.000000e+00> : vector<128xf32>
    %307 = vector.multi_reduction <add>, %302, %cst_164 [0, 1] : vector<16x16x128xf32> to vector<128xf32>
    %308 = vector.shape_cast %307 : vector<128xf32> to vector<1x1x128xf32>
    %cst_165 = arith.constant 2.560000e+02 : f32
    %309 = vector.broadcast %cst_165 : f32 to vector<1x1x128xf32>
    %310 = arith.divf %308, %309 : vector<1x1x128xf32>
    %cst_166 = arith.constant 5.000000e-01 : f32
    %311 = vector.broadcast %cst_166 : f32 to vector<1x1x128xf32>
    %312 = arith.mulf %311, %310 : vector<1x1x128xf32>
    %cst_167 = arith.constant 1.41421354 : f32
    %313 = vector.broadcast %cst_167 : f32 to vector<1x1x128xf32>
    %314 = arith.divf %310, %313 : vector<1x1x128xf32>
    %cst_168 = arith.constant 0.000000e+00 : f32
    %315 = vector.broadcast %cst_168 : f32 to vector<1x1x128xf32>
    %316 = arith.cmpf oge, %314, %315 : vector<1x1x128xf32>
    %cst_169 = arith.constant 1.000000e+00 : f32
    %cst_170 = arith.constant -1.000000e+00 : f32
    %317 = vector.broadcast %cst_169 : f32 to vector<1x1x128xf32>
    %318 = vector.broadcast %cst_170 : f32 to vector<1x1x128xf32>
    %319 = arith.select %316, %317, %318 : vector<1x1x128xi1>, vector<1x1x128xf32>
    %320 = math.absf %314 : vector<1x1x128xf32>
    %cst_171 = arith.constant 0.327591091 : f32
    %321 = vector.broadcast %cst_171 : f32 to vector<1x1x128xf32>
    %322 = arith.mulf %321, %320 : vector<1x1x128xf32>
    %cst_172 = arith.constant 1.000000e+00 : f32
    %323 = vector.broadcast %cst_172 : f32 to vector<1x1x128xf32>
    %324 = arith.addf %323, %322 : vector<1x1x128xf32>
    %cst_173 = arith.constant 1.000000e+00 : f32
    %325 = vector.broadcast %cst_173 : f32 to vector<1x1x128xf32>
    %326 = arith.divf %325, %324 : vector<1x1x128xf32>
    %cst_174 = arith.constant 1.06140542 : f32
    %327 = vector.broadcast %cst_174 : f32 to vector<1x1x128xf32>
    %328 = arith.mulf %327, %326 : vector<1x1x128xf32>
    %cst_175 = arith.constant -1.45315206 : f32
    %329 = vector.broadcast %cst_175 : f32 to vector<1x1x128xf32>
    %330 = arith.addf %328, %329 : vector<1x1x128xf32>
    %331 = arith.mulf %330, %326 : vector<1x1x128xf32>
    %cst_176 = arith.constant 1.42141378 : f32
    %332 = vector.broadcast %cst_176 : f32 to vector<1x1x128xf32>
    %333 = arith.addf %331, %332 : vector<1x1x128xf32>
    %334 = arith.mulf %333, %326 : vector<1x1x128xf32>
    %cst_177 = arith.constant -0.284496725 : f32
    %335 = vector.broadcast %cst_177 : f32 to vector<1x1x128xf32>
    %336 = arith.addf %334, %335 : vector<1x1x128xf32>
    %337 = arith.mulf %336, %326 : vector<1x1x128xf32>
    %cst_178 = arith.constant 0.254829586 : f32
    %338 = vector.broadcast %cst_178 : f32 to vector<1x1x128xf32>
    %339 = arith.addf %337, %338 : vector<1x1x128xf32>
    %340 = arith.mulf %339, %326 : vector<1x1x128xf32>
    %cst_179 = arith.constant 0.000000e+00 : f32
    %341 = vector.broadcast %cst_179 : f32 to vector<1x1x128xf32>
    %342 = arith.subf %341, %320 : vector<1x1x128xf32>
    %343 = arith.mulf %342, %320 : vector<1x1x128xf32>
    %344 = math.exp %343 : vector<1x1x128xf32>
    %345 = arith.mulf %340, %344 : vector<1x1x128xf32>
    %cst_180 = arith.constant 1.000000e+00 : f32
    %346 = vector.broadcast %cst_180 : f32 to vector<1x1x128xf32>
    %347 = arith.subf %346, %345 : vector<1x1x128xf32>
    %348 = arith.mulf %319, %347 : vector<1x1x128xf32>
    %cst_181 = arith.constant 1.000000e+00 : f32
    %349 = vector.broadcast %cst_181 : f32 to vector<1x1x128xf32>
    %350 = arith.addf %349, %348 : vector<1x1x128xf32>
    %351 = arith.mulf %312, %350 : vector<1x1x128xf32>
    %352 = vector.extract_strided_slice %37 {offsets = [0, 0, 2], sizes = [16, 16, 1], strides = [1, 1, 1]} : vector<16x16x3xf32> to vector<16x16x1xf32>
    %353 = vector.broadcast %351 : vector<1x1x128xf32> to vector<16x16x128xf32>
    %354 = vector.broadcast %352 : vector<16x16x1xf32> to vector<16x16x128xf32>
    %355 = arith.mulf %353, %354 : vector<16x16x128xf32>
    %356 = arith.addf %306, %355 : vector<16x16x128xf32>
    %357 = vector.shape_cast %356 : vector<16x16x128xf32> to vector<256x128xf32>
    %358 = arith.truncf %357 : vector<256x128xf32> to vector<256x128xbf16>
    %c0_182 = arith.constant 0 : index
    %c0_183 = arith.constant 0 : index
    %359 = vector.load %arg8[%c0_182, %c0_183] : memref<128x128xbf16, #tpu.memory_space<vmem>>, vector<128x128xbf16>
    %cst_184 = arith.constant dense<0.000000e+00> : vector<256x128xf32>
    %360 = tpu.matmul %358, %359, %cst_184 {dimension_numbers = #tpu.dot_dimension_numbers<[1], [0], [0], [1], [0, 0, 1, 1], [], []>} : vector<256x128xbf16>, vector<128x128xbf16>, vector<256x128xf32> -> vector<256x128xf32>
    %c0_185 = arith.constant 0 : index
    %c0_186 = arith.constant 0 : index
    %361 = vector.load %arg9[%c0_185, %c0_186] : memref<1x128xf32, #tpu.memory_space<vmem>>, vector<1x128xf32>
    %362 = vector.broadcast %361 : vector<1x128xf32> to vector<256x128xf32>
    %363 = arith.addf %360, %362 : vector<256x128xf32>
    %364 = arith.mulf %33, %363 : vector<256x128xf32>
    %c0_187 = arith.constant 0 : index
    %c0_188 = arith.constant 0 : index
    %365 = vector.load %arg10[%c0_187, %c0_188] : memref<32x128xbf16, #tpu.memory_space<vmem>>, vector<32x128xbf16>
    %366 = arith.truncf %364 : vector<256x128xf32> to vector<256x128xbf16>
    %cst_189 = arith.constant dense<0.000000e+00> : vector<32x256xf32>
    %367 = tpu.matmul %365, %366, %cst_189 {dimension_numbers = #tpu.dot_dimension_numbers<[1], [1], [0], [0], [0, 0, 1, 0], [], []>} : vector<32x128xbf16>, vector<256x128xbf16>, vector<32x256xf32> -> vector<32x256xf32>
    %c0_190 = arith.constant 0 : index
    %c0_191 = arith.constant 0 : index
    %368 = vector.load %arg11[%c0_190, %c0_191] : memref<32x1xf32, #tpu.memory_space<vmem>>, vector<32x1xf32>
    %369 = vector.broadcast %368 : vector<32x1xf32> to vector<32x256xf32>
    %370 = arith.addf %367, %369 : vector<32x256xf32>
    %c0_192 = arith.constant 0 : index
    %c0_193 = arith.constant 0 : index
    %371 = vector.load %arg14[%c0_192, %c0_193] : memref<32x1xf32, #tpu.memory_space<vmem>>, vector<32x1xf32>
    %372 = vector.broadcast %371 : vector<32x1xf32> to vector<32x256xf32>
    %373 = arith.mulf %372, %370 : vector<32x256xf32>
    %374 = arith.addf %1, %373 : vector<32x256xf32>
    %375 = vector.shape_cast %374 : vector<32x256xf32> to vector<1x32x256xf32>
    %cst_194 = arith.constant dense<0.000000e+00> : vector<1xf32>
    %376 = vector.multi_reduction <add>, %375, %cst_194 [1, 2] : vector<1x32x256xf32> to vector<1xf32>
    %377 = vector.shape_cast %376 : vector<1xf32> to vector<1x1x1xf32>
    %378 = vector.extract %377[0, 0, 0] : f32 from vector<1x1x1xf32>
    %379 = arith.mulf %374, %374 : vector<32x256xf32>
    %380 = vector.shape_cast %379 : vector<32x256xf32> to vector<1x32x256xf32>
    %cst_195 = arith.constant dense<0.000000e+00> : vector<1xf32>
    %381 = vector.multi_reduction <add>, %380, %cst_195 [1, 2] : vector<1x32x256xf32> to vector<1xf32>
    %382 = vector.shape_cast %381 : vector<1xf32> to vector<1x1x1xf32>
    %383 = vector.extract %382[0, 0, 0] : f32 from vector<1x1x1xf32>
    %cst_196 = arith.constant 1.22070313E-4 : f32
    %384 = arith.mulf %378, %cst_196 : f32
    %cst_197 = arith.constant 1.22070313E-4 : f32
    %385 = arith.mulf %383, %cst_197 : f32
    %386 = arith.mulf %384, %384 : f32
    %387 = arith.subf %385, %386 : f32
    %388 = vector.broadcast %384 : f32 to vector<32x256xf32>
    %389 = arith.subf %374, %388 : vector<32x256xf32>
    %cst_198 = arith.constant 9.99999974E-6 : f32
    %390 = arith.addf %387, %cst_198 : f32
    %391 = math.rsqrt %390 : f32
    %392 = vector.broadcast %391 : f32 to vector<32x256xf32>
    %393 = arith.mulf %389, %392 : vector<32x256xf32>
    %c0_199 = arith.constant 0 : index
    %c0_200 = arith.constant 0 : index
    %394 = vector.load %arg12[%c0_199, %c0_200] : memref<32x1xf32, #tpu.memory_space<vmem>>, vector<32x1xf32>
    %395 = vector.broadcast %394 : vector<32x1xf32> to vector<32x256xf32>
    %396 = arith.mulf %393, %395 : vector<32x256xf32>
    %c0_201 = arith.constant 0 : index
    %c0_202 = arith.constant 0 : index
    %397 = vector.load %arg13[%c0_201, %c0_202] : memref<32x1xf32, #tpu.memory_space<vmem>>, vector<32x1xf32>
    %398 = vector.broadcast %397 : vector<32x1xf32> to vector<32x256xf32>
    %399 = arith.addf %396, %398 : vector<32x256xf32>
    %c0_203 = arith.constant 0 : index
    %c0_204 = arith.constant 0 : index
    %400 = vector.load %arg15[%c0_203, %c0_204] : memref<32x1xf32, #tpu.memory_space<vmem>>, vector<32x1xf32>
    %401 = vector.broadcast %400 : vector<32x1xf32> to vector<32x256xf32>
    %402 = arith.mulf %401, %399 : vector<32x256xf32>
    %403 = arith.addf %374, %402 : vector<32x256xf32>
    %c0_205 = arith.constant 0 : index
    %c0_206 = arith.constant 0 : index
    %c0_207 = arith.constant 0 : index
    %404 = vector.load %arg16[%c0_205, %c0_206, %c0_207] : memref<1x32x256xf32, #tpu.memory_space<vmem>>, vector<1x32x256xf32>
    %405 = vector.shape_cast %404 : vector<1x32x256xf32> to vector<32x256xf32>
    %406 = vector.shape_cast %403 : vector<32x256xf32> to vector<1x32x256xf32>
    tpu.vector_store %arg16[%c0_205, %c0_206, %c0_207], %406 {strides = array<i32>} : memref<1x32x256xf32, #tpu.memory_space<vmem>>, vector<1x32x256xf32>,
    return
  }
  func.func @transform_0(%arg0: i32) -> (i32, i32, i32) {
    %c0_i32 = arith.constant 0 : i32
    %c0_i32_0 = arith.constant 0 : i32
    %c0_i32_1 = arith.constant 0 : i32
    return %arg0, %c0_i32, %c0_i32_0 : i32, i32, i32
  }
  func.func @transform_1(%arg0: i32) -> (i32, i32) {
    %c0_i32 = arith.constant 0 : i32
    %c0_i32_0 = arith.constant 0 : i32
    %c0_i32_1 = arith.constant 0 : i32
    return %c0_i32, %c0_i32_0 : i32, i32
  }
  func.func @transform_2(%arg0: i32) -> (i32, i32) {
    %c0_i32 = arith.constant 0 : i32
    %c0_i32_0 = arith.constant 0 : i32
    %c0_i32_1 = arith.constant 0 : i32
    return %c0_i32, %c0_i32_0 : i32, i32
  }
  func.func @transform_3(%arg0: i32) -> (i32, i32) {
    %c0_i32 = arith.constant 0 : i32
    %c0_i32_0 = arith.constant 0 : i32
    %c0_i32_1 = arith.constant 0 : i32
    return %c0_i32, %c0_i32_0 : i32, i32
  }
  func.func @transform_4(%arg0: i32) -> (i32, i32) {
    %c0_i32 = arith.constant 0 : i32
    %c0_i32_0 = arith.constant 0 : i32
    %c0_i32_1 = arith.constant 0 : i32
    return %c0_i32, %c0_i32_0 : i32, i32
  }
  func.func @transform_5(%arg0: i32) -> (i32, i32, i32) {
    %c0_i32 = arith.constant 0 : i32
    %c0_i32_0 = arith.constant 0 : i32
    %c0_i32_1 = arith.constant 0 : i32
    %c0_i32_2 = arith.constant 0 : i32
    return %c0_i32, %c0_i32_0, %c0_i32_1 : i32, i32, i32
  }
  func.func @transform_6(%arg0: i32) -> (i32, i32, i32) {
    %c0_i32 = arith.constant 0 : i32
    %c0_i32_0 = arith.constant 0 : i32
    %c0_i32_1 = arith.constant 0 : i32
    %c0_i32_2 = arith.constant 0 : i32
    return %c0_i32, %c0_i32_0, %c0_i32_1 : i32, i32, i32
  }
  func.func @transform_7(%arg0: i32) -> (i32, i32) {
    %c0_i32 = arith.constant 0 : i32
    %c0_i32_0 = arith.constant 0 : i32
    %c0_i32_1 = arith.constant 0 : i32
    return %c0_i32, %c0_i32_0 : i32, i32
  }
  func.func @transform_8(%arg0: i32) -> (i32, i32) {
    %c0_i32 = arith.constant 0 : i32
    %c0_i32_0 = arith.constant 0 : i32
    %c0_i32_1 = arith.constant 0 : i32
    return %c0_i32, %c0_i32_0 : i32, i32
  }
  func.func @transform_9(%arg0: i32) -> (i32, i32) {
    %c0_i32 = arith.constant 0 : i32
    %c0_i32_0 = arith.constant 0 : i32
    %c0_i32_1 = arith.constant 0 : i32
    return %c0_i32, %c0_i32_0 : i32, i32
  }
  func.func @transform_10(%arg0: i32) -> (i32, i32) {
    %c0_i32 = arith.constant 0 : i32
    %c0_i32_0 = arith.constant 0 : i32
    %c0_i32_1 = arith.constant 0 : i32
    return %c0_i32, %c0_i32_0 : i32, i32
  }
  func.func @transform_11(%arg0: i32) -> (i32, i32) {
    %c0_i32 = arith.constant 0 : i32
    %c0_i32_0 = arith.constant 0 : i32
    %c0_i32_1 = arith.constant 0 : i32
    return %c0_i32, %c0_i32_0 : i32, i32
  }
  func.func @transform_12(%arg0: i32) -> (i32, i32) {
    %c0_i32 = arith.constant 0 : i32
    %c0_i32_0 = arith.constant 0 : i32
    %c0_i32_1 = arith.constant 0 : i32
    return %c0_i32, %c0_i32_0 : i32, i32
  }
  func.func @transform_13(%arg0: i32) -> (i32, i32) {
    %c0_i32 = arith.constant 0 : i32
    %c0_i32_0 = arith.constant 0 : i32
    %c0_i32_1 = arith.constant 0 : i32
    return %c0_i32, %c0_i32_0 : i32, i32
  }
  func.func @transform_14(%arg0: i32) -> (i32, i32) {
    %c0_i32 = arith.constant 0 : i32
    %c0_i32_0 = arith.constant 0 : i32
    %c0_i32_1 = arith.constant 0 : i32
    return %c0_i32, %c0_i32_0 : i32, i32
  }
  func.func @transform_15(%arg0: i32) -> (i32, i32, i32) {
    %c0_i32 = arith.constant 0 : i32
    %c0_i32_0 = arith.constant 0 : i32
    %c0_i32_1 = arith.constant 0 : i32
    return %arg0, %c0_i32, %c0_i32_0 : i32, i32, i32
  }
}

</mosaic_0001>

<llo_original>
// kernel: tpu_custom_call.1
$region0: #{tpu_custom_call.1}
  #allocation0 [shape = 'u32[]', space=smem, size = 0x4, offset = 0x4, fixed_abs, tag = 'smem constant byte address 0x4 - core index']
  #allocation1 [shape = 'u32[144,128]{1,0:T(1,128)}', space=vmem, size = 0x12000, scoped, tag = 'internal scratch']
  #allocation2 [shape = 'f32[20,20,128]{2,1,0:T(8,128)}', space=vmem, size = 0x3c000, scoped, tag = 'scratch operand']
  %s0 = inlined_call_operand.vmem [shape: f32[2,32,256], index: 0, kind: input, shape index: {}]
  %s1 = inlined_call_operand.vmem [shape: f32[32,1], index: 1, kind: input, shape index: {}]
  %s2 = inlined_call_operand.vmem [shape: f32[32,1], index: 2, kind: input, shape index: {}]
  %s3 = inlined_call_operand.vmem [shape: bf16[32,384], index: 3, kind: input, shape index: {}]
  %s4 = inlined_call_operand.hbm [shape: f32[1,384], index: 4, kind: input, shape index: {}]
  %s5 = inlined_call_operand.hbm [shape: f32[3,3,128], index: 5, kind: input, shape index: {}]
  %s6 = inlined_call_operand.hbm [shape: f32[5,5,128], index: 6, kind: input, shape index: {}]
  %s7 = inlined_call_operand.vmem [shape: bf16[128,128], index: 7, kind: input, shape index: {}]
  %s8 = inlined_call_operand.vmem [shape: f32[1,128], index: 8, kind: input, shape index: {}]
  %s9 = inlined_call_operand.vmem [shape: bf16[32,128], index: 9, kind: input, shape index: {}]
  %s10 = inlined_call_operand.vmem [shape: f32[32,1], index: 10, kind: input, shape index: {}]
  %s11 = inlined_call_operand.vmem [shape: f32[32,1], index: 11, kind: input, shape index: {}]
  %s12 = inlined_call_operand.vmem [shape: f32[32,1], index: 12, kind: input, shape index: {}]
  %s13 = inlined_call_operand.vmem [shape: f32[32,1], index: 13, kind: input, shape index: {}]
  %s14 = inlined_call_operand.vmem [shape: f32[32,1], index: 14, kind: input, shape index: {}]
  %s15 = inlined_call_operand.hbm [shape: f32[2,32,256], index: 15, kind: output, shape index: {}]
  %s16 = sld [smem:[#allocation0]]
  $region105: #{tpu_custom_call.1} parent=0
    _
  %s18 = ssub.s32 1, %s16
  %s19 = scalar_select 0, %s18, %s16
  $region1: #{tpu_custom_call.1} parent=0
    #allocation3 [shape = 'u8[1536]{0}', space=vmem, size = 0x800, scoped, tag = 'input window, operand 4, single buffered']
    #allocation4 [shape = 's32[2]{0}', space=sflag, size = 0x8, scoped, tag = 'scoped memory for tpu_custom_call.1']
    #allocation5 [shape = 's32[2]{0}', space=sflag, size = 0x8, scoped, tag = 'scoped memory for tpu_custom_call.1']
    #allocation6 [shape = 'u8[6144]{0}', space=vmem, size = 0x1800, scoped, tag = 'input window, operand 5, single buffered']
    #allocation7 [shape = 's32[1]{0}', space=sflag, size = 0x4, scoped, tag = 'scoped memory for tpu_custom_call.1']
    #allocation8 [shape = 'u8[20480]{0}', space=vmem, size = 0x5000, scoped, tag = 'input window, operand 6, single buffered']
    #allocation9 [shape = 'u8[65536]{0}', space=vmem, size = 0x10000, scoped, tag = 'output window, operand 0']
    %20 = vsyncpa [#allocation4], 0
    %21 = vsyncpa [#allocation7], 0
    %22 = vsyncpa [#allocation5], 0
    %s23 = scalar_lea.sflag [#allocation5], 1
    %24 = vsyncpa %s23, 0
    loop: start=0, step=1, limit=4
    $region2: #{tpu_custom_call.1} parent=1 // loop_pre_header
      _
    $region3: #{tpu_custom_call.1} parent=1 // loop_header
      %s26 = sphi 0, %s30
      %p27 = scmp.ge.s32.totalorder %s26, 4
      %s36 = sphi 0, %s38
      %s39 = sphi 0, %s36
      %s40 = sphi 0, %s39
      %s56 = sphi 0, %s40
      %s60 = sphi 0, %s60
      %s62 = sphi 0, %s60
      %s63 = sphi 0, %s62
      %s77 = sphi 0, %s63
      %s81 = sphi 0, %s81
      %s83 = sphi 0, %s81
      %s84 = sphi 0, %s83
      %s98 = sphi 0, %s84
      %s102 = sphi 0, %s102
      %s104 = sphi 0, %s102
      %s105 = sphi 0, %s104
      %s119 = sphi 0, %s105
      %s123 = sphi 0, %s123
      %s125 = sphi 0, %s123
      %s126 = sphi 0, %s125
      %s140 = sphi 0, %s126
      %s144 = sphi 0, %s144
      %s146 = sphi 0, %s144
      %s147 = sphi 0, %s146
      %s161 = sphi 0, %s147
      %s165 = sphi 0, %s165
      %s167 = sphi 0, %s165
      %s168 = sphi 0, %s167
      %s182 = sphi 0, %s168
      %s186 = sphi 0, %s186
      %s188 = sphi 0, %s186
      %s189 = sphi 0, %s188
      %s203 = sphi 0, %s189
      %s207 = sphi 0, %s207
      %s209 = sphi 0, %s207
      %s210 = sphi 0, %s209
      %s224 = sphi 0, %s210
      %s228 = sphi 0, %s228
      %s230 = sphi 0, %s228
      %s231 = sphi 0, %s230
      %s245 = sphi 0, %s231
      %s249 = sphi 0, %s249
      %s251 = sphi 0, %s249
      %s252 = sphi 0, %s251
      %s266 = sphi 0, %s252
      %s270 = sphi 0, %s270
      %s272 = sphi 0, %s270
      %s273 = sphi 0, %s272
      %s287 = sphi 0, %s273
      %s291 = sphi 0, %s291
      %s293 = sphi 0, %s291
      %s294 = sphi 0, %s293
      %s308 = sphi 0, %s294
      %s312 = sphi 0, %s312
      %s314 = sphi 0, %s312
      %s315 = sphi 0, %s314
      %s329 = sphi 0, %s315
      %s333 = sphi 0, %s333
      %s335 = sphi 0, %s333
      %s336 = sphi 0, %s335
      %s350 = sphi 0, %s336
      %s356 = sphi 0, %s358
      %s359 = sphi 0, %s356
      %s360 = sphi 0, %s359
      %s376 = sphi 0, %s360
    $region4: #{tpu_custom_call.1} parent=1 // loop_header_branch
      %29 = sbr.rel (%p27) target = $region8
    $region5: #{tpu_custom_call.1} parent=1 // loop_body
      %s31 = ssub.s32 %s26, 1
      %s32 = ssub.s32 %s26, 2
      %s33 = sadd.s32 %s26, 1
      %s34 = ssub.s32 %s26, %s33
      %p35 = scmp.eq.s32.totalorder %s34, 0
      %s37 = sadd.s32 %s36, 1
      %s38 = scalar_select %p35, %s36, %s37
      %p41 = pneg %p35
      %p42 = scmp.eq.s32.totalorder %s26, 1
      %p43 = por %p41, %p42
      %p44 = scmp.ne.s32.totalorder %s36, %s39
      %p45 = scmp.eq.s32.totalorder %s26, 0
      %p46 = por %p44, %p45
      %p47 = scmp.ne.s32.totalorder %s36, %s39
      %p48 = scmp.eq.s32.totalorder %s31, 1
      %p49 = por %p47, %p48
      %p50 = scmp.ne.s32.totalorder %s39, %s40
      %p51 = scmp.eq.s32.totalorder %s31, 0
      %p52 = por %p50, %p51
      %p53 = scmp.ne.s32.totalorder %s39, %s40
      %p54 = scmp.eq.s32.totalorder %s32, 1
      %p55 = por %p53, %p54
      %p57 = scmp.ne.s32.totalorder %s40, %s56
      %p58 = scmp.eq.s32.totalorder %s32, 0
      %p59 = por %p57, %p58
      %s61 = sadd.s32 %s60, 1
      %p64 = scmp.eq.s32.totalorder %s26, 1
      %p65 = scmp.ne.s32.totalorder %s60, %s62
      %p66 = scmp.eq.s32.totalorder %s26, 0
      %p67 = por %p65, %p66
      %p68 = scmp.ne.s32.totalorder %s60, %s62
      %p69 = scmp.eq.s32.totalorder %s31, 1
      %p70 = por %p68, %p69
      %p71 = scmp.ne.s32.totalorder %s62, %s63
      %p72 = scmp.eq.s32.totalorder %s31, 0
      %p73 = por %p71, %p72
      %p74 = scmp.ne.s32.totalorder %s62, %s63
      %p75 = scmp.eq.s32.totalorder %s32, 1
      %p76 = por %p74, %p75
      %p78 = scmp.ne.s32.totalorder %s63, %s77
      %p79 = scmp.eq.s32.totalorder %s32, 0
      %p80 = por %p78, %p79
      %s82 = sadd.s32 %s81, 1
      %p85 = scmp.eq.s32.totalorder %s26, 1
      %p86 = scmp.ne.s32.totalorder %s81, %s83
      %p87 = scmp.eq.s32.totalorder %s26, 0
      %p88 = por %p86, %p87
      %p89 = scmp.ne.s32.totalorder %s81, %s83
      %p90 = scmp.eq.s32.totalorder %s31, 1
      %p91 = por %p89, %p90
      %p92 = scmp.ne.s32.totalorder %s83, %s84
      %p93 = scmp.eq.s32.totalorder %s31, 0
      %p94 = por %p92, %p93
      %p95 = scmp.ne.s32.totalorder %s83, %s84
      %p96 = scmp.eq.s32.totalorder %s32, 1
      %p97 = por %p95, %p96
      %p99 = scmp.ne.s32.totalorder %s84, %s98
      %p100 = scmp.eq.s32.totalorder %s32, 0
      %p101 = por %p99, %p100
      %s103 = sadd.s32 %s102, 1
      %p106 = scmp.eq.s32.totalorder %s26, 1
      %p107 = scmp.ne.s32.totalorder %s102, %s104
      %p108 = scmp.eq.s32.totalorder %s26, 0
      %p109 = por %p107, %p108
      %p110 = scmp.ne.s32.totalorder %s102, %s104
      %p111 = scmp.eq.s32.totalorder %s31, 1
      %p112 = por %p110, %p111
      %p113 = scmp.ne.s32.totalorder %s104, %s105
      %p114 = scmp.eq.s32.totalorder %s31, 0
      %p115 = por %p113, %p114
      %p116 = scmp.ne.s32.totalorder %s104, %s105
      %p117 = scmp.eq.s32.totalorder %s32, 1
      %p118 = por %p116, %p117
      %p120 = scmp.ne.s32.totalorder %s105, %s119
      %p121 = scmp.eq.s32.totalorder %s32, 0
      %p122 = por %p120, %p121
      %s124 = sadd.s32 %s123, 1
      %p127 = scmp.eq.s32.totalorder %s26, 1
      %p128 = scmp.ne.s32.totalorder %s123, %s125
      %p129 = scmp.eq.s32.totalorder %s26, 0
      %p130 = por %p128, %p129
      %p131 = scmp.ne.s32.totalorder %s123, %s125
      %p132 = scmp.eq.s32.totalorder %s31, 1
      %p133 = por %p131, %p132
      %p134 = scmp.ne.s32.totalorder %s125, %s126
      %p135 = scmp.eq.s32.totalorder %s31, 0
      %p136 = por %p134, %p135
      %p137 = scmp.ne.s32.totalorder %s125, %s126
      %p138 = scmp.eq.s32.totalorder %s32, 1
      %p139 = por %p137, %p138
      %p141 = scmp.ne.s32.totalorder %s126, %s140
      %p142 = scmp.eq.s32.totalorder %s32, 0
      %p143 = por %p141, %p142
      %s145 = sadd.s32 %s144, 1
      %p148 = scmp.eq.s32.totalorder %s26, 1
      %p149 = scmp.ne.s32.totalorder %s144, %s146
      %p150 = scmp.eq.s32.totalorder %s26, 0
      %p151 = por %p149, %p150
      %p152 = scmp.ne.s32.totalorder %s144, %s146
      %p153 = scmp.eq.s32.totalorder %s31, 1
      %p154 = por %p152, %p153
      %p155 = scmp.ne.s32.totalorder %s146, %s147
      %p156 = scmp.eq.s32.totalorder %s31, 0
      %p157 = por %p155, %p156
      %p158 = scmp.ne.s32.totalorder %s146, %s147
      %p159 = scmp.eq.s32.totalorder %s32, 1
      %p160 = por %p158, %p159
      %p162 = scmp.ne.s32.totalorder %s147, %s161
      %p163 = scmp.eq.s32.totalorder %s32, 0
      %p164 = por %p162, %p163
      %s166 = sadd.s32 %s165, 1
      %p169 = scmp.eq.s32.totalorder %s26, 1
      %p170 = scmp.ne.s32.totalorder %s165, %s167
      %p171 = scmp.eq.s32.totalorder %s26, 0
      %p172 = por %p170, %p171
      %p173 = scmp.ne.s32.totalorder %s165, %s167
      %p174 = scmp.eq.s32.totalorder %s31, 1
      %p175 = por %p173, %p174
      %p176 = scmp.ne.s32.totalorder %s167, %s168
      %p177 = scmp.eq.s32.totalorder %s31, 0
      %p178 = por %p176, %p177
      %p179 = scmp.ne.s32.totalorder %s167, %s168
      %p180 = scmp.eq.s32.totalorder %s32, 1
      %p181 = por %p179, %p180
      %p183 = scmp.ne.s32.totalorder %s168, %s182
      %p184 = scmp.eq.s32.totalorder %s32, 0
      %p185 = por %p183, %p184
      %s187 = sadd.s32 %s186, 1
      %p190 = scmp.eq.s32.totalorder %s26, 1
      %p191 = scmp.ne.s32.totalorder %s186, %s188
      %p192 = scmp.eq.s32.totalorder %s26, 0
      %p193 = por %p191, %p192
      %p194 = scmp.ne.s32.totalorder %s186, %s188
      %p195 = scmp.eq.s32.totalorder %s31, 1
      %p196 = por %p194, %p195
      %p197 = scmp.ne.s32.totalorder %s188, %s189
      %p198 = scmp.eq.s32.totalorder %s31, 0
      %p199 = por %p197, %p198
      %p200 = scmp.ne.s32.totalorder %s188, %s189
      %p201 = scmp.eq.s32.totalorder %s32, 1
      %p202 = por %p200, %p201
      %p204 = scmp.ne.s32.totalorder %s189, %s203
      %p205 = scmp.eq.s32.totalorder %s32, 0
      %p206 = por %p204, %p205
      %s208 = sadd.s32 %s207, 1
      %p211 = scmp.eq.s32.totalorder %s26, 1
      %p212 = scmp.ne.s32.totalorder %s207, %s209
      %p213 = scmp.eq.s32.totalorder %s26, 0
      %p214 = por %p212, %p213
      %p215 = scmp.ne.s32.totalorder %s207, %s209
      %p216 = scmp.eq.s32.totalorder %s31, 1
      %p217 = por %p215, %p216
      %p218 = scmp.ne.s32.totalorder %s209, %s210
      %p219 = scmp.eq.s32.totalorder %s31, 0
      %p220 = por %p218, %p219
      %p221 = scmp.ne.s32.totalorder %s209, %s210
      %p222 = scmp.eq.s32.totalorder %s32, 1
      %p223 = por %p221, %p222
      %p225 = scmp.ne.s32.totalorder %s210, %s224
      %p226 = scmp.eq.s32.totalorder %s32, 0
      %p227 = por %p225, %p226
      %s229 = sadd.s32 %s228, 1
      %p232 = scmp.eq.s32.totalorder %s26, 1
      %p233 = scmp.ne.s32.totalorder %s228, %s230
      %p234 = scmp.eq.s32.totalorder %s26, 0
      %p235 = por %p233, %p234
      %p236 = scmp.ne.s32.totalorder %s228, %s230
      %p237 = scmp.eq.s32.totalorder %s31, 1
      %p238 = por %p236, %p237
      %p239 = scmp.ne.s32.totalorder %s230, %s231
      %p240 = scmp.eq.s32.totalorder %s31, 0
      %p241 = por %p239, %p240
      %p242 = scmp.ne.s32.totalorder %s230, %s231
      %p243 = scmp.eq.s32.totalorder %s32, 1
      %p244 = por %p242, %p243
      %p246 = scmp.ne.s32.totalorder %s231, %s245
      %p247 = scmp.eq.s32.totalorder %s32, 0
      %p248 = por %p246, %p247
      %s250 = sadd.s32 %s249, 1
      %p253 = scmp.eq.s32.totalorder %s26, 1
      %p254 = scmp.ne.s32.totalorder %s249, %s251
      %p255 = scmp.eq.s32.totalorder %s26, 0
      %p256 = por %p254, %p255
      %p257 = scmp.ne.s32.totalorder %s249, %s251
      %p258 = scmp.eq.s32.totalorder %s31, 1
      %p259 = por %p257, %p258
      %p260 = scmp.ne.s32.totalorder %s251, %s252
      %p261 = scmp.eq.s32.totalorder %s31, 0
      %p262 = por %p260, %p261
      %p263 = scmp.ne.s32.totalorder %s251, %s252
      %p264 = scmp.eq.s32.totalorder %s32, 1
      %p265 = por %p263, %p264
      %p267 = scmp.ne.s32.totalorder %s252, %s266
      %p268 = scmp.eq.s32.totalorder %s32, 0
      %p269 = por %p267, %p268
      %s271 = sadd.s32 %s270, 1
      %p274 = scmp.eq.s32.totalorder %s26, 1
      %p275 = scmp.ne.s32.totalorder %s270, %s272
      %p276 = scmp.eq.s32.totalorder %s26, 0
      %p277 = por %p275, %p276
      %p278 = scmp.ne.s32.totalorder %s270, %s272
      %p279 = scmp.eq.s32.totalorder %s31, 1
      %p280 = por %p278, %p279
      %p281 = scmp.ne.s32.totalorder %s272, %s273
      %p282 = scmp.eq.s32.totalorder %s31, 0
      %p283 = por %p281, %p282
      %p284 = scmp.ne.s32.totalorder %s272, %s273
      %p285 = scmp.eq.s32.totalorder %s32, 1
      %p286 = por %p284, %p285
      %p288 = scmp.ne.s32.totalorder %s273, %s287
      %p289 = scmp.eq.s32.totalorder %s32, 0
      %p290 = por %p288, %p289
      %s292 = sadd.s32 %s291, 1
      %p295 = scmp.eq.s32.totalorder %s26, 1
      %p296 = scmp.ne.s32.totalorder %s291, %s293
      %p297 = scmp.eq.s32.totalorder %s26, 0
      %p298 = por %p296, %p297
      %p299 = scmp.ne.s32.totalorder %s291, %s293
      %p300 = scmp.eq.s32.totalorder %s31, 1
      %p301 = por %p299, %p300
      %p302 = scmp.ne.s32.totalorder %s293, %s294
      %p303 = scmp.eq.s32.totalorder %s31, 0
      %p304 = por %p302, %p303
      %p305 = scmp.ne.s32.totalorder %s293, %s294
      %p306 = scmp.eq.s32.totalorder %s32, 1
      %p307 = por %p305, %p306
      %p309 = scmp.ne.s32.totalorder %s294, %s308
      %p310 = scmp.eq.s32.totalorder %s32, 0
      %p311 = por %p309, %p310
      %s313 = sadd.s32 %s312, 1
      %p316 = scmp.eq.s32.totalorder %s26, 1
      %p317 = scmp.ne.s32.totalorder %s312, %s314
      %p318 = scmp.eq.s32.totalorder %s26, 0
      %p319 = por %p317, %p318
      %p320 = scmp.ne.s32.totalorder %s312, %s314
      %p321 = scmp.eq.s32.totalorder %s31, 1
      %p322 = por %p320, %p321
      %p323 = scmp.ne.s32.totalorder %s314, %s315
      %p324 = scmp.eq.s32.totalorder %s31, 0
      %p325 = por %p323, %p324
      %p326 = scmp.ne.s32.totalorder %s314, %s315
      %p327 = scmp.eq.s32.totalorder %s32, 1
      %p328 = por %p326, %p327
      %p330 = scmp.ne.s32.totalorder %s315, %s329
      %p331 = scmp.eq.s32.totalorder %s32, 0
      %p332 = por %p330, %p331
      %s334 = sadd.s32 %s333, 1
      %p337 = scmp.eq.s32.totalorder %s26, 1
      %p338 = scmp.ne.s32.totalorder %s333, %s335
      %p339 = scmp.eq.s32.totalorder %s26, 0
      %p340 = por %p338, %p339
      %p341 = scmp.ne.s32.totalorder %s333, %s335
      %p342 = scmp.eq.s32.totalorder %s31, 1
      %p343 = por %p341, %p342
      %p344 = scmp.ne.s32.totalorder %s335, %s336
      %p345 = scmp.eq.s32.totalorder %s31, 0
      %p346 = por %p344, %p345
      %p347 = scmp.ne.s32.totalorder %s335, %s336
      %p348 = scmp.eq.s32.totalorder %s32, 1
      %p349 = por %p347, %p348
      %p351 = scmp.ne.s32.totalorder %s336, %s350
      %p352 = scmp.eq.s32.totalorder %s32, 0
      %p353 = por %p351, %p352
      %s354 = ssub.s32 %s26, %s33
      %p355 = scmp.eq.s32.totalorder %s354, 0
      %s357 = sadd.s32 %s356, 1
      %s358 = scalar_select %p355, %s356, %s357
      %p361 = pneg %p355
      %p362 = scmp.eq.s32.totalorder %s26, 1
      %p363 = por %p361, %p362
      %p364 = scmp.ne.s32.totalorder %s356, %s359
      %p365 = scmp.eq.s32.totalorder %s26, 0
      %p366 = por %p364, %p365
      %p367 = scmp.ne.s32.totalorder %s356, %s359
      %p368 = scmp.eq.s32.totalorder %s31, 1
      %p369 = por %p367, %p368
      %p370 = scmp.ne.s32.totalorder %s359, %s360
      %p371 = scmp.eq.s32.totalorder %s31, 0
      %p372 = por %p370, %p371
      %p373 = scmp.ne.s32.totalorder %s359, %s360
      %p374 = scmp.eq.s32.totalorder %s32, 1
      %p375 = por %p373, %p374
      %p377 = scmp.ne.s32.totalorder %s360, %s376
      %p378 = scmp.eq.s32.totalorder %s32, 0
      %p379 = por %p377, %p378
      %p380 = scmp.le.s32.totalorder 1, %s26
      %p381 = scmp.lt.s32.totalorder %s26, 3
      %p382 = pnand %p380, %p381
      %p383 = pneg %p382
      // Predicated region
      $region9: #{tpu_custom_call.1} parent=5 // pred_check
        _
      $region10: #{tpu_custom_call.1} parent=5 // pred_check_branch
        %385 = sbr.rel (%p382) target = $region12
      $region11: #{tpu_custom_call.1} parent=5 // pred_region
        %s386 = ssub.s32 %s26, 1
        // Predicated region
        $region13: #{tpu_custom_call.1} parent=11 // pred_check
          %p387 = pneg %p73
        $region14: #{tpu_custom_call.1} parent=11 // pred_check_branch
          %389 = sbr.rel (%p387) target = $region16
        $region15: #{tpu_custom_call.1} parent=11 // pred_region
          _
        $region16: #{tpu_custom_call.1} parent=11 // pred_fallthru
          _
        // Predicated region
        $region17: #{tpu_custom_call.1} parent=11 // pred_check
          %p390 = pneg %p94
        $region18: #{tpu_custom_call.1} parent=11 // pred_check_branch
          %392 = sbr.rel (%p390) target = $region20
        $region19: #{tpu_custom_call.1} parent=11 // pred_region
          _
        $region20: #{tpu_custom_call.1} parent=11 // pred_fallthru
          _
        // Predicated region
        $region21: #{tpu_custom_call.1} parent=11 // pred_check
          %p393 = pneg %p115
        $region22: #{tpu_custom_call.1} parent=11 // pred_check_branch
          %395 = sbr.rel (%p393) target = $region24
        $region23: #{tpu_custom_call.1} parent=11 // pred_region
          _
        $region24: #{tpu_custom_call.1} parent=11 // pred_fallthru
          _
        // Predicated region
        $region25: #{tpu_custom_call.1} parent=11 // pred_check
          %p396 = pneg %p136
        $region26: #{tpu_custom_call.1} parent=11 // pred_check_branch
          %398 = sbr.rel (%p396) target = $region28
        $region27: #{tpu_custom_call.1} parent=11 // pred_region
          %s400 = ssub.s32 48, 48
          %401 = vsyncadd [#allocation4], %s400
          %s403 = sshll.u32 [#allocation3], 4
          %s404 = int_to_ptr.vmem [resolvable:$true] %s403
          %406 = dma.hbm_to_vmem [thread:$0]  %s4, 48, %s404, [#allocation4]
        $region28: #{tpu_custom_call.1} parent=11 // pred_fallthru
          _
        // Predicated region
        $region29: #{tpu_custom_call.1} parent=11 // pred_check
          %p407 = pneg %p157
        $region30: #{tpu_custom_call.1} parent=11 // pred_check_branch
          %409 = sbr.rel (%p407) target = $region32
        $region31: #{tpu_custom_call.1} parent=11 // pred_region
          %s411 = ssub.s32 192, 192
          %412 = vsyncadd [#allocation7], %s411
          %s413 = sshll.u32 [#allocation6], 4
          %s414 = int_to_ptr.vmem [resolvable:$true] %s413
          %419 = dma.hbm_to_vmem [thread:$0]  %s5, 192, %s414, [#allocation7], 64, 64, 4
        $region32: #{tpu_custom_call.1} parent=11 // pred_fallthru
          _
        // Predicated region
        $region33: #{tpu_custom_call.1} parent=11 // pred_check
          %p420 = pneg %p178
        $region34: #{tpu_custom_call.1} parent=11 // pred_check_branch
          %422 = sbr.rel (%p420) target = $region36
        $region35: #{tpu_custom_call.1} parent=11 // pred_region
          %s424 = ssub.s32 640, 640
          %425 = vsyncadd [#allocation7], %s424
          %s426 = sshll.u32 [#allocation8], 4
          %s427 = int_to_ptr.vmem [resolvable:$true] %s426
          %432 = dma.hbm_to_vmem [thread:$0]  %s6, 640, %s427, [#allocation7], 128, 128, 8
        $region36: #{tpu_custom_call.1} parent=11 // pred_fallthru
          _
        // Predicated region
        $region37: #{tpu_custom_call.1} parent=11 // pred_check
          %p433 = pneg %p199
        $region38: #{tpu_custom_call.1} parent=11 // pred_check_branch
          %435 = sbr.rel (%p433) target = $region40
        $region39: #{tpu_custom_call.1} parent=11 // pred_region
          _
        $region40: #{tpu_custom_call.1} parent=11 // pred_fallthru
          _
        // Predicated region
        $region41: #{tpu_custom_call.1} parent=11 // pred_check
          %p436 = pneg %p220
        $region42: #{tpu_custom_call.1} parent=11 // pred_check_branch
          %438 = sbr.rel (%p436) target = $region44
        $region43: #{tpu_custom_call.1} parent=11 // pred_region
          _
        $region44: #{tpu_custom_call.1} parent=11 // pred_fallthru
          _
        // Predicated region
        $region45: #{tpu_custom_call.1} parent=11 // pred_check
          %p439 = pneg %p241
        $region46: #{tpu_custom_call.1} parent=11 // pred_check_branch
          %441 = sbr.rel (%p439) target = $region48
        $region47: #{tpu_custom_call.1} parent=11 // pred_region
          _
        $region48: #{tpu_custom_call.1} parent=11 // pred_fallthru
          _
        // Predicated region
        $region49: #{tpu_custom_call.1} parent=11 // pred_check
          %p442 = pneg %p262
        $region50: #{tpu_custom_call.1} parent=11 // pred_check_branch
          %444 = sbr.rel (%p442) target = $region52
        $region51: #{tpu_custom_call.1} parent=11 // pred_region
          _
        $region52: #{tpu_custom_call.1} parent=11 // pred_fallthru
          _
        // Predicated region
        $region53: #{tpu_custom_call.1} parent=11 // pred_check
          %p445 = pneg %p283
        $region54: #{tpu_custom_call.1} parent=11 // pred_check_branch
          %447 = sbr.rel (%p445) target = $region56
        $region55: #{tpu_custom_call.1} parent=11 // pred_region
          _
        $region56: #{tpu_custom_call.1} parent=11 // pred_fallthru
          _
        // Predicated region
        $region57: #{tpu_custom_call.1} parent=11 // pred_check
          %p448 = pneg %p304
        $region58: #{tpu_custom_call.1} parent=11 // pred_check_branch
          %450 = sbr.rel (%p448) target = $region60
        $region59: #{tpu_custom_call.1} parent=11 // pred_region
          _
        $region60: #{tpu_custom_call.1} parent=11 // pred_fallthru
          _
        // Predicated region
        $region61: #{tpu_custom_call.1} parent=11 // pred_check
          %p451 = pneg %p325
        $region62: #{tpu_custom_call.1} parent=11 // pred_check_branch
          %453 = sbr.rel (%p451) target = $region64
        $region63: #{tpu_custom_call.1} parent=11 // pred_region
          _
        $region64: #{tpu_custom_call.1} parent=11 // pred_fallthru
          _
        // Predicated region
        $region65: #{tpu_custom_call.1} parent=11 // pred_check
          %p454 = pneg %p346
        $region66: #{tpu_custom_call.1} parent=11 // pred_check_branch
          %456 = sbr.rel (%p454) target = $region68
        $region67: #{tpu_custom_call.1} parent=11 // pred_region
          _
        $region68: #{tpu_custom_call.1} parent=11 // pred_fallthru
          _
      $region12: #{tpu_custom_call.1} parent=5 // pred_fallthru
        _
      %p457 = scmp.lt.s32.totalorder %s26, 2
      // Predicated region
      $region69: #{tpu_custom_call.1} parent=5 // pred_check
        %p458 = pneg %p457
      $region70: #{tpu_custom_call.1} parent=5 // pred_check_branch
        %460 = sbr.rel (%p458) target = $region72
      $region71: #{tpu_custom_call.1} parent=5 // pred_region
        // Predicated region
        $region73: #{tpu_custom_call.1} parent=71 // pred_check
          %p461 = pneg %p46
        $region74: #{tpu_custom_call.1} parent=71 // pred_check_branch
          %463 = sbr.rel (%p461) target = $region76
        $region75: #{tpu_custom_call.1} parent=71 // pred_region
          %p464 = scmp.lt.s32.totalorder %s26, 1
          %s465 = scalar_select %p464, %s26, 1
          %s466 = smul.addr %s465, 8
          %s467 = smul.addr %s466, 8
          %s468 = scalar_lea.vmem %s0, %s467
        $region76: #{tpu_custom_call.1} parent=71 // pred_fallthru
          _
      $region72: #{tpu_custom_call.1} parent=5 // pred_fallthru
        _
      %p469 = scmp.le.s32.totalorder 1, %s26
      %p470 = scmp.lt.s32.totalorder %s26, 3
      %p471 = pnand %p469, %p470
      %p472 = pneg %p471
      // Predicated region
      $region77: #{tpu_custom_call.1} parent=5 // pred_check
        _
      $region78: #{tpu_custom_call.1} parent=5 // pred_check_branch
        %474 = sbr.rel (%p471) target = $region80
      $region79: #{tpu_custom_call.1} parent=5 // pred_region
        %s475 = ssub.s32 %s26, 1
        // Predicated region
        $region81: #{tpu_custom_call.1} parent=79 // pred_check
          %p476 = pneg %p136
        $region82: #{tpu_custom_call.1} parent=79 // pred_check_branch
          %478 = sbr.rel (%p476) target = $region84
        $region83: #{tpu_custom_call.1} parent=79 // pred_region
          %479 = dma.done [#allocation4], 48
        $region84: #{tpu_custom_call.1} parent=79 // pred_fallthru
          _
        // Predicated region
        $region85: #{tpu_custom_call.1} parent=79 // pred_check
          %p480 = pneg %p157
        $region86: #{tpu_custom_call.1} parent=79 // pred_check_branch
          %482 = sbr.rel (%p480) target = $region88
        $region87: #{tpu_custom_call.1} parent=79 // pred_region
          %483 = dma.done [#allocation7], 192
        $region88: #{tpu_custom_call.1} parent=79 // pred_fallthru
          _
        // Predicated region
        $region89: #{tpu_custom_call.1} parent=79 // pred_check
          %p484 = pneg %p178
        $region90: #{tpu_custom_call.1} parent=79 // pred_check_branch
          %486 = sbr.rel (%p484) target = $region92
        $region91: #{tpu_custom_call.1} parent=79 // pred_region
          %487 = dma.done [#allocation7], 640
        $region92: #{tpu_custom_call.1} parent=79 // pred_fallthru
          _
        %p488 = scmp.lt.s32.totalorder %s31, 1
        %s489 = scalar_select %p488, %s31, 1
        %s490 = smul.addr %s489, 8
        %s491 = smul.addr %s490, 8
        %s492 = scalar_lea.vmem %s0, %s491
        %p493 = pneg %p52
        %p494 = pneg %p49
        %p495 = pneg %p73
        %p496 = pneg %p70
        %p497 = pneg %p94
        %p498 = pneg %p91
        %p499 = pneg %p115
        %p500 = pneg %p112
        %p501 = pneg %p136
        %p502 = pneg %p133
        %p503 = pneg %p157
        %p504 = pneg %p154
        %p505 = pneg %p178
        %p506 = pneg %p175
        %p507 = pneg %p199
        %p508 = pneg %p196
        %p509 = pneg %p220
        %p510 = pneg %p217
        %p511 = pneg %p241
        %p512 = pneg %p238
        %p513 = pneg %p262
        %p514 = pneg %p259
        %p515 = pneg %p283
        %p516 = pneg %p280
        %p517 = pneg %p304
        %p518 = pneg %p301
        %p519 = pneg %p325
        %p520 = pneg %p322
        %p521 = pneg %p346
        %p522 = pneg %p343
        %p523 = pneg %p372
        %p524 = pneg %p369
        %s525 = sand.u32 %s359, 1
        %s526 = scalar_lea.sflag [#allocation5], %s525
        %s527 = sand.u32 %s359, 1
        %s528 = smul.addr %s527, 64
        %s529 = scalar_lea.vmem [#allocation9], %s528
        %p530 = scmp.lt.s32.totalorder %s31, 1
        %s531 = scalar_select %p530, %s31, 1
        %s532 = smul.addr %s531, 8
        %s533 = smul.addr %s532, 8
        %s534 = scalar_lea.vmem %s0, %s533
        %v536 = vld [vmem:[%s534] sm:$0xff]
        %v537 = vld [vmem:[%s534 + $0x8] sm:$0xff]
        %v538 = vld [vmem:[%s534 + $0x10] sm:$0xff]
        %v539 = vld [vmem:[%s534 + $0x18] sm:$0xff]
        %v540 = vld [vmem:[%s534 + $0x20] sm:$0xff]
        %v541 = vld [vmem:[%s534 + $0x28] sm:$0xff]
        %v542 = vld [vmem:[%s534 + $0x30] sm:$0xff]
        %v543 = vld [vmem:[%s534 + $0x38] sm:$0xff]
        %v544 = vadd.f32 %v536, %v537
        %v545 = vadd.f32 %v544, %v538
        %v546 = vadd.f32 %v545, %v539
        %v547 = vadd.f32 %v546, %v540
        %v548 = vadd.f32 %v547, %v541
        %v549 = vadd.f32 %v548, %v542
        %v550 = vadd.f32 %v549, %v543
        %551 = vadd.xlane.f32.xlu0 %v550
        %v552 = vpop.xlane.xlu0 %551
        %v553 = vrot.slane %v552, 4
        %v554 = vadd.f32 %v552, %v553
        %v555 = vrot.slane %v554, 2
        %v556 = vadd.f32 %v554, %v555
        %v557 = vrot.slane %v556, 1
        %v558 = vadd.f32 %v556, %v557
        %s559 = vtos %v558
        %v560 = vmul.f32 %v536, %v536
        %v561 = vmul.f32 %v537, %v537
        %v562 = vmul.f32 %v538, %v538
        %v563 = vmul.f32 %v539, %v539
        %v564 = vmul.f32 %v540, %v540
        %v565 = vmul.f32 %v541, %v541
        %v566 = vmul.f32 %v542, %v542
        %v567 = vmul.f32 %v543, %v543
        %v568 = vadd.f32 %v560, %v561
        %v569 = vadd.f32 %v568, %v562
        %v570 = vadd.f32 %v569, %v563
        %v571 = vadd.f32 %v570, %v564
        %v572 = vadd.f32 %v571, %v565
        %v573 = vadd.f32 %v572, %v566
        %v574 = vadd.f32 %v573, %v567
        %575 = vadd.xlane.f32.xlu0 %v574
        %v576 = vpop.xlane.xlu0 %575
        %v577 = vrot.slane %v576, 4
        %v578 = vadd.f32 %v576, %v577
        %v579 = vrot.slane %v578, 2
        %v580 = vadd.f32 %v578, %v579
        %v581 = vrot.slane %v580, 1
        %v582 = vadd.f32 %v580, %v581
        %s583 = vtos %v582
        %s584 = smul.f32 %s559, 0.00012207031
        %s585 = smul.f32 %s583, 0.00012207031
        %s586 = smul.f32 %s584, %s584
        %s587 = ssub.f32 %s585, %s586
        %v588 = vstv %s584
        %v589 = vsub.f32 %v536, %v588
        %v590 = vsub.f32 %v537, %v588
        %v591 = vsub.f32 %v538, %v588
        %v592 = vsub.f32 %v539, %v588
        %v593 = vsub.f32 %v540, %v588
        %v594 = vsub.f32 %v541, %v588
        %v595 = vsub.f32 %v542, %v588
        %v596 = vsub.f32 %v543, %v588
        %s597 = sadd.f32 %s587, 1e-05
        %v598 = vstv %s597
        %v599 = vrsqrt.pop %v598
        %s600 = vtos %v599
        %v601 = vstv %s600
        %v602 = vmul.f32 %v589, %v601
        %v603 = vmul.f32 %v590, %v601
        %v604 = vmul.f32 %v591, %v601
        %v605 = vmul.f32 %v592, %v601
        %v606 = vmul.f32 %v593, %v601
        %v607 = vmul.f32 %v594, %v601
        %v608 = vmul.f32 %v595, %v601
        %v609 = vmul.f32 %v596, %v601
        %v610 = vld [vmem:[%s1] sm:$0xff]
        %v611 = vld [vmem:[%s1 + $0x8] sm:$0xff]
        %v612 = vld [vmem:[%s1 + $0x10] sm:$0xff]
        %v613 = vld [vmem:[%s1 + $0x18] sm:$0xff]
        %615 = vset.pattern.permute.xlu0 0
        %616 = vperm.xlu0 %615, %v610
        %v617 = vpop.permute.xlu0 %616
        %620 = vset.pattern.permute.xlu0 0
        %621 = vperm.xlu0 %620, %v611
        %v622 = vpop.permute.xlu0 %621
        %625 = vset.pattern.permute.xlu0 0
        %626 = vperm.xlu0 %625, %v612
        %v627 = vpop.permute.xlu0 %626
        %630 = vset.pattern.permute.xlu0 0
        %631 = vperm.xlu0 %630, %v613
        %v632 = vpop.permute.xlu0 %631
        %v634 = vmul.f32 %v602, %v617
        %v635 = vmul.f32 %v603, %v617
        %v636 = vmul.f32 %v604, %v622
        %v637 = vmul.f32 %v605, %v622
        %v638 = vmul.f32 %v606, %v627
        %v639 = vmul.f32 %v607, %v627
        %v640 = vmul.f32 %v608, %v632
        %v641 = vmul.f32 %v609, %v632
        %v642 = vld [vmem:[%s2] sm:$0xff]
        %v643 = vld [vmem:[%s2 + $0x8] sm:$0xff]
        %v644 = vld [vmem:[%s2 + $0x10] sm:$0xff]
        %v645 = vld [vmem:[%s2 + $0x18] sm:$0xff]
        %647 = vset.pattern.permute.xlu0 0
        %648 = vperm.xlu0 %647, %v642
        %v649 = vpop.permute.xlu0 %648
        %652 = vset.pattern.permute.xlu0 0
        %653 = vperm.xlu0 %652, %v643
        %v654 = vpop.permute.xlu0 %653
        %657 = vset.pattern.permute.xlu0 0
        %658 = vperm.xlu0 %657, %v644
        %v659 = vpop.permute.xlu0 %658
        %662 = vset.pattern.permute.xlu0 0
        %663 = vperm.xlu0 %662, %v645
        %v664 = vpop.permute.xlu0 %663
        %v666 = vadd.f32 %v634, %v649
        %v667 = vadd.f32 %v635, %v649
        %v668 = vadd.f32 %v636, %v654
        %v669 = vadd.f32 %v637, %v654
        %v670 = vadd.f32 %v638, %v659
        %v671 = vadd.f32 %v639, %v659
        %v672 = vadd.f32 %v640, %v664
        %v673 = vadd.f32 %v641, %v664
        %v674 = vpack.c.bf16 %v668, %v666
        %v675 = vpack.c.bf16 %v669, %v667
        %v676 = vpack.c.bf16 %v672, %v670
        %v677 = vpack.c.bf16 %v673, %v671
        %v678 = vld [vmem:[%s3] sm:$0xff]
        %v679 = vld [vmem:[%s3 + $0x8] sm:$0xf]
        %v680 = vld [vmem:[%s3 + $0xc] sm:$0xff]
        %v681 = vld [vmem:[%s3 + $0x14] sm:$0xf]
        %v682 = vld [vmem:[%s3 + $0x18] sm:$0xff]
        %v683 = vld [vmem:[%s3 + $0x20] sm:$0xf]
        %v684 = vld [vmem:[%s3 + $0x24] sm:$0xff]
        %v685 = vld [vmem:[%s3 + $0x2c] sm:$0xf]
        %v686 = vld [vmem:[#allocation3] sm:$0x7]
        %v688 = vlaneseq
        %v689 = vshrl.u32 %v688, 7
        %v690 = vsub.s32 0, %v689
        %v691 = vrot.slane %v686, %v690
        %v692 = vlaneseq
        %v693 = vshrl.u32 %v692, 7
        %v694 = vsub.s32 1, %v693
        %v695 = vrot.slane %v686, %v694
        %v696 = vlaneseq
        %v697 = vshrl.u32 %v696, 7
        %v698 = vsub.s32 2, %v697
        %v699 = vrot.slane %v686, %v698
        %703 = vxpose.xlu0.c.b16.start [1/8] %v674, 128
        %704 = vxpose.xlu0.c.b16.cont [2/8] %v676, 128
        %705 = vxpose.xlu0.c.b16.cont [3/8] 0, 128
        %706 = vxpose.xlu0.c.b16.cont [4/8] 0, 128
        %707 = vxpose.xlu0.c.b16.cont [5/8] 0, 128
        %708 = vxpose.xlu0.c.b16.cont [6/8] 0, 128
        %709 = vxpose.xlu0.c.b16.cont [7/8] 0, 128
        %710 = vxpose.xlu0.c.b16.end [8/8] 0, 128
        %v711 = vpop.trf.xlu0
        %v712 = vpop.trf.xlu0
        %v713 = vpop.trf.xlu0
        %v714 = vpop.trf.xlu0
        %v715 = vpop.trf.xlu0
        %v716 = vpop.trf.xlu0
        %v717 = vpop.trf.xlu0
        %v718 = vpop.trf.xlu0
        %719 = vxpose.xlu0.c.b16.start [1/8] %v675, 128
        %720 = vxpose.xlu0.c.b16.cont [2/8] %v677, 128
        %721 = vxpose.xlu0.c.b16.cont [3/8] 0, 128
        %722 = vxpose.xlu0.c.b16.cont [4/8] 0, 128
        %723 = vxpose.xlu0.c.b16.cont [5/8] 0, 128
        %724 = vxpose.xlu0.c.b16.cont [6/8] 0, 128
        %725 = vxpose.xlu0.c.b16.cont [7/8] 0, 128
        %726 = vxpose.xlu0.c.b16.end [8/8] 0, 128
        %v727 = vpop.trf.xlu0
        %v728 = vpop.trf.xlu0
        %v729 = vpop.trf.xlu0
        %v730 = vpop.trf.xlu0
        %v731 = vpop.trf.xlu0
        %v732 = vpop.trf.xlu0
        %v733 = vpop.trf.xlu0
        %v734 = vpop.trf.xlu0
        %v743 = vunpack.c.l.b16 %v678
        %v744 = vunpack.c.h.b16 %v678
        %v745 = vunpack.c.l.b16 %v679
        %v746 = vunpack.c.l.b16 %v680
        %v747 = vunpack.c.h.b16 %v680
        %v748 = vunpack.c.l.b16 %v681
        %v749 = vunpack.c.l.b16 %v682
        %v750 = vunpack.c.h.b16 %v682
        %v751 = vunpack.c.l.b16 %v683
        %v752 = vunpack.c.l.b16 %v684
        %v753 = vunpack.c.h.b16 %v684
        %v754 = vunpack.c.l.b16 %v685
        %v755 = vpack.c.b16 %v746, %v743
        %v756 = vpack.c.b16 %v747, %v744
        %v757 = vpack.c.b16 %v748, %v745
        %v758 = vpack.c.b16 %v752, %v749
        %v759 = vpack.c.b16 %v753, %v750
        %v760 = vpack.c.b16 %v754, %v751
        %vm767 = vcmask 261120
        %v769 = vsel %vm767, %v711, 0
        %v772 = vsel %vm767, %v712, 0
        %v775 = vsel %vm767, %v713, 0
        %v778 = vsel %vm767, %v714, 0
        %v781 = vsel %vm767, %v715, 0
        %v784 = vsel %vm767, %v716, 0
        %v787 = vsel %vm767, %v717, 0
        %v790 = vsel %vm767, %v718, 0
        %v793 = vsel %vm767, %v727, 0
        %v796 = vsel %vm767, %v728, 0
        %v799 = vsel %vm767, %v729, 0
        %v802 = vsel %vm767, %v730, 0
        %v805 = vsel %vm767, %v731, 0
        %v808 = vsel %vm767, %v732, 0
        %v811 = vsel %vm767, %v733, 0
        %v814 = vsel %vm767, %v734, 0
        %816 = vmatprep.subr.bf16.mxu0 %v756
        %817 = vmatpush1.bf16.msra.mxu0 %v755
        %818 = vmatprep.subr.bf16.mxu0 %v759
        %819 = vmatpush1.bf16.msra.mxu0 %v758
        %820 = vmatprep.subr.bf16.mxu0 0
        %821 = vmatpush1.bf16.msra.mxu0 0
        %822 = vmatprep.subr.bf16.mxu0 0
        %823 = vmatpush1.bf16.msra.mxu0 0
        %824 = vmatprep.subr.bf16.mxu0 0
        %825 = vmatpush1.bf16.msra.mxu0 0
        %826 = vmatprep.subr.bf16.mxu0 0
        %827 = vmatpush1.bf16.msra.mxu0 0
        %828 = vmatprep.subr.bf16.mxu0 0
        %829 = vmatpush1.bf16.msra.mxu0 0
        %830 = vmatprep.subr.bf16.mxu0 0
        %831 = vmatpush1.bf16.msra.mxu0 0
        %832 = vmatprep.subr.bf16.mxu0 0
        %833 = vmatpush1.bf16.msra.mxu0 0
        %834 = vmatprep.subr.bf16.mxu0 0
        %835 = vmatpush1.bf16.msra.mxu0 0
        %836 = vmatprep.subr.bf16.mxu0 0
        %837 = vmatpush1.bf16.msra.mxu0 0
        %838 = vmatprep.subr.bf16.mxu0 0
        %839 = vmatpush1.bf16.msra.mxu0 0
        %840 = vmatprep.subr.bf16.mxu0 0
        %841 = vmatpush1.bf16.msra.mxu0 0
        %842 = vmatprep.subr.bf16.mxu0 0
        %843 = vmatpush1.bf16.msra.mxu0 0
        %844 = vmatprep.subr.bf16.mxu0 0
        %845 = vmatpush1.bf16.msra.mxu0 0
        %846 = vmatprep.subr.bf16.mxu0 0
        %847 = vmatpush1.bf16.msra.mxu0 0
        %848 = vmatprep.mubr.bf16.mxu0 0
        %849 = vmatmul.mubr.bf16.gmra.mrb[0].mxu0 %v769
        %v850 = vpop.f32.mrb[0].mxu0
        %v851 = vadd.f32 %v691, %v850
        %v852 = vpop.f32.mrb[0].mxu0
        %v853 = vadd.f32 %v695, %v852
        %v854 = vpop.f32.mrb[0].mxu0
        %v855 = vadd.f32 %v691, %v854
        %v856 = vpop.f32.mrb[0].mxu0
        %v857 = vadd.f32 %v695, %v856
        %858 = vmatprep.mubr.bf16.mxu0 0
        %859 = vmatmul.mubr.bf16.gmra.mrb[0].mxu0 %v772
        %v860 = vpop.f32.mrb[0].mxu0
        %v861 = vadd.f32 %v691, %v860
        %v862 = vpop.f32.mrb[0].mxu0
        %v863 = vadd.f32 %v695, %v862
        %v864 = vpop.f32.mrb[0].mxu0
        %v865 = vadd.f32 %v691, %v864
        %v866 = vpop.f32.mrb[0].mxu0
        %v867 = vadd.f32 %v695, %v866
        %868 = vmatprep.mubr.bf16.mxu0 0
        %869 = vmatmul.mubr.bf16.gmra.mrb[0].mxu0 %v775
        %v870 = vpop.f32.mrb[0].mxu0
        %v871 = vadd.f32 %v691, %v870
        %v872 = vpop.f32.mrb[0].mxu0
        %v873 = vadd.f32 %v695, %v872
        %v874 = vpop.f32.mrb[0].mxu0
        %v875 = vadd.f32 %v691, %v874
        %v876 = vpop.f32.mrb[0].mxu0
        %v877 = vadd.f32 %v695, %v876
        %878 = vmatprep.mubr.bf16.mxu0 0
        %879 = vmatmul.mubr.bf16.gmra.mrb[0].mxu0 %v778
        %v880 = vpop.f32.mrb[0].mxu0
        %v881 = vadd.f32 %v691, %v880
        %v882 = vpop.f32.mrb[0].mxu0
        %v883 = vadd.f32 %v695, %v882
        %v884 = vpop.f32.mrb[0].mxu0
        %v885 = vadd.f32 %v691, %v884
        %v886 = vpop.f32.mrb[0].mxu0
        %v887 = vadd.f32 %v695, %v886
        %888 = vmatprep.mubr.bf16.mxu0 0
        %889 = vmatmul.mubr.bf16.gmra.mrb[0].mxu0 %v781
        %v890 = vpop.f32.mrb[0].mxu0
        %v891 = vadd.f32 %v691, %v890
        %v892 = vpop.f32.mrb[0].mxu0
        %v893 = vadd.f32 %v695, %v892
        %v894 = vpop.f32.mrb[0].mxu0
        %v895 = vadd.f32 %v691, %v894
        %v896 = vpop.f32.mrb[0].mxu0
        %v897 = vadd.f32 %v695, %v896
        %898 = vmatprep.mubr.bf16.mxu0 0
        %899 = vmatmul.mubr.bf16.gmra.mrb[0].mxu0 %v784
        %v900 = vpop.f32.mrb[0].mxu0
        %v901 = vadd.f32 %v691, %v900
        %v902 = vpop.f32.mrb[0].mxu0
        %v903 = vadd.f32 %v695, %v902
        %v904 = vpop.f32.mrb[0].mxu0
        %v905 = vadd.f32 %v691, %v904
        %v906 = vpop.f32.mrb[0].mxu0
        %v907 = vadd.f32 %v695, %v906
        %908 = vmatprep.mubr.bf16.mxu0 0
        %909 = vmatmul.mubr.bf16.gmra.mrb[0].mxu0 %v787
        %v910 = vpop.f32.mrb[0].mxu0
        %v911 = vadd.f32 %v691, %v910
        %v912 = vpop.f32.mrb[0].mxu0
        %v913 = vadd.f32 %v695, %v912
        %v914 = vpop.f32.mrb[0].mxu0
        %v915 = vadd.f32 %v691, %v914
        %v916 = vpop.f32.mrb[0].mxu0
        %v917 = vadd.f32 %v695, %v916
        %918 = vmatprep.mubr.bf16.mxu0 0
        %919 = vmatmul.mubr.bf16.gmra.mrb[0].mxu0 %v790
        %v920 = vpop.f32.mrb[0].mxu0
        %v921 = vadd.f32 %v691, %v920
        %v922 = vpop.f32.mrb[0].mxu0
        %v923 = vadd.f32 %v695, %v922
        %v924 = vpop.f32.mrb[0].mxu0
        %v925 = vadd.f32 %v691, %v924
        %v926 = vpop.f32.mrb[0].mxu0
        %v927 = vadd.f32 %v695, %v926
        %928 = vmatprep.mubr.bf16.mxu0 0
        %929 = vmatmul.mubr.bf16.gmra.mrb[0].mxu0 %v793
        %v930 = vpop.f32.mrb[0].mxu0
        %v931 = vadd.f32 %v691, %v930
        %v932 = vpop.f32.mrb[0].mxu0
        %v933 = vadd.f32 %v695, %v932
        %v934 = vpop.f32.mrb[0].mxu0
        %v935 = vadd.f32 %v691, %v934
        %v936 = vpop.f32.mrb[0].mxu0
        %v937 = vadd.f32 %v695, %v936
        %938 = vmatprep.mubr.bf16.mxu0 0
        %939 = vmatmul.mubr.bf16.gmra.mrb[0].mxu0 %v796
        %v940 = vpop.f32.mrb[0].mxu0
        %v941 = vadd.f32 %v691, %v940
        %v942 = vpop.f32.mrb[0].mxu0
        %v943 = vadd.f32 %v695, %v942
        %v944 = vpop.f32.mrb[0].mxu0
        %v945 = vadd.f32 %v691, %v944
        %v946 = vpop.f32.mrb[0].mxu0
        %v947 = vadd.f32 %v695, %v946
        %948 = vmatprep.mubr.bf16.mxu0 0
        %949 = vmatmul.mubr.bf16.gmra.mrb[0].mxu0 %v799
        %v950 = vpop.f32.mrb[0].mxu0
        %v951 = vadd.f32 %v691, %v950
        %v952 = vpop.f32.mrb[0].mxu0
        %v953 = vadd.f32 %v695, %v952
        %v954 = vpop.f32.mrb[0].mxu0
        %v955 = vadd.f32 %v691, %v954
        %v956 = vpop.f32.mrb[0].mxu0
        %v957 = vadd.f32 %v695, %v956
        %958 = vmatprep.mubr.bf16.mxu0 0
        %959 = vmatmul.mubr.bf16.gmra.mrb[0].mxu0 %v802
        %v960 = vpop.f32.mrb[0].mxu0
        %v961 = vadd.f32 %v691, %v960
        %v962 = vpop.f32.mrb[0].mxu0
        %v963 = vadd.f32 %v695, %v962
        %v964 = vpop.f32.mrb[0].mxu0
        %v965 = vadd.f32 %v691, %v964
        %v966 = vpop.f32.mrb[0].mxu0
        %v967 = vadd.f32 %v695, %v966
        %968 = vmatprep.mubr.bf16.mxu0 0
        %969 = vmatmul.mubr.bf16.gmra.mrb[0].mxu0 %v805
        %v970 = vpop.f32.mrb[0].mxu0
        %v971 = vadd.f32 %v691, %v970
        %v972 = vpop.f32.mrb[0].mxu0
        %v973 = vadd.f32 %v695, %v972
        %v974 = vpop.f32.mrb[0].mxu0
        %v975 = vadd.f32 %v691, %v974
        %v976 = vpop.f32.mrb[0].mxu0
        %v977 = vadd.f32 %v695, %v976
        %978 = vmatprep.mubr.bf16.mxu0 0
        %979 = vmatmul.mubr.bf16.gmra.mrb[0].mxu0 %v808
        %v980 = vpop.f32.mrb[0].mxu0
        %v981 = vadd.f32 %v691, %v980
        %v982 = vpop.f32.mrb[0].mxu0
        %v983 = vadd.f32 %v695, %v982
        %v984 = vpop.f32.mrb[0].mxu0
        %v985 = vadd.f32 %v691, %v984
        %v986 = vpop.f32.mrb[0].mxu0
        %v987 = vadd.f32 %v695, %v986
        %988 = vmatprep.mubr.bf16.mxu0 0
        %989 = vmatmul.mubr.bf16.gmra.mrb[0].mxu0 %v811
        %v990 = vpop.f32.mrb[0].mxu0
        %v991 = vadd.f32 %v691, %v990
        %v992 = vpop.f32.mrb[0].mxu0
        %v993 = vadd.f32 %v695, %v992
        %v994 = vpop.f32.mrb[0].mxu0
        %v995 = vadd.f32 %v691, %v994
        %v996 = vpop.f32.mrb[0].mxu0
        %v997 = vadd.f32 %v695, %v996
        %998 = vmatprep.mubr.bf16.mxu0 0
        %999 = vmatmul.mubr.bf16.gmra.mrb[0].mxu0 %v814
        %v1000 = vpop.f32.mrb[0].mxu0
        %v1001 = vadd.f32 %v691, %v1000
        %v1002 = vpop.f32.mrb[0].mxu0
        %v1003 = vadd.f32 %v695, %v1002
        %v1004 = vpop.f32.mrb[0].mxu0
        %v1005 = vadd.f32 %v691, %v1004
        %v1006 = vpop.f32.mrb[0].mxu0
        %v1007 = vadd.f32 %v695, %v1006
        %1008 = vdwg.mxu0
        %1009 = vmatprep.subr.bf16.mxu0 0
        %1010 = vmatpush1.bf16.msra.mxu0 %v757
        %1011 = vmatprep.subr.bf16.mxu0 0
        %1012 = vmatpush1.bf16.msra.mxu0 %v760
        %1013 = vmatprep.subr.bf16.mxu0 0
        %1014 = vmatpush1.bf16.msra.mxu0 0
        %1015 = vmatprep.subr.bf16.mxu0 0
        %1016 = vmatpush1.bf16.msra.mxu0 0
        %1017 = vmatprep.subr.bf16.mxu0 0
        %1018 = vmatpush1.bf16.msra.mxu0 0
        %1019 = vmatprep.subr.bf16.mxu0 0
        %1020 = vmatpush1.bf16.msra.mxu0 0
        %1021 = vmatprep.subr.bf16.mxu0 0
        %1022 = vmatpush1.bf16.msra.mxu0 0
        %1023 = vmatprep.subr.bf16.mxu0 0
        %1024 = vmatpush1.bf16.msra.mxu0 0
        %1025 = vmatprep.subr.bf16.mxu0 0
        %1026 = vmatpush1.bf16.msra.mxu0 0
        %1027 = vmatprep.subr.bf16.mxu0 0
        %1028 = vmatpush1.bf16.msra.mxu0 0
        %1029 = vmatprep.subr.bf16.mxu0 0
        %1030 = vmatpush1.bf16.msra.mxu0 0
        %1031 = vmatprep.subr.bf16.mxu0 0
        %1032 = vmatpush1.bf16.msra.mxu0 0
        %1033 = vmatprep.subr.bf16.mxu0 0
        %1034 = vmatpush1.bf16.msra.mxu0 0
        %1035 = vmatprep.subr.bf16.mxu0 0
        %1036 = vmatpush1.bf16.msra.mxu0 0
        %1037 = vmatprep.subr.bf16.mxu0 0
        %1038 = vmatpush1.bf16.msra.mxu0 0
        %1039 = vmatprep.subr.bf16.mxu0 0
        %1040 = vmatpush1.bf16.msra.mxu0 0
        %1041 = vmatprep.mubr.bf16.mxu0 0
        %1042 = vmatmul.mubr.bf16.gmra.mrb[0].mxu0 %v769
        %v1043 = vpop.f32.mrb[0].mxu0
        %v1044 = vadd.f32 %v699, %v1043
        %v1045 = vpop.f32.mrb[0].mxu0
        %v1046 = vpop.f32.mrb[0].mxu0
        %v1047 = vadd.f32 %v699, %v1046
        %v1048 = vpop.f32.mrb[0].mxu0
        %1049 = vmatprep.mubr.bf16.mxu0 0
        %1050 = vmatmul.mubr.bf16.gmra.mrb[0].mxu0 %v772
        %v1051 = vpop.f32.mrb[0].mxu0
        %v1052 = vadd.f32 %v699, %v1051
        %v1053 = vpop.f32.mrb[0].mxu0
        %v1054 = vpop.f32.mrb[0].mxu0
        %v1055 = vadd.f32 %v699, %v1054
        %v1056 = vpop.f32.mrb[0].mxu0
        %1057 = vmatprep.mubr.bf16.mxu0 0
        %1058 = vmatmul.mubr.bf16.gmra.mrb[0].mxu0 %v775
        %v1059 = vpop.f32.mrb[0].mxu0
        %v1060 = vadd.f32 %v699, %v1059
        %v1061 = vpop.f32.mrb[0].mxu0
        %v1062 = vpop.f32.mrb[0].mxu0
        %v1063 = vadd.f32 %v699, %v1062
        %v1064 = vpop.f32.mrb[0].mxu0
        %1065 = vmatprep.mubr.bf16.mxu0 0
        %1066 = vmatmul.mubr.bf16.gmra.mrb[0].mxu0 %v778
        %v1067 = vpop.f32.mrb[0].mxu0
        %v1068 = vadd.f32 %v699, %v1067
        %v1069 = vpop.f32.mrb[0].mxu0
        %v1070 = vpop.f32.mrb[0].mxu0
        %v1071 = vadd.f32 %v699, %v1070
        %v1072 = vpop.f32.mrb[0].mxu0
        %1073 = vmatprep.mubr.bf16.mxu0 0
        %1074 = vmatmul.mubr.bf16.gmra.mrb[0].mxu0 %v781
        %v1075 = vpop.f32.mrb[0].mxu0
        %v1076 = vadd.f32 %v699, %v1075
        %v1077 = vpop.f32.mrb[0].mxu0
        %v1078 = vpop.f32.mrb[0].mxu0
        %v1079 = vadd.f32 %v699, %v1078
        %v1080 = vpop.f32.mrb[0].mxu0
        %1081 = vmatprep.mubr.bf16.mxu0 0
        %1082 = vmatmul.mubr.bf16.gmra.mrb[0].mxu0 %v784
        %v1083 = vpop.f32.mrb[0].mxu0
        %v1084 = vadd.f32 %v699, %v1083
        %v1085 = vpop.f32.mrb[0].mxu0
        %v1086 = vpop.f32.mrb[0].mxu0
        %v1087 = vadd.f32 %v699, %v1086
        %v1088 = vpop.f32.mrb[0].mxu0
        %1089 = vmatprep.mubr.bf16.mxu0 0
        %1090 = vmatmul.mubr.bf16.gmra.mrb[0].mxu0 %v787
        %v1091 = vpop.f32.mrb[0].mxu0
        %v1092 = vadd.f32 %v699, %v1091
        %v1093 = vpop.f32.mrb[0].mxu0
        %v1094 = vpop.f32.mrb[0].mxu0
        %v1095 = vadd.f32 %v699, %v1094
        %v1096 = vpop.f32.mrb[0].mxu0
        %1097 = vmatprep.mubr.bf16.mxu0 0
        %1098 = vmatmul.mubr.bf16.gmra.mrb[0].mxu0 %v790
        %v1099 = vpop.f32.mrb[0].mxu0
        %v1100 = vadd.f32 %v699, %v1099
        %v1101 = vpop.f32.mrb[0].mxu0
        %v1102 = vpop.f32.mrb[0].mxu0
        %v1103 = vadd.f32 %v699, %v1102
        %v1104 = vpop.f32.mrb[0].mxu0
        %1105 = vmatprep.mubr.bf16.mxu0 0
        %1106 = vmatmul.mubr.bf16.gmra.mrb[0].mxu0 %v793
        %v1107 = vpop.f32.mrb[0].mxu0
        %v1108 = vadd.f32 %v699, %v1107
        %v1109 = vpop.f32.mrb[0].mxu0
        %v1110 = vpop.f32.mrb[0].mxu0
        %v1111 = vadd.f32 %v699, %v1110
        %v1112 = vpop.f32.mrb[0].mxu0
        %1113 = vmatprep.mubr.bf16.mxu0 0
        %1114 = vmatmul.mubr.bf16.gmra.mrb[0].mxu0 %v796
        %v1115 = vpop.f32.mrb[0].mxu0
        %v1116 = vadd.f32 %v699, %v1115
        %v1117 = vpop.f32.mrb[0].mxu0
        %v1118 = vpop.f32.mrb[0].mxu0
        %v1119 = vadd.f32 %v699, %v1118
        %v1120 = vpop.f32.mrb[0].mxu0
        %1121 = vmatprep.mubr.bf16.mxu0 0
        %1122 = vmatmul.mubr.bf16.gmra.mrb[0].mxu0 %v799
        %v1123 = vpop.f32.mrb[0].mxu0
        %v1124 = vadd.f32 %v699, %v1123
        %v1125 = vpop.f32.mrb[0].mxu0
        %v1126 = vpop.f32.mrb[0].mxu0
        %v1127 = vadd.f32 %v699, %v1126
        %v1128 = vpop.f32.mrb[0].mxu0
        %1129 = vmatprep.mubr.bf16.mxu0 0
        %1130 = vmatmul.mubr.bf16.gmra.mrb[0].mxu0 %v802
        %v1131 = vpop.f32.mrb[0].mxu0
        %v1132 = vadd.f32 %v699, %v1131
        %v1133 = vpop.f32.mrb[0].mxu0
        %v1134 = vpop.f32.mrb[0].mxu0
        %v1135 = vadd.f32 %v699, %v1134
        %v1136 = vpop.f32.mrb[0].mxu0
        %1137 = vmatprep.mubr.bf16.mxu0 0
        %1138 = vmatmul.mubr.bf16.gmra.mrb[0].mxu0 %v805
        %v1139 = vpop.f32.mrb[0].mxu0
        %v1140 = vadd.f32 %v699, %v1139
        %v1141 = vpop.f32.mrb[0].mxu0
        %v1142 = vpop.f32.mrb[0].mxu0
        %v1143 = vadd.f32 %v699, %v1142
        %v1144 = vpop.f32.mrb[0].mxu0
        %1145 = vmatprep.mubr.bf16.mxu0 0
        %1146 = vmatmul.mubr.bf16.gmra.mrb[0].mxu0 %v808
        %v1147 = vpop.f32.mrb[0].mxu0
        %v1148 = vadd.f32 %v699, %v1147
        %v1149 = vpop.f32.mrb[0].mxu0
        %v1150 = vpop.f32.mrb[0].mxu0
        %v1151 = vadd.f32 %v699, %v1150
        %v1152 = vpop.f32.mrb[0].mxu0
        %1153 = vmatprep.mubr.bf16.mxu0 0
        %1154 = vmatmul.mubr.bf16.gmra.mrb[0].mxu0 %v811
        %v1155 = vpop.f32.mrb[0].mxu0
        %v1156 = vadd.f32 %v699, %v1155
        %v1157 = vpop.f32.mrb[0].mxu0
        %v1158 = vpop.f32.mrb[0].mxu0
        %v1159 = vadd.f32 %v699, %v1158
        %v1160 = vpop.f32.mrb[0].mxu0
        %1161 = vmatprep.mubr.bf16.mxu0 0
        %1162 = vmatmul.mubr.bf16.gmra.mrb[0].mxu0 %v814
        %v1163 = vpop.f32.mrb[0].mxu0
        %v1164 = vadd.f32 %v699, %v1163
        %v1165 = vpop.f32.mrb[0].mxu0
        %v1166 = vpop.f32.mrb[0].mxu0
        %v1167 = vadd.f32 %v699, %v1166
        %v1168 = vpop.f32.mrb[0].mxu0
        %1169 = vdwg.mxu0
        %1170 = vst [vmem:[#allocation2] sm:$0xff] 0.0
        %1171 = vst [vmem:[#allocation2 + $0x8] sm:$0xff] 0.0
        %1172 = vst [vmem:[#allocation2 + $0x10] sm:$0xf] 0.0
        %1173 = vst [vmem:[#allocation2 + $0x18] sm:$0xff] 0.0
        %1174 = vst [vmem:[#allocation2 + $0x20] sm:$0xff] 0.0
        %1175 = vst [vmem:[#allocation2 + $0x28] sm:$0xf] 0.0
        %1176 = vst [vmem:[#allocation2 + $0x30] sm:$0xff] 0.0
        %1177 = vst [vmem:[#allocation2 + $0x38] sm:$0xff] 0.0
        %1178 = vst [vmem:[#allocation2 + $0x40] sm:$0xf] 0.0
        %1179 = vst [vmem:[#allocation2 + $0x48] sm:$0xff] 0.0
        %1180 = vst [vmem:[#allocation2 + $0x50] sm:$0xff] 0.0
        %1181 = vst [vmem:[#allocation2 + $0x58] sm:$0xf] 0.0
        %1182 = vst [vmem:[#allocation2 + $0x60] sm:$0xff] 0.0
        %1183 = vst [vmem:[#allocation2 + $0x68] sm:$0xff] 0.0
        %1184 = vst [vmem:[#allocation2 + $0x70] sm:$0xf] 0.0
        %1185 = vst [vmem:[#allocation2 + $0x78] sm:$0xff] 0.0
        %1186 = vst [vmem:[#allocation2 + $0x80] sm:$0xff] 0.0
        %1187 = vst [vmem:[#allocation2 + $0x88] sm:$0xf] 0.0
        %1188 = vst [vmem:[#allocation2 + $0x90] sm:$0xff] 0.0
        %1189 = vst [vmem:[#allocation2 + $0x98] sm:$0xff] 0.0
        %1190 = vst [vmem:[#allocation2 + $0xa0] sm:$0xf] 0.0
        %1191 = vst [vmem:[#allocation2 + $0xa8] sm:$0xff] 0.0
        %1192 = vst [vmem:[#allocation2 + $0xb0] sm:$0xff] 0.0
        %1193 = vst [vmem:[#allocation2 + $0xb8] sm:$0xf] 0.0
        %1194 = vst [vmem:[#allocation2 + $0xc0] sm:$0xff] 0.0
        %1195 = vst [vmem:[#allocation2 + $0xc8] sm:$0xff] 0.0
        %1196 = vst [vmem:[#allocation2 + $0xd0] sm:$0xf] 0.0
        %1197 = vst [vmem:[#allocation2 + $0xd8] sm:$0xff] 0.0
        %1198 = vst [vmem:[#allocation2 + $0xe0] sm:$0xff] 0.0
        %1199 = vst [vmem:[#allocation2 + $0xe8] sm:$0xf] 0.0
        %1200 = vst [vmem:[#allocation2 + $0xf0] sm:$0xff] 0.0
        %1201 = vst [vmem:[#allocation2 + $0xf8] sm:$0xff] 0.0
        %1202 = vst [vmem:[#allocation2 + $0x100] sm:$0xf] 0.0
        %1203 = vst [vmem:[#allocation2 + $0x108] sm:$0xff] 0.0
        %1204 = vst [vmem:[#allocation2 + $0x110] sm:$0xff] 0.0
        %1205 = vst [vmem:[#allocation2 + $0x118] sm:$0xf] 0.0
        %1206 = vst [vmem:[#allocation2 + $0x120] sm:$0xff] 0.0
        %1207 = vst [vmem:[#allocation2 + $0x128] sm:$0xff] 0.0
        %1208 = vst [vmem:[#allocation2 + $0x130] sm:$0xf] 0.0
        %1209 = vst [vmem:[#allocation2 + $0x138] sm:$0xff] 0.0
        %1210 = vst [vmem:[#allocation2 + $0x140] sm:$0xff] 0.0
        %1211 = vst [vmem:[#allocation2 + $0x148] sm:$0xf] 0.0
        %1212 = vst [vmem:[#allocation2 + $0x150] sm:$0xff] 0.0
        %1213 = vst [vmem:[#allocation2 + $0x158] sm:$0xff] 0.0
        %1214 = vst [vmem:[#allocation2 + $0x160] sm:$0xf] 0.0
        %1215 = vst [vmem:[#allocation2 + $0x168] sm:$0xff] 0.0
        %1216 = vst [vmem:[#allocation2 + $0x170] sm:$0xff] 0.0
        %1217 = vst [vmem:[#allocation2 + $0x178] sm:$0xf] 0.0
        %1218 = vst [vmem:[#allocation2 + $0x180] sm:$0xff] 0.0
        %1219 = vst [vmem:[#allocation2 + $0x188] sm:$0xff] 0.0
        %1220 = vst [vmem:[#allocation2 + $0x190] sm:$0xf] 0.0
        %1221 = vst [vmem:[#allocation2 + $0x198] sm:$0xff] 0.0
        %1222 = vst [vmem:[#allocation2 + $0x1a0] sm:$0xff] 0.0
        %1223 = vst [vmem:[#allocation2 + $0x1a8] sm:$0xf] 0.0
        %1224 = vst [vmem:[#allocation2 + $0x1b0] sm:$0xff] 0.0
        %1225 = vst [vmem:[#allocation2 + $0x1b8] sm:$0xff] 0.0
        %1226 = vst [vmem:[#allocation2 + $0x1c0] sm:$0xf] 0.0
        %1227 = vst [vmem:[#allocation2 + $0x1c8] sm:$0xff] 0.0
        %1228 = vst [vmem:[#allocation2 + $0x1d0] sm:$0xff] 0.0
        %1229 = vst [vmem:[#allocation2 + $0x1d8] sm:$0xf] 0.0
        %s1230 = scalar_lea.vmem [#allocation2], 48
        %1231 = vst [vmem:[%s1230 + $0x2] sm:$0xff] %v853
        %1232 = vst [vmem:[%s1230 + $0xa] sm:$0xff] %v857
        %1233 = vst [vmem:[%s1230 + $0x1a] sm:$0xff] %v863
        %1234 = vst [vmem:[%s1230 + $0x22] sm:$0xff] %v867
        %1235 = vst [vmem:[%s1230 + $0x32] sm:$0xff] %v873
        %1236 = vst [vmem:[%s1230 + $0x3a] sm:$0xff] %v877
        %1237 = vst [vmem:[%s1230 + $0x4a] sm:$0xff] %v883
        %1238 = vst [vmem:[%s1230 + $0x52] sm:$0xff] %v887
        %1239 = vst [vmem:[%s1230 + $0x62] sm:$0xff] %v893
        %1240 = vst [vmem:[%s1230 + $0x6a] sm:$0xff] %v897
        %1241 = vst [vmem:[%s1230 + $0x7a] sm:$0xff] %v903
        %1242 = vst [vmem:[%s1230 + $0x82] sm:$0xff] %v907
        %1243 = vst [vmem:[%s1230 + $0x92] sm:$0xff] %v913
        %1244 = vst [vmem:[%s1230 + $0x9a] sm:$0xff] %v917
        %1245 = vst [vmem:[%s1230 + $0xaa] sm:$0xff] %v923
        %1246 = vst [vmem:[%s1230 + $0xb2] sm:$0xff] %v927
        %1247 = vst [vmem:[%s1230 + $0xc2] sm:$0xff] %v933
        %1248 = vst [vmem:[%s1230 + $0xca] sm:$0xff] %v937
        %1249 = vst [vmem:[%s1230 + $0xda] sm:$0xff] %v943
        %1250 = vst [vmem:[%s1230 + $0xe2] sm:$0xff] %v947
        %1251 = vst [vmem:[%s1230 + $0xf2] sm:$0xff] %v953
        %1252 = vst [vmem:[%s1230 + $0xfa] sm:$0xff] %v957
        %1253 = vst [vmem:[%s1230 + $0x10a] sm:$0xff] %v963
        %1254 = vst [vmem:[%s1230 + $0x112] sm:$0xff] %v967
        %1255 = vst [vmem:[%s1230 + $0x122] sm:$0xff] %v973
        %1256 = vst [vmem:[%s1230 + $0x12a] sm:$0xff] %v977
        %1257 = vst [vmem:[%s1230 + $0x13a] sm:$0xff] %v983
        %1258 = vst [vmem:[%s1230 + $0x142] sm:$0xff] %v987
        %1259 = vst [vmem:[%s1230 + $0x152] sm:$0xff] %v993
        %1260 = vst [vmem:[%s1230 + $0x15a] sm:$0xff] %v997
        %1261 = vst [vmem:[%s1230 + $0x16a] sm:$0xff] %v1003
        %1262 = vst [vmem:[%s1230 + $0x172] sm:$0xff] %v1007
        %v1263 = vld [vmem:[#allocation6] sm:$0x7]
        %v1264 = vld [vmem:[#allocation6 + $0x4] sm:$0x7]
        %v1265 = vld [vmem:[#allocation6 + $0x8] sm:$0x7]
        %s1266 = scalar_lea.vmem [#allocation2], 24
        %v1267 = vld [vmem:[%s1266 + $0x1] sm:$0xff]
        %v1268 = vld [vmem:[%s1266 + $0x9] sm:$0xff]
        %v1269 = vld [vmem:[%s1266 + $0x19] sm:$0xff]
        %v1270 = vld [vmem:[%s1266 + $0x21] sm:$0xff]
        %v1271 = vld [vmem:[%s1266 + $0x31] sm:$0xff]
        %v1272 = vld [vmem:[%s1266 + $0x39] sm:$0xff]
        %v1273 = vld [vmem:[%s1266 + $0x49] sm:$0xff]
        %v1274 = vld [vmem:[%s1266 + $0x51] sm:$0xff]
        %v1275 = vld [vmem:[%s1266 + $0x61] sm:$0xff]
        %v1276 = vld [vmem:[%s1266 + $0x69] sm:$0xff]
        %v1277 = vld [vmem:[%s1266 + $0x79] sm:$0xff]
        %v1278 = vld [vmem:[%s1266 + $0x81] sm:$0xff]
        %v1279 = vld [vmem:[%s1266 + $0x91] sm:$0xff]
        %v1280 = vld [vmem:[%s1266 + $0x99] sm:$0xff]
        %v1281 = vld [vmem:[%s1266 + $0xa9] sm:$0xff]
        %v1282 = vld [vmem:[%s1266 + $0xb1] sm:$0xff]
        %v1283 = vld [vmem:[%s1266 + $0xc1] sm:$0xff]
        %v1284 = vld [vmem:[%s1266 + $0xc9] sm:$0xff]
        %v1285 = vld [vmem:[%s1266 + $0xd9] sm:$0xff]
        %v1286 = vld [vmem:[%s1266 + $0xe1] sm:$0xff]
        %v1287 = vld [vmem:[%s1266 + $0xf1] sm:$0xff]
        %v1288 = vld [vmem:[%s1266 + $0xf9] sm:$0xff]
        %v1289 = vld [vmem:[%s1266 + $0x109] sm:$0xff]
        %v1290 = vld [vmem:[%s1266 + $0x111] sm:$0xff]
        %v1291 = vld [vmem:[%s1266 + $0x121] sm:$0xff]
        %v1292 = vld [vmem:[%s1266 + $0x129] sm:$0xff]
        %v1293 = vld [vmem:[%s1266 + $0x139] sm:$0xff]
        %v1294 = vld [vmem:[%s1266 + $0x141] sm:$0xff]
        %v1295 = vld [vmem:[%s1266 + $0x151] sm:$0xff]
        %v1296 = vld [vmem:[%s1266 + $0x159] sm:$0xff]
        %v1297 = vld [vmem:[%s1266 + $0x169] sm:$0xff]
        %v1298 = vld [vmem:[%s1266 + $0x171] sm:$0xff]
        %v1299 = vlaneseq
        %v1300 = vshrl.u32 %v1299, 7
        %v1301 = vsub.s32 0, %v1300
        %v1302 = vrot.slane %v1263, %v1301
        %v1303 = vmul.f32 %v1267, %v1302
        %v1304 = vmul.f32 %v1268, %v1302
        %v1305 = vmul.f32 %v1269, %v1302
        %v1306 = vmul.f32 %v1270, %v1302
        %v1307 = vmul.f32 %v1271, %v1302
        %v1308 = vmul.f32 %v1272, %v1302
        %v1309 = vmul.f32 %v1273, %v1302
        %v1310 = vmul.f32 %v1274, %v1302
        %v1311 = vmul.f32 %v1275, %v1302
        %v1312 = vmul.f32 %v1276, %v1302
        %v1313 = vmul.f32 %v1277, %v1302
        %v1314 = vmul.f32 %v1278, %v1302
        %v1315 = vmul.f32 %v1279, %v1302
        %v1316 = vmul.f32 %v1280, %v1302
        %v1317 = vmul.f32 %v1281, %v1302
        %v1318 = vmul.f32 %v1282, %v1302
        %v1319 = vmul.f32 %v1283, %v1302
        %v1320 = vmul.f32 %v1284, %v1302
        %v1321 = vmul.f32 %v1285, %v1302
        %v1322 = vmul.f32 %v1286, %v1302
        %v1323 = vmul.f32 %v1287, %v1302
        %v1324 = vmul.f32 %v1288, %v1302
        %v1325 = vmul.f32 %v1289, %v1302
        %v1326 = vmul.f32 %v1290, %v1302
        %v1327 = vmul.f32 %v1291, %v1302
        %v1328 = vmul.f32 %v1292, %v1302
        %v1329 = vmul.f32 %v1293, %v1302
        %v1330 = vmul.f32 %v1294, %v1302
        %v1331 = vmul.f32 %v1295, %v1302
        %v1332 = vmul.f32 %v1296, %v1302
        %v1333 = vmul.f32 %v1297, %v1302
        %v1334 = vmul.f32 %v1298, %v1302
        %v1335 = vadd.f32 %v1303, 0.0
        %v1336 = vadd.f32 %v1304, 0.0
        %v1337 = vadd.f32 %v1305, 0.0
        %v1338 = vadd.f32 %v1306, 0.0
        %v1339 = vadd.f32 %v1307, 0.0
        %v1340 = vadd.f32 %v1308, 0.0
        %v1341 = vadd.f32 %v1309, 0.0
        %v1342 = vadd.f32 %v1310, 0.0
        %v1343 = vadd.f32 %v1311, 0.0
        %v1344 = vadd.f32 %v1312, 0.0
        %v1345 = vadd.f32 %v1313, 0.0
        %v1346 = vadd.f32 %v1314, 0.0
        %v1347 = vadd.f32 %v1315, 0.0
        %v1348 = vadd.f32 %v1316, 0.0
        %v1349 = vadd.f32 %v1317, 0.0
        %v1350 = vadd.f32 %v1318, 0.0
        %v1351 = vadd.f32 %v1319, 0.0
        %v1352 = vadd.f32 %v1320, 0.0
        %v1353 = vadd.f32 %v1321, 0.0
        %v1354 = vadd.f32 %v1322, 0.0
        %v1355 = vadd.f32 %v1323, 0.0
        %v1356 = vadd.f32 %v1324, 0.0
        %v1357 = vadd.f32 %v1325, 0.0
        %v1358 = vadd.f32 %v1326, 0.0
        %v1359 = vadd.f32 %v1327, 0.0
        %v1360 = vadd.f32 %v1328, 0.0
        %v1361 = vadd.f32 %v1329, 0.0
        %v1362 = vadd.f32 %v1330, 0.0
        %v1363 = vadd.f32 %v1331, 0.0
        %v1364 = vadd.f32 %v1332, 0.0
        %v1365 = vadd.f32 %v1333, 0.0
        %v1366 = vadd.f32 %v1334, 0.0
        %v1367 = vld [vmem:[%s1266 + $0x2] sm:$0xff]
        %v1368 = vld [vmem:[%s1266 + $0xa] sm:$0xff]
        %v1369 = vld [vmem:[%s1266 + $0x1a] sm:$0xff]
        %v1370 = vld [vmem:[%s1266 + $0x22] sm:$0xff]
        %v1371 = vld [vmem:[%s1266 + $0x32] sm:$0xff]
        %v1372 = vld [vmem:[%s1266 + $0x3a] sm:$0xff]
        %v1373 = vld [vmem:[%s1266 + $0x4a] sm:$0xff]
        %v1374 = vld [vmem:[%s1266 + $0x52] sm:$0xff]
        %v1375 = vld [vmem:[%s1266 + $0x62] sm:$0xff]
        %v1376 = vld [vmem:[%s1266 + $0x6a] sm:$0xff]
        %v1377 = vld [vmem:[%s1266 + $0x7a] sm:$0xff]
        %v1378 = vld [vmem:[%s1266 + $0x82] sm:$0xff]
        %v1379 = vld [vmem:[%s1266 + $0x92] sm:$0xff]
        %v1380 = vld [vmem:[%s1266 + $0x9a] sm:$0xff]
        %v1381 = vld [vmem:[%s1266 + $0xaa] sm:$0xff]
        %v1382 = vld [vmem:[%s1266 + $0xb2] sm:$0xff]
        %v1383 = vld [vmem:[%s1266 + $0xc2] sm:$0xff]
        %v1384 = vld [vmem:[%s1266 + $0xca] sm:$0xff]
        %v1385 = vld [vmem:[%s1266 + $0xda] sm:$0xff]
        %v1386 = vld [vmem:[%s1266 + $0xe2] sm:$0xff]
        %v1387 = vld [vmem:[%s1266 + $0xf2] sm:$0xff]
        %v1388 = vld [vmem:[%s1266 + $0xfa] sm:$0xff]
        %v1389 = vld [vmem:[%s1266 + $0x10a] sm:$0xff]
        %v1390 = vld [vmem:[%s1266 + $0x112] sm:$0xff]
        %v1391 = vld [vmem:[%s1266 + $0x122] sm:$0xff]
        %v1392 = vld [vmem:[%s1266 + $0x12a] sm:$0xff]
        %v1393 = vld [vmem:[%s1266 + $0x13a] sm:$0xff]
        %v1394 = vld [vmem:[%s1266 + $0x142] sm:$0xff]
        %v1395 = vld [vmem:[%s1266 + $0x152] sm:$0xff]
        %v1396 = vld [vmem:[%s1266 + $0x15a] sm:$0xff]
        %v1397 = vld [vmem:[%s1266 + $0x16a] sm:$0xff]
        %v1398 = vld [vmem:[%s1266 + $0x172] sm:$0xff]
        %v1399 = vlaneseq
        %v1400 = vshrl.u32 %v1399, 7
        %v1401 = vsub.s32 1, %v1400
        %v1402 = vrot.slane %v1263, %v1401
        %v1403 = vmul.f32 %v1367, %v1402
        %v1404 = vmul.f32 %v1368, %v1402
        %v1405 = vmul.f32 %v1369, %v1402
        %v1406 = vmul.f32 %v1370, %v1402
        %v1407 = vmul.f32 %v1371, %v1402
        %v1408 = vmul.f32 %v1372, %v1402
        %v1409 = vmul.f32 %v1373, %v1402
        %v1410 = vmul.f32 %v1374, %v1402
        %v1411 = vmul.f32 %v1375, %v1402
        %v1412 = vmul.f32 %v1376, %v1402
        %v1413 = vmul.f32 %v1377, %v1402
        %v1414 = vmul.f32 %v1378, %v1402
        %v1415 = vmul.f32 %v1379, %v1402
        %v1416 = vmul.f32 %v1380, %v1402
        %v1417 = vmul.f32 %v1381, %v1402
        %v1418 = vmul.f32 %v1382, %v1402
        %v1419 = vmul.f32 %v1383, %v1402
        %v1420 = vmul.f32 %v1384, %v1402
        %v1421 = vmul.f32 %v1385, %v1402
        %v1422 = vmul.f32 %v1386, %v1402
        %v1423 = vmul.f32 %v1387, %v1402
        %v1424 = vmul.f32 %v1388, %v1402
        %v1425 = vmul.f32 %v1389, %v1402
        %v1426 = vmul.f32 %v1390, %v1402
        %v1427 = vmul.f32 %v1391, %v1402
        %v1428 = vmul.f32 %v1392, %v1402
        %v1429 = vmul.f32 %v1393, %v1402
        %v1430 = vmul.f32 %v1394, %v1402
        %v1431 = vmul.f32 %v1395, %v1402
        %v1432 = vmul.f32 %v1396, %v1402
        %v1433 = vmul.f32 %v1397, %v1402
        %v1434 = vmul.f32 %v1398, %v1402
        %v1435 = vadd.f32 %v1335, %v1403
        %v1436 = vadd.f32 %v1336, %v1404
        %v1437 = vadd.f32 %v1337, %v1405
        %v1438 = vadd.f32 %v1338, %v1406
        %v1439 = vadd.f32 %v1339, %v1407
        %v1440 = vadd.f32 %v1340, %v1408
        %v1441 = vadd.f32 %v1341, %v1409
        %v1442 = vadd.f32 %v1342, %v1410
        %v1443 = vadd.f32 %v1343, %v1411
        %v1444 = vadd.f32 %v1344, %v1412
        %v1445 = vadd.f32 %v1345, %v1413
        %v1446 = vadd.f32 %v1346, %v1414
        %v1447 = vadd.f32 %v1347, %v1415
        %v1448 = vadd.f32 %v1348, %v1416
        %v1449 = vadd.f32 %v1349, %v1417
        %v1450 = vadd.f32 %v1350, %v1418
        %v1451 = vadd.f32 %v1351, %v1419
        %v1452 = vadd.f32 %v1352, %v1420
        %v1453 = vadd.f32 %v1353, %v1421
        %v1454 = vadd.f32 %v1354, %v1422
        %v1455 = vadd.f32 %v1355, %v1423
        %v1456 = vadd.f32 %v1356, %v1424
        %v1457 = vadd.f32 %v1357, %v1425
        %v1458 = vadd.f32 %v1358, %v1426
        %v1459 = vadd.f32 %v1359, %v1427
        %v1460 = vadd.f32 %v1360, %v1428
        %v1461 = vadd.f32 %v1361, %v1429
        %v1462 = vadd.f32 %v1362, %v1430
        %v1463 = vadd.f32 %v1363, %v1431
        %v1464 = vadd.f32 %v1364, %v1432
        %v1465 = vadd.f32 %v1365, %v1433
        %v1466 = vadd.f32 %v1366, %v1434
        %v1467 = vld [vmem:[%s1266 + $0x3] sm:$0xff]
        %v1468 = vld [vmem:[%s1266 + $0xb] sm:$0xff]
        %v1469 = vld [vmem:[%s1266 + $0x1b] sm:$0xff]
        %v1470 = vld [vmem:[%s1266 + $0x23] sm:$0xff]
        %v1471 = vld [vmem:[%s1266 + $0x33] sm:$0xff]
        %v1472 = vld [vmem:[%s1266 + $0x3b] sm:$0xff]
        %v1473 = vld [vmem:[%s1266 + $0x4b] sm:$0xff]
        %v1474 = vld [vmem:[%s1266 + $0x53] sm:$0xff]
        %v1475 = vld [vmem:[%s1266 + $0x63] sm:$0xff]
        %v1476 = vld [vmem:[%s1266 + $0x6b] sm:$0xff]
        %v1477 = vld [vmem:[%s1266 + $0x7b] sm:$0xff]
        %v1478 = vld [vmem:[%s1266 + $0x83] sm:$0xff]
        %v1479 = vld [vmem:[%s1266 + $0x93] sm:$0xff]
        %v1480 = vld [vmem:[%s1266 + $0x9b] sm:$0xff]
        %v1481 = vld [vmem:[%s1266 + $0xab] sm:$0xff]
        %v1482 = vld [vmem:[%s1266 + $0xb3] sm:$0xff]
        %v1483 = vld [vmem:[%s1266 + $0xc3] sm:$0xff]
        %v1484 = vld [vmem:[%s1266 + $0xcb] sm:$0xff]
        %v1485 = vld [vmem:[%s1266 + $0xdb] sm:$0xff]
        %v1486 = vld [vmem:[%s1266 + $0xe3] sm:$0xff]
        %v1487 = vld [vmem:[%s1266 + $0xf3] sm:$0xff]
        %v1488 = vld [vmem:[%s1266 + $0xfb] sm:$0xff]
        %v1489 = vld [vmem:[%s1266 + $0x10b] sm:$0xff]
        %v1490 = vld [vmem:[%s1266 + $0x113] sm:$0xff]
        %v1491 = vld [vmem:[%s1266 + $0x123] sm:$0xff]
        %v1492 = vld [vmem:[%s1266 + $0x12b] sm:$0xff]
        %v1493 = vld [vmem:[%s1266 + $0x13b] sm:$0xff]
        %v1494 = vld [vmem:[%s1266 + $0x143] sm:$0xff]
        %v1495 = vld [vmem:[%s1266 + $0x153] sm:$0xff]
        %v1496 = vld [vmem:[%s1266 + $0x15b] sm:$0xff]
        %v1497 = vld [vmem:[%s1266 + $0x16b] sm:$0xff]
        %v1498 = vld [vmem:[%s1266 + $0x173] sm:$0xff]
        %v1499 = vlaneseq
        %v1500 = vshrl.u32 %v1499, 7
        %v1501 = vsub.s32 2, %v1500
        %v1502 = vrot.slane %v1263, %v1501
        %v1503 = vmul.f32 %v1467, %v1502
        %v1504 = vmul.f32 %v1468, %v1502
        %v1505 = vmul.f32 %v1469, %v1502
        %v1506 = vmul.f32 %v1470, %v1502
        %v1507 = vmul.f32 %v1471, %v1502
        %v1508 = vmul.f32 %v1472, %v1502
        %v1509 = vmul.f32 %v1473, %v1502
        %v1510 = vmul.f32 %v1474, %v1502
        %v1511 = vmul.f32 %v1475, %v1502
        %v1512 = vmul.f32 %v1476, %v1502
        %v1513 = vmul.f32 %v1477, %v1502
        %v1514 = vmul.f32 %v1478, %v1502
        %v1515 = vmul.f32 %v1479, %v1502
        %v1516 = vmul.f32 %v1480, %v1502
        %v1517 = vmul.f32 %v1481, %v1502
        %v1518 = vmul.f32 %v1482, %v1502
        %v1519 = vmul.f32 %v1483, %v1502
        %v1520 = vmul.f32 %v1484, %v1502
        %v1521 = vmul.f32 %v1485, %v1502
        %v1522 = vmul.f32 %v1486, %v1502
        %v1523 = vmul.f32 %v1487, %v1502
        %v1524 = vmul.f32 %v1488, %v1502
        %v1525 = vmul.f32 %v1489, %v1502
        %v1526 = vmul.f32 %v1490, %v1502
        %v1527 = vmul.f32 %v1491, %v1502
        %v1528 = vmul.f32 %v1492, %v1502
        %v1529 = vmul.f32 %v1493, %v1502
        %v1530 = vmul.f32 %v1494, %v1502
        %v1531 = vmul.f32 %v1495, %v1502
        %v1532 = vmul.f32 %v1496, %v1502
        %v1533 = vmul.f32 %v1497, %v1502
        %v1534 = vmul.f32 %v1498, %v1502
        %v1535 = vadd.f32 %v1435, %v1503
        %v1536 = vadd.f32 %v1436, %v1504
        %v1537 = vadd.f32 %v1437, %v1505
        %v1538 = vadd.f32 %v1438, %v1506
        %v1539 = vadd.f32 %v1439, %v1507
        %v1540 = vadd.f32 %v1440, %v1508
        %v1541 = vadd.f32 %v1441, %v1509
        %v1542 = vadd.f32 %v1442, %v1510
        %v1543 = vadd.f32 %v1443, %v1511
        %v1544 = vadd.f32 %v1444, %v1512
        %v1545 = vadd.f32 %v1445, %v1513
        %v1546 = vadd.f32 %v1446, %v1514
        %v1547 = vadd.f32 %v1447, %v1515
        %v1548 = vadd.f32 %v1448, %v1516
        %v1549 = vadd.f32 %v1449, %v1517
        %v1550 = vadd.f32 %v1450, %v1518
        %v1551 = vadd.f32 %v1451, %v1519
        %v1552 = vadd.f32 %v1452, %v1520
        %v1553 = vadd.f32 %v1453, %v1521
        %v1554 = vadd.f32 %v1454, %v1522
        %v1555 = vadd.f32 %v1455, %v1523
        %v1556 = vadd.f32 %v1456, %v1524
        %v1557 = vadd.f32 %v1457, %v1525
        %v1558 = vadd.f32 %v1458, %v1526
        %v1559 = vadd.f32 %v1459, %v1527
        %v1560 = vadd.f32 %v1460, %v1528
        %v1561 = vadd.f32 %v1461, %v1529
        %v1562 = vadd.f32 %v1462, %v1530
        %v1563 = vadd.f32 %v1463, %v1531
        %v1564 = vadd.f32 %v1464, %v1532
        %v1565 = vadd.f32 %v1465, %v1533
        %v1566 = vadd.f32 %v1466, %v1534
        %v1567 = vld [vmem:[%s1230 + $0x1] sm:$0xff]
        %v1568 = vld [vmem:[%s1230 + $0x9] sm:$0xff]
        %v1569 = vld [vmem:[%s1230 + $0x19] sm:$0xff]
        %v1570 = vld [vmem:[%s1230 + $0x21] sm:$0xff]
        %v1571 = vld [vmem:[%s1230 + $0x31] sm:$0xff]
        %v1572 = vld [vmem:[%s1230 + $0x39] sm:$0xff]
        %v1573 = vld [vmem:[%s1230 + $0x49] sm:$0xff]
        %v1574 = vld [vmem:[%s1230 + $0x51] sm:$0xff]
        %v1575 = vld [vmem:[%s1230 + $0x61] sm:$0xff]
        %v1576 = vld [vmem:[%s1230 + $0x69] sm:$0xff]
        %v1577 = vld [vmem:[%s1230 + $0x79] sm:$0xff]
        %v1578 = vld [vmem:[%s1230 + $0x81] sm:$0xff]
        %v1579 = vld [vmem:[%s1230 + $0x91] sm:$0xff]
        %v1580 = vld [vmem:[%s1230 + $0x99] sm:$0xff]
        %v1581 = vld [vmem:[%s1230 + $0xa9] sm:$0xff]
        %v1582 = vld [vmem:[%s1230 + $0xb1] sm:$0xff]
        %v1583 = vld [vmem:[%s1230 + $0xc1] sm:$0xff]
        %v1584 = vld [vmem:[%s1230 + $0xc9] sm:$0xff]
        %v1585 = vld [vmem:[%s1230 + $0xd9] sm:$0xff]
        %v1586 = vld [vmem:[%s1230 + $0xe1] sm:$0xff]
        %v1587 = vld [vmem:[%s1230 + $0xf1] sm:$0xff]
        %v1588 = vld [vmem:[%s1230 + $0xf9] sm:$0xff]
        %v1589 = vld [vmem:[%s1230 + $0x109] sm:$0xff]
        %v1590 = vld [vmem:[%s1230 + $0x111] sm:$0xff]
        %v1591 = vld [vmem:[%s1230 + $0x121] sm:$0xff]
        %v1592 = vld [vmem:[%s1230 + $0x129] sm:$0xff]
        %v1593 = vld [vmem:[%s1230 + $0x139] sm:$0xff]
        %v1594 = vld [vmem:[%s1230 + $0x141] sm:$0xff]
        %v1595 = vld [vmem:[%s1230 + $0x151] sm:$0xff]
        %v1596 = vld [vmem:[%s1230 + $0x159] sm:$0xff]
        %v1597 = vld [vmem:[%s1230 + $0x169] sm:$0xff]
        %v1598 = vld [vmem:[%s1230 + $0x171] sm:$0xff]
        %v1599 = vlaneseq
        %v1600 = vshrl.u32 %v1599, 7
        %v1601 = vsub.s32 0, %v1600
        %v1602 = vrot.slane %v1264, %v1601
        %v1603 = vmul.f32 %v1567, %v1602
        %v1604 = vmul.f32 %v1568, %v1602
        %v1605 = vmul.f32 %v1569, %v1602
        %v1606 = vmul.f32 %v1570, %v1602
        %v1607 = vmul.f32 %v1571, %v1602
        %v1608 = vmul.f32 %v1572, %v1602
        %v1609 = vmul.f32 %v1573, %v1602
        %v1610 = vmul.f32 %v1574, %v1602
        %v1611 = vmul.f32 %v1575, %v1602
        %v1612 = vmul.f32 %v1576, %v1602
        %v1613 = vmul.f32 %v1577, %v1602
        %v1614 = vmul.f32 %v1578, %v1602
        %v1615 = vmul.f32 %v1579, %v1602
        %v1616 = vmul.f32 %v1580, %v1602
        %v1617 = vmul.f32 %v1581, %v1602
        %v1618 = vmul.f32 %v1582, %v1602
        %v1619 = vmul.f32 %v1583, %v1602
        %v1620 = vmul.f32 %v1584, %v1602
        %v1621 = vmul.f32 %v1585, %v1602
        %v1622 = vmul.f32 %v1586, %v1602
        %v1623 = vmul.f32 %v1587, %v1602
        %v1624 = vmul.f32 %v1588, %v1602
        %v1625 = vmul.f32 %v1589, %v1602
        %v1626 = vmul.f32 %v1590, %v1602
        %v1627 = vmul.f32 %v1591, %v1602
        %v1628 = vmul.f32 %v1592, %v1602
        %v1629 = vmul.f32 %v1593, %v1602
        %v1630 = vmul.f32 %v1594, %v1602
        %v1631 = vmul.f32 %v1595, %v1602
        %v1632 = vmul.f32 %v1596, %v1602
        %v1633 = vmul.f32 %v1597, %v1602
        %v1634 = vmul.f32 %v1598, %v1602
        %v1635 = vadd.f32 %v1535, %v1603
        %v1636 = vadd.f32 %v1536, %v1604
        %v1637 = vadd.f32 %v1537, %v1605
        %v1638 = vadd.f32 %v1538, %v1606
        %v1639 = vadd.f32 %v1539, %v1607
        %v1640 = vadd.f32 %v1540, %v1608
        %v1641 = vadd.f32 %v1541, %v1609
        %v1642 = vadd.f32 %v1542, %v1610
        %v1643 = vadd.f32 %v1543, %v1611
        %v1644 = vadd.f32 %v1544, %v1612
        %v1645 = vadd.f32 %v1545, %v1613
        %v1646 = vadd.f32 %v1546, %v1614
        %v1647 = vadd.f32 %v1547, %v1615
        %v1648 = vadd.f32 %v1548, %v1616
        %v1649 = vadd.f32 %v1549, %v1617
        %v1650 = vadd.f32 %v1550, %v1618
        %v1651 = vadd.f32 %v1551, %v1619
        %v1652 = vadd.f32 %v1552, %v1620
        %v1653 = vadd.f32 %v1553, %v1621
        %v1654 = vadd.f32 %v1554, %v1622
        %v1655 = vadd.f32 %v1555, %v1623
        %v1656 = vadd.f32 %v1556, %v1624
        %v1657 = vadd.f32 %v1557, %v1625
        %v1658 = vadd.f32 %v1558, %v1626
        %v1659 = vadd.f32 %v1559, %v1627
        %v1660 = vadd.f32 %v1560, %v1628
        %v1661 = vadd.f32 %v1561, %v1629
        %v1662 = vadd.f32 %v1562, %v1630
        %v1663 = vadd.f32 %v1563, %v1631
        %v1664 = vadd.f32 %v1564, %v1632
        %v1665 = vadd.f32 %v1565, %v1633
        %v1666 = vadd.f32 %v1566, %v1634
        %v1667 = vld [vmem:[%s1230 + $0x2] sm:$0xff]
        %v1668 = vld [vmem:[%s1230 + $0xa] sm:$0xff]
        %v1669 = vld [vmem:[%s1230 + $0x1a] sm:$0xff]
        %v1670 = vld [vmem:[%s1230 + $0x22] sm:$0xff]
        %v1671 = vld [vmem:[%s1230 + $0x32] sm:$0xff]
        %v1672 = vld [vmem:[%s1230 + $0x3a] sm:$0xff]
        %v1673 = vld [vmem:[%s1230 + $0x4a] sm:$0xff]
        %v1674 = vld [vmem:[%s1230 + $0x52] sm:$0xff]
        %v1675 = vld [vmem:[%s1230 + $0x62] sm:$0xff]
        %v1676 = vld [vmem:[%s1230 + $0x6a] sm:$0xff]
        %v1677 = vld [vmem:[%s1230 + $0x7a] sm:$0xff]
        %v1678 = vld [vmem:[%s1230 + $0x82] sm:$0xff]
        %v1679 = vld [vmem:[%s1230 + $0x92] sm:$0xff]
        %v1680 = vld [vmem:[%s1230 + $0x9a] sm:$0xff]
        %v1681 = vld [vmem:[%s1230 + $0xaa] sm:$0xff]
        %v1682 = vld [vmem:[%s1230 + $0xb2] sm:$0xff]
        %v1683 = vld [vmem:[%s1230 + $0xc2] sm:$0xff]
        %v1684 = vld [vmem:[%s1230 + $0xca] sm:$0xff]
        %v1685 = vld [vmem:[%s1230 + $0xda] sm:$0xff]
        %v1686 = vld [vmem:[%s1230 + $0xe2] sm:$0xff]
        %v1687 = vld [vmem:[%s1230 + $0xf2] sm:$0xff]
        %v1688 = vld [vmem:[%s1230 + $0xfa] sm:$0xff]
        %v1689 = vld [vmem:[%s1230 + $0x10a] sm:$0xff]
        %v1690 = vld [vmem:[%s1230 + $0x112] sm:$0xff]
        %v1691 = vld [vmem:[%s1230 + $0x122] sm:$0xff]
        %v1692 = vld [vmem:[%s1230 + $0x12a] sm:$0xff]
        %v1693 = vld [vmem:[%s1230 + $0x13a] sm:$0xff]
        %v1694 = vld [vmem:[%s1230 + $0x142] sm:$0xff]
        %v1695 = vld [vmem:[%s1230 + $0x152] sm:$0xff]
        %v1696 = vld [vmem:[%s1230 + $0x15a] sm:$0xff]
        %v1697 = vld [vmem:[%s1230 + $0x16a] sm:$0xff]
        %v1698 = vld [vmem:[%s1230 + $0x172] sm:$0xff]
        %v1699 = vlaneseq
        %v1700 = vshrl.u32 %v1699, 7
        %v1701 = vsub.s32 1, %v1700
        %v1702 = vrot.slane %v1264, %v1701
        %v1703 = vmul.f32 %v1667, %v1702
        %v1704 = vmul.f32 %v1668, %v1702
        %v1705 = vmul.f32 %v1669, %v1702
        %v1706 = vmul.f32 %v1670, %v1702
        %v1707 = vmul.f32 %v1671, %v1702
        %v1708 = vmul.f32 %v1672, %v1702
        %v1709 = vmul.f32 %v1673, %v1702
        %v1710 = vmul.f32 %v1674, %v1702
        %v1711 = vmul.f32 %v1675, %v1702
        %v1712 = vmul.f32 %v1676, %v1702
        %v1713 = vmul.f32 %v1677, %v1702
        %v1714 = vmul.f32 %v1678, %v1702
        %v1715 = vmul.f32 %v1679, %v1702
        %v1716 = vmul.f32 %v1680, %v1702
        %v1717 = vmul.f32 %v1681, %v1702
        %v1718 = vmul.f32 %v1682, %v1702
        %v1719 = vmul.f32 %v1683, %v1702
        %v1720 = vmul.f32 %v1684, %v1702
        %v1721 = vmul.f32 %v1685, %v1702
        %v1722 = vmul.f32 %v1686, %v1702
        %v1723 = vmul.f32 %v1687, %v1702
        %v1724 = vmul.f32 %v1688, %v1702
        %v1725 = vmul.f32 %v1689, %v1702
        %v1726 = vmul.f32 %v1690, %v1702
        %v1727 = vmul.f32 %v1691, %v1702
        %v1728 = vmul.f32 %v1692, %v1702
        %v1729 = vmul.f32 %v1693, %v1702
        %v1730 = vmul.f32 %v1694, %v1702
        %v1731 = vmul.f32 %v1695, %v1702
        %v1732 = vmul.f32 %v1696, %v1702
        %v1733 = vmul.f32 %v1697, %v1702
        %v1734 = vmul.f32 %v1698, %v1702
        %v1735 = vadd.f32 %v1635, %v1703
        %v1736 = vadd.f32 %v1636, %v1704
        %v1737 = vadd.f32 %v1637, %v1705
        %v1738 = vadd.f32 %v1638, %v1706
        %v1739 = vadd.f32 %v1639, %v1707
        %v1740 = vadd.f32 %v1640, %v1708
        %v1741 = vadd.f32 %v1641, %v1709
        %v1742 = vadd.f32 %v1642, %v1710
        %v1743 = vadd.f32 %v1643, %v1711
        %v1744 = vadd.f32 %v1644, %v1712
        %v1745 = vadd.f32 %v1645, %v1713
        %v1746 = vadd.f32 %v1646, %v1714
        %v1747 = vadd.f32 %v1647, %v1715
        %v1748 = vadd.f32 %v1648, %v1716
        %v1749 = vadd.f32 %v1649, %v1717
        %v1750 = vadd.f32 %v1650, %v1718
        %v1751 = vadd.f32 %v1651, %v1719
        %v1752 = vadd.f32 %v1652, %v1720
        %v1753 = vadd.f32 %v1653, %v1721
        %v1754 = vadd.f32 %v1654, %v1722
        %v1755 = vadd.f32 %v1655, %v1723
        %v1756 = vadd.f32 %v1656, %v1724
        %v1757 = vadd.f32 %v1657, %v1725
        %v1758 = vadd.f32 %v1658, %v1726
        %v1759 = vadd.f32 %v1659, %v1727
        %v1760 = vadd.f32 %v1660, %v1728
        %v1761 = vadd.f32 %v1661, %v1729
        %v1762 = vadd.f32 %v1662, %v1730
        %v1763 = vadd.f32 %v1663, %v1731
        %v1764 = vadd.f32 %v1664, %v1732
        %v1765 = vadd.f32 %v1665, %v1733
        %v1766 = vadd.f32 %v1666, %v1734
        %v1767 = vld [vmem:[%s1230 + $0x3] sm:$0xff]
        %v1768 = vld [vmem:[%s1230 + $0xb] sm:$0xff]
        %v1769 = vld [vmem:[%s1230 + $0x1b] sm:$0xff]
        %v1770 = vld [vmem:[%s1230 + $0x23] sm:$0xff]
        %v1771 = vld [vmem:[%s1230 + $0x33] sm:$0xff]
        %v1772 = vld [vmem:[%s1230 + $0x3b] sm:$0xff]
        %v1773 = vld [vmem:[%s1230 + $0x4b] sm:$0xff]
        %v1774 = vld [vmem:[%s1230 + $0x53] sm:$0xff]
        %v1775 = vld [vmem:[%s1230 + $0x63] sm:$0xff]
        %v1776 = vld [vmem:[%s1230 + $0x6b] sm:$0xff]
        %v1777 = vld [vmem:[%s1230 + $0x7b] sm:$0xff]
        %v1778 = vld [vmem:[%s1230 + $0x83] sm:$0xff]
        %v1779 = vld [vmem:[%s1230 + $0x93] sm:$0xff]
        %v1780 = vld [vmem:[%s1230 + $0x9b] sm:$0xff]
        %v1781 = vld [vmem:[%s1230 + $0xab] sm:$0xff]
        %v1782 = vld [vmem:[%s1230 + $0xb3] sm:$0xff]
        %v1783 = vld [vmem:[%s1230 + $0xc3] sm:$0xff]
        %v1784 = vld [vmem:[%s1230 + $0xcb] sm:$0xff]
        %v1785 = vld [vmem:[%s1230 + $0xdb] sm:$0xff]
        %v1786 = vld [vmem:[%s1230 + $0xe3] sm:$0xff]
        %v1787 = vld [vmem:[%s1230 + $0xf3] sm:$0xff]
        %v1788 = vld [vmem:[%s1230 + $0xfb] sm:$0xff]
        %v1789 = vld [vmem:[%s1230 + $0x10b] sm:$0xff]
        %v1790 = vld [vmem:[%s1230 + $0x113] sm:$0xff]
        %v1791 = vld [vmem:[%s1230 + $0x123] sm:$0xff]
        %v1792 = vld [vmem:[%s1230 + $0x12b] sm:$0xff]
        %v1793 = vld [vmem:[%s1230 + $0x13b] sm:$0xff]
        %v1794 = vld [vmem:[%s1230 + $0x143] sm:$0xff]
        %v1795 = vld [vmem:[%s1230 + $0x153] sm:$0xff]
        %v1796 = vld [vmem:[%s1230 + $0x15b] sm:$0xff]
        %v1797 = vld [vmem:[%s1230 + $0x16b] sm:$0xff]
        %v1798 = vld [vmem:[%s1230 + $0x173] sm:$0xff]
        %v1799 = vlaneseq
        %v1800 = vshrl.u32 %v1799, 7
        %v1801 = vsub.s32 2, %v1800
        %v1802 = vrot.slane %v1264, %v1801
        %v1803 = vmul.f32 %v1767, %v1802
        %v1804 = vmul.f32 %v1768, %v1802
        %v1805 = vmul.f32 %v1769, %v1802
        %v1806 = vmul.f32 %v1770, %v1802
        %v1807 = vmul.f32 %v1771, %v1802
        %v1808 = vmul.f32 %v1772, %v1802
        %v1809 = vmul.f32 %v1773, %v1802
        %v1810 = vmul.f32 %v1774, %v1802
        %v1811 = vmul.f32 %v1775, %v1802
        %v1812 = vmul.f32 %v1776, %v1802
        %v1813 = vmul.f32 %v1777, %v1802
        %v1814 = vmul.f32 %v1778, %v1802
        %v1815 = vmul.f32 %v1779, %v1802
        %v1816 = vmul.f32 %v1780, %v1802
        %v1817 = vmul.f32 %v1781, %v1802
        %v1818 = vmul.f32 %v1782, %v1802
        %v1819 = vmul.f32 %v1783, %v1802
        %v1820 = vmul.f32 %v1784, %v1802
        %v1821 = vmul.f32 %v1785, %v1802
        %v1822 = vmul.f32 %v1786, %v1802
        %v1823 = vmul.f32 %v1787, %v1802
        %v1824 = vmul.f32 %v1788, %v1802
        %v1825 = vmul.f32 %v1789, %v1802
        %v1826 = vmul.f32 %v1790, %v1802
        %v1827 = vmul.f32 %v1791, %v1802
        %v1828 = vmul.f32 %v1792, %v1802
        %v1829 = vmul.f32 %v1793, %v1802
        %v1830 = vmul.f32 %v1794, %v1802
        %v1831 = vmul.f32 %v1795, %v1802
        %v1832 = vmul.f32 %v1796, %v1802
        %v1833 = vmul.f32 %v1797, %v1802
        %v1834 = vmul.f32 %v1798, %v1802
        %v1835 = vadd.f32 %v1735, %v1803
        %v1836 = vadd.f32 %v1736, %v1804
        %v1837 = vadd.f32 %v1737, %v1805
        %v1838 = vadd.f32 %v1738, %v1806
        %v1839 = vadd.f32 %v1739, %v1807
        %v1840 = vadd.f32 %v1740, %v1808
        %v1841 = vadd.f32 %v1741, %v1809
        %v1842 = vadd.f32 %v1742, %v1810
        %v1843 = vadd.f32 %v1743, %v1811
        %v1844 = vadd.f32 %v1744, %v1812
        %v1845 = vadd.f32 %v1745, %v1813
        %v1846 = vadd.f32 %v1746, %v1814
        %v1847 = vadd.f32 %v1747, %v1815
        %v1848 = vadd.f32 %v1748, %v1816
        %v1849 = vadd.f32 %v1749, %v1817
        %v1850 = vadd.f32 %v1750, %v1818
        %v1851 = vadd.f32 %v1751, %v1819
        %v1852 = vadd.f32 %v1752, %v1820
        %v1853 = vadd.f32 %v1753, %v1821
        %v1854 = vadd.f32 %v1754, %v1822
        %v1855 = vadd.f32 %v1755, %v1823
        %v1856 = vadd.f32 %v1756, %v1824
        %v1857 = vadd.f32 %v1757, %v1825
        %v1858 = vadd.f32 %v1758, %v1826
        %v1859 = vadd.f32 %v1759, %v1827
        %v1860 = vadd.f32 %v1760, %v1828
        %v1861 = vadd.f32 %v1761, %v1829
        %v1862 = vadd.f32 %v1762, %v1830
        %v1863 = vadd.f32 %v1763, %v1831
        %v1864 = vadd.f32 %v1764, %v1832
        %v1865 = vadd.f32 %v1765, %v1833
        %v1866 = vadd.f32 %v1766, %v1834
        %s1867 = scalar_lea.vmem [#allocation2], 72
        %v1868 = vld [vmem:[%s1867 + $0x1] sm:$0xff]
        %v1869 = vld [vmem:[%s1867 + $0x9] sm:$0xff]
        %v1870 = vld [vmem:[%s1867 + $0x19] sm:$0xff]
        %v1871 = vld [vmem:[%s1867 + $0x21] sm:$0xff]
        %v1872 = vld [vmem:[%s1867 + $0x31] sm:$0xff]
        %v1873 = vld [vmem:[%s1867 + $0x39] sm:$0xff]
        %v1874 = vld [vmem:[%s1867 + $0x49] sm:$0xff]
        %v1875 = vld [vmem:[%s1867 + $0x51] sm:$0xff]
        %v1876 = vld [vmem:[%s1867 + $0x61] sm:$0xff]
        %v1877 = vld [vmem:[%s1867 + $0x69] sm:$0xff]
        %v1878 = vld [vmem:[%s1867 + $0x79] sm:$0xff]
        %v1879 = vld [vmem:[%s1867 + $0x81] sm:$0xff]
        %v1880 = vld [vmem:[%s1867 + $0x91] sm:$0xff]
        %v1881 = vld [vmem:[%s1867 + $0x99] sm:$0xff]
        %v1882 = vld [vmem:[%s1867 + $0xa9] sm:$0xff]
        %v1883 = vld [vmem:[%s1867 + $0xb1] sm:$0xff]
        %v1884 = vld [vmem:[%s1867 + $0xc1] sm:$0xff]
        %v1885 = vld [vmem:[%s1867 + $0xc9] sm:$0xff]
        %v1886 = vld [vmem:[%s1867 + $0xd9] sm:$0xff]
        %v1887 = vld [vmem:[%s1867 + $0xe1] sm:$0xff]
        %v1888 = vld [vmem:[%s1867 + $0xf1] sm:$0xff]
        %v1889 = vld [vmem:[%s1867 + $0xf9] sm:$0xff]
        %v1890 = vld [vmem:[%s1867 + $0x109] sm:$0xff]
        %v1891 = vld [vmem:[%s1867 + $0x111] sm:$0xff]
        %v1892 = vld [vmem:[%s1867 + $0x121] sm:$0xff]
        %v1893 = vld [vmem:[%s1867 + $0x129] sm:$0xff]
        %v1894 = vld [vmem:[%s1867 + $0x139] sm:$0xff]
        %v1895 = vld [vmem:[%s1867 + $0x141] sm:$0xff]
        %v1896 = vld [vmem:[%s1867 + $0x151] sm:$0xff]
        %v1897 = vld [vmem:[%s1867 + $0x159] sm:$0xff]
        %v1898 = vld [vmem:[%s1867 + $0x169] sm:$0xff]
        %v1899 = vld [vmem:[%s1867 + $0x171] sm:$0xff]
        %v1900 = vlaneseq
        %v1901 = vshrl.u32 %v1900, 7
        %v1902 = vsub.s32 0, %v1901
        %v1903 = vrot.slane %v1265, %v1902
        %v1904 = vmul.f32 %v1868, %v1903
        %v1905 = vmul.f32 %v1869, %v1903
        %v1906 = vmul.f32 %v1870, %v1903
        %v1907 = vmul.f32 %v1871, %v1903
        %v1908 = vmul.f32 %v1872, %v1903
        %v1909 = vmul.f32 %v1873, %v1903
        %v1910 = vmul.f32 %v1874, %v1903
        %v1911 = vmul.f32 %v1875, %v1903
        %v1912 = vmul.f32 %v1876, %v1903
        %v1913 = vmul.f32 %v1877, %v1903
        %v1914 = vmul.f32 %v1878, %v1903
        %v1915 = vmul.f32 %v1879, %v1903
        %v1916 = vmul.f32 %v1880, %v1903
        %v1917 = vmul.f32 %v1881, %v1903
        %v1918 = vmul.f32 %v1882, %v1903
        %v1919 = vmul.f32 %v1883, %v1903
        %v1920 = vmul.f32 %v1884, %v1903
        %v1921 = vmul.f32 %v1885, %v1903
        %v1922 = vmul.f32 %v1886, %v1903
        %v1923 = vmul.f32 %v1887, %v1903
        %v1924 = vmul.f32 %v1888, %v1903
        %v1925 = vmul.f32 %v1889, %v1903
        %v1926 = vmul.f32 %v1890, %v1903
        %v1927 = vmul.f32 %v1891, %v1903
        %v1928 = vmul.f32 %v1892, %v1903
        %v1929 = vmul.f32 %v1893, %v1903
        %v1930 = vmul.f32 %v1894, %v1903
        %v1931 = vmul.f32 %v1895, %v1903
        %v1932 = vmul.f32 %v1896, %v1903
        %v1933 = vmul.f32 %v1897, %v1903
        %v1934 = vmul.f32 %v1898, %v1903
        %v1935 = vmul.f32 %v1899, %v1903
        %v1936 = vadd.f32 %v1835, %v1904
        %v1937 = vadd.f32 %v1836, %v1905
        %v1938 = vadd.f32 %v1837, %v1906
        %v1939 = vadd.f32 %v1838, %v1907
        %v1940 = vadd.f32 %v1839, %v1908
        %v1941 = vadd.f32 %v1840, %v1909
        %v1942 = vadd.f32 %v1841, %v1910
        %v1943 = vadd.f32 %v1842, %v1911
        %v1944 = vadd.f32 %v1843, %v1912
        %v1945 = vadd.f32 %v1844, %v1913
        %v1946 = vadd.f32 %v1845, %v1914
        %v1947 = vadd.f32 %v1846, %v1915
        %v1948 = vadd.f32 %v1847, %v1916
        %v1949 = vadd.f32 %v1848, %v1917
        %v1950 = vadd.f32 %v1849, %v1918
        %v1951 = vadd.f32 %v1850, %v1919
        %v1952 = vadd.f32 %v1851, %v1920
        %v1953 = vadd.f32 %v1852, %v1921
        %v1954 = vadd.f32 %v1853, %v1922
        %v1955 = vadd.f32 %v1854, %v1923
        %v1956 = vadd.f32 %v1855, %v1924
        %v1957 = vadd.f32 %v1856, %v1925
        %v1958 = vadd.f32 %v1857, %v1926
        %v1959 = vadd.f32 %v1858, %v1927
        %v1960 = vadd.f32 %v1859, %v1928
        %v1961 = vadd.f32 %v1860, %v1929
        %v1962 = vadd.f32 %v1861, %v1930
        %v1963 = vadd.f32 %v1862, %v1931
        %v1964 = vadd.f32 %v1863, %v1932
        %v1965 = vadd.f32 %v1864, %v1933
        %v1966 = vadd.f32 %v1865, %v1934
        %v1967 = vadd.f32 %v1866, %v1935
        %v1968 = vld [vmem:[%s1867 + $0x2] sm:$0xff]
        %v1969 = vld [vmem:[%s1867 + $0xa] sm:$0xff]
        %v1970 = vld [vmem:[%s1867 + $0x1a] sm:$0xff]
        %v1971 = vld [vmem:[%s1867 + $0x22] sm:$0xff]
        %v1972 = vld [vmem:[%s1867 + $0x32] sm:$0xff]
        %v1973 = vld [vmem:[%s1867 + $0x3a] sm:$0xff]
        %v1974 = vld [vmem:[%s1867 + $0x4a] sm:$0xff]
        %v1975 = vld [vmem:[%s1867 + $0x52] sm:$0xff]
        %v1976 = vld [vmem:[%s1867 + $0x62] sm:$0xff]
        %v1977 = vld [vmem:[%s1867 + $0x6a] sm:$0xff]
        %v1978 = vld [vmem:[%s1867 + $0x7a] sm:$0xff]
        %v1979 = vld [vmem:[%s1867 + $0x82] sm:$0xff]
        %v1980 = vld [vmem:[%s1867 + $0x92] sm:$0xff]
        %v1981 = vld [vmem:[%s1867 + $0x9a] sm:$0xff]
        %v1982 = vld [vmem:[%s1867 + $0xaa] sm:$0xff]
        %v1983 = vld [vmem:[%s1867 + $0xb2] sm:$0xff]
        %v1984 = vld [vmem:[%s1867 + $0xc2] sm:$0xff]
        %v1985 = vld [vmem:[%s1867 + $0xca] sm:$0xff]
        %v1986 = vld [vmem:[%s1867 + $0xda] sm:$0xff]
        %v1987 = vld [vmem:[%s1867 + $0xe2] sm:$0xff]
        %v1988 = vld [vmem:[%s1867 + $0xf2] sm:$0xff]
        %v1989 = vld [vmem:[%s1867 + $0xfa] sm:$0xff]
        %v1990 = vld [vmem:[%s1867 + $0x10a] sm:$0xff]
        %v1991 = vld [vmem:[%s1867 + $0x112] sm:$0xff]
        %v1992 = vld [vmem:[%s1867 + $0x122] sm:$0xff]
        %v1993 = vld [vmem:[%s1867 + $0x12a] sm:$0xff]
        %v1994 = vld [vmem:[%s1867 + $0x13a] sm:$0xff]
        %v1995 = vld [vmem:[%s1867 + $0x142] sm:$0xff]
        %v1996 = vld [vmem:[%s1867 + $0x152] sm:$0xff]
        %v1997 = vld [vmem:[%s1867 + $0x15a] sm:$0xff]
        %v1998 = vld [vmem:[%s1867 + $0x16a] sm:$0xff]
        %v1999 = vld [vmem:[%s1867 + $0x172] sm:$0xff]
        %v2000 = vlaneseq
        %v2001 = vshrl.u32 %v2000, 7
        %v2002 = vsub.s32 1, %v2001
        %v2003 = vrot.slane %v1265, %v2002
        %v2004 = vmul.f32 %v1968, %v2003
        %v2005 = vmul.f32 %v1969, %v2003
        %v2006 = vmul.f32 %v1970, %v2003
        %v2007 = vmul.f32 %v1971, %v2003
        %v2008 = vmul.f32 %v1972, %v2003
        %v2009 = vmul.f32 %v1973, %v2003
        %v2010 = vmul.f32 %v1974, %v2003
        %v2011 = vmul.f32 %v1975, %v2003
        %v2012 = vmul.f32 %v1976, %v2003
        %v2013 = vmul.f32 %v1977, %v2003
        %v2014 = vmul.f32 %v1978, %v2003
        %v2015 = vmul.f32 %v1979, %v2003
        %v2016 = vmul.f32 %v1980, %v2003
        %v2017 = vmul.f32 %v1981, %v2003
        %v2018 = vmul.f32 %v1982, %v2003
        %v2019 = vmul.f32 %v1983, %v2003
        %v2020 = vmul.f32 %v1984, %v2003
        %v2021 = vmul.f32 %v1985, %v2003
        %v2022 = vmul.f32 %v1986, %v2003
        %v2023 = vmul.f32 %v1987, %v2003
        %v2024 = vmul.f32 %v1988, %v2003
        %v2025 = vmul.f32 %v1989, %v2003
        %v2026 = vmul.f32 %v1990, %v2003
        %v2027 = vmul.f32 %v1991, %v2003
        %v2028 = vmul.f32 %v1992, %v2003
        %v2029 = vmul.f32 %v1993, %v2003
        %v2030 = vmul.f32 %v1994, %v2003
        %v2031 = vmul.f32 %v1995, %v2003
        %v2032 = vmul.f32 %v1996, %v2003
        %v2033 = vmul.f32 %v1997, %v2003
        %v2034 = vmul.f32 %v1998, %v2003
        %v2035 = vmul.f32 %v1999, %v2003
        %v2036 = vadd.f32 %v1936, %v2004
        %v2037 = vadd.f32 %v1937, %v2005
        %v2038 = vadd.f32 %v1938, %v2006
        %v2039 = vadd.f32 %v1939, %v2007
        %v2040 = vadd.f32 %v1940, %v2008
        %v2041 = vadd.f32 %v1941, %v2009
        %v2042 = vadd.f32 %v1942, %v2010
        %v2043 = vadd.f32 %v1943, %v2011
        %v2044 = vadd.f32 %v1944, %v2012
        %v2045 = vadd.f32 %v1945, %v2013
        %v2046 = vadd.f32 %v1946, %v2014
        %v2047 = vadd.f32 %v1947, %v2015
        %v2048 = vadd.f32 %v1948, %v2016
        %v2049 = vadd.f32 %v1949, %v2017
        %v2050 = vadd.f32 %v1950, %v2018
        %v2051 = vadd.f32 %v1951, %v2019
        %v2052 = vadd.f32 %v1952, %v2020
        %v2053 = vadd.f32 %v1953, %v2021
        %v2054 = vadd.f32 %v1954, %v2022
        %v2055 = vadd.f32 %v1955, %v2023
        %v2056 = vadd.f32 %v1956, %v2024
        %v2057 = vadd.f32 %v1957, %v2025
        %v2058 = vadd.f32 %v1958, %v2026
        %v2059 = vadd.f32 %v1959, %v2027
        %v2060 = vadd.f32 %v1960, %v2028
        %v2061 = vadd.f32 %v1961, %v2029
        %v2062 = vadd.f32 %v1962, %v2030
        %v2063 = vadd.f32 %v1963, %v2031
        %v2064 = vadd.f32 %v1964, %v2032
        %v2065 = vadd.f32 %v1965, %v2033
        %v2066 = vadd.f32 %v1966, %v2034
        %v2067 = vadd.f32 %v1967, %v2035
        %v2068 = vld [vmem:[%s1867 + $0x3] sm:$0xff]
        %v2069 = vld [vmem:[%s1867 + $0xb] sm:$0xff]
        %v2070 = vld [vmem:[%s1867 + $0x1b] sm:$0xff]
        %v2071 = vld [vmem:[%s1867 + $0x23] sm:$0xff]
        %v2072 = vld [vmem:[%s1867 + $0x33] sm:$0xff]
        %v2073 = vld [vmem:[%s1867 + $0x3b] sm:$0xff]
        %v2074 = vld [vmem:[%s1867 + $0x4b] sm:$0xff]
        %v2075 = vld [vmem:[%s1867 + $0x53] sm:$0xff]
        %v2076 = vld [vmem:[%s1867 + $0x63] sm:$0xff]
        %v2077 = vld [vmem:[%s1867 + $0x6b] sm:$0xff]
        %v2078 = vld [vmem:[%s1867 + $0x7b] sm:$0xff]
        %v2079 = vld [vmem:[%s1867 + $0x83] sm:$0xff]
        %v2080 = vld [vmem:[%s1867 + $0x93] sm:$0xff]
        %v2081 = vld [vmem:[%s1867 + $0x9b] sm:$0xff]
        %v2082 = vld [vmem:[%s1867 + $0xab] sm:$0xff]
        %v2083 = vld [vmem:[%s1867 + $0xb3] sm:$0xff]
        %v2084 = vld [vmem:[%s1867 + $0xc3] sm:$0xff]
        %v2085 = vld [vmem:[%s1867 + $0xcb] sm:$0xff]
        %v2086 = vld [vmem:[%s1867 + $0xdb] sm:$0xff]
        %v2087 = vld [vmem:[%s1867 + $0xe3] sm:$0xff]
        %v2088 = vld [vmem:[%s1867 + $0xf3] sm:$0xff]
        %v2089 = vld [vmem:[%s1867 + $0xfb] sm:$0xff]
        %v2090 = vld [vmem:[%s1867 + $0x10b] sm:$0xff]
        %v2091 = vld [vmem:[%s1867 + $0x113] sm:$0xff]
        %v2092 = vld [vmem:[%s1867 + $0x123] sm:$0xff]
        %v2093 = vld [vmem:[%s1867 + $0x12b] sm:$0xff]
        %v2094 = vld [vmem:[%s1867 + $0x13b] sm:$0xff]
        %v2095 = vld [vmem:[%s1867 + $0x143] sm:$0xff]
        %v2096 = vld [vmem:[%s1867 + $0x153] sm:$0xff]
        %v2097 = vld [vmem:[%s1867 + $0x15b] sm:$0xff]
        %v2098 = vld [vmem:[%s1867 + $0x16b] sm:$0xff]
        %v2099 = vld [vmem:[%s1867 + $0x173] sm:$0xff]
        %v2100 = vlaneseq
        %v2101 = vshrl.u32 %v2100, 7
        %v2102 = vsub.s32 2, %v2101
        %v2103 = vrot.slane %v1265, %v2102
        %v2104 = vmul.f32 %v2068, %v2103
        %v2105 = vmul.f32 %v2069, %v2103
        %v2106 = vmul.f32 %v2070, %v2103
        %v2107 = vmul.f32 %v2071, %v2103
        %v2108 = vmul.f32 %v2072, %v2103
        %v2109 = vmul.f32 %v2073, %v2103
        %v2110 = vmul.f32 %v2074, %v2103
        %v2111 = vmul.f32 %v2075, %v2103
        %v2112 = vmul.f32 %v2076, %v2103
        %v2113 = vmul.f32 %v2077, %v2103
        %v2114 = vmul.f32 %v2078, %v2103
        %v2115 = vmul.f32 %v2079, %v2103
        %v2116 = vmul.f32 %v2080, %v2103
        %v2117 = vmul.f32 %v2081, %v2103
        %v2118 = vmul.f32 %v2082, %v2103
        %v2119 = vmul.f32 %v2083, %v2103
        %v2120 = vmul.f32 %v2084, %v2103
        %v2121 = vmul.f32 %v2085, %v2103
        %v2122 = vmul.f32 %v2086, %v2103
        %v2123 = vmul.f32 %v2087, %v2103
        %v2124 = vmul.f32 %v2088, %v2103
        %v2125 = vmul.f32 %v2089, %v2103
        %v2126 = vmul.f32 %v2090, %v2103
        %v2127 = vmul.f32 %v2091, %v2103
        %v2128 = vmul.f32 %v2092, %v2103
        %v2129 = vmul.f32 %v2093, %v2103
        %v2130 = vmul.f32 %v2094, %v2103
        %v2131 = vmul.f32 %v2095, %v2103
        %v2132 = vmul.f32 %v2096, %v2103
        %v2133 = vmul.f32 %v2097, %v2103
        %v2134 = vmul.f32 %v2098, %v2103
        %v2135 = vmul.f32 %v2099, %v2103
        %v2136 = vadd.f32 %v2036, %v2104
        %v2137 = vadd.f32 %v2037, %v2105
        %v2138 = vadd.f32 %v2038, %v2106
        %v2139 = vadd.f32 %v2039, %v2107
        %v2140 = vadd.f32 %v2040, %v2108
        %v2141 = vadd.f32 %v2041, %v2109
        %v2142 = vadd.f32 %v2042, %v2110
        %v2143 = vadd.f32 %v2043, %v2111
        %v2144 = vadd.f32 %v2044, %v2112
        %v2145 = vadd.f32 %v2045, %v2113
        %v2146 = vadd.f32 %v2046, %v2114
        %v2147 = vadd.f32 %v2047, %v2115
        %v2148 = vadd.f32 %v2048, %v2116
        %v2149 = vadd.f32 %v2049, %v2117
        %v2150 = vadd.f32 %v2050, %v2118
        %v2151 = vadd.f32 %v2051, %v2119
        %v2152 = vadd.f32 %v2052, %v2120
        %v2153 = vadd.f32 %v2053, %v2121
        %v2154 = vadd.f32 %v2054, %v2122
        %v2155 = vadd.f32 %v2055, %v2123
        %v2156 = vadd.f32 %v2056, %v2124
        %v2157 = vadd.f32 %v2057, %v2125
        %v2158 = vadd.f32 %v2058, %v2126
        %v2159 = vadd.f32 %v2059, %v2127
        %v2160 = vadd.f32 %v2060, %v2128
        %v2161 = vadd.f32 %v2061, %v2129
        %v2162 = vadd.f32 %v2062, %v2130
        %v2163 = vadd.f32 %v2063, %v2131
        %v2164 = vadd.f32 %v2064, %v2132
        %v2165 = vadd.f32 %v2065, %v2133
        %v2166 = vadd.f32 %v2066, %v2134
        %v2167 = vadd.f32 %v2067, %v2135
        %v2168 = vmul.f32 %v2136, 0.5
        %v2169 = vmul.f32 %v2137, 0.5
        %v2170 = vmul.f32 %v2138, 0.5
        %v2171 = vmul.f32 %v2139, 0.5
        %v2172 = vmul.f32 %v2140, 0.5
        %v2173 = vmul.f32 %v2141, 0.5
        %v2174 = vmul.f32 %v2142, 0.5
        %v2175 = vmul.f32 %v2143, 0.5
        %v2176 = vmul.f32 %v2144, 0.5
        %v2177 = vmul.f32 %v2145, 0.5
        %v2178 = vmul.f32 %v2146, 0.5
        %v2179 = vmul.f32 %v2147, 0.5
        %v2180 = vmul.f32 %v2148, 0.5
        %v2181 = vmul.f32 %v2149, 0.5
        %v2182 = vmul.f32 %v2150, 0.5
        %v2183 = vmul.f32 %v2151, 0.5
        %v2184 = vmul.f32 %v2152, 0.5
        %v2185 = vmul.f32 %v2153, 0.5
        %v2186 = vmul.f32 %v2154, 0.5
        %v2187 = vmul.f32 %v2155, 0.5
        %v2188 = vmul.f32 %v2156, 0.5
        %v2189 = vmul.f32 %v2157, 0.5
        %v2190 = vmul.f32 %v2158, 0.5
        %v2191 = vmul.f32 %v2159, 0.5
        %v2192 = vmul.f32 %v2160, 0.5
        %v2193 = vmul.f32 %v2161, 0.5
        %v2194 = vmul.f32 %v2162, 0.5
        %v2195 = vmul.f32 %v2163, 0.5
        %v2196 = vmul.f32 %v2164, 0.5
        %v2197 = vmul.f32 %v2165, 0.5
        %v2198 = vmul.f32 %v2166, 0.5
        %v2199 = vmul.f32 %v2167, 0.5
        %v2200 = vrcp.pop 1.4142135
        %v2201 = vmul.f32 %v2136, %v2200
        %v2202 = vmul.f32 %v2137, %v2200
        %v2203 = vmul.f32 %v2138, %v2200
        %v2204 = vmul.f32 %v2139, %v2200
        %v2205 = vmul.f32 %v2140, %v2200
        %v2206 = vmul.f32 %v2141, %v2200
        %v2207 = vmul.f32 %v2142, %v2200
        %v2208 = vmul.f32 %v2143, %v2200
        %v2209 = vmul.f32 %v2144, %v2200
        %v2210 = vmul.f32 %v2145, %v2200
        %v2211 = vmul.f32 %v2146, %v2200
        %v2212 = vmul.f32 %v2147, %v2200
        %v2213 = vmul.f32 %v2148, %v2200
        %v2214 = vmul.f32 %v2149, %v2200
        %v2215 = vmul.f32 %v2150, %v2200
        %v2216 = vmul.f32 %v2151, %v2200
        %v2217 = vmul.f32 %v2152, %v2200
        %v2218 = vmul.f32 %v2153, %v2200
        %v2219 = vmul.f32 %v2154, %v2200
        %v2220 = vmul.f32 %v2155, %v2200
        %v2221 = vmul.f32 %v2156, %v2200
        %v2222 = vmul.f32 %v2157, %v2200
        %v2223 = vmul.f32 %v2158, %v2200
        %v2224 = vmul.f32 %v2159, %v2200
        %v2225 = vmul.f32 %v2160, %v2200
        %v2226 = vmul.f32 %v2161, %v2200
        %v2227 = vmul.f32 %v2162, %v2200
        %v2228 = vmul.f32 %v2163, %v2200
        %v2229 = vmul.f32 %v2164, %v2200
        %v2230 = vmul.f32 %v2165, %v2200
        %v2231 = vmul.f32 %v2166, %v2200
        %v2232 = vmul.f32 %v2167, %v2200
        %vm2233 = vcmp.ge.f32.partialorder %v2201, 0.0
        %vm2234 = vcmp.ge.f32.partialorder %v2202, 0.0
        %vm2235 = vcmp.ge.f32.partialorder %v2203, 0.0
        %vm2236 = vcmp.ge.f32.partialorder %v2204, 0.0
        %vm2237 = vcmp.ge.f32.partialorder %v2205, 0.0
        %vm2238 = vcmp.ge.f32.partialorder %v2206, 0.0
        %vm2239 = vcmp.ge.f32.partialorder %v2207, 0.0
        %vm2240 = vcmp.ge.f32.partialorder %v2208, 0.0
        %vm2241 = vcmp.ge.f32.partialorder %v2209, 0.0
        %vm2242 = vcmp.ge.f32.partialorder %v2210, 0.0
        %vm2243 = vcmp.ge.f32.partialorder %v2211, 0.0
        %vm2244 = vcmp.ge.f32.partialorder %v2212, 0.0
        %vm2245 = vcmp.ge.f32.partialorder %v2213, 0.0
        %vm2246 = vcmp.ge.f32.partialorder %v2214, 0.0
        %vm2247 = vcmp.ge.f32.partialorder %v2215, 0.0
        %vm2248 = vcmp.ge.f32.partialorder %v2216, 0.0
        %vm2249 = vcmp.ge.f32.partialorder %v2217, 0.0
        %vm2250 = vcmp.ge.f32.partialorder %v2218, 0.0
        %vm2251 = vcmp.ge.f32.partialorder %v2219, 0.0
        %vm2252 = vcmp.ge.f32.partialorder %v2220, 0.0
        %vm2253 = vcmp.ge.f32.partialorder %v2221, 0.0
        %vm2254 = vcmp.ge.f32.partialorder %v2222, 0.0
        %vm2255 = vcmp.ge.f32.partialorder %v2223, 0.0
        %vm2256 = vcmp.ge.f32.partialorder %v2224, 0.0
        %vm2257 = vcmp.ge.f32.partialorder %v2225, 0.0
        %vm2258 = vcmp.ge.f32.partialorder %v2226, 0.0
        %vm2259 = vcmp.ge.f32.partialorder %v2227, 0.0
        %vm2260 = vcmp.ge.f32.partialorder %v2228, 0.0
        %vm2261 = vcmp.ge.f32.partialorder %v2229, 0.0
        %vm2262 = vcmp.ge.f32.partialorder %v2230, 0.0
        %vm2263 = vcmp.ge.f32.partialorder %v2231, 0.0
        %vm2264 = vcmp.ge.f32.partialorder %v2232, 0.0
        %v2265 = vsel %vm2233, 1.0, -1.0
        %v2266 = vsel %vm2234, 1.0, -1.0
        %v2267 = vsel %vm2235, 1.0, -1.0
        %v2268 = vsel %vm2236, 1.0, -1.0
        %v2269 = vsel %vm2237, 1.0, -1.0
        %v2270 = vsel %vm2238, 1.0, -1.0
        %v2271 = vsel %vm2239, 1.0, -1.0
        %v2272 = vsel %vm2240, 1.0, -1.0
        %v2273 = vsel %vm2241, 1.0, -1.0
        %v2274 = vsel %vm2242, 1.0, -1.0
        %v2275 = vsel %vm2243, 1.0, -1.0
        %v2276 = vsel %vm2244, 1.0, -1.0
        %v2277 = vsel %vm2245, 1.0, -1.0
        %v2278 = vsel %vm2246, 1.0, -1.0
        %v2279 = vsel %vm2247, 1.0, -1.0
        %v2280 = vsel %vm2248, 1.0, -1.0
        %v2281 = vsel %vm2249, 1.0, -1.0
        %v2282 = vsel %vm2250, 1.0, -1.0
        %v2283 = vsel %vm2251, 1.0, -1.0
        %v2284 = vsel %vm2252, 1.0, -1.0
        %v2285 = vsel %vm2253, 1.0, -1.0
        %v2286 = vsel %vm2254, 1.0, -1.0
        %v2287 = vsel %vm2255, 1.0, -1.0
        %v2288 = vsel %vm2256, 1.0, -1.0
        %v2289 = vsel %vm2257, 1.0, -1.0
        %v2290 = vsel %vm2258, 1.0, -1.0
        %v2291 = vsel %vm2259, 1.0, -1.0
        %v2292 = vsel %vm2260, 1.0, -1.0
        %v2293 = vsel %vm2261, 1.0, -1.0
        %v2294 = vsel %vm2262, 1.0, -1.0
        %v2295 = vsel %vm2263, 1.0, -1.0
        %v2296 = vsel %vm2264, 1.0, -1.0
        %v2297 = vand.u32 2147483647, %v2201
        %v2298 = vand.u32 2147483647, %v2202
        %v2299 = vand.u32 2147483647, %v2203
        %v2300 = vand.u32 2147483647, %v2204
        %v2301 = vand.u32 2147483647, %v2205
        %v2302 = vand.u32 2147483647, %v2206
        %v2303 = vand.u32 2147483647, %v2207
        %v2304 = vand.u32 2147483647, %v2208
        %v2305 = vand.u32 2147483647, %v2209
        %v2306 = vand.u32 2147483647, %v2210
        %v2307 = vand.u32 2147483647, %v2211
        %v2308 = vand.u32 2147483647, %v2212
        %v2309 = vand.u32 2147483647, %v2213
        %v2310 = vand.u32 2147483647, %v2214
        %v2311 = vand.u32 2147483647, %v2215
        %v2312 = vand.u32 2147483647, %v2216
        %v2313 = vand.u32 2147483647, %v2217
        %v2314 = vand.u32 2147483647, %v2218
        %v2315 = vand.u32 2147483647, %v2219
        %v2316 = vand.u32 2147483647, %v2220
        %v2317 = vand.u32 2147483647, %v2221
        %v2318 = vand.u32 2147483647, %v2222
        %v2319 = vand.u32 2147483647, %v2223
        %v2320 = vand.u32 2147483647, %v2224
        %v2321 = vand.u32 2147483647, %v2225
        %v2322 = vand.u32 2147483647, %v2226
        %v2323 = vand.u32 2147483647, %v2227
        %v2324 = vand.u32 2147483647, %v2228
        %v2325 = vand.u32 2147483647, %v2229
        %v2326 = vand.u32 2147483647, %v2230
        %v2327 = vand.u32 2147483647, %v2231
        %v2328 = vand.u32 2147483647, %v2232
        %v2329 = vmul.f32 %v2297, 0.3275911
        %v2330 = vmul.f32 %v2298, 0.3275911
        %v2331 = vmul.f32 %v2299, 0.3275911
        %v2332 = vmul.f32 %v2300, 0.3275911
        %v2333 = vmul.f32 %v2301, 0.3275911
        %v2334 = vmul.f32 %v2302, 0.3275911
        %v2335 = vmul.f32 %v2303, 0.3275911
        %v2336 = vmul.f32 %v2304, 0.3275911
        %v2337 = vmul.f32 %v2305, 0.3275911
        %v2338 = vmul.f32 %v2306, 0.3275911
        %v2339 = vmul.f32 %v2307, 0.3275911
        %v2340 = vmul.f32 %v2308, 0.3275911
        %v2341 = vmul.f32 %v2309, 0.3275911
        %v2342 = vmul.f32 %v2310, 0.3275911
        %v2343 = vmul.f32 %v2311, 0.3275911
        %v2344 = vmul.f32 %v2312, 0.3275911
        %v2345 = vmul.f32 %v2313, 0.3275911
        %v2346 = vmul.f32 %v2314, 0.3275911
        %v2347 = vmul.f32 %v2315, 0.3275911
        %v2348 = vmul.f32 %v2316, 0.3275911
        %v2349 = vmul.f32 %v2317, 0.3275911
        %v2350 = vmul.f32 %v2318, 0.3275911
        %v2351 = vmul.f32 %v2319, 0.3275911
        %v2352 = vmul.f32 %v2320, 0.3275911
        %v2353 = vmul.f32 %v2321, 0.3275911
        %v2354 = vmul.f32 %v2322, 0.3275911
        %v2355 = vmul.f32 %v2323, 0.3275911
        %v2356 = vmul.f32 %v2324, 0.3275911
        %v2357 = vmul.f32 %v2325, 0.3275911
        %v2358 = vmul.f32 %v2326, 0.3275911
        %v2359 = vmul.f32 %v2327, 0.3275911
        %v2360 = vmul.f32 %v2328, 0.3275911
        %v2361 = vadd.f32 %v2329, 1.0
        %v2362 = vadd.f32 %v2330, 1.0
        %v2363 = vadd.f32 %v2331, 1.0
        %v2364 = vadd.f32 %v2332, 1.0
        %v2365 = vadd.f32 %v2333, 1.0
        %v2366 = vadd.f32 %v2334, 1.0
        %v2367 = vadd.f32 %v2335, 1.0
        %v2368 = vadd.f32 %v2336, 1.0
        %v2369 = vadd.f32 %v2337, 1.0
        %v2370 = vadd.f32 %v2338, 1.0
        %v2371 = vadd.f32 %v2339, 1.0
        %v2372 = vadd.f32 %v2340, 1.0
        %v2373 = vadd.f32 %v2341, 1.0
        %v2374 = vadd.f32 %v2342, 1.0
        %v2375 = vadd.f32 %v2343, 1.0
        %v2376 = vadd.f32 %v2344, 1.0
        %v2377 = vadd.f32 %v2345, 1.0
        %v2378 = vadd.f32 %v2346, 1.0
        %v2379 = vadd.f32 %v2347, 1.0
        %v2380 = vadd.f32 %v2348, 1.0
        %v2381 = vadd.f32 %v2349, 1.0
        %v2382 = vadd.f32 %v2350, 1.0
        %v2383 = vadd.f32 %v2351, 1.0
        %v2384 = vadd.f32 %v2352, 1.0
        %v2385 = vadd.f32 %v2353, 1.0
        %v2386 = vadd.f32 %v2354, 1.0
        %v2387 = vadd.f32 %v2355, 1.0
        %v2388 = vadd.f32 %v2356, 1.0
        %v2389 = vadd.f32 %v2357, 1.0
        %v2390 = vadd.f32 %v2358, 1.0
        %v2391 = vadd.f32 %v2359, 1.0
        %v2392 = vadd.f32 %v2360, 1.0
        %v2393 = vrcp.pop %v2361
        %v2394 = vmul.f32 1.0, %v2393
        %v2395 = vrcp.pop %v2362
        %v2396 = vmul.f32 1.0, %v2395
        %v2397 = vrcp.pop %v2363
        %v2398 = vmul.f32 1.0, %v2397
        %v2399 = vrcp.pop %v2364
        %v2400 = vmul.f32 1.0, %v2399
        %v2401 = vrcp.pop %v2365
        %v2402 = vmul.f32 1.0, %v2401
        %v2403 = vrcp.pop %v2366
        %v2404 = vmul.f32 1.0, %v2403
        %v2405 = vrcp.pop %v2367
        %v2406 = vmul.f32 1.0, %v2405
        %v2407 = vrcp.pop %v2368
        %v2408 = vmul.f32 1.0, %v2407
        %v2409 = vrcp.pop %v2369
        %v2410 = vmul.f32 1.0, %v2409
        %v2411 = vrcp.pop %v2370
        %v2412 = vmul.f32 1.0, %v2411
        %v2413 = vrcp.pop %v2371
        %v2414 = vmul.f32 1.0, %v2413
        %v2415 = vrcp.pop %v2372
        %v2416 = vmul.f32 1.0, %v2415
        %v2417 = vrcp.pop %v2373
        %v2418 = vmul.f32 1.0, %v2417
        %v2419 = vrcp.pop %v2374
        %v2420 = vmul.f32 1.0, %v2419
        %v2421 = vrcp.pop %v2375
        %v2422 = vmul.f32 1.0, %v2421
        %v2423 = vrcp.pop %v2376
        %v2424 = vmul.f32 1.0, %v2423
        %v2425 = vrcp.pop %v2377
        %v2426 = vmul.f32 1.0, %v2425
        %v2427 = vrcp.pop %v2378
        %v2428 = vmul.f32 1.0, %v2427
        %v2429 = vrcp.pop %v2379
        %v2430 = vmul.f32 1.0, %v2429
        %v2431 = vrcp.pop %v2380
        %v2432 = vmul.f32 1.0, %v2431
        %v2433 = vrcp.pop %v2381
        %v2434 = vmul.f32 1.0, %v2433
        %v2435 = vrcp.pop %v2382
        %v2436 = vmul.f32 1.0, %v2435
        %v2437 = vrcp.pop %v2383
        %v2438 = vmul.f32 1.0, %v2437
        %v2439 = vrcp.pop %v2384
        %v2440 = vmul.f32 1.0, %v2439
        %v2441 = vrcp.pop %v2385
        %v2442 = vmul.f32 1.0, %v2441
        %v2443 = vrcp.pop %v2386
        %v2444 = vmul.f32 1.0, %v2443
        %v2445 = vrcp.pop %v2387
        %v2446 = vmul.f32 1.0, %v2445
        %v2447 = vrcp.pop %v2388
        %v2448 = vmul.f32 1.0, %v2447
        %v2449 = vrcp.pop %v2389
        %v2450 = vmul.f32 1.0, %v2449
        %v2451 = vrcp.pop %v2390
        %v2452 = vmul.f32 1.0, %v2451
        %v2453 = vrcp.pop %v2391
        %v2454 = vmul.f32 1.0, %v2453
        %v2455 = vrcp.pop %v2392
        %v2456 = vmul.f32 1.0, %v2455
        %v2457 = vmul.f32 %v2394, 1.0614054
        %v2458 = vmul.f32 %v2396, 1.0614054
        %v2459 = vmul.f32 %v2398, 1.0614054
        %v2460 = vmul.f32 %v2400, 1.0614054
        %v2461 = vmul.f32 %v2402, 1.0614054
        %v2462 = vmul.f32 %v2404, 1.0614054
        %v2463 = vmul.f32 %v2406, 1.0614054
        %v2464 = vmul.f32 %v2408, 1.0614054
        %v2465 = vmul.f32 %v2410, 1.0614054
        %v2466 = vmul.f32 %v2412, 1.0614054
        %v2467 = vmul.f32 %v2414, 1.0614054
        %v2468 = vmul.f32 %v2416, 1.0614054
        %v2469 = vmul.f32 %v2418, 1.0614054
        %v2470 = vmul.f32 %v2420, 1.0614054
        %v2471 = vmul.f32 %v2422, 1.0614054
        %v2472 = vmul.f32 %v2424, 1.0614054
        %v2473 = vmul.f32 %v2426, 1.0614054
        %v2474 = vmul.f32 %v2428, 1.0614054
        %v2475 = vmul.f32 %v2430, 1.0614054
        %v2476 = vmul.f32 %v2432, 1.0614054
        %v2477 = vmul.f32 %v2434, 1.0614054
        %v2478 = vmul.f32 %v2436, 1.0614054
        %v2479 = vmul.f32 %v2438, 1.0614054
        %v2480 = vmul.f32 %v2440, 1.0614054
        %v2481 = vmul.f32 %v2442, 1.0614054
        %v2482 = vmul.f32 %v2444, 1.0614054
        %v2483 = vmul.f32 %v2446, 1.0614054
        %v2484 = vmul.f32 %v2448, 1.0614054
        %v2485 = vmul.f32 %v2450, 1.0614054
        %v2486 = vmul.f32 %v2452, 1.0614054
        %v2487 = vmul.f32 %v2454, 1.0614054
        %v2488 = vmul.f32 %v2456, 1.0614054
        %v2489 = vadd.f32 %v2457, -1.4531521
        %v2490 = vadd.f32 %v2458, -1.4531521
        %v2491 = vadd.f32 %v2459, -1.4531521
        %v2492 = vadd.f32 %v2460, -1.4531521
        %v2493 = vadd.f32 %v2461, -1.4531521
        %v2494 = vadd.f32 %v2462, -1.4531521
        %v2495 = vadd.f32 %v2463, -1.4531521
        %v2496 = vadd.f32 %v2464, -1.4531521
        %v2497 = vadd.f32 %v2465, -1.4531521
        %v2498 = vadd.f32 %v2466, -1.4531521
        %v2499 = vadd.f32 %v2467, -1.4531521
        %v2500 = vadd.f32 %v2468, -1.4531521
        %v2501 = vadd.f32 %v2469, -1.4531521
        %v2502 = vadd.f32 %v2470, -1.4531521
        %v2503 = vadd.f32 %v2471, -1.4531521
        %v2504 = vadd.f32 %v2472, -1.4531521
        %v2505 = vadd.f32 %v2473, -1.4531521
        %v2506 = vadd.f32 %v2474, -1.4531521
        %v2507 = vadd.f32 %v2475, -1.4531521
        %v2508 = vadd.f32 %v2476, -1.4531521
        %v2509 = vadd.f32 %v2477, -1.4531521
        %v2510 = vadd.f32 %v2478, -1.4531521
        %v2511 = vadd.f32 %v2479, -1.4531521
        %v2512 = vadd.f32 %v2480, -1.4531521
        %v2513 = vadd.f32 %v2481, -1.4531521
        %v2514 = vadd.f32 %v2482, -1.4531521
        %v2515 = vadd.f32 %v2483, -1.4531521
        %v2516 = vadd.f32 %v2484, -1.4531521
        %v2517 = vadd.f32 %v2485, -1.4531521
        %v2518 = vadd.f32 %v2486, -1.4531521
        %v2519 = vadd.f32 %v2487, -1.4531521
        %v2520 = vadd.f32 %v2488, -1.4531521
        %v2521 = vmul.f32 %v2489, %v2394
        %v2522 = vmul.f32 %v2490, %v2396
        %v2523 = vmul.f32 %v2491, %v2398
        %v2524 = vmul.f32 %v2492, %v2400
        %v2525 = vmul.f32 %v2493, %v2402
        %v2526 = vmul.f32 %v2494, %v2404
        %v2527 = vmul.f32 %v2495, %v2406
        %v2528 = vmul.f32 %v2496, %v2408
        %v2529 = vmul.f32 %v2497, %v2410
        %v2530 = vmul.f32 %v2498, %v2412
        %v2531 = vmul.f32 %v2499, %v2414
        %v2532 = vmul.f32 %v2500, %v2416
        %v2533 = vmul.f32 %v2501, %v2418
        %v2534 = vmul.f32 %v2502, %v2420
        %v2535 = vmul.f32 %v2503, %v2422
        %v2536 = vmul.f32 %v2504, %v2424
        %v2537 = vmul.f32 %v2505, %v2426
        %v2538 = vmul.f32 %v2506, %v2428
        %v2539 = vmul.f32 %v2507, %v2430
        %v2540 = vmul.f32 %v2508, %v2432
        %v2541 = vmul.f32 %v2509, %v2434
        %v2542 = vmul.f32 %v2510, %v2436
        %v2543 = vmul.f32 %v2511, %v2438
        %v2544 = vmul.f32 %v2512, %v2440
        %v2545 = vmul.f32 %v2513, %v2442
        %v2546 = vmul.f32 %v2514, %v2444
        %v2547 = vmul.f32 %v2515, %v2446
        %v2548 = vmul.f32 %v2516, %v2448
        %v2549 = vmul.f32 %v2517, %v2450
        %v2550 = vmul.f32 %v2518, %v2452
        %v2551 = vmul.f32 %v2519, %v2454
        %v2552 = vmul.f32 %v2520, %v2456
        %v2553 = vadd.f32 %v2521, 1.4214138
        %v2554 = vadd.f32 %v2522, 1.4214138
        %v2555 = vadd.f32 %v2523, 1.4214138
        %v2556 = vadd.f32 %v2524, 1.4214138
        %v2557 = vadd.f32 %v2525, 1.4214138
        %v2558 = vadd.f32 %v2526, 1.4214138
        %v2559 = vadd.f32 %v2527, 1.4214138
        %v2560 = vadd.f32 %v2528, 1.4214138
        %v2561 = vadd.f32 %v2529, 1.4214138
        %v2562 = vadd.f32 %v2530, 1.4214138
        %v2563 = vadd.f32 %v2531, 1.4214138
        %v2564 = vadd.f32 %v2532, 1.4214138
        %v2565 = vadd.f32 %v2533, 1.4214138
        %v2566 = vadd.f32 %v2534, 1.4214138
        %v2567 = vadd.f32 %v2535, 1.4214138
        %v2568 = vadd.f32 %v2536, 1.4214138
        %v2569 = vadd.f32 %v2537, 1.4214138
        %v2570 = vadd.f32 %v2538, 1.4214138
        %v2571 = vadd.f32 %v2539, 1.4214138
        %v2572 = vadd.f32 %v2540, 1.4214138
        %v2573 = vadd.f32 %v2541, 1.4214138
        %v2574 = vadd.f32 %v2542, 1.4214138
        %v2575 = vadd.f32 %v2543, 1.4214138
        %v2576 = vadd.f32 %v2544, 1.4214138
        %v2577 = vadd.f32 %v2545, 1.4214138
        %v2578 = vadd.f32 %v2546, 1.4214138
        %v2579 = vadd.f32 %v2547, 1.4214138
        %v2580 = vadd.f32 %v2548, 1.4214138
        %v2581 = vadd.f32 %v2549, 1.4214138
        %v2582 = vadd.f32 %v2550, 1.4214138
        %v2583 = vadd.f32 %v2551, 1.4214138
        %v2584 = vadd.f32 %v2552, 1.4214138
        %v2585 = vmul.f32 %v2553, %v2394
        %v2586 = vmul.f32 %v2554, %v2396
        %v2587 = vmul.f32 %v2555, %v2398
        %v2588 = vmul.f32 %v2556, %v2400
        %v2589 = vmul.f32 %v2557, %v2402
        %v2590 = vmul.f32 %v2558, %v2404
        %v2591 = vmul.f32 %v2559, %v2406
        %v2592 = vmul.f32 %v2560, %v2408
        %v2593 = vmul.f32 %v2561, %v2410
        %v2594 = vmul.f32 %v2562, %v2412
        %v2595 = vmul.f32 %v2563, %v2414
        %v2596 = vmul.f32 %v2564, %v2416
        %v2597 = vmul.f32 %v2565, %v2418
        %v2598 = vmul.f32 %v2566, %v2420
        %v2599 = vmul.f32 %v2567, %v2422
        %v2600 = vmul.f32 %v2568, %v2424
        %v2601 = vmul.f32 %v2569, %v2426
        %v2602 = vmul.f32 %v2570, %v2428
        %v2603 = vmul.f32 %v2571, %v2430
        %v2604 = vmul.f32 %v2572, %v2432
        %v2605 = vmul.f32 %v2573, %v2434
        %v2606 = vmul.f32 %v2574, %v2436
        %v2607 = vmul.f32 %v2575, %v2438
        %v2608 = vmul.f32 %v2576, %v2440
        %v2609 = vmul.f32 %v2577, %v2442
        %v2610 = vmul.f32 %v2578, %v2444
        %v2611 = vmul.f32 %v2579, %v2446
        %v2612 = vmul.f32 %v2580, %v2448
        %v2613 = vmul.f32 %v2581, %v2450
        %v2614 = vmul.f32 %v2582, %v2452
        %v2615 = vmul.f32 %v2583, %v2454
        %v2616 = vmul.f32 %v2584, %v2456
        %v2617 = vadd.f32 %v2585, -0.28449672
        %v2618 = vadd.f32 %v2586, -0.28449672
        %v2619 = vadd.f32 %v2587, -0.28449672
        %v2620 = vadd.f32 %v2588, -0.28449672
        %v2621 = vadd.f32 %v2589, -0.28449672
        %v2622 = vadd.f32 %v2590, -0.28449672
        %v2623 = vadd.f32 %v2591, -0.28449672
        %v2624 = vadd.f32 %v2592, -0.28449672
        %v2625 = vadd.f32 %v2593, -0.28449672
        %v2626 = vadd.f32 %v2594, -0.28449672
        %v2627 = vadd.f32 %v2595, -0.28449672
        %v2628 = vadd.f32 %v2596, -0.28449672
        %v2629 = vadd.f32 %v2597, -0.28449672
        %v2630 = vadd.f32 %v2598, -0.28449672
        %v2631 = vadd.f32 %v2599, -0.28449672
        %v2632 = vadd.f32 %v2600, -0.28449672
        %v2633 = vadd.f32 %v2601, -0.28449672
        %v2634 = vadd.f32 %v2602, -0.28449672
        %v2635 = vadd.f32 %v2603, -0.28449672
        %v2636 = vadd.f32 %v2604, -0.28449672
        %v2637 = vadd.f32 %v2605, -0.28449672
        %v2638 = vadd.f32 %v2606, -0.28449672
        %v2639 = vadd.f32 %v2607, -0.28449672
        %v2640 = vadd.f32 %v2608, -0.28449672
        %v2641 = vadd.f32 %v2609, -0.28449672
        %v2642 = vadd.f32 %v2610, -0.28449672
        %v2643 = vadd.f32 %v2611, -0.28449672
        %v2644 = vadd.f32 %v2612, -0.28449672
        %v2645 = vadd.f32 %v2613, -0.28449672
        %v2646 = vadd.f32 %v2614, -0.28449672
        %v2647 = vadd.f32 %v2615, -0.28449672
        %v2648 = vadd.f32 %v2616, -0.28449672
        %v2649 = vmul.f32 %v2617, %v2394
        %v2650 = vmul.f32 %v2618, %v2396
        %v2651 = vmul.f32 %v2619, %v2398
        %v2652 = vmul.f32 %v2620, %v2400
        %v2653 = vmul.f32 %v2621, %v2402
        %v2654 = vmul.f32 %v2622, %v2404
        %v2655 = vmul.f32 %v2623, %v2406
        %v2656 = vmul.f32 %v2624, %v2408
        %v2657 = vmul.f32 %v2625, %v2410
        %v2658 = vmul.f32 %v2626, %v2412
        %v2659 = vmul.f32 %v2627, %v2414
        %v2660 = vmul.f32 %v2628, %v2416
        %v2661 = vmul.f32 %v2629, %v2418
        %v2662 = vmul.f32 %v2630, %v2420
        %v2663 = vmul.f32 %v2631, %v2422
        %v2664 = vmul.f32 %v2632, %v2424
        %v2665 = vmul.f32 %v2633, %v2426
        %v2666 = vmul.f32 %v2634, %v2428
        %v2667 = vmul.f32 %v2635, %v2430
        %v2668 = vmul.f32 %v2636, %v2432
        %v2669 = vmul.f32 %v2637, %v2434
        %v2670 = vmul.f32 %v2638, %v2436
        %v2671 = vmul.f32 %v2639, %v2438
        %v2672 = vmul.f32 %v2640, %v2440
        %v2673 = vmul.f32 %v2641, %v2442
        %v2674 = vmul.f32 %v2642, %v2444
        %v2675 = vmul.f32 %v2643, %v2446
        %v2676 = vmul.f32 %v2644, %v2448
        %v2677 = vmul.f32 %v2645, %v2450
        %v2678 = vmul.f32 %v2646, %v2452
        %v2679 = vmul.f32 %v2647, %v2454
        %v2680 = vmul.f32 %v2648, %v2456
        %v2681 = vadd.f32 %v2649, 0.2548296
        %v2682 = vadd.f32 %v2650, 0.2548296
        %v2683 = vadd.f32 %v2651, 0.2548296
        %v2684 = vadd.f32 %v2652, 0.2548296
        %v2685 = vadd.f32 %v2653, 0.2548296
        %v2686 = vadd.f32 %v2654, 0.2548296
        %v2687 = vadd.f32 %v2655, 0.2548296
        %v2688 = vadd.f32 %v2656, 0.2548296
        %v2689 = vadd.f32 %v2657, 0.2548296
        %v2690 = vadd.f32 %v2658, 0.2548296
        %v2691 = vadd.f32 %v2659, 0.2548296
        %v2692 = vadd.f32 %v2660, 0.2548296
        %v2693 = vadd.f32 %v2661, 0.2548296
        %v2694 = vadd.f32 %v2662, 0.2548296
        %v2695 = vadd.f32 %v2663, 0.2548296
        %v2696 = vadd.f32 %v2664, 0.2548296
        %v2697 = vadd.f32 %v2665, 0.2548296
        %v2698 = vadd.f32 %v2666, 0.2548296
        %v2699 = vadd.f32 %v2667, 0.2548296
        %v2700 = vadd.f32 %v2668, 0.2548296
        %v2701 = vadd.f32 %v2669, 0.2548296
        %v2702 = vadd.f32 %v2670, 0.2548296
        %v2703 = vadd.f32 %v2671, 0.2548296
        %v2704 = vadd.f32 %v2672, 0.2548296
        %v2705 = vadd.f32 %v2673, 0.2548296
        %v2706 = vadd.f32 %v2674, 0.2548296
        %v2707 = vadd.f32 %v2675, 0.2548296
        %v2708 = vadd.f32 %v2676, 0.2548296
        %v2709 = vadd.f32 %v2677, 0.2548296
        %v2710 = vadd.f32 %v2678, 0.2548296
        %v2711 = vadd.f32 %v2679, 0.2548296
        %v2712 = vadd.f32 %v2680, 0.2548296
        %v2713 = vmul.f32 %v2681, %v2394
        %v2714 = vmul.f32 %v2682, %v2396
        %v2715 = vmul.f32 %v2683, %v2398
        %v2716 = vmul.f32 %v2684, %v2400
        %v2717 = vmul.f32 %v2685, %v2402
        %v2718 = vmul.f32 %v2686, %v2404
        %v2719 = vmul.f32 %v2687, %v2406
        %v2720 = vmul.f32 %v2688, %v2408
        %v2721 = vmul.f32 %v2689, %v2410
        %v2722 = vmul.f32 %v2690, %v2412
        %v2723 = vmul.f32 %v2691, %v2414
        %v2724 = vmul.f32 %v2692, %v2416
        %v2725 = vmul.f32 %v2693, %v2418
        %v2726 = vmul.f32 %v2694, %v2420
        %v2727 = vmul.f32 %v2695, %v2422
        %v2728 = vmul.f32 %v2696, %v2424
        %v2729 = vmul.f32 %v2697, %v2426
        %v2730 = vmul.f32 %v2698, %v2428
        %v2731 = vmul.f32 %v2699, %v2430
        %v2732 = vmul.f32 %v2700, %v2432
        %v2733 = vmul.f32 %v2701, %v2434
        %v2734 = vmul.f32 %v2702, %v2436
        %v2735 = vmul.f32 %v2703, %v2438
        %v2736 = vmul.f32 %v2704, %v2440
        %v2737 = vmul.f32 %v2705, %v2442
        %v2738 = vmul.f32 %v2706, %v2444
        %v2739 = vmul.f32 %v2707, %v2446
        %v2740 = vmul.f32 %v2708, %v2448
        %v2741 = vmul.f32 %v2709, %v2450
        %v2742 = vmul.f32 %v2710, %v2452
        %v2743 = vmul.f32 %v2711, %v2454
        %v2744 = vmul.f32 %v2712, %v2456
        %v2745 = vsub.f32 0.0, %v2297
        %v2746 = vsub.f32 0.0, %v2298
        %v2747 = vsub.f32 0.0, %v2299
        %v2748 = vsub.f32 0.0, %v2300
        %v2749 = vsub.f32 0.0, %v2301
        %v2750 = vsub.f32 0.0, %v2302
        %v2751 = vsub.f32 0.0, %v2303
        %v2752 = vsub.f32 0.0, %v2304
        %v2753 = vsub.f32 0.0, %v2305
        %v2754 = vsub.f32 0.0, %v2306
        %v2755 = vsub.f32 0.0, %v2307
        %v2756 = vsub.f32 0.0, %v2308
        %v2757 = vsub.f32 0.0, %v2309
        %v2758 = vsub.f32 0.0, %v2310
        %v2759 = vsub.f32 0.0, %v2311
        %v2760 = vsub.f32 0.0, %v2312
        %v2761 = vsub.f32 0.0, %v2313
        %v2762 = vsub.f32 0.0, %v2314
        %v2763 = vsub.f32 0.0, %v2315
        %v2764 = vsub.f32 0.0, %v2316
        %v2765 = vsub.f32 0.0, %v2317
        %v2766 = vsub.f32 0.0, %v2318
        %v2767 = vsub.f32 0.0, %v2319
        %v2768 = vsub.f32 0.0, %v2320
        %v2769 = vsub.f32 0.0, %v2321
        %v2770 = vsub.f32 0.0, %v2322
        %v2771 = vsub.f32 0.0, %v2323
        %v2772 = vsub.f32 0.0, %v2324
        %v2773 = vsub.f32 0.0, %v2325
        %v2774 = vsub.f32 0.0, %v2326
        %v2775 = vsub.f32 0.0, %v2327
        %v2776 = vsub.f32 0.0, %v2328
        %v2777 = vmul.f32 %v2745, %v2297
        %v2778 = vmul.f32 %v2746, %v2298
        %v2779 = vmul.f32 %v2747, %v2299
        %v2780 = vmul.f32 %v2748, %v2300
        %v2781 = vmul.f32 %v2749, %v2301
        %v2782 = vmul.f32 %v2750, %v2302
        %v2783 = vmul.f32 %v2751, %v2303
        %v2784 = vmul.f32 %v2752, %v2304
        %v2785 = vmul.f32 %v2753, %v2305
        %v2786 = vmul.f32 %v2754, %v2306
        %v2787 = vmul.f32 %v2755, %v2307
        %v2788 = vmul.f32 %v2756, %v2308
        %v2789 = vmul.f32 %v2757, %v2309
        %v2790 = vmul.f32 %v2758, %v2310
        %v2791 = vmul.f32 %v2759, %v2311
        %v2792 = vmul.f32 %v2760, %v2312
        %v2793 = vmul.f32 %v2761, %v2313
        %v2794 = vmul.f32 %v2762, %v2314
        %v2795 = vmul.f32 %v2763, %v2315
        %v2796 = vmul.f32 %v2764, %v2316
        %v2797 = vmul.f32 %v2765, %v2317
        %v2798 = vmul.f32 %v2766, %v2318
        %v2799 = vmul.f32 %v2767, %v2319
        %v2800 = vmul.f32 %v2768, %v2320
        %v2801 = vmul.f32 %v2769, %v2321
        %v2802 = vmul.f32 %v2770, %v2322
        %v2803 = vmul.f32 %v2771, %v2323
        %v2804 = vmul.f32 %v2772, %v2324
        %v2805 = vmul.f32 %v2773, %v2325
        %v2806 = vmul.f32 %v2774, %v2326
        %v2807 = vmul.f32 %v2775, %v2327
        %v2808 = vmul.f32 %v2776, %v2328
        %v2809 = vmul.f32 %v2777, 1.442695
        %v2810 = vpow.pop %v2809
        %v2811 = vmul.f32 %v2778, 1.442695
        %v2812 = vpow.pop %v2811
        %v2813 = vmul.f32 %v2779, 1.442695
        %v2814 = vpow.pop %v2813
        %v2815 = vmul.f32 %v2780, 1.442695
        %v2816 = vpow.pop %v2815
        %v2817 = vmul.f32 %v2781, 1.442695
        %v2818 = vpow.pop %v2817
        %v2819 = vmul.f32 %v2782, 1.442695
        %v2820 = vpow.pop %v2819
        %v2821 = vmul.f32 %v2783, 1.442695
        %v2822 = vpow.pop %v2821
        %v2823 = vmul.f32 %v2784, 1.442695
        %v2824 = vpow.pop %v2823
        %v2825 = vmul.f32 %v2785, 1.442695
        %v2826 = vpow.pop %v2825
        %v2827 = vmul.f32 %v2786, 1.442695
        %v2828 = vpow.pop %v2827
        %v2829 = vmul.f32 %v2787, 1.442695
        %v2830 = vpow.pop %v2829
        %v2831 = vmul.f32 %v2788, 1.442695
        %v2832 = vpow.pop %v2831
        %v2833 = vmul.f32 %v2789, 1.442695
        %v2834 = vpow.pop %v2833
        %v2835 = vmul.f32 %v2790, 1.442695
        %v2836 = vpow.pop %v2835
        %v2837 = vmul.f32 %v2791, 1.442695
        %v2838 = vpow.pop %v2837
        %v2839 = vmul.f32 %v2792, 1.442695
        %v2840 = vpow.pop %v2839
        %v2841 = vmul.f32 %v2793, 1.442695
        %v2842 = vpow.pop %v2841
        %v2843 = vmul.f32 %v2794, 1.442695
        %v2844 = vpow.pop %v2843
        %v2845 = vmul.f32 %v2795, 1.442695
        %v2846 = vpow.pop %v2845
        %v2847 = vmul.f32 %v2796, 1.442695
        %v2848 = vpow.pop %v2847
        %v2849 = vmul.f32 %v2797, 1.442695
        %v2850 = vpow.pop %v2849
        %v2851 = vmul.f32 %v2798, 1.442695
        %v2852 = vpow.pop %v2851
        %v2853 = vmul.f32 %v2799, 1.442695
        %v2854 = vpow.pop %v2853
        %v2855 = vmul.f32 %v2800, 1.442695
        %v2856 = vpow.pop %v2855
        %v2857 = vmul.f32 %v2801, 1.442695
        %v2858 = vpow.pop %v2857
        %v2859 = vmul.f32 %v2802, 1.442695
        %v2860 = vpow.pop %v2859
        %v2861 = vmul.f32 %v2803, 1.442695
        %v2862 = vpow.pop %v2861
        %v2863 = vmul.f32 %v2804, 1.442695
        %v2864 = vpow.pop %v2863
        %v2865 = vmul.f32 %v2805, 1.442695
        %v2866 = vpow.pop %v2865
        %v2867 = vmul.f32 %v2806, 1.442695
        %v2868 = vpow.pop %v2867
        %v2869 = vmul.f32 %v2807, 1.442695
        %v2870 = vpow.pop %v2869
        %v2871 = vmul.f32 %v2808, 1.442695
        %v2872 = vpow.pop %v2871
        %v2873 = vmul.f32 %v2713, %v2810
        %v2874 = vmul.f32 %v2714, %v2812
        %v2875 = vmul.f32 %v2715, %v2814
        %v2876 = vmul.f32 %v2716, %v2816
        %v2877 = vmul.f32 %v2717, %v2818
        %v2878 = vmul.f32 %v2718, %v2820
        %v2879 = vmul.f32 %v2719, %v2822
        %v2880 = vmul.f32 %v2720, %v2824
        %v2881 = vmul.f32 %v2721, %v2826
        %v2882 = vmul.f32 %v2722, %v2828
        %v2883 = vmul.f32 %v2723, %v2830
        %v2884 = vmul.f32 %v2724, %v2832
        %v2885 = vmul.f32 %v2725, %v2834
        %v2886 = vmul.f32 %v2726, %v2836
        %v2887 = vmul.f32 %v2727, %v2838
        %v2888 = vmul.f32 %v2728, %v2840
        %v2889 = vmul.f32 %v2729, %v2842
        %v2890 = vmul.f32 %v2730, %v2844
        %v2891 = vmul.f32 %v2731, %v2846
        %v2892 = vmul.f32 %v2732, %v2848
        %v2893 = vmul.f32 %v2733, %v2850
        %v2894 = vmul.f32 %v2734, %v2852
        %v2895 = vmul.f32 %v2735, %v2854
        %v2896 = vmul.f32 %v2736, %v2856
        %v2897 = vmul.f32 %v2737, %v2858
        %v2898 = vmul.f32 %v2738, %v2860
        %v2899 = vmul.f32 %v2739, %v2862
        %v2900 = vmul.f32 %v2740, %v2864
        %v2901 = vmul.f32 %v2741, %v2866
        %v2902 = vmul.f32 %v2742, %v2868
        %v2903 = vmul.f32 %v2743, %v2870
        %v2904 = vmul.f32 %v2744, %v2872
        %v2905 = vsub.f32 1.0, %v2873
        %v2906 = vsub.f32 1.0, %v2874
        %v2907 = vsub.f32 1.0, %v2875
        %v2908 = vsub.f32 1.0, %v2876
        %v2909 = vsub.f32 1.0, %v2877
        %v2910 = vsub.f32 1.0, %v2878
        %v2911 = vsub.f32 1.0, %v2879
        %v2912 = vsub.f32 1.0, %v2880
        %v2913 = vsub.f32 1.0, %v2881
        %v2914 = vsub.f32 1.0, %v2882
        %v2915 = vsub.f32 1.0, %v2883
        %v2916 = vsub.f32 1.0, %v2884
        %v2917 = vsub.f32 1.0, %v2885
        %v2918 = vsub.f32 1.0, %v2886
        %v2919 = vsub.f32 1.0, %v2887
        %v2920 = vsub.f32 1.0, %v2888
        %v2921 = vsub.f32 1.0, %v2889
        %v2922 = vsub.f32 1.0, %v2890
        %v2923 = vsub.f32 1.0, %v2891
        %v2924 = vsub.f32 1.0, %v2892
        %v2925 = vsub.f32 1.0, %v2893
        %v2926 = vsub.f32 1.0, %v2894
        %v2927 = vsub.f32 1.0, %v2895
        %v2928 = vsub.f32 1.0, %v2896
        %v2929 = vsub.f32 1.0, %v2897
        %v2930 = vsub.f32 1.0, %v2898
        %v2931 = vsub.f32 1.0, %v2899
        %v2932 = vsub.f32 1.0, %v2900
        %v2933 = vsub.f32 1.0, %v2901
        %v2934 = vsub.f32 1.0, %v2902
        %v2935 = vsub.f32 1.0, %v2903
        %v2936 = vsub.f32 1.0, %v2904
        %v2937 = vmul.f32 %v2265, %v2905
        %v2938 = vmul.f32 %v2266, %v2906
        %v2939 = vmul.f32 %v2267, %v2907
        %v2940 = vmul.f32 %v2268, %v2908
        %v2941 = vmul.f32 %v2269, %v2909
        %v2942 = vmul.f32 %v2270, %v2910
        %v2943 = vmul.f32 %v2271, %v2911
        %v2944 = vmul.f32 %v2272, %v2912
        %v2945 = vmul.f32 %v2273, %v2913
        %v2946 = vmul.f32 %v2274, %v2914
        %v2947 = vmul.f32 %v2275, %v2915
        %v2948 = vmul.f32 %v2276, %v2916
        %v2949 = vmul.f32 %v2277, %v2917
        %v2950 = vmul.f32 %v2278, %v2918
        %v2951 = vmul.f32 %v2279, %v2919
        %v2952 = vmul.f32 %v2280, %v2920
        %v2953 = vmul.f32 %v2281, %v2921
        %v2954 = vmul.f32 %v2282, %v2922
        %v2955 = vmul.f32 %v2283, %v2923
        %v2956 = vmul.f32 %v2284, %v2924
        %v2957 = vmul.f32 %v2285, %v2925
        %v2958 = vmul.f32 %v2286, %v2926
        %v2959 = vmul.f32 %v2287, %v2927
        %v2960 = vmul.f32 %v2288, %v2928
        %v2961 = vmul.f32 %v2289, %v2929
        %v2962 = vmul.f32 %v2290, %v2930
        %v2963 = vmul.f32 %v2291, %v2931
        %v2964 = vmul.f32 %v2292, %v2932
        %v2965 = vmul.f32 %v2293, %v2933
        %v2966 = vmul.f32 %v2294, %v2934
        %v2967 = vmul.f32 %v2295, %v2935
        %v2968 = vmul.f32 %v2296, %v2936
        %v2969 = vadd.f32 %v2937, 1.0
        %v2970 = vadd.f32 %v2938, 1.0
        %v2971 = vadd.f32 %v2939, 1.0
        %v2972 = vadd.f32 %v2940, 1.0
        %v2973 = vadd.f32 %v2941, 1.0
        %v2974 = vadd.f32 %v2942, 1.0
        %v2975 = vadd.f32 %v2943, 1.0
        %v2976 = vadd.f32 %v2944, 1.0
        %v2977 = vadd.f32 %v2945, 1.0
        %v2978 = vadd.f32 %v2946, 1.0
        %v2979 = vadd.f32 %v2947, 1.0
        %v2980 = vadd.f32 %v2948, 1.0
        %v2981 = vadd.f32 %v2949, 1.0
        %v2982 = vadd.f32 %v2950, 1.0
        %v2983 = vadd.f32 %v2951, 1.0
        %v2984 = vadd.f32 %v2952, 1.0
        %v2985 = vadd.f32 %v2953, 1.0
        %v2986 = vadd.f32 %v2954, 1.0
        %v2987 = vadd.f32 %v2955, 1.0
        %v2988 = vadd.f32 %v2956, 1.0
        %v2989 = vadd.f32 %v2957, 1.0
        %v2990 = vadd.f32 %v2958, 1.0
        %v2991 = vadd.f32 %v2959, 1.0
        %v2992 = vadd.f32 %v2960, 1.0
        %v2993 = vadd.f32 %v2961, 1.0
        %v2994 = vadd.f32 %v2962, 1.0
        %v2995 = vadd.f32 %v2963, 1.0
        %v2996 = vadd.f32 %v2964, 1.0
        %v2997 = vadd.f32 %v2965, 1.0
        %v2998 = vadd.f32 %v2966, 1.0
        %v2999 = vadd.f32 %v2967, 1.0
        %v3000 = vadd.f32 %v2968, 1.0
        %v3001 = vmul.f32 %v2168, %v2969
        %v3002 = vmul.f32 %v2169, %v2970
        %v3003 = vmul.f32 %v2170, %v2971
        %v3004 = vmul.f32 %v2171, %v2972
        %v3005 = vmul.f32 %v2172, %v2973
        %v3006 = vmul.f32 %v2173, %v2974
        %v3007 = vmul.f32 %v2174, %v2975
        %v3008 = vmul.f32 %v2175, %v2976
        %v3009 = vmul.f32 %v2176, %v2977
        %v3010 = vmul.f32 %v2177, %v2978
        %v3011 = vmul.f32 %v2178, %v2979
        %v3012 = vmul.f32 %v2179, %v2980
        %v3013 = vmul.f32 %v2180, %v2981
        %v3014 = vmul.f32 %v2181, %v2982
        %v3015 = vmul.f32 %v2182, %v2983
        %v3016 = vmul.f32 %v2183, %v2984
        %v3017 = vmul.f32 %v2184, %v2985
        %v3018 = vmul.f32 %v2185, %v2986
        %v3019 = vmul.f32 %v2186, %v2987
        %v3020 = vmul.f32 %v2187, %v2988
        %v3021 = vmul.f32 %v2188, %v2989
        %v3022 = vmul.f32 %v2189, %v2990
        %v3023 = vmul.f32 %v2190, %v2991
        %v3024 = vmul.f32 %v2191, %v2992
        %v3025 = vmul.f32 %v2192, %v2993
        %v3026 = vmul.f32 %v2193, %v2994
        %v3027 = vmul.f32 %v2194, %v2995
        %v3028 = vmul.f32 %v2195, %v2996
        %v3029 = vmul.f32 %v2196, %v2997
        %v3030 = vmul.f32 %v2197, %v2998
        %v3031 = vmul.f32 %v2198, %v2999
        %v3032 = vmul.f32 %v2199, %v3000
        %3034 = vset.pattern.permute.xlu0 0
        %3035 = vperm.xlu0 %3034, %v1044
        %v3036 = vpop.permute.xlu0 %3035
        %3039 = vset.pattern.permute.xlu0 0
        %3040 = vperm.xlu0 %3039, %v1047
        %v3041 = vpop.permute.xlu0 %3040
        %3044 = vset.pattern.permute.xlu0 0
        %3045 = vperm.xlu0 %3044, %v1052
        %v3046 = vpop.permute.xlu0 %3045
        %3049 = vset.pattern.permute.xlu0 0
        %3050 = vperm.xlu0 %3049, %v1055
        %v3051 = vpop.permute.xlu0 %3050
        %3054 = vset.pattern.permute.xlu0 0
        %3055 = vperm.xlu0 %3054, %v1060
        %v3056 = vpop.permute.xlu0 %3055
        %3059 = vset.pattern.permute.xlu0 0
        %3060 = vperm.xlu0 %3059, %v1063
        %v3061 = vpop.permute.xlu0 %3060
        %3064 = vset.pattern.permute.xlu0 0
        %3065 = vperm.xlu0 %3064, %v1068
        %v3066 = vpop.permute.xlu0 %3065
        %3069 = vset.pattern.permute.xlu0 0
        %3070 = vperm.xlu0 %3069, %v1071
        %v3071 = vpop.permute.xlu0 %3070
        %3074 = vset.pattern.permute.xlu0 0
        %3075 = vperm.xlu0 %3074, %v1076
        %v3076 = vpop.permute.xlu0 %3075
        %3079 = vset.pattern.permute.xlu0 0
        %3080 = vperm.xlu0 %3079, %v1079
        %v3081 = vpop.permute.xlu0 %3080
        %3084 = vset.pattern.permute.xlu0 0
        %3085 = vperm.xlu0 %3084, %v1084
        %v3086 = vpop.permute.xlu0 %3085
        %3089 = vset.pattern.permute.xlu0 0
        %3090 = vperm.xlu0 %3089, %v1087
        %v3091 = vpop.permute.xlu0 %3090
        %3094 = vset.pattern.permute.xlu0 0
        %3095 = vperm.xlu0 %3094, %v1092
        %v3096 = vpop.permute.xlu0 %3095
        %3099 = vset.pattern.permute.xlu0 0
        %3100 = vperm.xlu0 %3099, %v1095
        %v3101 = vpop.permute.xlu0 %3100
        %3104 = vset.pattern.permute.xlu0 0
        %3105 = vperm.xlu0 %3104, %v1100
        %v3106 = vpop.permute.xlu0 %3105
        %3109 = vset.pattern.permute.xlu0 0
        %3110 = vperm.xlu0 %3109, %v1103
        %v3111 = vpop.permute.xlu0 %3110
        %3114 = vset.pattern.permute.xlu0 0
        %3115 = vperm.xlu0 %3114, %v1108
        %v3116 = vpop.permute.xlu0 %3115
        %3119 = vset.pattern.permute.xlu0 0
        %3120 = vperm.xlu0 %3119, %v1111
        %v3121 = vpop.permute.xlu0 %3120
        %3124 = vset.pattern.permute.xlu0 0
        %3125 = vperm.xlu0 %3124, %v1116
        %v3126 = vpop.permute.xlu0 %3125
        %3129 = vset.pattern.permute.xlu0 0
        %3130 = vperm.xlu0 %3129, %v1119
        %v3131 = vpop.permute.xlu0 %3130
        %3134 = vset.pattern.permute.xlu0 0
        %3135 = vperm.xlu0 %3134, %v1124
        %v3136 = vpop.permute.xlu0 %3135
        %3139 = vset.pattern.permute.xlu0 0
        %3140 = vperm.xlu0 %3139, %v1127
        %v3141 = vpop.permute.xlu0 %3140
        %3144 = vset.pattern.permute.xlu0 0
        %3145 = vperm.xlu0 %3144, %v1132
        %v3146 = vpop.permute.xlu0 %3145
        %3149 = vset.pattern.permute.xlu0 0
        %3150 = vperm.xlu0 %3149, %v1135
        %v3151 = vpop.permute.xlu0 %3150
        %3154 = vset.pattern.permute.xlu0 0
        %3155 = vperm.xlu0 %3154, %v1140
        %v3156 = vpop.permute.xlu0 %3155
        %3159 = vset.pattern.permute.xlu0 0
        %3160 = vperm.xlu0 %3159, %v1143
        %v3161 = vpop.permute.xlu0 %3160
        %3164 = vset.pattern.permute.xlu0 0
        %3165 = vperm.xlu0 %3164, %v1148
        %v3166 = vpop.permute.xlu0 %3165
        %3169 = vset.pattern.permute.xlu0 0
        %3170 = vperm.xlu0 %3169, %v1151
        %v3171 = vpop.permute.xlu0 %3170
        %3174 = vset.pattern.permute.xlu0 0
        %3175 = vperm.xlu0 %3174, %v1156
        %v3176 = vpop.permute.xlu0 %3175
        %3179 = vset.pattern.permute.xlu0 0
        %3180 = vperm.xlu0 %3179, %v1159
        %v3181 = vpop.permute.xlu0 %3180
        %3184 = vset.pattern.permute.xlu0 0
        %3185 = vperm.xlu0 %3184, %v1164
        %v3186 = vpop.permute.xlu0 %3185
        %3189 = vset.pattern.permute.xlu0 0
        %3190 = vperm.xlu0 %3189, %v1167
        %v3191 = vpop.permute.xlu0 %3190
        %v3193 = vmul.f32 %v3001, %v3036
        %v3194 = vmul.f32 %v3002, %v3041
        %v3195 = vmul.f32 %v3003, %v3046
        %v3196 = vmul.f32 %v3004, %v3051
        %v3197 = vmul.f32 %v3005, %v3056
        %v3198 = vmul.f32 %v3006, %v3061
        %v3199 = vmul.f32 %v3007, %v3066
        %v3200 = vmul.f32 %v3008, %v3071
        %v3201 = vmul.f32 %v3009, %v3076
        %v3202 = vmul.f32 %v3010, %v3081
        %v3203 = vmul.f32 %v3011, %v3086
        %v3204 = vmul.f32 %v3012, %v3091
        %v3205 = vmul.f32 %v3013, %v3096
        %v3206 = vmul.f32 %v3014, %v3101
        %v3207 = vmul.f32 %v3015, %v3106
        %v3208 = vmul.f32 %v3016, %v3111
        %v3209 = vmul.f32 %v3017, %v3116
        %v3210 = vmul.f32 %v3018, %v3121
        %v3211 = vmul.f32 %v3019, %v3126
        %v3212 = vmul.f32 %v3020, %v3131
        %v3213 = vmul.f32 %v3021, %v3136
        %v3214 = vmul.f32 %v3022, %v3141
        %v3215 = vmul.f32 %v3023, %v3146
        %v3216 = vmul.f32 %v3024, %v3151
        %v3217 = vmul.f32 %v3025, %v3156
        %v3218 = vmul.f32 %v3026, %v3161
        %v3219 = vmul.f32 %v3027, %v3166
        %v3220 = vmul.f32 %v3028, %v3171
        %v3221 = vmul.f32 %v3029, %v3176
        %v3222 = vmul.f32 %v3030, %v3181
        %v3223 = vmul.f32 %v3031, %v3186
        %v3224 = vmul.f32 %v3032, %v3191
        %v3225 = vadd.f32 %v3193, 0.0
        %v3226 = vadd.f32 %v3194, 0.0
        %v3227 = vadd.f32 %v3195, 0.0
        %v3228 = vadd.f32 %v3196, 0.0
        %v3229 = vadd.f32 %v3197, 0.0
        %v3230 = vadd.f32 %v3198, 0.0
        %v3231 = vadd.f32 %v3199, 0.0
        %v3232 = vadd.f32 %v3200, 0.0
        %v3233 = vadd.f32 %v3201, 0.0
        %v3234 = vadd.f32 %v3202, 0.0
        %v3235 = vadd.f32 %v3203, 0.0
        %v3236 = vadd.f32 %v3204, 0.0
        %v3237 = vadd.f32 %v3205, 0.0
        %v3238 = vadd.f32 %v3206, 0.0
        %v3239 = vadd.f32 %v3207, 0.0
        %v3240 = vadd.f32 %v3208, 0.0
        %v3241 = vadd.f32 %v3209, 0.0
        %v3242 = vadd.f32 %v3210, 0.0
        %v3243 = vadd.f32 %v3211, 0.0
        %v3244 = vadd.f32 %v3212, 0.0
        %v3245 = vadd.f32 %v3213, 0.0
        %v3246 = vadd.f32 %v3214, 0.0
        %v3247 = vadd.f32 %v3215, 0.0
        %v3248 = vadd.f32 %v3216, 0.0
        %v3249 = vadd.f32 %v3217, 0.0
        %v3250 = vadd.f32 %v3218, 0.0
        %v3251 = vadd.f32 %v3219, 0.0
        %v3252 = vadd.f32 %v3220, 0.0
        %v3253 = vadd.f32 %v3221, 0.0
        %v3254 = vadd.f32 %v3222, 0.0
        %v3255 = vadd.f32 %v3223, 0.0
        %v3256 = vadd.f32 %v3224, 0.0
        %3257 = vst [vmem:[%s1230 + $0x2] sm:$0xff] %v3001
        %3258 = vst [vmem:[%s1230 + $0xa] sm:$0xff] %v3002
        %3259 = vst [vmem:[%s1230 + $0x1a] sm:$0xff] %v3003
        %3260 = vst [vmem:[%s1230 + $0x22] sm:$0xff] %v3004
        %3261 = vst [vmem:[%s1230 + $0x32] sm:$0xff] %v3005
        %3262 = vst [vmem:[%s1230 + $0x3a] sm:$0xff] %v3006
        %3263 = vst [vmem:[%s1230 + $0x4a] sm:$0xff] %v3007
        %3264 = vst [vmem:[%s1230 + $0x52] sm:$0xff] %v3008
        %3265 = vst [vmem:[%s1230 + $0x62] sm:$0xff] %v3009
        %3266 = vst [vmem:[%s1230 + $0x6a] sm:$0xff] %v3010
        %3267 = vst [vmem:[%s1230 + $0x7a] sm:$0xff] %v3011
        %3268 = vst [vmem:[%s1230 + $0x82] sm:$0xff] %v3012
        %3269 = vst [vmem:[%s1230 + $0x92] sm:$0xff] %v3013
        %3270 = vst [vmem:[%s1230 + $0x9a] sm:$0xff] %v3014
        %3271 = vst [vmem:[%s1230 + $0xaa] sm:$0xff] %v3015
        %3272 = vst [vmem:[%s1230 + $0xb2] sm:$0xff] %v3016
        %3273 = vst [vmem:[%s1230 + $0xc2] sm:$0xff] %v3017
        %3274 = vst [vmem:[%s1230 + $0xca] sm:$0xff] %v3018
        %3275 = vst [vmem:[%s1230 + $0xda] sm:$0xff] %v3019
        %3276 = vst [vmem:[%s1230 + $0xe2] sm:$0xff] %v3020
        %3277 = vst [vmem:[%s1230 + $0xf2] sm:$0xff] %v3021
        %3278 = vst [vmem:[%s1230 + $0xfa] sm:$0xff] %v3022
        %3279 = vst [vmem:[%s1230 + $0x10a] sm:$0xff] %v3023
        %3280 = vst [vmem:[%s1230 + $0x112] sm:$0xff] %v3024
        %3281 = vst [vmem:[%s1230 + $0x122] sm:$0xff] %v3025
        %3282 = vst [vmem:[%s1230 + $0x12a] sm:$0xff] %v3026
        %3283 = vst [vmem:[%s1230 + $0x13a] sm:$0xff] %v3027
        %3284 = vst [vmem:[%s1230 + $0x142] sm:$0xff] %v3028
        %3285 = vst [vmem:[%s1230 + $0x152] sm:$0xff] %v3029
        %3286 = vst [vmem:[%s1230 + $0x15a] sm:$0xff] %v3030
        %3287 = vst [vmem:[%s1230 + $0x16a] sm:$0xff] %v3031
        %3288 = vst [vmem:[%s1230 + $0x172] sm:$0xff] %v3032
        %v3289 = vld [vmem:[#allocation8] sm:$0x1f]
        %v3290 = vld [vmem:[#allocation8 + $0x8] sm:$0x1f]
        %v3291 = vld [vmem:[#allocation8 + $0x10] sm:$0x1f]
        %v3292 = vld [vmem:[#allocation8 + $0x18] sm:$0x1f]
        %v3293 = vld [vmem:[#allocation8 + $0x20] sm:$0x1f]
        %v3294 = vld [vmem:[#allocation2] sm:$0xff]
        %v3295 = vld [vmem:[#allocation2 + $0x8] sm:$0xff]
        %v3296 = vld [vmem:[#allocation2 + $0x18] sm:$0xff]
        %v3297 = vld [vmem:[#allocation2 + $0x20] sm:$0xff]
        %v3298 = vld [vmem:[#allocation2 + $0x30] sm:$0xff]
        %v3299 = vld [vmem:[#allocation2 + $0x38] sm:$0xff]
        %v3300 = vld [vmem:[#allocation2 + $0x48] sm:$0xff]
        %v3301 = vld [vmem:[#allocation2 + $0x50] sm:$0xff]
        %v3302 = vld [vmem:[#allocation2 + $0x60] sm:$0xff]
        %v3303 = vld [vmem:[#allocation2 + $0x68] sm:$0xff]
        %v3304 = vld [vmem:[#allocation2 + $0x78] sm:$0xff]
        %v3305 = vld [vmem:[#allocation2 + $0x80] sm:$0xff]
        %v3306 = vld [vmem:[#allocation2 + $0x90] sm:$0xff]
        %v3307 = vld [vmem:[#allocation2 + $0x98] sm:$0xff]
        %v3308 = vld [vmem:[#allocation2 + $0xa8] sm:$0xff]
        %v3309 = vld [vmem:[#allocation2 + $0xb0] sm:$0xff]
        %v3310 = vld [vmem:[#allocation2 + $0xc0] sm:$0xff]
        %v3311 = vld [vmem:[#allocation2 + $0xc8] sm:$0xff]
        %v3312 = vld [vmem:[#allocation2 + $0xd8] sm:$0xff]
        %v3313 = vld [vmem:[#allocation2 + $0xe0] sm:$0xff]
        %v3314 = vld [vmem:[#allocation2 + $0xf0] sm:$0xff]
        %v3315 = vld [vmem:[#allocation2 + $0xf8] sm:$0xff]
        %v3316 = vld [vmem:[#allocation2 + $0x108] sm:$0xff]
        %v3317 = vld [vmem:[#allocation2 + $0x110] sm:$0xff]
        %v3318 = vld [vmem:[#allocation2 + $0x120] sm:$0xff]
        %v3319 = vld [vmem:[#allocation2 + $0x128] sm:$0xff]
        %v3320 = vld [vmem:[#allocation2 + $0x138] sm:$0xff]
        %v3321 = vld [vmem:[#allocation2 + $0x140] sm:$0xff]
        %v3322 = vld [vmem:[#allocation2 + $0x150] sm:$0xff]
        %v3323 = vld [vmem:[#allocation2 + $0x158] sm:$0xff]
        %v3324 = vld [vmem:[#allocation2 + $0x168] sm:$0xff]
        %v3325 = vld [vmem:[#allocation2 + $0x170] sm:$0xff]
        %v3326 = vlaneseq
        %v3327 = vshrl.u32 %v3326, 7
        %v3328 = vsub.s32 0, %v3327
        %v3329 = vrot.slane %v3289, %v3328
        %v3330 = vmul.f32 %v3294, %v3329
        %v3331 = vmul.f32 %v3295, %v3329
        %v3332 = vmul.f32 %v3296, %v3329
        %v3333 = vmul.f32 %v3297, %v3329
        %v3334 = vmul.f32 %v3298, %v3329
        %v3335 = vmul.f32 %v3299, %v3329
        %v3336 = vmul.f32 %v3300, %v3329
        %v3337 = vmul.f32 %v3301, %v3329
        %v3338 = vmul.f32 %v3302, %v3329
        %v3339 = vmul.f32 %v3303, %v3329
        %v3340 = vmul.f32 %v3304, %v3329
        %v3341 = vmul.f32 %v3305, %v3329
        %v3342 = vmul.f32 %v3306, %v3329
        %v3343 = vmul.f32 %v3307, %v3329
        %v3344 = vmul.f32 %v3308, %v3329
        %v3345 = vmul.f32 %v3309, %v3329
        %v3346 = vmul.f32 %v3310, %v3329
        %v3347 = vmul.f32 %v3311, %v3329
        %v3348 = vmul.f32 %v3312, %v3329
        %v3349 = vmul.f32 %v3313, %v3329
        %v3350 = vmul.f32 %v3314, %v3329
        %v3351 = vmul.f32 %v3315, %v3329
        %v3352 = vmul.f32 %v3316, %v3329
        %v3353 = vmul.f32 %v3317, %v3329
        %v3354 = vmul.f32 %v3318, %v3329
        %v3355 = vmul.f32 %v3319, %v3329
        %v3356 = vmul.f32 %v3320, %v3329
        %v3357 = vmul.f32 %v3321, %v3329
        %v3358 = vmul.f32 %v3322, %v3329
        %v3359 = vmul.f32 %v3323, %v3329
        %v3360 = vmul.f32 %v3324, %v3329
        %v3361 = vmul.f32 %v3325, %v3329
        %v3362 = vadd.f32 %v3330, 0.0
        %v3363 = vadd.f32 %v3331, 0.0
        %v3364 = vadd.f32 %v3332, 0.0
        %v3365 = vadd.f32 %v3333, 0.0
        %v3366 = vadd.f32 %v3334, 0.0
        %v3367 = vadd.f32 %v3335, 0.0
        %v3368 = vadd.f32 %v3336, 0.0
        %v3369 = vadd.f32 %v3337, 0.0
        %v3370 = vadd.f32 %v3338, 0.0
        %v3371 = vadd.f32 %v3339, 0.0
        %v3372 = vadd.f32 %v3340, 0.0
        %v3373 = vadd.f32 %v3341, 0.0
        %v3374 = vadd.f32 %v3342, 0.0
        %v3375 = vadd.f32 %v3343, 0.0
        %v3376 = vadd.f32 %v3344, 0.0
        %v3377 = vadd.f32 %v3345, 0.0
        %v3378 = vadd.f32 %v3346, 0.0
        %v3379 = vadd.f32 %v3347, 0.0
        %v3380 = vadd.f32 %v3348, 0.0
        %v3381 = vadd.f32 %v3349, 0.0
        %v3382 = vadd.f32 %v3350, 0.0
        %v3383 = vadd.f32 %v3351, 0.0
        %v3384 = vadd.f32 %v3352, 0.0
        %v3385 = vadd.f32 %v3353, 0.0
        %v3386 = vadd.f32 %v3354, 0.0
        %v3387 = vadd.f32 %v3355, 0.0
        %v3388 = vadd.f32 %v3356, 0.0
        %v3389 = vadd.f32 %v3357, 0.0
        %v3390 = vadd.f32 %v3358, 0.0
        %v3391 = vadd.f32 %v3359, 0.0
        %v3392 = vadd.f32 %v3360, 0.0
        %v3393 = vadd.f32 %v3361, 0.0
        %v3394 = vld [vmem:[#allocation2 + $0x1] sm:$0xff]
        %v3395 = vld [vmem:[#allocation2 + $0x9] sm:$0xff]
        %v3396 = vld [vmem:[#allocation2 + $0x19] sm:$0xff]
        %v3397 = vld [vmem:[#allocation2 + $0x21] sm:$0xff]
        %v3398 = vld [vmem:[#allocation2 + $0x31] sm:$0xff]
        %v3399 = vld [vmem:[#allocation2 + $0x39] sm:$0xff]
        %v3400 = vld [vmem:[#allocation2 + $0x49] sm:$0xff]
        %v3401 = vld [vmem:[#allocation2 + $0x51] sm:$0xff]
        %v3402 = vld [vmem:[#allocation2 + $0x61] sm:$0xff]
        %v3403 = vld [vmem:[#allocation2 + $0x69] sm:$0xff]
        %v3404 = vld [vmem:[#allocation2 + $0x79] sm:$0xff]
        %v3405 = vld [vmem:[#allocation2 + $0x81] sm:$0xff]
        %v3406 = vld [vmem:[#allocation2 + $0x91] sm:$0xff]
        %v3407 = vld [vmem:[#allocation2 + $0x99] sm:$0xff]
        %v3408 = vld [vmem:[#allocation2 + $0xa9] sm:$0xff]
        %v3409 = vld [vmem:[#allocation2 + $0xb1] sm:$0xff]
        %v3410 = vld [vmem:[#allocation2 + $0xc1] sm:$0xff]
        %v3411 = vld [vmem:[#allocation2 + $0xc9] sm:$0xff]
        %v3412 = vld [vmem:[#allocation2 + $0xd9] sm:$0xff]
        %v3413 = vld [vmem:[#allocation2 + $0xe1] sm:$0xff]
        %v3414 = vld [vmem:[#allocation2 + $0xf1] sm:$0xff]
        %v3415 = vld [vmem:[#allocation2 + $0xf9] sm:$0xff]
        %v3416 = vld [vmem:[#allocation2 + $0x109] sm:$0xff]
        %v3417 = vld [vmem:[#allocation2 + $0x111] sm:$0xff]
        %v3418 = vld [vmem:[#allocation2 + $0x121] sm:$0xff]
        %v3419 = vld [vmem:[#allocation2 + $0x129] sm:$0xff]
        %v3420 = vld [vmem:[#allocation2 + $0x139] sm:$0xff]
        %v3421 = vld [vmem:[#allocation2 + $0x141] sm:$0xff]
        %v3422 = vld [vmem:[#allocation2 + $0x151] sm:$0xff]
        %v3423 = vld [vmem:[#allocation2 + $0x159] sm:$0xff]
        %v3424 = vld [vmem:[#allocation2 + $0x169] sm:$0xff]
        %v3425 = vld [vmem:[#allocation2 + $0x171] sm:$0xff]
        %v3426 = vlaneseq
        %v3427 = vshrl.u32 %v3426, 7
        %v3428 = vsub.s32 1, %v3427
        %v3429 = vrot.slane %v3289, %v3428
        %v3430 = vmul.f32 %v3394, %v3429
        %v3431 = vmul.f32 %v3395, %v3429
        %v3432 = vmul.f32 %v3396, %v3429
        %v3433 = vmul.f32 %v3397, %v3429
        %v3434 = vmul.f32 %v3398, %v3429
        %v3435 = vmul.f32 %v3399, %v3429
        %v3436 = vmul.f32 %v3400, %v3429
        %v3437 = vmul.f32 %v3401, %v3429
        %v3438 = vmul.f32 %v3402, %v3429
        %v3439 = vmul.f32 %v3403, %v3429
        %v3440 = vmul.f32 %v3404, %v3429
        %v3441 = vmul.f32 %v3405, %v3429
        %v3442 = vmul.f32 %v3406, %v3429
        %v3443 = vmul.f32 %v3407, %v3429
        %v3444 = vmul.f32 %v3408, %v3429
        %v3445 = vmul.f32 %v3409, %v3429
        %v3446 = vmul.f32 %v3410, %v3429
        %v3447 = vmul.f32 %v3411, %v3429
        %v3448 = vmul.f32 %v3412, %v3429
        %v3449 = vmul.f32 %v3413, %v3429
        %v3450 = vmul.f32 %v3414, %v3429
        %v3451 = vmul.f32 %v3415, %v3429
        %v3452 = vmul.f32 %v3416, %v3429
        %v3453 = vmul.f32 %v3417, %v3429
        %v3454 = vmul.f32 %v3418, %v3429
        %v3455 = vmul.f32 %v3419, %v3429
        %v3456 = vmul.f32 %v3420, %v3429
        %v3457 = vmul.f32 %v3421, %v3429
        %v3458 = vmul.f32 %v3422, %v3429
        %v3459 = vmul.f32 %v3423, %v3429
        %v3460 = vmul.f32 %v3424, %v3429
        %v3461 = vmul.f32 %v3425, %v3429
        %v3462 = vadd.f32 %v3362, %v3430
        %v3463 = vadd.f32 %v3363, %v3431
        %v3464 = vadd.f32 %v3364, %v3432
        %v3465 = vadd.f32 %v3365, %v3433
        %v3466 = vadd.f32 %v3366, %v3434
        %v3467 = vadd.f32 %v3367, %v3435
        %v3468 = vadd.f32 %v3368, %v3436
        %v3469 = vadd.f32 %v3369, %v3437
        %v3470 = vadd.f32 %v3370, %v3438
        %v3471 = vadd.f32 %v3371, %v3439
        %v3472 = vadd.f32 %v3372, %v3440
        %v3473 = vadd.f32 %v3373, %v3441
        %v3474 = vadd.f32 %v3374, %v3442
        %v3475 = vadd.f32 %v3375, %v3443
        %v3476 = vadd.f32 %v3376, %v3444
        %v3477 = vadd.f32 %v3377, %v3445
        %v3478 = vadd.f32 %v3378, %v3446
        %v3479 = vadd.f32 %v3379, %v3447
        %v3480 = vadd.f32 %v3380, %v3448
        %v3481 = vadd.f32 %v3381, %v3449
        %v3482 = vadd.f32 %v3382, %v3450
        %v3483 = vadd.f32 %v3383, %v3451
        %v3484 = vadd.f32 %v3384, %v3452
        %v3485 = vadd.f32 %v3385, %v3453
        %v3486 = vadd.f32 %v3386, %v3454
        %v3487 = vadd.f32 %v3387, %v3455
        %v3488 = vadd.f32 %v3388, %v3456
        %v3489 = vadd.f32 %v3389, %v3457
        %v3490 = vadd.f32 %v3390, %v3458
        %v3491 = vadd.f32 %v3391, %v3459
        %v3492 = vadd.f32 %v3392, %v3460
        %v3493 = vadd.f32 %v3393, %v3461
        %v3494 = vld [vmem:[#allocation2 + $0x2] sm:$0xff]
        %v3495 = vld [vmem:[#allocation2 + $0xa] sm:$0xff]
        %v3496 = vld [vmem:[#allocation2 + $0x1a] sm:$0xff]
        %v3497 = vld [vmem:[#allocation2 + $0x22] sm:$0xff]
        %v3498 = vld [vmem:[#allocation2 + $0x32] sm:$0xff]
        %v3499 = vld [vmem:[#allocation2 + $0x3a] sm:$0xff]
        %v3500 = vld [vmem:[#allocation2 + $0x4a] sm:$0xff]
        %v3501 = vld [vmem:[#allocation2 + $0x52] sm:$0xff]
        %v3502 = vld [vmem:[#allocation2 + $0x62] sm:$0xff]
        %v3503 = vld [vmem:[#allocation2 + $0x6a] sm:$0xff]
        %v3504 = vld [vmem:[#allocation2 + $0x7a] sm:$0xff]
        %v3505 = vld [vmem:[#allocation2 + $0x82] sm:$0xff]
        %v3506 = vld [vmem:[#allocation2 + $0x92] sm:$0xff]
        %v3507 = vld [vmem:[#allocation2 + $0x9a] sm:$0xff]
        %v3508 = vld [vmem:[#allocation2 + $0xaa] sm:$0xff]
        %v3509 = vld [vmem:[#allocation2 + $0xb2] sm:$0xff]
        %v3510 = vld [vmem:[#allocation2 + $0xc2] sm:$0xff]
        %v3511 = vld [vmem:[#allocation2 + $0xca] sm:$0xff]
        %v3512 = vld [vmem:[#allocation2 + $0xda] sm:$0xff]
        %v3513 = vld [vmem:[#allocation2 + $0xe2] sm:$0xff]
        %v3514 = vld [vmem:[#allocation2 + $0xf2] sm:$0xff]
        %v3515 = vld [vmem:[#allocation2 + $0xfa] sm:$0xff]
        %v3516 = vld [vmem:[#allocation2 + $0x10a] sm:$0xff]
        %v3517 = vld [vmem:[#allocation2 + $0x112] sm:$0xff]
        %v3518 = vld [vmem:[#allocation2 + $0x122] sm:$0xff]
        %v3519 = vld [vmem:[#allocation2 + $0x12a] sm:$0xff]
        %v3520 = vld [vmem:[#allocation2 + $0x13a] sm:$0xff]
        %v3521 = vld [vmem:[#allocation2 + $0x142] sm:$0xff]
        %v3522 = vld [vmem:[#allocation2 + $0x152] sm:$0xff]
        %v3523 = vld [vmem:[#allocation2 + $0x15a] sm:$0xff]
        %v3524 = vld [vmem:[#allocation2 + $0x16a] sm:$0xff]
        %v3525 = vld [vmem:[#allocation2 + $0x172] sm:$0xff]
        %v3526 = vlaneseq
        %v3527 = vshrl.u32 %v3526, 7
        %v3528 = vsub.s32 2, %v3527
        %v3529 = vrot.slane %v3289, %v3528
        %v3530 = vmul.f32 %v3494, %v3529
        %v3531 = vmul.f32 %v3495, %v3529
        %v3532 = vmul.f32 %v3496, %v3529
        %v3533 = vmul.f32 %v3497, %v3529
        %v3534 = vmul.f32 %v3498, %v3529
        %v3535 = vmul.f32 %v3499, %v3529
        %v3536 = vmul.f32 %v3500, %v3529
        %v3537 = vmul.f32 %v3501, %v3529
        %v3538 = vmul.f32 %v3502, %v3529
        %v3539 = vmul.f32 %v3503, %v3529
        %v3540 = vmul.f32 %v3504, %v3529
        %v3541 = vmul.f32 %v3505, %v3529
        %v3542 = vmul.f32 %v3506, %v3529
        %v3543 = vmul.f32 %v3507, %v3529
        %v3544 = vmul.f32 %v3508, %v3529
        %v3545 = vmul.f32 %v3509, %v3529
        %v3546 = vmul.f32 %v3510, %v3529
        %v3547 = vmul.f32 %v3511, %v3529
        %v3548 = vmul.f32 %v3512, %v3529
        %v3549 = vmul.f32 %v3513, %v3529
        %v3550 = vmul.f32 %v3514, %v3529
        %v3551 = vmul.f32 %v3515, %v3529
        %v3552 = vmul.f32 %v3516, %v3529
        %v3553 = vmul.f32 %v3517, %v3529
        %v3554 = vmul.f32 %v3518, %v3529
        %v3555 = vmul.f32 %v3519, %v3529
        %v3556 = vmul.f32 %v3520, %v3529
        %v3557 = vmul.f32 %v3521, %v3529
        %v3558 = vmul.f32 %v3522, %v3529
        %v3559 = vmul.f32 %v3523, %v3529
        %v3560 = vmul.f32 %v3524, %v3529
        %v3561 = vmul.f32 %v3525, %v3529
        %v3562 = vadd.f32 %v3462, %v3530
        %v3563 = vadd.f32 %v3463, %v3531
        %v3564 = vadd.f32 %v3464, %v3532
        %v3565 = vadd.f32 %v3465, %v3533
        %v3566 = vadd.f32 %v3466, %v3534
        %v3567 = vadd.f32 %v3467, %v3535
        %v3568 = vadd.f32 %v3468, %v3536
        %v3569 = vadd.f32 %v3469, %v3537
        %v3570 = vadd.f32 %v3470, %v3538
        %v3571 = vadd.f32 %v3471, %v3539
        %v3572 = vadd.f32 %v3472, %v3540
        %v3573 = vadd.f32 %v3473, %v3541
        %v3574 = vadd.f32 %v3474, %v3542
        %v3575 = vadd.f32 %v3475, %v3543
        %v3576 = vadd.f32 %v3476, %v3544
        %v3577 = vadd.f32 %v3477, %v3545
        %v3578 = vadd.f32 %v3478, %v3546
        %v3579 = vadd.f32 %v3479, %v3547
        %v3580 = vadd.f32 %v3480, %v3548
        %v3581 = vadd.f32 %v3481, %v3549
        %v3582 = vadd.f32 %v3482, %v3550
        %v3583 = vadd.f32 %v3483, %v3551
        %v3584 = vadd.f32 %v3484, %v3552
        %v3585 = vadd.f32 %v3485, %v3553
        %v3586 = vadd.f32 %v3486, %v3554
        %v3587 = vadd.f32 %v3487, %v3555
        %v3588 = vadd.f32 %v3488, %v3556
        %v3589 = vadd.f32 %v3489, %v3557
        %v3590 = vadd.f32 %v3490, %v3558
        %v3591 = vadd.f32 %v3491, %v3559
        %v3592 = vadd.f32 %v3492, %v3560
        %v3593 = vadd.f32 %v3493, %v3561
        %v3594 = vld [vmem:[#allocation2 + $0x3] sm:$0xff]
        %v3595 = vld [vmem:[#allocation2 + $0xb] sm:$0xff]
        %v3596 = vld [vmem:[#allocation2 + $0x1b] sm:$0xff]
        %v3597 = vld [vmem:[#allocation2 + $0x23] sm:$0xff]
        %v3598 = vld [vmem:[#allocation2 + $0x33] sm:$0xff]
        %v3599 = vld [vmem:[#allocation2 + $0x3b] sm:$0xff]
        %v3600 = vld [vmem:[#allocation2 + $0x4b] sm:$0xff]
        %v3601 = vld [vmem:[#allocation2 + $0x53] sm:$0xff]
        %v3602 = vld [vmem:[#allocation2 + $0x63] sm:$0xff]
        %v3603 = vld [vmem:[#allocation2 + $0x6b] sm:$0xff]
        %v3604 = vld [vmem:[#allocation2 + $0x7b] sm:$0xff]
        %v3605 = vld [vmem:[#allocation2 + $0x83] sm:$0xff]
        %v3606 = vld [vmem:[#allocation2 + $0x93] sm:$0xff]
        %v3607 = vld [vmem:[#allocation2 + $0x9b] sm:$0xff]
        %v3608 = vld [vmem:[#allocation2 + $0xab] sm:$0xff]
        %v3609 = vld [vmem:[#allocation2 + $0xb3] sm:$0xff]
        %v3610 = vld [vmem:[#allocation2 + $0xc3] sm:$0xff]
        %v3611 = vld [vmem:[#allocation2 + $0xcb] sm:$0xff]
        %v3612 = vld [vmem:[#allocation2 + $0xdb] sm:$0xff]
        %v3613 = vld [vmem:[#allocation2 + $0xe3] sm:$0xff]
        %v3614 = vld [vmem:[#allocation2 + $0xf3] sm:$0xff]
        %v3615 = vld [vmem:[#allocation2 + $0xfb] sm:$0xff]
        %v3616 = vld [vmem:[#allocation2 + $0x10b] sm:$0xff]
        %v3617 = vld [vmem:[#allocation2 + $0x113] sm:$0xff]
        %v3618 = vld [vmem:[#allocation2 + $0x123] sm:$0xff]
        %v3619 = vld [vmem:[#allocation2 + $0x12b] sm:$0xff]
        %v3620 = vld [vmem:[#allocation2 + $0x13b] sm:$0xff]
        %v3621 = vld [vmem:[#allocation2 + $0x143] sm:$0xff]
        %v3622 = vld [vmem:[#allocation2 + $0x153] sm:$0xff]
        %v3623 = vld [vmem:[#allocation2 + $0x15b] sm:$0xff]
        %v3624 = vld [vmem:[#allocation2 + $0x16b] sm:$0xff]
        %v3625 = vld [vmem:[#allocation2 + $0x173] sm:$0xff]
        %v3626 = vlaneseq
        %v3627 = vshrl.u32 %v3626, 7
        %v3628 = vsub.s32 3, %v3627
        %v3629 = vrot.slane %v3289, %v3628
        %v3630 = vmul.f32 %v3594, %v3629
        %v3631 = vmul.f32 %v3595, %v3629
        %v3632 = vmul.f32 %v3596, %v3629
        %v3633 = vmul.f32 %v3597, %v3629
        %v3634 = vmul.f32 %v3598, %v3629
        %v3635 = vmul.f32 %v3599, %v3629
        %v3636 = vmul.f32 %v3600, %v3629
        %v3637 = vmul.f32 %v3601, %v3629
        %v3638 = vmul.f32 %v3602, %v3629
        %v3639 = vmul.f32 %v3603, %v3629
        %v3640 = vmul.f32 %v3604, %v3629
        %v3641 = vmul.f32 %v3605, %v3629
        %v3642 = vmul.f32 %v3606, %v3629
        %v3643 = vmul.f32 %v3607, %v3629
        %v3644 = vmul.f32 %v3608, %v3629
        %v3645 = vmul.f32 %v3609, %v3629
        %v3646 = vmul.f32 %v3610, %v3629
        %v3647 = vmul.f32 %v3611, %v3629
        %v3648 = vmul.f32 %v3612, %v3629
        %v3649 = vmul.f32 %v3613, %v3629
        %v3650 = vmul.f32 %v3614, %v3629
        %v3651 = vmul.f32 %v3615, %v3629
        %v3652 = vmul.f32 %v3616, %v3629
        %v3653 = vmul.f32 %v3617, %v3629
        %v3654 = vmul.f32 %v3618, %v3629
        %v3655 = vmul.f32 %v3619, %v3629
        %v3656 = vmul.f32 %v3620, %v3629
        %v3657 = vmul.f32 %v3621, %v3629
        %v3658 = vmul.f32 %v3622, %v3629
        %v3659 = vmul.f32 %v3623, %v3629
        %v3660 = vmul.f32 %v3624, %v3629
        %v3661 = vmul.f32 %v3625, %v3629
        %v3662 = vadd.f32 %v3562, %v3630
        %v3663 = vadd.f32 %v3563, %v3631
        %v3664 = vadd.f32 %v3564, %v3632
        %v3665 = vadd.f32 %v3565, %v3633
        %v3666 = vadd.f32 %v3566, %v3634
        %v3667 = vadd.f32 %v3567, %v3635
        %v3668 = vadd.f32 %v3568, %v3636
        %v3669 = vadd.f32 %v3569, %v3637
        %v3670 = vadd.f32 %v3570, %v3638
        %v3671 = vadd.f32 %v3571, %v3639
        %v3672 = vadd.f32 %v3572, %v3640
        %v3673 = vadd.f32 %v3573, %v3641
        %v3674 = vadd.f32 %v3574, %v3642
        %v3675 = vadd.f32 %v3575, %v3643
        %v3676 = vadd.f32 %v3576, %v3644
        %v3677 = vadd.f32 %v3577, %v3645
        %v3678 = vadd.f32 %v3578, %v3646
        %v3679 = vadd.f32 %v3579, %v3647
        %v3680 = vadd.f32 %v3580, %v3648
        %v3681 = vadd.f32 %v3581, %v3649
        %v3682 = vadd.f32 %v3582, %v3650
        %v3683 = vadd.f32 %v3583, %v3651
        %v3684 = vadd.f32 %v3584, %v3652
        %v3685 = vadd.f32 %v3585, %v3653
        %v3686 = vadd.f32 %v3586, %v3654
        %v3687 = vadd.f32 %v3587, %v3655
        %v3688 = vadd.f32 %v3588, %v3656
        %v3689 = vadd.f32 %v3589, %v3657
        %v3690 = vadd.f32 %v3590, %v3658
        %v3691 = vadd.f32 %v3591, %v3659
        %v3692 = vadd.f32 %v3592, %v3660
        %v3693 = vadd.f32 %v3593, %v3661
        %v3694 = vld [vmem:[#allocation2 + $0x4] sm:$0xff]
        %v3695 = vld [vmem:[#allocation2 + $0xc] sm:$0xff]
        %v3696 = vld [vmem:[#allocation2 + $0x1c] sm:$0xff]
        %v3697 = vld [vmem:[#allocation2 + $0x24] sm:$0xff]
        %v3698 = vld [vmem:[#allocation2 + $0x34] sm:$0xff]
        %v3699 = vld [vmem:[#allocation2 + $0x3c] sm:$0xff]
        %v3700 = vld [vmem:[#allocation2 + $0x4c] sm:$0xff]
        %v3701 = vld [vmem:[#allocation2 + $0x54] sm:$0xff]
        %v3702 = vld [vmem:[#allocation2 + $0x64] sm:$0xff]
        %v3703 = vld [vmem:[#allocation2 + $0x6c] sm:$0xff]
        %v3704 = vld [vmem:[#allocation2 + $0x7c] sm:$0xff]
        %v3705 = vld [vmem:[#allocation2 + $0x84] sm:$0xff]
        %v3706 = vld [vmem:[#allocation2 + $0x94] sm:$0xff]
        %v3707 = vld [vmem:[#allocation2 + $0x9c] sm:$0xff]
        %v3708 = vld [vmem:[#allocation2 + $0xac] sm:$0xff]
        %v3709 = vld [vmem:[#allocation2 + $0xb4] sm:$0xff]
        %v3710 = vld [vmem:[#allocation2 + $0xc4] sm:$0xff]
        %v3711 = vld [vmem:[#allocation2 + $0xcc] sm:$0xff]
        %v3712 = vld [vmem:[#allocation2 + $0xdc] sm:$0xff]
        %v3713 = vld [vmem:[#allocation2 + $0xe4] sm:$0xff]
        %v3714 = vld [vmem:[#allocation2 + $0xf4] sm:$0xff]
        %v3715 = vld [vmem:[#allocation2 + $0xfc] sm:$0xff]
        %v3716 = vld [vmem:[#allocation2 + $0x10c] sm:$0xff]
        %v3717 = vld [vmem:[#allocation2 + $0x114] sm:$0xff]
        %v3718 = vld [vmem:[#allocation2 + $0x124] sm:$0xff]
        %v3719 = vld [vmem:[#allocation2 + $0x12c] sm:$0xff]
        %v3720 = vld [vmem:[#allocation2 + $0x13c] sm:$0xff]
        %v3721 = vld [vmem:[#allocation2 + $0x144] sm:$0xff]
        %v3722 = vld [vmem:[#allocation2 + $0x154] sm:$0xff]
        %v3723 = vld [vmem:[#allocation2 + $0x15c] sm:$0xff]
        %v3724 = vld [vmem:[#allocation2 + $0x16c] sm:$0xff]
        %v3725 = vld [vmem:[#allocation2 + $0x174] sm:$0xff]
        %v3726 = vlaneseq
        %v3727 = vshrl.u32 %v3726, 7
        %v3728 = vsub.s32 4, %v3727
        %v3729 = vrot.slane %v3289, %v3728
        %v3730 = vmul.f32 %v3694, %v3729
        %v3731 = vmul.f32 %v3695, %v3729
        %v3732 = vmul.f32 %v3696, %v3729
        %v3733 = vmul.f32 %v3697, %v3729
        %v3734 = vmul.f32 %v3698, %v3729
        %v3735 = vmul.f32 %v3699, %v3729
        %v3736 = vmul.f32 %v3700, %v3729
        %v3737 = vmul.f32 %v3701, %v3729
        %v3738 = vmul.f32 %v3702, %v3729
        %v3739 = vmul.f32 %v3703, %v3729
        %v3740 = vmul.f32 %v3704, %v3729
        %v3741 = vmul.f32 %v3705, %v3729
        %v3742 = vmul.f32 %v3706, %v3729
        %v3743 = vmul.f32 %v3707, %v3729
        %v3744 = vmul.f32 %v3708, %v3729
        %v3745 = vmul.f32 %v3709, %v3729
        %v3746 = vmul.f32 %v3710, %v3729
        %v3747 = vmul.f32 %v3711, %v3729
        %v3748 = vmul.f32 %v3712, %v3729
        %v3749 = vmul.f32 %v3713, %v3729
        %v3750 = vmul.f32 %v3714, %v3729
        %v3751 = vmul.f32 %v3715, %v3729
        %v3752 = vmul.f32 %v3716, %v3729
        %v3753 = vmul.f32 %v3717, %v3729
        %v3754 = vmul.f32 %v3718, %v3729
        %v3755 = vmul.f32 %v3719, %v3729
        %v3756 = vmul.f32 %v3720, %v3729
        %v3757 = vmul.f32 %v3721, %v3729
        %v3758 = vmul.f32 %v3722, %v3729
        %v3759 = vmul.f32 %v3723, %v3729
        %v3760 = vmul.f32 %v3724, %v3729
        %v3761 = vmul.f32 %v3725, %v3729
        %v3762 = vadd.f32 %v3662, %v3730
        %v3763 = vadd.f32 %v3663, %v3731
        %v3764 = vadd.f32 %v3664, %v3732
        %v3765 = vadd.f32 %v3665, %v3733
        %v3766 = vadd.f32 %v3666, %v3734
        %v3767 = vadd.f32 %v3667, %v3735
        %v3768 = vadd.f32 %v3668, %v3736
        %v3769 = vadd.f32 %v3669, %v3737
        %v3770 = vadd.f32 %v3670, %v3738
        %v3771 = vadd.f32 %v3671, %v3739
        %v3772 = vadd.f32 %v3672, %v3740
        %v3773 = vadd.f32 %v3673, %v3741
        %v3774 = vadd.f32 %v3674, %v3742
        %v3775 = vadd.f32 %v3675, %v3743
        %v3776 = vadd.f32 %v3676, %v3744
        %v3777 = vadd.f32 %v3677, %v3745
        %v3778 = vadd.f32 %v3678, %v3746
        %v3779 = vadd.f32 %v3679, %v3747
        %v3780 = vadd.f32 %v3680, %v3748
        %v3781 = vadd.f32 %v3681, %v3749
        %v3782 = vadd.f32 %v3682, %v3750
        %v3783 = vadd.f32 %v3683, %v3751
        %v3784 = vadd.f32 %v3684, %v3752
        %v3785 = vadd.f32 %v3685, %v3753
        %v3786 = vadd.f32 %v3686, %v3754
        %v3787 = vadd.f32 %v3687, %v3755
        %v3788 = vadd.f32 %v3688, %v3756
        %v3789 = vadd.f32 %v3689, %v3757
        %v3790 = vadd.f32 %v3690, %v3758
        %v3791 = vadd.f32 %v3691, %v3759
        %v3792 = vadd.f32 %v3692, %v3760
        %v3793 = vadd.f32 %v3693, %v3761
        %v3794 = vld [vmem:[%s1266] sm:$0xff]
        %v3795 = vld [vmem:[%s1266 + $0x8] sm:$0xff]
        %v3796 = vld [vmem:[%s1266 + $0x18] sm:$0xff]
        %v3797 = vld [vmem:[%s1266 + $0x20] sm:$0xff]
        %v3798 = vld [vmem:[%s1266 + $0x30] sm:$0xff]
        %v3799 = vld [vmem:[%s1266 + $0x38] sm:$0xff]
        %v3800 = vld [vmem:[%s1266 + $0x48] sm:$0xff]
        %v3801 = vld [vmem:[%s1266 + $0x50] sm:$0xff]
        %v3802 = vld [vmem:[%s1266 + $0x60] sm:$0xff]
        %v3803 = vld [vmem:[%s1266 + $0x68] sm:$0xff]
        %v3804 = vld [vmem:[%s1266 + $0x78] sm:$0xff]
        %v3805 = vld [vmem:[%s1266 + $0x80] sm:$0xff]
        %v3806 = vld [vmem:[%s1266 + $0x90] sm:$0xff]
        %v3807 = vld [vmem:[%s1266 + $0x98] sm:$0xff]
        %v3808 = vld [vmem:[%s1266 + $0xa8] sm:$0xff]
        %v3809 = vld [vmem:[%s1266 + $0xb0] sm:$0xff]
        %v3810 = vld [vmem:[%s1266 + $0xc0] sm:$0xff]
        %v3811 = vld [vmem:[%s1266 + $0xc8] sm:$0xff]
        %v3812 = vld [vmem:[%s1266 + $0xd8] sm:$0xff]
        %v3813 = vld [vmem:[%s1266 + $0xe0] sm:$0xff]
        %v3814 = vld [vmem:[%s1266 + $0xf0] sm:$0xff]
        %v3815 = vld [vmem:[%s1266 + $0xf8] sm:$0xff]
        %v3816 = vld [vmem:[%s1266 + $0x108] sm:$0xff]
        %v3817 = vld [vmem:[%s1266 + $0x110] sm:$0xff]
        %v3818 = vld [vmem:[%s1266 + $0x120] sm:$0xff]
        %v3819 = vld [vmem:[%s1266 + $0x128] sm:$0xff]
        %v3820 = vld [vmem:[%s1266 + $0x138] sm:$0xff]
        %v3821 = vld [vmem:[%s1266 + $0x140] sm:$0xff]
        %v3822 = vld [vmem:[%s1266 + $0x150] sm:$0xff]
        %v3823 = vld [vmem:[%s1266 + $0x158] sm:$0xff]
        %v3824 = vld [vmem:[%s1266 + $0x168] sm:$0xff]
        %v3825 = vld [vmem:[%s1266 + $0x170] sm:$0xff]
        %v3826 = vlaneseq
        %v3827 = vshrl.u32 %v3826, 7
        %v3828 = vsub.s32 0, %v3827
        %v3829 = vrot.slane %v3290, %v3828
        %v3830 = vmul.f32 %v3794, %v3829
        %v3831 = vmul.f32 %v3795, %v3829
        %v3832 = vmul.f32 %v3796, %v3829
        %v3833 = vmul.f32 %v3797, %v3829
        %v3834 = vmul.f32 %v3798, %v3829
        %v3835 = vmul.f32 %v3799, %v3829
        %v3836 = vmul.f32 %v3800, %v3829
        %v3837 = vmul.f32 %v3801, %v3829
        %v3838 = vmul.f32 %v3802, %v3829
        %v3839 = vmul.f32 %v3803, %v3829
        %v3840 = vmul.f32 %v3804, %v3829
        %v3841 = vmul.f32 %v3805, %v3829
        %v3842 = vmul.f32 %v3806, %v3829
        %v3843 = vmul.f32 %v3807, %v3829
        %v3844 = vmul.f32 %v3808, %v3829
        %v3845 = vmul.f32 %v3809, %v3829
        %v3846 = vmul.f32 %v3810, %v3829
        %v3847 = vmul.f32 %v3811, %v3829
        %v3848 = vmul.f32 %v3812, %v3829
        %v3849 = vmul.f32 %v3813, %v3829
        %v3850 = vmul.f32 %v3814, %v3829
        %v3851 = vmul.f32 %v3815, %v3829
        %v3852 = vmul.f32 %v3816, %v3829
        %v3853 = vmul.f32 %v3817, %v3829
        %v3854 = vmul.f32 %v3818, %v3829
        %v3855 = vmul.f32 %v3819, %v3829
        %v3856 = vmul.f32 %v3820, %v3829
        %v3857 = vmul.f32 %v3821, %v3829
        %v3858 = vmul.f32 %v3822, %v3829
        %v3859 = vmul.f32 %v3823, %v3829
        %v3860 = vmul.f32 %v3824, %v3829
        %v3861 = vmul.f32 %v3825, %v3829
        %v3862 = vadd.f32 %v3762, %v3830
        %v3863 = vadd.f32 %v3763, %v3831
        %v3864 = vadd.f32 %v3764, %v3832
        %v3865 = vadd.f32 %v3765, %v3833
        %v3866 = vadd.f32 %v3766, %v3834
        %v3867 = vadd.f32 %v3767, %v3835
        %v3868 = vadd.f32 %v3768, %v3836
        %v3869 = vadd.f32 %v3769, %v3837
        %v3870 = vadd.f32 %v3770, %v3838
        %v3871 = vadd.f32 %v3771, %v3839
        %v3872 = vadd.f32 %v3772, %v3840
        %v3873 = vadd.f32 %v3773, %v3841
        %v3874 = vadd.f32 %v3774, %v3842
        %v3875 = vadd.f32 %v3775, %v3843
        %v3876 = vadd.f32 %v3776, %v3844
        %v3877 = vadd.f32 %v3777, %v3845
        %v3878 = vadd.f32 %v3778, %v3846
        %v3879 = vadd.f32 %v3779, %v3847
        %v3880 = vadd.f32 %v3780, %v3848
        %v3881 = vadd.f32 %v3781, %v3849
        %v3882 = vadd.f32 %v3782, %v3850
        %v3883 = vadd.f32 %v3783, %v3851
        %v3884 = vadd.f32 %v3784, %v3852
        %v3885 = vadd.f32 %v3785, %v3853
        %v3886 = vadd.f32 %v3786, %v3854
        %v3887 = vadd.f32 %v3787, %v3855
        %v3888 = vadd.f32 %v3788, %v3856
        %v3889 = vadd.f32 %v3789, %v3857
        %v3890 = vadd.f32 %v3790, %v3858
        %v3891 = vadd.f32 %v3791, %v3859
        %v3892 = vadd.f32 %v3792, %v3860
        %v3893 = vadd.f32 %v3793, %v3861
        %v3894 = vld [vmem:[%s1266 + $0x1] sm:$0xff]
        %v3895 = vld [vmem:[%s1266 + $0x9] sm:$0xff]
        %v3896 = vld [vmem:[%s1266 + $0x19] sm:$0xff]
        %v3897 = vld [vmem:[%s1266 + $0x21] sm:$0xff]
        %v3898 = vld [vmem:[%s1266 + $0x31] sm:$0xff]
        %v3899 = vld [vmem:[%s1266 + $0x39] sm:$0xff]
        %v3900 = vld [vmem:[%s1266 + $0x49] sm:$0xff]
        %v3901 = vld [vmem:[%s1266 + $0x51] sm:$0xff]
        %v3902 = vld [vmem:[%s1266 + $0x61] sm:$0xff]
        %v3903 = vld [vmem:[%s1266 + $0x69] sm:$0xff]
        %v3904 = vld [vmem:[%s1266 + $0x79] sm:$0xff]
        %v3905 = vld [vmem:[%s1266 + $0x81] sm:$0xff]
        %v3906 = vld [vmem:[%s1266 + $0x91] sm:$0xff]
        %v3907 = vld [vmem:[%s1266 + $0x99] sm:$0xff]
        %v3908 = vld [vmem:[%s1266 + $0xa9] sm:$0xff]
        %v3909 = vld [vmem:[%s1266 + $0xb1] sm:$0xff]
        %v3910 = vld [vmem:[%s1266 + $0xc1] sm:$0xff]
        %v3911 = vld [vmem:[%s1266 + $0xc9] sm:$0xff]
        %v3912 = vld [vmem:[%s1266 + $0xd9] sm:$0xff]
        %v3913 = vld [vmem:[%s1266 + $0xe1] sm:$0xff]
        %v3914 = vld [vmem:[%s1266 + $0xf1] sm:$0xff]
        %v3915 = vld [vmem:[%s1266 + $0xf9] sm:$0xff]
        %v3916 = vld [vmem:[%s1266 + $0x109] sm:$0xff]
        %v3917 = vld [vmem:[%s1266 + $0x111] sm:$0xff]
        %v3918 = vld [vmem:[%s1266 + $0x121] sm:$0xff]
        %v3919 = vld [vmem:[%s1266 + $0x129] sm:$0xff]
        %v3920 = vld [vmem:[%s1266 + $0x139] sm:$0xff]
        %v3921 = vld [vmem:[%s1266 + $0x141] sm:$0xff]
        %v3922 = vld [vmem:[%s1266 + $0x151] sm:$0xff]
        %v3923 = vld [vmem:[%s1266 + $0x159] sm:$0xff]
        %v3924 = vld [vmem:[%s1266 + $0x169] sm:$0xff]
        %v3925 = vld [vmem:[%s1266 + $0x171] sm:$0xff]
        %v3926 = vlaneseq
        %v3927 = vshrl.u32 %v3926, 7
        %v3928 = vsub.s32 1, %v3927
        %v3929 = vrot.slane %v3290, %v3928
        %v3930 = vmul.f32 %v3894, %v3929
        %v3931 = vmul.f32 %v3895, %v3929
        %v3932 = vmul.f32 %v3896, %v3929
        %v3933 = vmul.f32 %v3897, %v3929
        %v3934 = vmul.f32 %v3898, %v3929
        %v3935 = vmul.f32 %v3899, %v3929
        %v3936 = vmul.f32 %v3900, %v3929
        %v3937 = vmul.f32 %v3901, %v3929
        %v3938 = vmul.f32 %v3902, %v3929
        %v3939 = vmul.f32 %v3903, %v3929
        %v3940 = vmul.f32 %v3904, %v3929
        %v3941 = vmul.f32 %v3905, %v3929
        %v3942 = vmul.f32 %v3906, %v3929
        %v3943 = vmul.f32 %v3907, %v3929
        %v3944 = vmul.f32 %v3908, %v3929
        %v3945 = vmul.f32 %v3909, %v3929
        %v3946 = vmul.f32 %v3910, %v3929
        %v3947 = vmul.f32 %v3911, %v3929
        %v3948 = vmul.f32 %v3912, %v3929
        %v3949 = vmul.f32 %v3913, %v3929
        %v3950 = vmul.f32 %v3914, %v3929
        %v3951 = vmul.f32 %v3915, %v3929
        %v3952 = vmul.f32 %v3916, %v3929
        %v3953 = vmul.f32 %v3917, %v3929
        %v3954 = vmul.f32 %v3918, %v3929
        %v3955 = vmul.f32 %v3919, %v3929
        %v3956 = vmul.f32 %v3920, %v3929
        %v3957 = vmul.f32 %v3921, %v3929
        %v3958 = vmul.f32 %v3922, %v3929
        %v3959 = vmul.f32 %v3923, %v3929
        %v3960 = vmul.f32 %v3924, %v3929
        %v3961 = vmul.f32 %v3925, %v3929
        %v3962 = vadd.f32 %v3862, %v3930
        %v3963 = vadd.f32 %v3863, %v3931
        %v3964 = vadd.f32 %v3864, %v3932
        %v3965 = vadd.f32 %v3865, %v3933
        %v3966 = vadd.f32 %v3866, %v3934
        %v3967 = vadd.f32 %v3867, %v3935
        %v3968 = vadd.f32 %v3868, %v3936
        %v3969 = vadd.f32 %v3869, %v3937
        %v3970 = vadd.f32 %v3870, %v3938
        %v3971 = vadd.f32 %v3871, %v3939
        %v3972 = vadd.f32 %v3872, %v3940
        %v3973 = vadd.f32 %v3873, %v3941
        %v3974 = vadd.f32 %v3874, %v3942
        %v3975 = vadd.f32 %v3875, %v3943
        %v3976 = vadd.f32 %v3876, %v3944
        %v3977 = vadd.f32 %v3877, %v3945
        %v3978 = vadd.f32 %v3878, %v3946
        %v3979 = vadd.f32 %v3879, %v3947
        %v3980 = vadd.f32 %v3880, %v3948
        %v3981 = vadd.f32 %v3881, %v3949
        %v3982 = vadd.f32 %v3882, %v3950
        %v3983 = vadd.f32 %v3883, %v3951
        %v3984 = vadd.f32 %v3884, %v3952
        %v3985 = vadd.f32 %v3885, %v3953
        %v3986 = vadd.f32 %v3886, %v3954
        %v3987 = vadd.f32 %v3887, %v3955
        %v3988 = vadd.f32 %v3888, %v3956
        %v3989 = vadd.f32 %v3889, %v3957
        %v3990 = vadd.f32 %v3890, %v3958
        %v3991 = vadd.f32 %v3891, %v3959
        %v3992 = vadd.f32 %v3892, %v3960
        %v3993 = vadd.f32 %v3893, %v3961
        %v3994 = vld [vmem:[%s1266 + $0x2] sm:$0xff]
        %v3995 = vld [vmem:[%s1266 + $0xa] sm:$0xff]
        %v3996 = vld [vmem:[%s1266 + $0x1a] sm:$0xff]
        %v3997 = vld [vmem:[%s1266 + $0x22] sm:$0xff]
        %v3998 = vld [vmem:[%s1266 + $0x32] sm:$0xff]
        %v3999 = vld [vmem:[%s1266 + $0x3a] sm:$0xff]
        %v4000 = vld [vmem:[%s1266 + $0x4a] sm:$0xff]
        %v4001 = vld [vmem:[%s1266 + $0x52] sm:$0xff]
        %v4002 = vld [vmem:[%s1266 + $0x62] sm:$0xff]
        %v4003 = vld [vmem:[%s1266 + $0x6a] sm:$0xff]
        %v4004 = vld [vmem:[%s1266 + $0x7a] sm:$0xff]
        %v4005 = vld [vmem:[%s1266 + $0x82] sm:$0xff]
        %v4006 = vld [vmem:[%s1266 + $0x92] sm:$0xff]
        %v4007 = vld [vmem:[%s1266 + $0x9a] sm:$0xff]
        %v4008 = vld [vmem:[%s1266 + $0xaa] sm:$0xff]
        %v4009 = vld [vmem:[%s1266 + $0xb2] sm:$0xff]
        %v4010 = vld [vmem:[%s1266 + $0xc2] sm:$0xff]
        %v4011 = vld [vmem:[%s1266 + $0xca] sm:$0xff]
        %v4012 = vld [vmem:[%s1266 + $0xda] sm:$0xff]
        %v4013 = vld [vmem:[%s1266 + $0xe2] sm:$0xff]
        %v4014 = vld [vmem:[%s1266 + $0xf2] sm:$0xff]
        %v4015 = vld [vmem:[%s1266 + $0xfa] sm:$0xff]
        %v4016 = vld [vmem:[%s1266 + $0x10a] sm:$0xff]
        %v4017 = vld [vmem:[%s1266 + $0x112] sm:$0xff]
        %v4018 = vld [vmem:[%s1266 + $0x122] sm:$0xff]
        %v4019 = vld [vmem:[%s1266 + $0x12a] sm:$0xff]
        %v4020 = vld [vmem:[%s1266 + $0x13a] sm:$0xff]
        %v4021 = vld [vmem:[%s1266 + $0x142] sm:$0xff]
        %v4022 = vld [vmem:[%s1266 + $0x152] sm:$0xff]
        %v4023 = vld [vmem:[%s1266 + $0x15a] sm:$0xff]
        %v4024 = vld [vmem:[%s1266 + $0x16a] sm:$0xff]
        %v4025 = vld [vmem:[%s1266 + $0x172] sm:$0xff]
        %v4026 = vlaneseq
        %v4027 = vshrl.u32 %v4026, 7
        %v4028 = vsub.s32 2, %v4027
        %v4029 = vrot.slane %v3290, %v4028
        %v4030 = vmul.f32 %v3994, %v4029
        %v4031 = vmul.f32 %v3995, %v4029
        %v4032 = vmul.f32 %v3996, %v4029
        %v4033 = vmul.f32 %v3997, %v4029
        %v4034 = vmul.f32 %v3998, %v4029
        %v4035 = vmul.f32 %v3999, %v4029
        %v4036 = vmul.f32 %v4000, %v4029
        %v4037 = vmul.f32 %v4001, %v4029
        %v4038 = vmul.f32 %v4002, %v4029
        %v4039 = vmul.f32 %v4003, %v4029
        %v4040 = vmul.f32 %v4004, %v4029
        %v4041 = vmul.f32 %v4005, %v4029
        %v4042 = vmul.f32 %v4006, %v4029
        %v4043 = vmul.f32 %v4007, %v4029
        %v4044 = vmul.f32 %v4008, %v4029
        %v4045 = vmul.f32 %v4009, %v4029
        %v4046 = vmul.f32 %v4010, %v4029
        %v4047 = vmul.f32 %v4011, %v4029
        %v4048 = vmul.f32 %v4012, %v4029
        %v4049 = vmul.f32 %v4013, %v4029
        %v4050 = vmul.f32 %v4014, %v4029
        %v4051 = vmul.f32 %v4015, %v4029
        %v4052 = vmul.f32 %v4016, %v4029
        %v4053 = vmul.f32 %v4017, %v4029
        %v4054 = vmul.f32 %v4018, %v4029
        %v4055 = vmul.f32 %v4019, %v4029
        %v4056 = vmul.f32 %v4020, %v4029
        %v4057 = vmul.f32 %v4021, %v4029
        %v4058 = vmul.f32 %v4022, %v4029
        %v4059 = vmul.f32 %v4023, %v4029
        %v4060 = vmul.f32 %v4024, %v4029
        %v4061 = vmul.f32 %v4025, %v4029
        %v4062 = vadd.f32 %v3962, %v4030
        %v4063 = vadd.f32 %v3963, %v4031
        %v4064 = vadd.f32 %v3964, %v4032
        %v4065 = vadd.f32 %v3965, %v4033
        %v4066 = vadd.f32 %v3966, %v4034
        %v4067 = vadd.f32 %v3967, %v4035
        %v4068 = vadd.f32 %v3968, %v4036
        %v4069 = vadd.f32 %v3969, %v4037
        %v4070 = vadd.f32 %v3970, %v4038
        %v4071 = vadd.f32 %v3971, %v4039
        %v4072 = vadd.f32 %v3972, %v4040
        %v4073 = vadd.f32 %v3973, %v4041
        %v4074 = vadd.f32 %v3974, %v4042
        %v4075 = vadd.f32 %v3975, %v4043
        %v4076 = vadd.f32 %v3976, %v4044
        %v4077 = vadd.f32 %v3977, %v4045
        %v4078 = vadd.f32 %v3978, %v4046
        %v4079 = vadd.f32 %v3979, %v4047
        %v4080 = vadd.f32 %v3980, %v4048
        %v4081 = vadd.f32 %v3981, %v4049
        %v4082 = vadd.f32 %v3982, %v4050
        %v4083 = vadd.f32 %v3983, %v4051
        %v4084 = vadd.f32 %v3984, %v4052
        %v4085 = vadd.f32 %v3985, %v4053
        %v4086 = vadd.f32 %v3986, %v4054
        %v4087 = vadd.f32 %v3987, %v4055
        %v4088 = vadd.f32 %v3988, %v4056
        %v4089 = vadd.f32 %v3989, %v4057
        %v4090 = vadd.f32 %v3990, %v4058
        %v4091 = vadd.f32 %v3991, %v4059
        %v4092 = vadd.f32 %v3992, %v4060
        %v4093 = vadd.f32 %v3993, %v4061
        %v4094 = vld [vmem:[%s1266 + $0x3] sm:$0xff]
        %v4095 = vld [vmem:[%s1266 + $0xb] sm:$0xff]
        %v4096 = vld [vmem:[%s1266 + $0x1b] sm:$0xff]
        %v4097 = vld [vmem:[%s1266 + $0x23] sm:$0xff]
        %v4098 = vld [vmem:[%s1266 + $0x33] sm:$0xff]
        %v4099 = vld [vmem:[%s1266 + $0x3b] sm:$0xff]
        %v4100 = vld [vmem:[%s1266 + $0x4b] sm:$0xff]
        %v4101 = vld [vmem:[%s1266 + $0x53] sm:$0xff]
        %v4102 = vld [vmem:[%s1266 + $0x63] sm:$0xff]
        %v4103 = vld [vmem:[%s1266 + $0x6b] sm:$0xff]
        %v4104 = vld [vmem:[%s1266 + $0x7b] sm:$0xff]
        %v4105 = vld [vmem:[%s1266 + $0x83] sm:$0xff]
        %v4106 = vld [vmem:[%s1266 + $0x93] sm:$0xff]
        %v4107 = vld [vmem:[%s1266 + $0x9b] sm:$0xff]
        %v4108 = vld [vmem:[%s1266 + $0xab] sm:$0xff]
        %v4109 = vld [vmem:[%s1266 + $0xb3] sm:$0xff]
        %v4110 = vld [vmem:[%s1266 + $0xc3] sm:$0xff]
        %v4111 = vld [vmem:[%s1266 + $0xcb] sm:$0xff]
        %v4112 = vld [vmem:[%s1266 + $0xdb] sm:$0xff]
        %v4113 = vld [vmem:[%s1266 + $0xe3] sm:$0xff]
        %v4114 = vld [vmem:[%s1266 + $0xf3] sm:$0xff]
        %v4115 = vld [vmem:[%s1266 + $0xfb] sm:$0xff]
        %v4116 = vld [vmem:[%s1266 + $0x10b] sm:$0xff]
        %v4117 = vld [vmem:[%s1266 + $0x113] sm:$0xff]
        %v4118 = vld [vmem:[%s1266 + $0x123] sm:$0xff]
        %v4119 = vld [vmem:[%s1266 + $0x12b] sm:$0xff]
        %v4120 = vld [vmem:[%s1266 + $0x13b] sm:$0xff]
        %v4121 = vld [vmem:[%s1266 + $0x143] sm:$0xff]
        %v4122 = vld [vmem:[%s1266 + $0x153] sm:$0xff]
        %v4123 = vld [vmem:[%s1266 + $0x15b] sm:$0xff]
        %v4124 = vld [vmem:[%s1266 + $0x16b] sm:$0xff]
        %v4125 = vld [vmem:[%s1266 + $0x173] sm:$0xff]
        %v4126 = vlaneseq
        %v4127 = vshrl.u32 %v4126, 7
        %v4128 = vsub.s32 3, %v4127
        %v4129 = vrot.slane %v3290, %v4128
        %v4130 = vmul.f32 %v4094, %v4129
        %v4131 = vmul.f32 %v4095, %v4129
        %v4132 = vmul.f32 %v4096, %v4129
        %v4133 = vmul.f32 %v4097, %v4129
        %v4134 = vmul.f32 %v4098, %v4129
        %v4135 = vmul.f32 %v4099, %v4129
        %v4136 = vmul.f32 %v4100, %v4129
        %v4137 = vmul.f32 %v4101, %v4129
        %v4138 = vmul.f32 %v4102, %v4129
        %v4139 = vmul.f32 %v4103, %v4129
        %v4140 = vmul.f32 %v4104, %v4129
        %v4141 = vmul.f32 %v4105, %v4129
        %v4142 = vmul.f32 %v4106, %v4129
        %v4143 = vmul.f32 %v4107, %v4129
        %v4144 = vmul.f32 %v4108, %v4129
        %v4145 = vmul.f32 %v4109, %v4129
        %v4146 = vmul.f32 %v4110, %v4129
        %v4147 = vmul.f32 %v4111, %v4129
        %v4148 = vmul.f32 %v4112, %v4129
        %v4149 = vmul.f32 %v4113, %v4129
        %v4150 = vmul.f32 %v4114, %v4129
        %v4151 = vmul.f32 %v4115, %v4129
        %v4152 = vmul.f32 %v4116, %v4129
        %v4153 = vmul.f32 %v4117, %v4129
        %v4154 = vmul.f32 %v4118, %v4129
        %v4155 = vmul.f32 %v4119, %v4129
        %v4156 = vmul.f32 %v4120, %v4129
        %v4157 = vmul.f32 %v4121, %v4129
        %v4158 = vmul.f32 %v4122, %v4129
        %v4159 = vmul.f32 %v4123, %v4129
        %v4160 = vmul.f32 %v4124, %v4129
        %v4161 = vmul.f32 %v4125, %v4129
        %v4162 = vadd.f32 %v4062, %v4130
        %v4163 = vadd.f32 %v4063, %v4131
        %v4164 = vadd.f32 %v4064, %v4132
        %v4165 = vadd.f32 %v4065, %v4133
        %v4166 = vadd.f32 %v4066, %v4134
        %v4167 = vadd.f32 %v4067, %v4135
        %v4168 = vadd.f32 %v4068, %v4136
        %v4169 = vadd.f32 %v4069, %v4137
        %v4170 = vadd.f32 %v4070, %v4138
        %v4171 = vadd.f32 %v4071, %v4139
        %v4172 = vadd.f32 %v4072, %v4140
        %v4173 = vadd.f32 %v4073, %v4141
        %v4174 = vadd.f32 %v4074, %v4142
        %v4175 = vadd.f32 %v4075, %v4143
        %v4176 = vadd.f32 %v4076, %v4144
        %v4177 = vadd.f32 %v4077, %v4145
        %v4178 = vadd.f32 %v4078, %v4146
        %v4179 = vadd.f32 %v4079, %v4147
        %v4180 = vadd.f32 %v4080, %v4148
        %v4181 = vadd.f32 %v4081, %v4149
        %v4182 = vadd.f32 %v4082, %v4150
        %v4183 = vadd.f32 %v4083, %v4151
        %v4184 = vadd.f32 %v4084, %v4152
        %v4185 = vadd.f32 %v4085, %v4153
        %v4186 = vadd.f32 %v4086, %v4154
        %v4187 = vadd.f32 %v4087, %v4155
        %v4188 = vadd.f32 %v4088, %v4156
        %v4189 = vadd.f32 %v4089, %v4157
        %v4190 = vadd.f32 %v4090, %v4158
        %v4191 = vadd.f32 %v4091, %v4159
        %v4192 = vadd.f32 %v4092, %v4160
        %v4193 = vadd.f32 %v4093, %v4161
        %v4194 = vld [vmem:[%s1266 + $0x4] sm:$0xff]
        %v4195 = vld [vmem:[%s1266 + $0xc] sm:$0xff]
        %v4196 = vld [vmem:[%s1266 + $0x1c] sm:$0xff]
        %v4197 = vld [vmem:[%s1266 + $0x24] sm:$0xff]
        %v4198 = vld [vmem:[%s1266 + $0x34] sm:$0xff]
        %v4199 = vld [vmem:[%s1266 + $0x3c] sm:$0xff]
        %v4200 = vld [vmem:[%s1266 + $0x4c] sm:$0xff]
        %v4201 = vld [vmem:[%s1266 + $0x54] sm:$0xff]
        %v4202 = vld [vmem:[%s1266 + $0x64] sm:$0xff]
        %v4203 = vld [vmem:[%s1266 + $0x6c] sm:$0xff]
        %v4204 = vld [vmem:[%s1266 + $0x7c] sm:$0xff]
        %v4205 = vld [vmem:[%s1266 + $0x84] sm:$0xff]
        %v4206 = vld [vmem:[%s1266 + $0x94] sm:$0xff]
        %v4207 = vld [vmem:[%s1266 + $0x9c] sm:$0xff]
        %v4208 = vld [vmem:[%s1266 + $0xac] sm:$0xff]
        %v4209 = vld [vmem:[%s1266 + $0xb4] sm:$0xff]
        %v4210 = vld [vmem:[%s1266 + $0xc4] sm:$0xff]
        %v4211 = vld [vmem:[%s1266 + $0xcc] sm:$0xff]
        %v4212 = vld [vmem:[%s1266 + $0xdc] sm:$0xff]
        %v4213 = vld [vmem:[%s1266 + $0xe4] sm:$0xff]
        %v4214 = vld [vmem:[%s1266 + $0xf4] sm:$0xff]
        %v4215 = vld [vmem:[%s1266 + $0xfc] sm:$0xff]
        %v4216 = vld [vmem:[%s1266 + $0x10c] sm:$0xff]
        %v4217 = vld [vmem:[%s1266 + $0x114] sm:$0xff]
        %v4218 = vld [vmem:[%s1266 + $0x124] sm:$0xff]
        %v4219 = vld [vmem:[%s1266 + $0x12c] sm:$0xff]
        %v4220 = vld [vmem:[%s1266 + $0x13c] sm:$0xff]
        %v4221 = vld [vmem:[%s1266 + $0x144] sm:$0xff]
        %v4222 = vld [vmem:[%s1266 + $0x154] sm:$0xff]
        %v4223 = vld [vmem:[%s1266 + $0x15c] sm:$0xff]
        %v4224 = vld [vmem:[%s1266 + $0x16c] sm:$0xff]
        %v4225 = vld [vmem:[%s1266 + $0x174] sm:$0xff]
        %v4226 = vlaneseq
        %v4227 = vshrl.u32 %v4226, 7
        %v4228 = vsub.s32 4, %v4227
        %v4229 = vrot.slane %v3290, %v4228
        %v4230 = vmul.f32 %v4194, %v4229
        %v4231 = vmul.f32 %v4195, %v4229
        %v4232 = vmul.f32 %v4196, %v4229
        %v4233 = vmul.f32 %v4197, %v4229
        %v4234 = vmul.f32 %v4198, %v4229
        %v4235 = vmul.f32 %v4199, %v4229
        %v4236 = vmul.f32 %v4200, %v4229
        %v4237 = vmul.f32 %v4201, %v4229
        %v4238 = vmul.f32 %v4202, %v4229
        %v4239 = vmul.f32 %v4203, %v4229
        %v4240 = vmul.f32 %v4204, %v4229
        %v4241 = vmul.f32 %v4205, %v4229
        %v4242 = vmul.f32 %v4206, %v4229
        %v4243 = vmul.f32 %v4207, %v4229
        %v4244 = vmul.f32 %v4208, %v4229
        %v4245 = vmul.f32 %v4209, %v4229
        %v4246 = vmul.f32 %v4210, %v4229
        %v4247 = vmul.f32 %v4211, %v4229
        %v4248 = vmul.f32 %v4212, %v4229
        %v4249 = vmul.f32 %v4213, %v4229
        %v4250 = vmul.f32 %v4214, %v4229
        %v4251 = vmul.f32 %v4215, %v4229
        %v4252 = vmul.f32 %v4216, %v4229
        %v4253 = vmul.f32 %v4217, %v4229
        %v4254 = vmul.f32 %v4218, %v4229
        %v4255 = vmul.f32 %v4219, %v4229
        %v4256 = vmul.f32 %v4220, %v4229
        %v4257 = vmul.f32 %v4221, %v4229
        %v4258 = vmul.f32 %v4222, %v4229
        %v4259 = vmul.f32 %v4223, %v4229
        %v4260 = vmul.f32 %v4224, %v4229
        %v4261 = vmul.f32 %v4225, %v4229
        %v4262 = vadd.f32 %v4162, %v4230
        %v4263 = vadd.f32 %v4163, %v4231
        %v4264 = vadd.f32 %v4164, %v4232
        %v4265 = vadd.f32 %v4165, %v4233
        %v4266 = vadd.f32 %v4166, %v4234
        %v4267 = vadd.f32 %v4167, %v4235
        %v4268 = vadd.f32 %v4168, %v4236
        %v4269 = vadd.f32 %v4169, %v4237
        %v4270 = vadd.f32 %v4170, %v4238
        %v4271 = vadd.f32 %v4171, %v4239
        %v4272 = vadd.f32 %v4172, %v4240
        %v4273 = vadd.f32 %v4173, %v4241
        %v4274 = vadd.f32 %v4174, %v4242
        %v4275 = vadd.f32 %v4175, %v4243
        %v4276 = vadd.f32 %v4176, %v4244
        %v4277 = vadd.f32 %v4177, %v4245
        %v4278 = vadd.f32 %v4178, %v4246
        %v4279 = vadd.f32 %v4179, %v4247
        %v4280 = vadd.f32 %v4180, %v4248
        %v4281 = vadd.f32 %v4181, %v4249
        %v4282 = vadd.f32 %v4182, %v4250
        %v4283 = vadd.f32 %v4183, %v4251
        %v4284 = vadd.f32 %v4184, %v4252
        %v4285 = vadd.f32 %v4185, %v4253
        %v4286 = vadd.f32 %v4186, %v4254
        %v4287 = vadd.f32 %v4187, %v4255
        %v4288 = vadd.f32 %v4188, %v4256
        %v4289 = vadd.f32 %v4189, %v4257
        %v4290 = vadd.f32 %v4190, %v4258
        %v4291 = vadd.f32 %v4191, %v4259
        %v4292 = vadd.f32 %v4192, %v4260
        %v4293 = vadd.f32 %v4193, %v4261
        %v4294 = vld [vmem:[%s1230] sm:$0xff]
        %v4295 = vld [vmem:[%s1230 + $0x8] sm:$0xff]
        %v4296 = vld [vmem:[%s1230 + $0x18] sm:$0xff]
        %v4297 = vld [vmem:[%s1230 + $0x20] sm:$0xff]
        %v4298 = vld [vmem:[%s1230 + $0x30] sm:$0xff]
        %v4299 = vld [vmem:[%s1230 + $0x38] sm:$0xff]
        %v4300 = vld [vmem:[%s1230 + $0x48] sm:$0xff]
        %v4301 = vld [vmem:[%s1230 + $0x50] sm:$0xff]
        %v4302 = vld [vmem:[%s1230 + $0x60] sm:$0xff]
        %v4303 = vld [vmem:[%s1230 + $0x68] sm:$0xff]
        %v4304 = vld [vmem:[%s1230 + $0x78] sm:$0xff]
        %v4305 = vld [vmem:[%s1230 + $0x80] sm:$0xff]
        %v4306 = vld [vmem:[%s1230 + $0x90] sm:$0xff]
        %v4307 = vld [vmem:[%s1230 + $0x98] sm:$0xff]
        %v4308 = vld [vmem:[%s1230 + $0xa8] sm:$0xff]
        %v4309 = vld [vmem:[%s1230 + $0xb0] sm:$0xff]
        %v4310 = vld [vmem:[%s1230 + $0xc0] sm:$0xff]
        %v4311 = vld [vmem:[%s1230 + $0xc8] sm:$0xff]
        %v4312 = vld [vmem:[%s1230 + $0xd8] sm:$0xff]
        %v4313 = vld [vmem:[%s1230 + $0xe0] sm:$0xff]
        %v4314 = vld [vmem:[%s1230 + $0xf0] sm:$0xff]
        %v4315 = vld [vmem:[%s1230 + $0xf8] sm:$0xff]
        %v4316 = vld [vmem:[%s1230 + $0x108] sm:$0xff]
        %v4317 = vld [vmem:[%s1230 + $0x110] sm:$0xff]
        %v4318 = vld [vmem:[%s1230 + $0x120] sm:$0xff]
        %v4319 = vld [vmem:[%s1230 + $0x128] sm:$0xff]
        %v4320 = vld [vmem:[%s1230 + $0x138] sm:$0xff]
        %v4321 = vld [vmem:[%s1230 + $0x140] sm:$0xff]
        %v4322 = vld [vmem:[%s1230 + $0x150] sm:$0xff]
        %v4323 = vld [vmem:[%s1230 + $0x158] sm:$0xff]
        %v4324 = vld [vmem:[%s1230 + $0x168] sm:$0xff]
        %v4325 = vld [vmem:[%s1230 + $0x170] sm:$0xff]
        %v4326 = vlaneseq
        %v4327 = vshrl.u32 %v4326, 7
        %v4328 = vsub.s32 0, %v4327
        %v4329 = vrot.slane %v3291, %v4328
        %v4330 = vmul.f32 %v4294, %v4329
        %v4331 = vmul.f32 %v4295, %v4329
        %v4332 = vmul.f32 %v4296, %v4329
        %v4333 = vmul.f32 %v4297, %v4329
        %v4334 = vmul.f32 %v4298, %v4329
        %v4335 = vmul.f32 %v4299, %v4329
        %v4336 = vmul.f32 %v4300, %v4329
        %v4337 = vmul.f32 %v4301, %v4329
        %v4338 = vmul.f32 %v4302, %v4329
        %v4339 = vmul.f32 %v4303, %v4329
        %v4340 = vmul.f32 %v4304, %v4329
        %v4341 = vmul.f32 %v4305, %v4329
        %v4342 = vmul.f32 %v4306, %v4329
        %v4343 = vmul.f32 %v4307, %v4329
        %v4344 = vmul.f32 %v4308, %v4329
        %v4345 = vmul.f32 %v4309, %v4329
        %v4346 = vmul.f32 %v4310, %v4329
        %v4347 = vmul.f32 %v4311, %v4329
        %v4348 = vmul.f32 %v4312, %v4329
        %v4349 = vmul.f32 %v4313, %v4329
        %v4350 = vmul.f32 %v4314, %v4329
        %v4351 = vmul.f32 %v4315, %v4329
        %v4352 = vmul.f32 %v4316, %v4329
        %v4353 = vmul.f32 %v4317, %v4329
        %v4354 = vmul.f32 %v4318, %v4329
        %v4355 = vmul.f32 %v4319, %v4329
        %v4356 = vmul.f32 %v4320, %v4329
        %v4357 = vmul.f32 %v4321, %v4329
        %v4358 = vmul.f32 %v4322, %v4329
        %v4359 = vmul.f32 %v4323, %v4329
        %v4360 = vmul.f32 %v4324, %v4329
        %v4361 = vmul.f32 %v4325, %v4329
        %v4362 = vadd.f32 %v4262, %v4330
        %v4363 = vadd.f32 %v4263, %v4331
        %v4364 = vadd.f32 %v4264, %v4332
        %v4365 = vadd.f32 %v4265, %v4333
        %v4366 = vadd.f32 %v4266, %v4334
        %v4367 = vadd.f32 %v4267, %v4335
        %v4368 = vadd.f32 %v4268, %v4336
        %v4369 = vadd.f32 %v4269, %v4337
        %v4370 = vadd.f32 %v4270, %v4338
        %v4371 = vadd.f32 %v4271, %v4339
        %v4372 = vadd.f32 %v4272, %v4340
        %v4373 = vadd.f32 %v4273, %v4341
        %v4374 = vadd.f32 %v4274, %v4342
        %v4375 = vadd.f32 %v4275, %v4343
        %v4376 = vadd.f32 %v4276, %v4344
        %v4377 = vadd.f32 %v4277, %v4345
        %v4378 = vadd.f32 %v4278, %v4346
        %v4379 = vadd.f32 %v4279, %v4347
        %v4380 = vadd.f32 %v4280, %v4348
        %v4381 = vadd.f32 %v4281, %v4349
        %v4382 = vadd.f32 %v4282, %v4350
        %v4383 = vadd.f32 %v4283, %v4351
        %v4384 = vadd.f32 %v4284, %v4352
        %v4385 = vadd.f32 %v4285, %v4353
        %v4386 = vadd.f32 %v4286, %v4354
        %v4387 = vadd.f32 %v4287, %v4355
        %v4388 = vadd.f32 %v4288, %v4356
        %v4389 = vadd.f32 %v4289, %v4357
        %v4390 = vadd.f32 %v4290, %v4358
        %v4391 = vadd.f32 %v4291, %v4359
        %v4392 = vadd.f32 %v4292, %v4360
        %v4393 = vadd.f32 %v4293, %v4361
        %v4394 = vld [vmem:[%s1230 + $0x1] sm:$0xff]
        %v4395 = vld [vmem:[%s1230 + $0x9] sm:$0xff]
        %v4396 = vld [vmem:[%s1230 + $0x19] sm:$0xff]
        %v4397 = vld [vmem:[%s1230 + $0x21] sm:$0xff]
        %v4398 = vld [vmem:[%s1230 + $0x31] sm:$0xff]
        %v4399 = vld [vmem:[%s1230 + $0x39] sm:$0xff]
        %v4400 = vld [vmem:[%s1230 + $0x49] sm:$0xff]
        %v4401 = vld [vmem:[%s1230 + $0x51] sm:$0xff]
        %v4402 = vld [vmem:[%s1230 + $0x61] sm:$0xff]
        %v4403 = vld [vmem:[%s1230 + $0x69] sm:$0xff]
        %v4404 = vld [vmem:[%s1230 + $0x79] sm:$0xff]
        %v4405 = vld [vmem:[%s1230 + $0x81] sm:$0xff]
        %v4406 = vld [vmem:[%s1230 + $0x91] sm:$0xff]
        %v4407 = vld [vmem:[%s1230 + $0x99] sm:$0xff]
        %v4408 = vld [vmem:[%s1230 + $0xa9] sm:$0xff]
        %v4409 = vld [vmem:[%s1230 + $0xb1] sm:$0xff]
        %v4410 = vld [vmem:[%s1230 + $0xc1] sm:$0xff]
        %v4411 = vld [vmem:[%s1230 + $0xc9] sm:$0xff]
        %v4412 = vld [vmem:[%s1230 + $0xd9] sm:$0xff]
        %v4413 = vld [vmem:[%s1230 + $0xe1] sm:$0xff]
        %v4414 = vld [vmem:[%s1230 + $0xf1] sm:$0xff]
        %v4415 = vld [vmem:[%s1230 + $0xf9] sm:$0xff]
        %v4416 = vld [vmem:[%s1230 + $0x109] sm:$0xff]
        %v4417 = vld [vmem:[%s1230 + $0x111] sm:$0xff]
        %v4418 = vld [vmem:[%s1230 + $0x121] sm:$0xff]
        %v4419 = vld [vmem:[%s1230 + $0x129] sm:$0xff]
        %v4420 = vld [vmem:[%s1230 + $0x139] sm:$0xff]
        %v4421 = vld [vmem:[%s1230 + $0x141] sm:$0xff]
        %v4422 = vld [vmem:[%s1230 + $0x151] sm:$0xff]
        %v4423 = vld [vmem:[%s1230 + $0x159] sm:$0xff]
        %v4424 = vld [vmem:[%s1230 + $0x169] sm:$0xff]
        %v4425 = vld [vmem:[%s1230 + $0x171] sm:$0xff]
        %v4426 = vlaneseq
        %v4427 = vshrl.u32 %v4426, 7
        %v4428 = vsub.s32 1, %v4427
        %v4429 = vrot.slane %v3291, %v4428
        %v4430 = vmul.f32 %v4394, %v4429
        %v4431 = vmul.f32 %v4395, %v4429
        %v4432 = vmul.f32 %v4396, %v4429
        %v4433 = vmul.f32 %v4397, %v4429
        %v4434 = vmul.f32 %v4398, %v4429
        %v4435 = vmul.f32 %v4399, %v4429
        %v4436 = vmul.f32 %v4400, %v4429
        %v4437 = vmul.f32 %v4401, %v4429
        %v4438 = vmul.f32 %v4402, %v4429
        %v4439 = vmul.f32 %v4403, %v4429
        %v4440 = vmul.f32 %v4404, %v4429
        %v4441 = vmul.f32 %v4405, %v4429
        %v4442 = vmul.f32 %v4406, %v4429
        %v4443 = vmul.f32 %v4407, %v4429
        %v4444 = vmul.f32 %v4408, %v4429
        %v4445 = vmul.f32 %v4409, %v4429
        %v4446 = vmul.f32 %v4410, %v4429
        %v4447 = vmul.f32 %v4411, %v4429
        %v4448 = vmul.f32 %v4412, %v4429
        %v4449 = vmul.f32 %v4413, %v4429
        %v4450 = vmul.f32 %v4414, %v4429
        %v4451 = vmul.f32 %v4415, %v4429
        %v4452 = vmul.f32 %v4416, %v4429
        %v4453 = vmul.f32 %v4417, %v4429
        %v4454 = vmul.f32 %v4418, %v4429
        %v4455 = vmul.f32 %v4419, %v4429
        %v4456 = vmul.f32 %v4420, %v4429
        %v4457 = vmul.f32 %v4421, %v4429
        %v4458 = vmul.f32 %v4422, %v4429
        %v4459 = vmul.f32 %v4423, %v4429
        %v4460 = vmul.f32 %v4424, %v4429
        %v4461 = vmul.f32 %v4425, %v4429
        %v4462 = vadd.f32 %v4362, %v4430
        %v4463 = vadd.f32 %v4363, %v4431
        %v4464 = vadd.f32 %v4364, %v4432
        %v4465 = vadd.f32 %v4365, %v4433
        %v4466 = vadd.f32 %v4366, %v4434
        %v4467 = vadd.f32 %v4367, %v4435
        %v4468 = vadd.f32 %v4368, %v4436
        %v4469 = vadd.f32 %v4369, %v4437
        %v4470 = vadd.f32 %v4370, %v4438
        %v4471 = vadd.f32 %v4371, %v4439
        %v4472 = vadd.f32 %v4372, %v4440
        %v4473 = vadd.f32 %v4373, %v4441
        %v4474 = vadd.f32 %v4374, %v4442
        %v4475 = vadd.f32 %v4375, %v4443
        %v4476 = vadd.f32 %v4376, %v4444
        %v4477 = vadd.f32 %v4377, %v4445
        %v4478 = vadd.f32 %v4378, %v4446
        %v4479 = vadd.f32 %v4379, %v4447
        %v4480 = vadd.f32 %v4380, %v4448
        %v4481 = vadd.f32 %v4381, %v4449
        %v4482 = vadd.f32 %v4382, %v4450
        %v4483 = vadd.f32 %v4383, %v4451
        %v4484 = vadd.f32 %v4384, %v4452
        %v4485 = vadd.f32 %v4385, %v4453
        %v4486 = vadd.f32 %v4386, %v4454
        %v4487 = vadd.f32 %v4387, %v4455
        %v4488 = vadd.f32 %v4388, %v4456
        %v4489 = vadd.f32 %v4389, %v4457
        %v4490 = vadd.f32 %v4390, %v4458
        %v4491 = vadd.f32 %v4391, %v4459
        %v4492 = vadd.f32 %v4392, %v4460
        %v4493 = vadd.f32 %v4393, %v4461
        %v4494 = vld [vmem:[%s1230 + $0x2] sm:$0xff]
        %v4495 = vld [vmem:[%s1230 + $0xa] sm:$0xff]
        %v4496 = vld [vmem:[%s1230 + $0x1a] sm:$0xff]
        %v4497 = vld [vmem:[%s1230 + $0x22] sm:$0xff]
        %v4498 = vld [vmem:[%s1230 + $0x32] sm:$0xff]
        %v4499 = vld [vmem:[%s1230 + $0x3a] sm:$0xff]
        %v4500 = vld [vmem:[%s1230 + $0x4a] sm:$0xff]
        %v4501 = vld [vmem:[%s1230 + $0x52] sm:$0xff]
        %v4502 = vld [vmem:[%s1230 + $0x62] sm:$0xff]
        %v4503 = vld [vmem:[%s1230 + $0x6a] sm:$0xff]
        %v4504 = vld [vmem:[%s1230 + $0x7a] sm:$0xff]
        %v4505 = vld [vmem:[%s1230 + $0x82] sm:$0xff]
        %v4506 = vld [vmem:[%s1230 + $0x92] sm:$0xff]
        %v4507 = vld [vmem:[%s1230 + $0x9a] sm:$0xff]
        %v4508 = vld [vmem:[%s1230 + $0xaa] sm:$0xff]
        %v4509 = vld [vmem:[%s1230 + $0xb2] sm:$0xff]
        %v4510 = vld [vmem:[%s1230 + $0xc2] sm:$0xff]
        %v4511 = vld [vmem:[%s1230 + $0xca] sm:$0xff]
        %v4512 = vld [vmem:[%s1230 + $0xda] sm:$0xff]
        %v4513 = vld [vmem:[%s1230 + $0xe2] sm:$0xff]
        %v4514 = vld [vmem:[%s1230 + $0xf2] sm:$0xff]
        %v4515 = vld [vmem:[%s1230 + $0xfa] sm:$0xff]
        %v4516 = vld [vmem:[%s1230 + $0x10a] sm:$0xff]
        %v4517 = vld [vmem:[%s1230 + $0x112] sm:$0xff]
        %v4518 = vld [vmem:[%s1230 + $0x122] sm:$0xff]
        %v4519 = vld [vmem:[%s1230 + $0x12a] sm:$0xff]
        %v4520 = vld [vmem:[%s1230 + $0x13a] sm:$0xff]
        %v4521 = vld [vmem:[%s1230 + $0x142] sm:$0xff]
        %v4522 = vld [vmem:[%s1230 + $0x152] sm:$0xff]
        %v4523 = vld [vmem:[%s1230 + $0x15a] sm:$0xff]
        %v4524 = vld [vmem:[%s1230 + $0x16a] sm:$0xff]
        %v4525 = vld [vmem:[%s1230 + $0x172] sm:$0xff]
        %v4526 = vlaneseq
        %v4527 = vshrl.u32 %v4526, 7
        %v4528 = vsub.s32 2, %v4527
        %v4529 = vrot.slane %v3291, %v4528
        %v4530 = vmul.f32 %v4494, %v4529
        %v4531 = vmul.f32 %v4495, %v4529
        %v4532 = vmul.f32 %v4496, %v4529
        %v4533 = vmul.f32 %v4497, %v4529
        %v4534 = vmul.f32 %v4498, %v4529
        %v4535 = vmul.f32 %v4499, %v4529
        %v4536 = vmul.f32 %v4500, %v4529
        %v4537 = vmul.f32 %v4501, %v4529
        %v4538 = vmul.f32 %v4502, %v4529
        %v4539 = vmul.f32 %v4503, %v4529
        %v4540 = vmul.f32 %v4504, %v4529
        %v4541 = vmul.f32 %v4505, %v4529
        %v4542 = vmul.f32 %v4506, %v4529
        %v4543 = vmul.f32 %v4507, %v4529
        %v4544 = vmul.f32 %v4508, %v4529
        %v4545 = vmul.f32 %v4509, %v4529
        %v4546 = vmul.f32 %v4510, %v4529
        %v4547 = vmul.f32 %v4511, %v4529
        %v4548 = vmul.f32 %v4512, %v4529
        %v4549 = vmul.f32 %v4513, %v4529
        %v4550 = vmul.f32 %v4514, %v4529
        %v4551 = vmul.f32 %v4515, %v4529
        %v4552 = vmul.f32 %v4516, %v4529
        %v4553 = vmul.f32 %v4517, %v4529
        %v4554 = vmul.f32 %v4518, %v4529
        %v4555 = vmul.f32 %v4519, %v4529
        %v4556 = vmul.f32 %v4520, %v4529
        %v4557 = vmul.f32 %v4521, %v4529
        %v4558 = vmul.f32 %v4522, %v4529
        %v4559 = vmul.f32 %v4523, %v4529
        %v4560 = vmul.f32 %v4524, %v4529
        %v4561 = vmul.f32 %v4525, %v4529
        %v4562 = vadd.f32 %v4462, %v4530
        %v4563 = vadd.f32 %v4463, %v4531
        %v4564 = vadd.f32 %v4464, %v4532
        %v4565 = vadd.f32 %v4465, %v4533
        %v4566 = vadd.f32 %v4466, %v4534
        %v4567 = vadd.f32 %v4467, %v4535
        %v4568 = vadd.f32 %v4468, %v4536
        %v4569 = vadd.f32 %v4469, %v4537
        %v4570 = vadd.f32 %v4470, %v4538
        %v4571 = vadd.f32 %v4471, %v4539
        %v4572 = vadd.f32 %v4472, %v4540
        %v4573 = vadd.f32 %v4473, %v4541
        %v4574 = vadd.f32 %v4474, %v4542
        %v4575 = vadd.f32 %v4475, %v4543
        %v4576 = vadd.f32 %v4476, %v4544
        %v4577 = vadd.f32 %v4477, %v4545
        %v4578 = vadd.f32 %v4478, %v4546
        %v4579 = vadd.f32 %v4479, %v4547
        %v4580 = vadd.f32 %v4480, %v4548
        %v4581 = vadd.f32 %v4481, %v4549
        %v4582 = vadd.f32 %v4482, %v4550
        %v4583 = vadd.f32 %v4483, %v4551
        %v4584 = vadd.f32 %v4484, %v4552
        %v4585 = vadd.f32 %v4485, %v4553
        %v4586 = vadd.f32 %v4486, %v4554
        %v4587 = vadd.f32 %v4487, %v4555
        %v4588 = vadd.f32 %v4488, %v4556
        %v4589 = vadd.f32 %v4489, %v4557
        %v4590 = vadd.f32 %v4490, %v4558
        %v4591 = vadd.f32 %v4491, %v4559
        %v4592 = vadd.f32 %v4492, %v4560
        %v4593 = vadd.f32 %v4493, %v4561
        %v4594 = vld [vmem:[%s1230 + $0x3] sm:$0xff]
        %v4595 = vld [vmem:[%s1230 + $0xb] sm:$0xff]
        %v4596 = vld [vmem:[%s1230 + $0x1b] sm:$0xff]
        %v4597 = vld [vmem:[%s1230 + $0x23] sm:$0xff]
        %v4598 = vld [vmem:[%s1230 + $0x33] sm:$0xff]
        %v4599 = vld [vmem:[%s1230 + $0x3b] sm:$0xff]
        %v4600 = vld [vmem:[%s1230 + $0x4b] sm:$0xff]
        %v4601 = vld [vmem:[%s1230 + $0x53] sm:$0xff]
        %v4602 = vld [vmem:[%s1230 + $0x63] sm:$0xff]
        %v4603 = vld [vmem:[%s1230 + $0x6b] sm:$0xff]
        %v4604 = vld [vmem:[%s1230 + $0x7b] sm:$0xff]
        %v4605 = vld [vmem:[%s1230 + $0x83] sm:$0xff]
        %v4606 = vld [vmem:[%s1230 + $0x93] sm:$0xff]
        %v4607 = vld [vmem:[%s1230 + $0x9b] sm:$0xff]
        %v4608 = vld [vmem:[%s1230 + $0xab] sm:$0xff]
        %v4609 = vld [vmem:[%s1230 + $0xb3] sm:$0xff]
        %v4610 = vld [vmem:[%s1230 + $0xc3] sm:$0xff]
        %v4611 = vld [vmem:[%s1230 + $0xcb] sm:$0xff]
        %v4612 = vld [vmem:[%s1230 + $0xdb] sm:$0xff]
        %v4613 = vld [vmem:[%s1230 + $0xe3] sm:$0xff]
        %v4614 = vld [vmem:[%s1230 + $0xf3] sm:$0xff]
        %v4615 = vld [vmem:[%s1230 + $0xfb] sm:$0xff]
        %v4616 = vld [vmem:[%s1230 + $0x10b] sm:$0xff]
        %v4617 = vld [vmem:[%s1230 + $0x113] sm:$0xff]
        %v4618 = vld [vmem:[%s1230 + $0x123] sm:$0xff]
        %v4619 = vld [vmem:[%s1230 + $0x12b] sm:$0xff]
        %v4620 = vld [vmem:[%s1230 + $0x13b] sm:$0xff]
        %v4621 = vld [vmem:[%s1230 + $0x143] sm:$0xff]
        %v4622 = vld [vmem:[%s1230 + $0x153] sm:$0xff]
        %v4623 = vld [vmem:[%s1230 + $0x15b] sm:$0xff]
        %v4624 = vld [vmem:[%s1230 + $0x16b] sm:$0xff]
        %v4625 = vld [vmem:[%s1230 + $0x173] sm:$0xff]
        %v4626 = vlaneseq
        %v4627 = vshrl.u32 %v4626, 7
        %v4628 = vsub.s32 3, %v4627
        %v4629 = vrot.slane %v3291, %v4628
        %v4630 = vmul.f32 %v4594, %v4629
        %v4631 = vmul.f32 %v4595, %v4629
        %v4632 = vmul.f32 %v4596, %v4629
        %v4633 = vmul.f32 %v4597, %v4629
        %v4634 = vmul.f32 %v4598, %v4629
        %v4635 = vmul.f32 %v4599, %v4629
        %v4636 = vmul.f32 %v4600, %v4629
        %v4637 = vmul.f32 %v4601, %v4629
        %v4638 = vmul.f32 %v4602, %v4629
        %v4639 = vmul.f32 %v4603, %v4629
        %v4640 = vmul.f32 %v4604, %v4629
        %v4641 = vmul.f32 %v4605, %v4629
        %v4642 = vmul.f32 %v4606, %v4629
        %v4643 = vmul.f32 %v4607, %v4629
        %v4644 = vmul.f32 %v4608, %v4629
        %v4645 = vmul.f32 %v4609, %v4629
        %v4646 = vmul.f32 %v4610, %v4629
        %v4647 = vmul.f32 %v4611, %v4629
        %v4648 = vmul.f32 %v4612, %v4629
        %v4649 = vmul.f32 %v4613, %v4629
        %v4650 = vmul.f32 %v4614, %v4629
        %v4651 = vmul.f32 %v4615, %v4629
        %v4652 = vmul.f32 %v4616, %v4629
        %v4653 = vmul.f32 %v4617, %v4629
        %v4654 = vmul.f32 %v4618, %v4629
        %v4655 = vmul.f32 %v4619, %v4629
        %v4656 = vmul.f32 %v4620, %v4629
        %v4657 = vmul.f32 %v4621, %v4629
        %v4658 = vmul.f32 %v4622, %v4629
        %v4659 = vmul.f32 %v4623, %v4629
        %v4660 = vmul.f32 %v4624, %v4629
        %v4661 = vmul.f32 %v4625, %v4629
        %v4662 = vadd.f32 %v4562, %v4630
        %v4663 = vadd.f32 %v4563, %v4631
        %v4664 = vadd.f32 %v4564, %v4632
        %v4665 = vadd.f32 %v4565, %v4633
        %v4666 = vadd.f32 %v4566, %v4634
        %v4667 = vadd.f32 %v4567, %v4635
        %v4668 = vadd.f32 %v4568, %v4636
        %v4669 = vadd.f32 %v4569, %v4637
        %v4670 = vadd.f32 %v4570, %v4638
        %v4671 = vadd.f32 %v4571, %v4639
        %v4672 = vadd.f32 %v4572, %v4640
        %v4673 = vadd.f32 %v4573, %v4641
        %v4674 = vadd.f32 %v4574, %v4642
        %v4675 = vadd.f32 %v4575, %v4643
        %v4676 = vadd.f32 %v4576, %v4644
        %v4677 = vadd.f32 %v4577, %v4645
        %v4678 = vadd.f32 %v4578, %v4646
        %v4679 = vadd.f32 %v4579, %v4647
        %v4680 = vadd.f32 %v4580, %v4648
        %v4681 = vadd.f32 %v4581, %v4649
        %v4682 = vadd.f32 %v4582, %v4650
        %v4683 = vadd.f32 %v4583, %v4651
        %v4684 = vadd.f32 %v4584, %v4652
        %v4685 = vadd.f32 %v4585, %v4653
        %v4686 = vadd.f32 %v4586, %v4654
        %v4687 = vadd.f32 %v4587, %v4655
        %v4688 = vadd.f32 %v4588, %v4656
        %v4689 = vadd.f32 %v4589, %v4657
        %v4690 = vadd.f32 %v4590, %v4658
        %v4691 = vadd.f32 %v4591, %v4659
        %v4692 = vadd.f32 %v4592, %v4660
        %v4693 = vadd.f32 %v4593, %v4661
        %v4694 = vld [vmem:[%s1230 + $0x4] sm:$0xff]
        %v4695 = vld [vmem:[%s1230 + $0xc] sm:$0xff]
        %v4696 = vld [vmem:[%s1230 + $0x1c] sm:$0xff]
        %v4697 = vld [vmem:[%s1230 + $0x24] sm:$0xff]
        %v4698 = vld [vmem:[%s1230 + $0x34] sm:$0xff]
        %v4699 = vld [vmem:[%s1230 + $0x3c] sm:$0xff]
        %v4700 = vld [vmem:[%s1230 + $0x4c] sm:$0xff]
        %v4701 = vld [vmem:[%s1230 + $0x54] sm:$0xff]
        %v4702 = vld [vmem:[%s1230 + $0x64] sm:$0xff]
        %v4703 = vld [vmem:[%s1230 + $0x6c] sm:$0xff]
        %v4704 = vld [vmem:[%s1230 + $0x7c] sm:$0xff]
        %v4705 = vld [vmem:[%s1230 + $0x84] sm:$0xff]
        %v4706 = vld [vmem:[%s1230 + $0x94] sm:$0xff]
        %v4707 = vld [vmem:[%s1230 + $0x9c] sm:$0xff]
        %v4708 = vld [vmem:[%s1230 + $0xac] sm:$0xff]
        %v4709 = vld [vmem:[%s1230 + $0xb4] sm:$0xff]
        %v4710 = vld [vmem:[%s1230 + $0xc4] sm:$0xff]
        %v4711 = vld [vmem:[%s1230 + $0xcc] sm:$0xff]
        %v4712 = vld [vmem:[%s1230 + $0xdc] sm:$0xff]
        %v4713 = vld [vmem:[%s1230 + $0xe4] sm:$0xff]
        %v4714 = vld [vmem:[%s1230 + $0xf4] sm:$0xff]
        %v4715 = vld [vmem:[%s1230 + $0xfc] sm:$0xff]
        %v4716 = vld [vmem:[%s1230 + $0x10c] sm:$0xff]
        %v4717 = vld [vmem:[%s1230 + $0x114] sm:$0xff]
        %v4718 = vld [vmem:[%s1230 + $0x124] sm:$0xff]
        %v4719 = vld [vmem:[%s1230 + $0x12c] sm:$0xff]
        %v4720 = vld [vmem:[%s1230 + $0x13c] sm:$0xff]
        %v4721 = vld [vmem:[%s1230 + $0x144] sm:$0xff]
        %v4722 = vld [vmem:[%s1230 + $0x154] sm:$0xff]
        %v4723 = vld [vmem:[%s1230 + $0x15c] sm:$0xff]
        %v4724 = vld [vmem:[%s1230 + $0x16c] sm:$0xff]
        %v4725 = vld [vmem:[%s1230 + $0x174] sm:$0xff]
        %v4726 = vlaneseq
        %v4727 = vshrl.u32 %v4726, 7
        %v4728 = vsub.s32 4, %v4727
        %v4729 = vrot.slane %v3291, %v4728
        %v4730 = vmul.f32 %v4694, %v4729
        %v4731 = vmul.f32 %v4695, %v4729
        %v4732 = vmul.f32 %v4696, %v4729
        %v4733 = vmul.f32 %v4697, %v4729
        %v4734 = vmul.f32 %v4698, %v4729
        %v4735 = vmul.f32 %v4699, %v4729
        %v4736 = vmul.f32 %v4700, %v4729
        %v4737 = vmul.f32 %v4701, %v4729
        %v4738 = vmul.f32 %v4702, %v4729
        %v4739 = vmul.f32 %v4703, %v4729
        %v4740 = vmul.f32 %v4704, %v4729
        %v4741 = vmul.f32 %v4705, %v4729
        %v4742 = vmul.f32 %v4706, %v4729
        %v4743 = vmul.f32 %v4707, %v4729
        %v4744 = vmul.f32 %v4708, %v4729
        %v4745 = vmul.f32 %v4709, %v4729
        %v4746 = vmul.f32 %v4710, %v4729
        %v4747 = vmul.f32 %v4711, %v4729
        %v4748 = vmul.f32 %v4712, %v4729
        %v4749 = vmul.f32 %v4713, %v4729
        %v4750 = vmul.f32 %v4714, %v4729
        %v4751 = vmul.f32 %v4715, %v4729
        %v4752 = vmul.f32 %v4716, %v4729
        %v4753 = vmul.f32 %v4717, %v4729
        %v4754 = vmul.f32 %v4718, %v4729
        %v4755 = vmul.f32 %v4719, %v4729
        %v4756 = vmul.f32 %v4720, %v4729
        %v4757 = vmul.f32 %v4721, %v4729
        %v4758 = vmul.f32 %v4722, %v4729
        %v4759 = vmul.f32 %v4723, %v4729
        %v4760 = vmul.f32 %v4724, %v4729
        %v4761 = vmul.f32 %v4725, %v4729
        %v4762 = vadd.f32 %v4662, %v4730
        %v4763 = vadd.f32 %v4663, %v4731
        %v4764 = vadd.f32 %v4664, %v4732
        %v4765 = vadd.f32 %v4665, %v4733
        %v4766 = vadd.f32 %v4666, %v4734
        %v4767 = vadd.f32 %v4667, %v4735
        %v4768 = vadd.f32 %v4668, %v4736
        %v4769 = vadd.f32 %v4669, %v4737
        %v4770 = vadd.f32 %v4670, %v4738
        %v4771 = vadd.f32 %v4671, %v4739
        %v4772 = vadd.f32 %v4672, %v4740
        %v4773 = vadd.f32 %v4673, %v4741
        %v4774 = vadd.f32 %v4674, %v4742
        %v4775 = vadd.f32 %v4675, %v4743
        %v4776 = vadd.f32 %v4676, %v4744
        %v4777 = vadd.f32 %v4677, %v4745
        %v4778 = vadd.f32 %v4678, %v4746
        %v4779 = vadd.f32 %v4679, %v4747
        %v4780 = vadd.f32 %v4680, %v4748
        %v4781 = vadd.f32 %v4681, %v4749
        %v4782 = vadd.f32 %v4682, %v4750
        %v4783 = vadd.f32 %v4683, %v4751
        %v4784 = vadd.f32 %v4684, %v4752
        %v4785 = vadd.f32 %v4685, %v4753
        %v4786 = vadd.f32 %v4686, %v4754
        %v4787 = vadd.f32 %v4687, %v4755
        %v4788 = vadd.f32 %v4688, %v4756
        %v4789 = vadd.f32 %v4689, %v4757
        %v4790 = vadd.f32 %v4690, %v4758
        %v4791 = vadd.f32 %v4691, %v4759
        %v4792 = vadd.f32 %v4692, %v4760
        %v4793 = vadd.f32 %v4693, %v4761
        %v4794 = vld [vmem:[%s1867] sm:$0xff]
        %v4795 = vld [vmem:[%s1867 + $0x8] sm:$0xff]
        %v4796 = vld [vmem:[%s1867 + $0x18] sm:$0xff]
        %v4797 = vld [vmem:[%s1867 + $0x20] sm:$0xff]
        %v4798 = vld [vmem:[%s1867 + $0x30] sm:$0xff]
        %v4799 = vld [vmem:[%s1867 + $0x38] sm:$0xff]
        %v4800 = vld [vmem:[%s1867 + $0x48] sm:$0xff]
        %v4801 = vld [vmem:[%s1867 + $0x50] sm:$0xff]
        %v4802 = vld [vmem:[%s1867 + $0x60] sm:$0xff]
        %v4803 = vld [vmem:[%s1867 + $0x68] sm:$0xff]
        %v4804 = vld [vmem:[%s1867 + $0x78] sm:$0xff]
        %v4805 = vld [vmem:[%s1867 + $0x80] sm:$0xff]
        %v4806 = vld [vmem:[%s1867 + $0x90] sm:$0xff]
        %v4807 = vld [vmem:[%s1867 + $0x98] sm:$0xff]
        %v4808 = vld [vmem:[%s1867 + $0xa8] sm:$0xff]
        %v4809 = vld [vmem:[%s1867 + $0xb0] sm:$0xff]
        %v4810 = vld [vmem:[%s1867 + $0xc0] sm:$0xff]
        %v4811 = vld [vmem:[%s1867 + $0xc8] sm:$0xff]
        %v4812 = vld [vmem:[%s1867 + $0xd8] sm:$0xff]
        %v4813 = vld [vmem:[%s1867 + $0xe0] sm:$0xff]
        %v4814 = vld [vmem:[%s1867 + $0xf0] sm:$0xff]
        %v4815 = vld [vmem:[%s1867 + $0xf8] sm:$0xff]
        %v4816 = vld [vmem:[%s1867 + $0x108] sm:$0xff]
        %v4817 = vld [vmem:[%s1867 + $0x110] sm:$0xff]
        %v4818 = vld [vmem:[%s1867 + $0x120] sm:$0xff]
        %v4819 = vld [vmem:[%s1867 + $0x128] sm:$0xff]
        %v4820 = vld [vmem:[%s1867 + $0x138] sm:$0xff]
        %v4821 = vld [vmem:[%s1867 + $0x140] sm:$0xff]
        %v4822 = vld [vmem:[%s1867 + $0x150] sm:$0xff]
        %v4823 = vld [vmem:[%s1867 + $0x158] sm:$0xff]
        %v4824 = vld [vmem:[%s1867 + $0x168] sm:$0xff]
        %v4825 = vld [vmem:[%s1867 + $0x170] sm:$0xff]
        %v4826 = vlaneseq
        %v4827 = vshrl.u32 %v4826, 7
        %v4828 = vsub.s32 0, %v4827
        %v4829 = vrot.slane %v3292, %v4828
        %v4830 = vmul.f32 %v4794, %v4829
        %v4831 = vmul.f32 %v4795, %v4829
        %v4832 = vmul.f32 %v4796, %v4829
        %v4833 = vmul.f32 %v4797, %v4829
        %v4834 = vmul.f32 %v4798, %v4829
        %v4835 = vmul.f32 %v4799, %v4829
        %v4836 = vmul.f32 %v4800, %v4829
        %v4837 = vmul.f32 %v4801, %v4829
        %v4838 = vmul.f32 %v4802, %v4829
        %v4839 = vmul.f32 %v4803, %v4829
        %v4840 = vmul.f32 %v4804, %v4829
        %v4841 = vmul.f32 %v4805, %v4829
        %v4842 = vmul.f32 %v4806, %v4829
        %v4843 = vmul.f32 %v4807, %v4829
        %v4844 = vmul.f32 %v4808, %v4829
        %v4845 = vmul.f32 %v4809, %v4829
        %v4846 = vmul.f32 %v4810, %v4829
        %v4847 = vmul.f32 %v4811, %v4829
        %v4848 = vmul.f32 %v4812, %v4829
        %v4849 = vmul.f32 %v4813, %v4829
        %v4850 = vmul.f32 %v4814, %v4829
        %v4851 = vmul.f32 %v4815, %v4829
        %v4852 = vmul.f32 %v4816, %v4829
        %v4853 = vmul.f32 %v4817, %v4829
        %v4854 = vmul.f32 %v4818, %v4829
        %v4855 = vmul.f32 %v4819, %v4829
        %v4856 = vmul.f32 %v4820, %v4829
        %v4857 = vmul.f32 %v4821, %v4829
        %v4858 = vmul.f32 %v4822, %v4829
        %v4859 = vmul.f32 %v4823, %v4829
        %v4860 = vmul.f32 %v4824, %v4829
        %v4861 = vmul.f32 %v4825, %v4829
        %v4862 = vadd.f32 %v4762, %v4830
        %v4863 = vadd.f32 %v4763, %v4831
        %v4864 = vadd.f32 %v4764, %v4832
        %v4865 = vadd.f32 %v4765, %v4833
        %v4866 = vadd.f32 %v4766, %v4834
        %v4867 = vadd.f32 %v4767, %v4835
        %v4868 = vadd.f32 %v4768, %v4836
        %v4869 = vadd.f32 %v4769, %v4837
        %v4870 = vadd.f32 %v4770, %v4838
        %v4871 = vadd.f32 %v4771, %v4839
        %v4872 = vadd.f32 %v4772, %v4840
        %v4873 = vadd.f32 %v4773, %v4841
        %v4874 = vadd.f32 %v4774, %v4842
        %v4875 = vadd.f32 %v4775, %v4843
        %v4876 = vadd.f32 %v4776, %v4844
        %v4877 = vadd.f32 %v4777, %v4845
        %v4878 = vadd.f32 %v4778, %v4846
        %v4879 = vadd.f32 %v4779, %v4847
        %v4880 = vadd.f32 %v4780, %v4848
        %v4881 = vadd.f32 %v4781, %v4849
        %v4882 = vadd.f32 %v4782, %v4850
        %v4883 = vadd.f32 %v4783, %v4851
        %v4884 = vadd.f32 %v4784, %v4852
        %v4885 = vadd.f32 %v4785, %v4853
        %v4886 = vadd.f32 %v4786, %v4854
        %v4887 = vadd.f32 %v4787, %v4855
        %v4888 = vadd.f32 %v4788, %v4856
        %v4889 = vadd.f32 %v4789, %v4857
        %v4890 = vadd.f32 %v4790, %v4858
        %v4891 = vadd.f32 %v4791, %v4859
        %v4892 = vadd.f32 %v4792, %v4860
        %v4893 = vadd.f32 %v4793, %v4861
        %v4894 = vld [vmem:[%s1867 + $0x1] sm:$0xff]
        %v4895 = vld [vmem:[%s1867 + $0x9] sm:$0xff]
        %v4896 = vld [vmem:[%s1867 + $0x19] sm:$0xff]
        %v4897 = vld [vmem:[%s1867 + $0x21] sm:$0xff]
        %v4898 = vld [vmem:[%s1867 + $0x31] sm:$0xff]
        %v4899 = vld [vmem:[%s1867 + $0x39] sm:$0xff]
        %v4900 = vld [vmem:[%s1867 + $0x49] sm:$0xff]
        %v4901 = vld [vmem:[%s1867 + $0x51] sm:$0xff]
        %v4902 = vld [vmem:[%s1867 + $0x61] sm:$0xff]
        %v4903 = vld [vmem:[%s1867 + $0x69] sm:$0xff]
        %v4904 = vld [vmem:[%s1867 + $0x79] sm:$0xff]
        %v4905 = vld [vmem:[%s1867 + $0x81] sm:$0xff]
        %v4906 = vld [vmem:[%s1867 + $0x91] sm:$0xff]
        %v4907 = vld [vmem:[%s1867 + $0x99] sm:$0xff]
        %v4908 = vld [vmem:[%s1867 + $0xa9] sm:$0xff]
        %v4909 = vld [vmem:[%s1867 + $0xb1] sm:$0xff]
        %v4910 = vld [vmem:[%s1867 + $0xc1] sm:$0xff]
        %v4911 = vld [vmem:[%s1867 + $0xc9] sm:$0xff]
        %v4912 = vld [vmem:[%s1867 + $0xd9] sm:$0xff]
        %v4913 = vld [vmem:[%s1867 + $0xe1] sm:$0xff]
        %v4914 = vld [vmem:[%s1867 + $0xf1] sm:$0xff]
        %v4915 = vld [vmem:[%s1867 + $0xf9] sm:$0xff]
        %v4916 = vld [vmem:[%s1867 + $0x109] sm:$0xff]
        %v4917 = vld [vmem:[%s1867 + $0x111] sm:$0xff]
        %v4918 = vld [vmem:[%s1867 + $0x121] sm:$0xff]
        %v4919 = vld [vmem:[%s1867 + $0x129] sm:$0xff]
        %v4920 = vld [vmem:[%s1867 + $0x139] sm:$0xff]
        %v4921 = vld [vmem:[%s1867 + $0x141] sm:$0xff]
        %v4922 = vld [vmem:[%s1867 + $0x151] sm:$0xff]
        %v4923 = vld [vmem:[%s1867 + $0x159] sm:$0xff]
        %v4924 = vld [vmem:[%s1867 + $0x169] sm:$0xff]
        %v4925 = vld [vmem:[%s1867 + $0x171] sm:$0xff]
        %v4926 = vlaneseq
        %v4927 = vshrl.u32 %v4926, 7
        %v4928 = vsub.s32 1, %v4927
        %v4929 = vrot.slane %v3292, %v4928
        %v4930 = vmul.f32 %v4894, %v4929
        %v4931 = vmul.f32 %v4895, %v4929
        %v4932 = vmul.f32 %v4896, %v4929
        %v4933 = vmul.f32 %v4897, %v4929
        %v4934 = vmul.f32 %v4898, %v4929
        %v4935 = vmul.f32 %v4899, %v4929
        %v4936 = vmul.f32 %v4900, %v4929
        %v4937 = vmul.f32 %v4901, %v4929
        %v4938 = vmul.f32 %v4902, %v4929
        %v4939 = vmul.f32 %v4903, %v4929
        %v4940 = vmul.f32 %v4904, %v4929
        %v4941 = vmul.f32 %v4905, %v4929
        %v4942 = vmul.f32 %v4906, %v4929
        %v4943 = vmul.f32 %v4907, %v4929
        %v4944 = vmul.f32 %v4908, %v4929
        %v4945 = vmul.f32 %v4909, %v4929
        %v4946 = vmul.f32 %v4910, %v4929
        %v4947 = vmul.f32 %v4911, %v4929
        %v4948 = vmul.f32 %v4912, %v4929
        %v4949 = vmul.f32 %v4913, %v4929
        %v4950 = vmul.f32 %v4914, %v4929
        %v4951 = vmul.f32 %v4915, %v4929
        %v4952 = vmul.f32 %v4916, %v4929
        %v4953 = vmul.f32 %v4917, %v4929
        %v4954 = vmul.f32 %v4918, %v4929
        %v4955 = vmul.f32 %v4919, %v4929
        %v4956 = vmul.f32 %v4920, %v4929
        %v4957 = vmul.f32 %v4921, %v4929
        %v4958 = vmul.f32 %v4922, %v4929
        %v4959 = vmul.f32 %v4923, %v4929
        %v4960 = vmul.f32 %v4924, %v4929
        %v4961 = vmul.f32 %v4925, %v4929
        %v4962 = vadd.f32 %v4862, %v4930
        %v4963 = vadd.f32 %v4863, %v4931
        %v4964 = vadd.f32 %v4864, %v4932
        %v4965 = vadd.f32 %v4865, %v4933
        %v4966 = vadd.f32 %v4866, %v4934
        %v4967 = vadd.f32 %v4867, %v4935
        %v4968 = vadd.f32 %v4868, %v4936
        %v4969 = vadd.f32 %v4869, %v4937
        %v4970 = vadd.f32 %v4870, %v4938
        %v4971 = vadd.f32 %v4871, %v4939
        %v4972 = vadd.f32 %v4872, %v4940
        %v4973 = vadd.f32 %v4873, %v4941
        %v4974 = vadd.f32 %v4874, %v4942
        %v4975 = vadd.f32 %v4875, %v4943
        %v4976 = vadd.f32 %v4876, %v4944
        %v4977 = vadd.f32 %v4877, %v4945
        %v4978 = vadd.f32 %v4878, %v4946
        %v4979 = vadd.f32 %v4879, %v4947
        %v4980 = vadd.f32 %v4880, %v4948
        %v4981 = vadd.f32 %v4881, %v4949
        %v4982 = vadd.f32 %v4882, %v4950
        %v4983 = vadd.f32 %v4883, %v4951
        %v4984 = vadd.f32 %v4884, %v4952
        %v4985 = vadd.f32 %v4885, %v4953
        %v4986 = vadd.f32 %v4886, %v4954
        %v4987 = vadd.f32 %v4887, %v4955
        %v4988 = vadd.f32 %v4888, %v4956
        %v4989 = vadd.f32 %v4889, %v4957
        %v4990 = vadd.f32 %v4890, %v4958
        %v4991 = vadd.f32 %v4891, %v4959
        %v4992 = vadd.f32 %v4892, %v4960
        %v4993 = vadd.f32 %v4893, %v4961
        %v4994 = vld [vmem:[%s1867 + $0x2] sm:$0xff]
        %v4995 = vld [vmem:[%s1867 + $0xa] sm:$0xff]
        %v4996 = vld [vmem:[%s1867 + $0x1a] sm:$0xff]
        %v4997 = vld [vmem:[%s1867 + $0x22] sm:$0xff]
        %v4998 = vld [vmem:[%s1867 + $0x32] sm:$0xff]
        %v4999 = vld [vmem:[%s1867 + $0x3a] sm:$0xff]
        %v5000 = vld [vmem:[%s1867 + $0x4a] sm:$0xff]
        %v5001 = vld [vmem:[%s1867 + $0x52] sm:$0xff]
        %v5002 = vld [vmem:[%s1867 + $0x62] sm:$0xff]
        %v5003 = vld [vmem:[%s1867 + $0x6a] sm:$0xff]
        %v5004 = vld [vmem:[%s1867 + $0x7a] sm:$0xff]
        %v5005 = vld [vmem:[%s1867 + $0x82] sm:$0xff]
        %v5006 = vld [vmem:[%s1867 + $0x92] sm:$0xff]
        %v5007 = vld [vmem:[%s1867 + $0x9a] sm:$0xff]
        %v5008 = vld [vmem:[%s1867 + $0xaa] sm:$0xff]
        %v5009 = vld [vmem:[%s1867 + $0xb2] sm:$0xff]
        %v5010 = vld [vmem:[%s1867 + $0xc2] sm:$0xff]
        %v5011 = vld [vmem:[%s1867 + $0xca] sm:$0xff]
        %v5012 = vld [vmem:[%s1867 + $0xda] sm:$0xff]
        %v5013 = vld [vmem:[%s1867 + $0xe2] sm:$0xff]
        %v5014 = vld [vmem:[%s1867 + $0xf2] sm:$0xff]
        %v5015 = vld [vmem:[%s1867 + $0xfa] sm:$0xff]
        %v5016 = vld [vmem:[%s1867 + $0x10a] sm:$0xff]
        %v5017 = vld [vmem:[%s1867 + $0x112] sm:$0xff]
        %v5018 = vld [vmem:[%s1867 + $0x122] sm:$0xff]
        %v5019 = vld [vmem:[%s1867 + $0x12a] sm:$0xff]
        %v5020 = vld [vmem:[%s1867 + $0x13a] sm:$0xff]
        %v5021 = vld [vmem:[%s1867 + $0x142] sm:$0xff]
        %v5022 = vld [vmem:[%s1867 + $0x152] sm:$0xff]
        %v5023 = vld [vmem:[%s1867 + $0x15a] sm:$0xff]
        %v5024 = vld [vmem:[%s1867 + $0x16a] sm:$0xff]
        %v5025 = vld [vmem:[%s1867 + $0x172] sm:$0xff]
        %v5026 = vlaneseq
        %v5027 = vshrl.u32 %v5026, 7
        %v5028 = vsub.s32 2, %v5027
        %v5029 = vrot.slane %v3292, %v5028
        %v5030 = vmul.f32 %v4994, %v5029
        %v5031 = vmul.f32 %v4995, %v5029
        %v5032 = vmul.f32 %v4996, %v5029
        %v5033 = vmul.f32 %v4997, %v5029
        %v5034 = vmul.f32 %v4998, %v5029
        %v5035 = vmul.f32 %v4999, %v5029
        %v5036 = vmul.f32 %v5000, %v5029
        %v5037 = vmul.f32 %v5001, %v5029
        %v5038 = vmul.f32 %v5002, %v5029
        %v5039 = vmul.f32 %v5003, %v5029
        %v5040 = vmul.f32 %v5004, %v5029
        %v5041 = vmul.f32 %v5005, %v5029
        %v5042 = vmul.f32 %v5006, %v5029
        %v5043 = vmul.f32 %v5007, %v5029
        %v5044 = vmul.f32 %v5008, %v5029
        %v5045 = vmul.f32 %v5009, %v5029
        %v5046 = vmul.f32 %v5010, %v5029
        %v5047 = vmul.f32 %v5011, %v5029
        %v5048 = vmul.f32 %v5012, %v5029
        %v5049 = vmul.f32 %v5013, %v5029
        %v5050 = vmul.f32 %v5014, %v5029
        %v5051 = vmul.f32 %v5015, %v5029
        %v5052 = vmul.f32 %v5016, %v5029
        %v5053 = vmul.f32 %v5017, %v5029
        %v5054 = vmul.f32 %v5018, %v5029
        %v5055 = vmul.f32 %v5019, %v5029
        %v5056 = vmul.f32 %v5020, %v5029
        %v5057 = vmul.f32 %v5021, %v5029
        %v5058 = vmul.f32 %v5022, %v5029
        %v5059 = vmul.f32 %v5023, %v5029
        %v5060 = vmul.f32 %v5024, %v5029
        %v5061 = vmul.f32 %v5025, %v5029
        %v5062 = vadd.f32 %v4962, %v5030
        %v5063 = vadd.f32 %v4963, %v5031
        %v5064 = vadd.f32 %v4964, %v5032
        %v5065 = vadd.f32 %v4965, %v5033
        %v5066 = vadd.f32 %v4966, %v5034
        %v5067 = vadd.f32 %v4967, %v5035
        %v5068 = vadd.f32 %v4968, %v5036
        %v5069 = vadd.f32 %v4969, %v5037
        %v5070 = vadd.f32 %v4970, %v5038
        %v5071 = vadd.f32 %v4971, %v5039
        %v5072 = vadd.f32 %v4972, %v5040
        %v5073 = vadd.f32 %v4973, %v5041
        %v5074 = vadd.f32 %v4974, %v5042
        %v5075 = vadd.f32 %v4975, %v5043
        %v5076 = vadd.f32 %v4976, %v5044
        %v5077 = vadd.f32 %v4977, %v5045
        %v5078 = vadd.f32 %v4978, %v5046
        %v5079 = vadd.f32 %v4979, %v5047
        %v5080 = vadd.f32 %v4980, %v5048
        %v5081 = vadd.f32 %v4981, %v5049
        %v5082 = vadd.f32 %v4982, %v5050
        %v5083 = vadd.f32 %v4983, %v5051
        %v5084 = vadd.f32 %v4984, %v5052
        %v5085 = vadd.f32 %v4985, %v5053
        %v5086 = vadd.f32 %v4986, %v5054
        %v5087 = vadd.f32 %v4987, %v5055
        %v5088 = vadd.f32 %v4988, %v5056
        %v5089 = vadd.f32 %v4989, %v5057
        %v5090 = vadd.f32 %v4990, %v5058
        %v5091 = vadd.f32 %v4991, %v5059
        %v5092 = vadd.f32 %v4992, %v5060
        %v5093 = vadd.f32 %v4993, %v5061
        %v5094 = vld [vmem:[%s1867 + $0x3] sm:$0xff]
        %v5095 = vld [vmem:[%s1867 + $0xb] sm:$0xff]
        %v5096 = vld [vmem:[%s1867 + $0x1b] sm:$0xff]
        %v5097 = vld [vmem:[%s1867 + $0x23] sm:$0xff]
        %v5098 = vld [vmem:[%s1867 + $0x33] sm:$0xff]
        %v5099 = vld [vmem:[%s1867 + $0x3b] sm:$0xff]
        %v5100 = vld [vmem:[%s1867 + $0x4b] sm:$0xff]
        %v5101 = vld [vmem:[%s1867 + $0x53] sm:$0xff]
        %v5102 = vld [vmem:[%s1867 + $0x63] sm:$0xff]
        %v5103 = vld [vmem:[%s1867 + $0x6b] sm:$0xff]
        %v5104 = vld [vmem:[%s1867 + $0x7b] sm:$0xff]
        %v5105 = vld [vmem:[%s1867 + $0x83] sm:$0xff]
        %v5106 = vld [vmem:[%s1867 + $0x93] sm:$0xff]
        %v5107 = vld [vmem:[%s1867 + $0x9b] sm:$0xff]
        %v5108 = vld [vmem:[%s1867 + $0xab] sm:$0xff]
        %v5109 = vld [vmem:[%s1867 + $0xb3] sm:$0xff]
        %v5110 = vld [vmem:[%s1867 + $0xc3] sm:$0xff]
        %v5111 = vld [vmem:[%s1867 + $0xcb] sm:$0xff]
        %v5112 = vld [vmem:[%s1867 + $0xdb] sm:$0xff]
        %v5113 = vld [vmem:[%s1867 + $0xe3] sm:$0xff]
        %v5114 = vld [vmem:[%s1867 + $0xf3] sm:$0xff]
        %v5115 = vld [vmem:[%s1867 + $0xfb] sm:$0xff]
        %v5116 = vld [vmem:[%s1867 + $0x10b] sm:$0xff]
        %v5117 = vld [vmem:[%s1867 + $0x113] sm:$0xff]
        %v5118 = vld [vmem:[%s1867 + $0x123] sm:$0xff]
        %v5119 = vld [vmem:[%s1867 + $0x12b] sm:$0xff]
        %v5120 = vld [vmem:[%s1867 + $0x13b] sm:$0xff]
        %v5121 = vld [vmem:[%s1867 + $0x143] sm:$0xff]
        %v5122 = vld [vmem:[%s1867 + $0x153] sm:$0xff]
        %v5123 = vld [vmem:[%s1867 + $0x15b] sm:$0xff]
        %v5124 = vld [vmem:[%s1867 + $0x16b] sm:$0xff]
        %v5125 = vld [vmem:[%s1867 + $0x173] sm:$0xff]
        %v5126 = vlaneseq
        %v5127 = vshrl.u32 %v5126, 7
        %v5128 = vsub.s32 3, %v5127
        %v5129 = vrot.slane %v3292, %v5128
        %v5130 = vmul.f32 %v5094, %v5129
        %v5131 = vmul.f32 %v5095, %v5129
        %v5132 = vmul.f32 %v5096, %v5129
        %v5133 = vmul.f32 %v5097, %v5129
        %v5134 = vmul.f32 %v5098, %v5129
        %v5135 = vmul.f32 %v5099, %v5129
        %v5136 = vmul.f32 %v5100, %v5129
        %v5137 = vmul.f32 %v5101, %v5129
        %v5138 = vmul.f32 %v5102, %v5129
        %v5139 = vmul.f32 %v5103, %v5129
        %v5140 = vmul.f32 %v5104, %v5129
        %v5141 = vmul.f32 %v5105, %v5129
        %v5142 = vmul.f32 %v5106, %v5129
        %v5143 = vmul.f32 %v5107, %v5129
        %v5144 = vmul.f32 %v5108, %v5129
        %v5145 = vmul.f32 %v5109, %v5129
        %v5146 = vmul.f32 %v5110, %v5129
        %v5147 = vmul.f32 %v5111, %v5129
        %v5148 = vmul.f32 %v5112, %v5129
        %v5149 = vmul.f32 %v5113, %v5129
        %v5150 = vmul.f32 %v5114, %v5129
        %v5151 = vmul.f32 %v5115, %v5129
        %v5152 = vmul.f32 %v5116, %v5129
        %v5153 = vmul.f32 %v5117, %v5129
        %v5154 = vmul.f32 %v5118, %v5129
        %v5155 = vmul.f32 %v5119, %v5129
        %v5156 = vmul.f32 %v5120, %v5129
        %v5157 = vmul.f32 %v5121, %v5129
        %v5158 = vmul.f32 %v5122, %v5129
        %v5159 = vmul.f32 %v5123, %v5129
        %v5160 = vmul.f32 %v5124, %v5129
        %v5161 = vmul.f32 %v5125, %v5129
        %v5162 = vadd.f32 %v5062, %v5130
        %v5163 = vadd.f32 %v5063, %v5131
        %v5164 = vadd.f32 %v5064, %v5132
        %v5165 = vadd.f32 %v5065, %v5133
        %v5166 = vadd.f32 %v5066, %v5134
        %v5167 = vadd.f32 %v5067, %v5135
        %v5168 = vadd.f32 %v5068, %v5136
        %v5169 = vadd.f32 %v5069, %v5137
        %v5170 = vadd.f32 %v5070, %v5138
        %v5171 = vadd.f32 %v5071, %v5139
        %v5172 = vadd.f32 %v5072, %v5140
        %v5173 = vadd.f32 %v5073, %v5141
        %v5174 = vadd.f32 %v5074, %v5142
        %v5175 = vadd.f32 %v5075, %v5143
        %v5176 = vadd.f32 %v5076, %v5144
        %v5177 = vadd.f32 %v5077, %v5145
        %v5178 = vadd.f32 %v5078, %v5146
        %v5179 = vadd.f32 %v5079, %v5147
        %v5180 = vadd.f32 %v5080, %v5148
        %v5181 = vadd.f32 %v5081, %v5149
        %v5182 = vadd.f32 %v5082, %v5150
        %v5183 = vadd.f32 %v5083, %v5151
        %v5184 = vadd.f32 %v5084, %v5152
        %v5185 = vadd.f32 %v5085, %v5153
        %v5186 = vadd.f32 %v5086, %v5154
        %v5187 = vadd.f32 %v5087, %v5155
        %v5188 = vadd.f32 %v5088, %v5156
        %v5189 = vadd.f32 %v5089, %v5157
        %v5190 = vadd.f32 %v5090, %v5158
        %v5191 = vadd.f32 %v5091, %v5159
        %v5192 = vadd.f32 %v5092, %v5160
        %v5193 = vadd.f32 %v5093, %v5161
        %v5194 = vld [vmem:[%s1867 + $0x4] sm:$0xff]
        %v5195 = vld [vmem:[%s1867 + $0xc] sm:$0xff]
        %v5196 = vld [vmem:[%s1867 + $0x1c] sm:$0xff]
        %v5197 = vld [vmem:[%s1867 + $0x24] sm:$0xff]
        %v5198 = vld [vmem:[%s1867 + $0x34] sm:$0xff]
        %v5199 = vld [vmem:[%s1867 + $0x3c] sm:$0xff]
        %v5200 = vld [vmem:[%s1867 + $0x4c] sm:$0xff]
        %v5201 = vld [vmem:[%s1867 + $0x54] sm:$0xff]
        %v5202 = vld [vmem:[%s1867 + $0x64] sm:$0xff]
        %v5203 = vld [vmem:[%s1867 + $0x6c] sm:$0xff]
        %v5204 = vld [vmem:[%s1867 + $0x7c] sm:$0xff]
        %v5205 = vld [vmem:[%s1867 + $0x84] sm:$0xff]
        %v5206 = vld [vmem:[%s1867 + $0x94] sm:$0xff]
        %v5207 = vld [vmem:[%s1867 + $0x9c] sm:$0xff]
        %v5208 = vld [vmem:[%s1867 + $0xac] sm:$0xff]
        %v5209 = vld [vmem:[%s1867 + $0xb4] sm:$0xff]
        %v5210 = vld [vmem:[%s1867 + $0xc4] sm:$0xff]
        %v5211 = vld [vmem:[%s1867 + $0xcc] sm:$0xff]
        %v5212 = vld [vmem:[%s1867 + $0xdc] sm:$0xff]
        %v5213 = vld [vmem:[%s1867 + $0xe4] sm:$0xff]
        %v5214 = vld [vmem:[%s1867 + $0xf4] sm:$0xff]
        %v5215 = vld [vmem:[%s1867 + $0xfc] sm:$0xff]
        %v5216 = vld [vmem:[%s1867 + $0x10c] sm:$0xff]
        %v5217 = vld [vmem:[%s1867 + $0x114] sm:$0xff]
        %v5218 = vld [vmem:[%s1867 + $0x124] sm:$0xff]
        %v5219 = vld [vmem:[%s1867 + $0x12c] sm:$0xff]
        %v5220 = vld [vmem:[%s1867 + $0x13c] sm:$0xff]
        %v5221 = vld [vmem:[%s1867 + $0x144] sm:$0xff]
        %v5222 = vld [vmem:[%s1867 + $0x154] sm:$0xff]
        %v5223 = vld [vmem:[%s1867 + $0x15c] sm:$0xff]
        %v5224 = vld [vmem:[%s1867 + $0x16c] sm:$0xff]
        %v5225 = vld [vmem:[%s1867 + $0x174] sm:$0xff]
        %v5226 = vlaneseq
        %v5227 = vshrl.u32 %v5226, 7
        %v5228 = vsub.s32 4, %v5227
        %v5229 = vrot.slane %v3292, %v5228
        %v5230 = vmul.f32 %v5194, %v5229
        %v5231 = vmul.f32 %v5195, %v5229
        %v5232 = vmul.f32 %v5196, %v5229
        %v5233 = vmul.f32 %v5197, %v5229
        %v5234 = vmul.f32 %v5198, %v5229
        %v5235 = vmul.f32 %v5199, %v5229
        %v5236 = vmul.f32 %v5200, %v5229
        %v5237 = vmul.f32 %v5201, %v5229
        %v5238 = vmul.f32 %v5202, %v5229
        %v5239 = vmul.f32 %v5203, %v5229
        %v5240 = vmul.f32 %v5204, %v5229
        %v5241 = vmul.f32 %v5205, %v5229
        %v5242 = vmul.f32 %v5206, %v5229
        %v5243 = vmul.f32 %v5207, %v5229
        %v5244 = vmul.f32 %v5208, %v5229
        %v5245 = vmul.f32 %v5209, %v5229
        %v5246 = vmul.f32 %v5210, %v5229
        %v5247 = vmul.f32 %v5211, %v5229
        %v5248 = vmul.f32 %v5212, %v5229
        %v5249 = vmul.f32 %v5213, %v5229
        %v5250 = vmul.f32 %v5214, %v5229
        %v5251 = vmul.f32 %v5215, %v5229
        %v5252 = vmul.f32 %v5216, %v5229
        %v5253 = vmul.f32 %v5217, %v5229
        %v5254 = vmul.f32 %v5218, %v5229
        %v5255 = vmul.f32 %v5219, %v5229
        %v5256 = vmul.f32 %v5220, %v5229
        %v5257 = vmul.f32 %v5221, %v5229
        %v5258 = vmul.f32 %v5222, %v5229
        %v5259 = vmul.f32 %v5223, %v5229
        %v5260 = vmul.f32 %v5224, %v5229
        %v5261 = vmul.f32 %v5225, %v5229
        %v5262 = vadd.f32 %v5162, %v5230
        %v5263 = vadd.f32 %v5163, %v5231
        %v5264 = vadd.f32 %v5164, %v5232
        %v5265 = vadd.f32 %v5165, %v5233
        %v5266 = vadd.f32 %v5166, %v5234
        %v5267 = vadd.f32 %v5167, %v5235
        %v5268 = vadd.f32 %v5168, %v5236
        %v5269 = vadd.f32 %v5169, %v5237
        %v5270 = vadd.f32 %v5170, %v5238
        %v5271 = vadd.f32 %v5171, %v5239
        %v5272 = vadd.f32 %v5172, %v5240
        %v5273 = vadd.f32 %v5173, %v5241
        %v5274 = vadd.f32 %v5174, %v5242
        %v5275 = vadd.f32 %v5175, %v5243
        %v5276 = vadd.f32 %v5176, %v5244
        %v5277 = vadd.f32 %v5177, %v5245
        %v5278 = vadd.f32 %v5178, %v5246
        %v5279 = vadd.f32 %v5179, %v5247
        %v5280 = vadd.f32 %v5180, %v5248
        %v5281 = vadd.f32 %v5181, %v5249
        %v5282 = vadd.f32 %v5182, %v5250
        %v5283 = vadd.f32 %v5183, %v5251
        %v5284 = vadd.f32 %v5184, %v5252
        %v5285 = vadd.f32 %v5185, %v5253
        %v5286 = vadd.f32 %v5186, %v5254
        %v5287 = vadd.f32 %v5187, %v5255
        %v5288 = vadd.f32 %v5188, %v5256
        %v5289 = vadd.f32 %v5189, %v5257
        %v5290 = vadd.f32 %v5190, %v5258
        %v5291 = vadd.f32 %v5191, %v5259
        %v5292 = vadd.f32 %v5192, %v5260
        %v5293 = vadd.f32 %v5193, %v5261
        %s5294 = scalar_lea.vmem [#allocation2], 96
        %v5295 = vld [vmem:[%s5294] sm:$0xff]
        %v5296 = vld [vmem:[%s5294 + $0x8] sm:$0xff]
        %v5297 = vld [vmem:[%s5294 + $0x18] sm:$0xff]
        %v5298 = vld [vmem:[%s5294 + $0x20] sm:$0xff]
        %v5299 = vld [vmem:[%s5294 + $0x30] sm:$0xff]
        %v5300 = vld [vmem:[%s5294 + $0x38] sm:$0xff]
        %v5301 = vld [vmem:[%s5294 + $0x48] sm:$0xff]
        %v5302 = vld [vmem:[%s5294 + $0x50] sm:$0xff]
        %v5303 = vld [vmem:[%s5294 + $0x60] sm:$0xff]
        %v5304 = vld [vmem:[%s5294 + $0x68] sm:$0xff]
        %v5305 = vld [vmem:[%s5294 + $0x78] sm:$0xff]
        %v5306 = vld [vmem:[%s5294 + $0x80] sm:$0xff]
        %v5307 = vld [vmem:[%s5294 + $0x90] sm:$0xff]
        %v5308 = vld [vmem:[%s5294 + $0x98] sm:$0xff]
        %v5309 = vld [vmem:[%s5294 + $0xa8] sm:$0xff]
        %v5310 = vld [vmem:[%s5294 + $0xb0] sm:$0xff]
        %v5311 = vld [vmem:[%s5294 + $0xc0] sm:$0xff]
        %v5312 = vld [vmem:[%s5294 + $0xc8] sm:$0xff]
        %v5313 = vld [vmem:[%s5294 + $0xd8] sm:$0xff]
        %v5314 = vld [vmem:[%s5294 + $0xe0] sm:$0xff]
        %v5315 = vld [vmem:[%s5294 + $0xf0] sm:$0xff]
        %v5316 = vld [vmem:[%s5294 + $0xf8] sm:$0xff]
        %v5317 = vld [vmem:[%s5294 + $0x108] sm:$0xff]
        %v5318 = vld [vmem:[%s5294 + $0x110] sm:$0xff]
        %v5319 = vld [vmem:[%s5294 + $0x120] sm:$0xff]
        %v5320 = vld [vmem:[%s5294 + $0x128] sm:$0xff]
        %v5321 = vld [vmem:[%s5294 + $0x138] sm:$0xff]
        %v5322 = vld [vmem:[%s5294 + $0x140] sm:$0xff]
        %v5323 = vld [vmem:[%s5294 + $0x150] sm:$0xff]
        %v5324 = vld [vmem:[%s5294 + $0x158] sm:$0xff]
        %v5325 = vld [vmem:[%s5294 + $0x168] sm:$0xff]
        %v5326 = vld [vmem:[%s5294 + $0x170] sm:$0xff]
        %v5327 = vlaneseq
        %v5328 = vshrl.u32 %v5327, 7
        %v5329 = vsub.s32 0, %v5328
        %v5330 = vrot.slane %v3293, %v5329
        %v5331 = vmul.f32 %v5295, %v5330
        %v5332 = vmul.f32 %v5296, %v5330
        %v5333 = vmul.f32 %v5297, %v5330
        %v5334 = vmul.f32 %v5298, %v5330
        %v5335 = vmul.f32 %v5299, %v5330
        %v5336 = vmul.f32 %v5300, %v5330
        %v5337 = vmul.f32 %v5301, %v5330
        %v5338 = vmul.f32 %v5302, %v5330
        %v5339 = vmul.f32 %v5303, %v5330
        %v5340 = vmul.f32 %v5304, %v5330
        %v5341 = vmul.f32 %v5305, %v5330
        %v5342 = vmul.f32 %v5306, %v5330
        %v5343 = vmul.f32 %v5307, %v5330
        %v5344 = vmul.f32 %v5308, %v5330
        %v5345 = vmul.f32 %v5309, %v5330
        %v5346 = vmul.f32 %v5310, %v5330
        %v5347 = vmul.f32 %v5311, %v5330
        %v5348 = vmul.f32 %v5312, %v5330
        %v5349 = vmul.f32 %v5313, %v5330
        %v5350 = vmul.f32 %v5314, %v5330
        %v5351 = vmul.f32 %v5315, %v5330
        %v5352 = vmul.f32 %v5316, %v5330
        %v5353 = vmul.f32 %v5317, %v5330
        %v5354 = vmul.f32 %v5318, %v5330
        %v5355 = vmul.f32 %v5319, %v5330
        %v5356 = vmul.f32 %v5320, %v5330
        %v5357 = vmul.f32 %v5321, %v5330
        %v5358 = vmul.f32 %v5322, %v5330
        %v5359 = vmul.f32 %v5323, %v5330
        %v5360 = vmul.f32 %v5324, %v5330
        %v5361 = vmul.f32 %v5325, %v5330
        %v5362 = vmul.f32 %v5326, %v5330
        %v5363 = vadd.f32 %v5262, %v5331
        %v5364 = vadd.f32 %v5263, %v5332
        %v5365 = vadd.f32 %v5264, %v5333
        %v5366 = vadd.f32 %v5265, %v5334
        %v5367 = vadd.f32 %v5266, %v5335
        %v5368 = vadd.f32 %v5267, %v5336
        %v5369 = vadd.f32 %v5268, %v5337
        %v5370 = vadd.f32 %v5269, %v5338
        %v5371 = vadd.f32 %v5270, %v5339
        %v5372 = vadd.f32 %v5271, %v5340
        %v5373 = vadd.f32 %v5272, %v5341
        %v5374 = vadd.f32 %v5273, %v5342
        %v5375 = vadd.f32 %v5274, %v5343
        %v5376 = vadd.f32 %v5275, %v5344
        %v5377 = vadd.f32 %v5276, %v5345
        %v5378 = vadd.f32 %v5277, %v5346
        %v5379 = vadd.f32 %v5278, %v5347
        %v5380 = vadd.f32 %v5279, %v5348
        %v5381 = vadd.f32 %v5280, %v5349
        %v5382 = vadd.f32 %v5281, %v5350
        %v5383 = vadd.f32 %v5282, %v5351
        %v5384 = vadd.f32 %v5283, %v5352
        %v5385 = vadd.f32 %v5284, %v5353
        %v5386 = vadd.f32 %v5285, %v5354
        %v5387 = vadd.f32 %v5286, %v5355
        %v5388 = vadd.f32 %v5287, %v5356
        %v5389 = vadd.f32 %v5288, %v5357
        %v5390 = vadd.f32 %v5289, %v5358
        %v5391 = vadd.f32 %v5290, %v5359
        %v5392 = vadd.f32 %v5291, %v5360
        %v5393 = vadd.f32 %v5292, %v5361
        %v5394 = vadd.f32 %v5293, %v5362
        %v5395 = vld [vmem:[%s5294 + $0x1] sm:$0xff]
        %v5396 = vld [vmem:[%s5294 + $0x9] sm:$0xff]
        %v5397 = vld [vmem:[%s5294 + $0x19] sm:$0xff]
        %v5398 = vld [vmem:[%s5294 + $0x21] sm:$0xff]
        %v5399 = vld [vmem:[%s5294 + $0x31] sm:$0xff]
        %v5400 = vld [vmem:[%s5294 + $0x39] sm:$0xff]
        %v5401 = vld [vmem:[%s5294 + $0x49] sm:$0xff]
        %v5402 = vld [vmem:[%s5294 + $0x51] sm:$0xff]
        %v5403 = vld [vmem:[%s5294 + $0x61] sm:$0xff]
        %v5404 = vld [vmem:[%s5294 + $0x69] sm:$0xff]
        %v5405 = vld [vmem:[%s5294 + $0x79] sm:$0xff]
        %v5406 = vld [vmem:[%s5294 + $0x81] sm:$0xff]
        %v5407 = vld [vmem:[%s5294 + $0x91] sm:$0xff]
        %v5408 = vld [vmem:[%s5294 + $0x99] sm:$0xff]
        %v5409 = vld [vmem:[%s5294 + $0xa9] sm:$0xff]
        %v5410 = vld [vmem:[%s5294 + $0xb1] sm:$0xff]
        %v5411 = vld [vmem:[%s5294 + $0xc1] sm:$0xff]
        %v5412 = vld [vmem:[%s5294 + $0xc9] sm:$0xff]
        %v5413 = vld [vmem:[%s5294 + $0xd9] sm:$0xff]
        %v5414 = vld [vmem:[%s5294 + $0xe1] sm:$0xff]
        %v5415 = vld [vmem:[%s5294 + $0xf1] sm:$0xff]
        %v5416 = vld [vmem:[%s5294 + $0xf9] sm:$0xff]
        %v5417 = vld [vmem:[%s5294 + $0x109] sm:$0xff]
        %v5418 = vld [vmem:[%s5294 + $0x111] sm:$0xff]
        %v5419 = vld [vmem:[%s5294 + $0x121] sm:$0xff]
        %v5420 = vld [vmem:[%s5294 + $0x129] sm:$0xff]
        %v5421 = vld [vmem:[%s5294 + $0x139] sm:$0xff]
        %v5422 = vld [vmem:[%s5294 + $0x141] sm:$0xff]
        %v5423 = vld [vmem:[%s5294 + $0x151] sm:$0xff]
        %v5424 = vld [vmem:[%s5294 + $0x159] sm:$0xff]
        %v5425 = vld [vmem:[%s5294 + $0x169] sm:$0xff]
        %v5426 = vld [vmem:[%s5294 + $0x171] sm:$0xff]
        %v5427 = vlaneseq
        %v5428 = vshrl.u32 %v5427, 7
        %v5429 = vsub.s32 1, %v5428
        %v5430 = vrot.slane %v3293, %v5429
        %v5431 = vmul.f32 %v5395, %v5430
        %v5432 = vmul.f32 %v5396, %v5430
        %v5433 = vmul.f32 %v5397, %v5430
        %v5434 = vmul.f32 %v5398, %v5430
        %v5435 = vmul.f32 %v5399, %v5430
        %v5436 = vmul.f32 %v5400, %v5430
        %v5437 = vmul.f32 %v5401, %v5430
        %v5438 = vmul.f32 %v5402, %v5430
        %v5439 = vmul.f32 %v5403, %v5430
        %v5440 = vmul.f32 %v5404, %v5430
        %v5441 = vmul.f32 %v5405, %v5430
        %v5442 = vmul.f32 %v5406, %v5430
        %v5443 = vmul.f32 %v5407, %v5430
        %v5444 = vmul.f32 %v5408, %v5430
        %v5445 = vmul.f32 %v5409, %v5430
        %v5446 = vmul.f32 %v5410, %v5430
        %v5447 = vmul.f32 %v5411, %v5430
        %v5448 = vmul.f32 %v5412, %v5430
        %v5449 = vmul.f32 %v5413, %v5430
        %v5450 = vmul.f32 %v5414, %v5430
        %v5451 = vmul.f32 %v5415, %v5430
        %v5452 = vmul.f32 %v5416, %v5430
        %v5453 = vmul.f32 %v5417, %v5430
        %v5454 = vmul.f32 %v5418, %v5430
        %v5455 = vmul.f32 %v5419, %v5430
        %v5456 = vmul.f32 %v5420, %v5430
        %v5457 = vmul.f32 %v5421, %v5430
        %v5458 = vmul.f32 %v5422, %v5430
        %v5459 = vmul.f32 %v5423, %v5430
        %v5460 = vmul.f32 %v5424, %v5430
        %v5461 = vmul.f32 %v5425, %v5430
        %v5462 = vmul.f32 %v5426, %v5430
        %v5463 = vadd.f32 %v5363, %v5431
        %v5464 = vadd.f32 %v5364, %v5432
        %v5465 = vadd.f32 %v5365, %v5433
        %v5466 = vadd.f32 %v5366, %v5434
        %v5467 = vadd.f32 %v5367, %v5435
        %v5468 = vadd.f32 %v5368, %v5436
        %v5469 = vadd.f32 %v5369, %v5437
        %v5470 = vadd.f32 %v5370, %v5438
        %v5471 = vadd.f32 %v5371, %v5439
        %v5472 = vadd.f32 %v5372, %v5440
        %v5473 = vadd.f32 %v5373, %v5441
        %v5474 = vadd.f32 %v5374, %v5442
        %v5475 = vadd.f32 %v5375, %v5443
        %v5476 = vadd.f32 %v5376, %v5444
        %v5477 = vadd.f32 %v5377, %v5445
        %v5478 = vadd.f32 %v5378, %v5446
        %v5479 = vadd.f32 %v5379, %v5447
        %v5480 = vadd.f32 %v5380, %v5448
        %v5481 = vadd.f32 %v5381, %v5449
        %v5482 = vadd.f32 %v5382, %v5450
        %v5483 = vadd.f32 %v5383, %v5451
        %v5484 = vadd.f32 %v5384, %v5452
        %v5485 = vadd.f32 %v5385, %v5453
        %v5486 = vadd.f32 %v5386, %v5454
        %v5487 = vadd.f32 %v5387, %v5455
        %v5488 = vadd.f32 %v5388, %v5456
        %v5489 = vadd.f32 %v5389, %v5457
        %v5490 = vadd.f32 %v5390, %v5458
        %v5491 = vadd.f32 %v5391, %v5459
        %v5492 = vadd.f32 %v5392, %v5460
        %v5493 = vadd.f32 %v5393, %v5461
        %v5494 = vadd.f32 %v5394, %v5462
        %v5495 = vld [vmem:[%s5294 + $0x2] sm:$0xff]
        %v5496 = vld [vmem:[%s5294 + $0xa] sm:$0xff]
        %v5497 = vld [vmem:[%s5294 + $0x1a] sm:$0xff]
        %v5498 = vld [vmem:[%s5294 + $0x22] sm:$0xff]
        %v5499 = vld [vmem:[%s5294 + $0x32] sm:$0xff]
        %v5500 = vld [vmem:[%s5294 + $0x3a] sm:$0xff]
        %v5501 = vld [vmem:[%s5294 + $0x4a] sm:$0xff]
        %v5502 = vld [vmem:[%s5294 + $0x52] sm:$0xff]
        %v5503 = vld [vmem:[%s5294 + $0x62] sm:$0xff]
        %v5504 = vld [vmem:[%s5294 + $0x6a] sm:$0xff]
        %v5505 = vld [vmem:[%s5294 + $0x7a] sm:$0xff]
        %v5506 = vld [vmem:[%s5294 + $0x82] sm:$0xff]
        %v5507 = vld [vmem:[%s5294 + $0x92] sm:$0xff]
        %v5508 = vld [vmem:[%s5294 + $0x9a] sm:$0xff]
        %v5509 = vld [vmem:[%s5294 + $0xaa] sm:$0xff]
        %v5510 = vld [vmem:[%s5294 + $0xb2] sm:$0xff]
        %v5511 = vld [vmem:[%s5294 + $0xc2] sm:$0xff]
        %v5512 = vld [vmem:[%s5294 + $0xca] sm:$0xff]
        %v5513 = vld [vmem:[%s5294 + $0xda] sm:$0xff]
        %v5514 = vld [vmem:[%s5294 + $0xe2] sm:$0xff]
        %v5515 = vld [vmem:[%s5294 + $0xf2] sm:$0xff]
        %v5516 = vld [vmem:[%s5294 + $0xfa] sm:$0xff]
        %v5517 = vld [vmem:[%s5294 + $0x10a] sm:$0xff]
        %v5518 = vld [vmem:[%s5294 + $0x112] sm:$0xff]
        %v5519 = vld [vmem:[%s5294 + $0x122] sm:$0xff]
        %v5520 = vld [vmem:[%s5294 + $0x12a] sm:$0xff]
        %v5521 = vld [vmem:[%s5294 + $0x13a] sm:$0xff]
        %v5522 = vld [vmem:[%s5294 + $0x142] sm:$0xff]
        %v5523 = vld [vmem:[%s5294 + $0x152] sm:$0xff]
        %v5524 = vld [vmem:[%s5294 + $0x15a] sm:$0xff]
        %v5525 = vld [vmem:[%s5294 + $0x16a] sm:$0xff]
        %v5526 = vld [vmem:[%s5294 + $0x172] sm:$0xff]
        %v5527 = vlaneseq
        %v5528 = vshrl.u32 %v5527, 7
        %v5529 = vsub.s32 2, %v5528
        %v5530 = vrot.slane %v3293, %v5529
        %v5531 = vmul.f32 %v5495, %v5530
        %v5532 = vmul.f32 %v5496, %v5530
        %v5533 = vmul.f32 %v5497, %v5530
        %v5534 = vmul.f32 %v5498, %v5530
        %v5535 = vmul.f32 %v5499, %v5530
        %v5536 = vmul.f32 %v5500, %v5530
        %v5537 = vmul.f32 %v5501, %v5530
        %v5538 = vmul.f32 %v5502, %v5530
        %v5539 = vmul.f32 %v5503, %v5530
        %v5540 = vmul.f32 %v5504, %v5530
        %v5541 = vmul.f32 %v5505, %v5530
        %v5542 = vmul.f32 %v5506, %v5530
        %v5543 = vmul.f32 %v5507, %v5530
        %v5544 = vmul.f32 %v5508, %v5530
        %v5545 = vmul.f32 %v5509, %v5530
        %v5546 = vmul.f32 %v5510, %v5530
        %v5547 = vmul.f32 %v5511, %v5530
        %v5548 = vmul.f32 %v5512, %v5530
        %v5549 = vmul.f32 %v5513, %v5530
        %v5550 = vmul.f32 %v5514, %v5530
        %v5551 = vmul.f32 %v5515, %v5530
        %v5552 = vmul.f32 %v5516, %v5530
        %v5553 = vmul.f32 %v5517, %v5530
        %v5554 = vmul.f32 %v5518, %v5530
        %v5555 = vmul.f32 %v5519, %v5530
        %v5556 = vmul.f32 %v5520, %v5530
        %v5557 = vmul.f32 %v5521, %v5530
        %v5558 = vmul.f32 %v5522, %v5530
        %v5559 = vmul.f32 %v5523, %v5530
        %v5560 = vmul.f32 %v5524, %v5530
        %v5561 = vmul.f32 %v5525, %v5530
        %v5562 = vmul.f32 %v5526, %v5530
        %v5563 = vadd.f32 %v5463, %v5531
        %v5564 = vadd.f32 %v5464, %v5532
        %v5565 = vadd.f32 %v5465, %v5533
        %v5566 = vadd.f32 %v5466, %v5534
        %v5567 = vadd.f32 %v5467, %v5535
        %v5568 = vadd.f32 %v5468, %v5536
        %v5569 = vadd.f32 %v5469, %v5537
        %v5570 = vadd.f32 %v5470, %v5538
        %v5571 = vadd.f32 %v5471, %v5539
        %v5572 = vadd.f32 %v5472, %v5540
        %v5573 = vadd.f32 %v5473, %v5541
        %v5574 = vadd.f32 %v5474, %v5542
        %v5575 = vadd.f32 %v5475, %v5543
        %v5576 = vadd.f32 %v5476, %v5544
        %v5577 = vadd.f32 %v5477, %v5545
        %v5578 = vadd.f32 %v5478, %v5546
        %v5579 = vadd.f32 %v5479, %v5547
        %v5580 = vadd.f32 %v5480, %v5548
        %v5581 = vadd.f32 %v5481, %v5549
        %v5582 = vadd.f32 %v5482, %v5550
        %v5583 = vadd.f32 %v5483, %v5551
        %v5584 = vadd.f32 %v5484, %v5552
        %v5585 = vadd.f32 %v5485, %v5553
        %v5586 = vadd.f32 %v5486, %v5554
        %v5587 = vadd.f32 %v5487, %v5555
        %v5588 = vadd.f32 %v5488, %v5556
        %v5589 = vadd.f32 %v5489, %v5557
        %v5590 = vadd.f32 %v5490, %v5558
        %v5591 = vadd.f32 %v5491, %v5559
        %v5592 = vadd.f32 %v5492, %v5560
        %v5593 = vadd.f32 %v5493, %v5561
        %v5594 = vadd.f32 %v5494, %v5562
        %v5595 = vld [vmem:[%s5294 + $0x3] sm:$0xff]
        %v5596 = vld [vmem:[%s5294 + $0xb] sm:$0xff]
        %v5597 = vld [vmem:[%s5294 + $0x1b] sm:$0xff]
        %v5598 = vld [vmem:[%s5294 + $0x23] sm:$0xff]
        %v5599 = vld [vmem:[%s5294 + $0x33] sm:$0xff]
        %v5600 = vld [vmem:[%s5294 + $0x3b] sm:$0xff]
        %v5601 = vld [vmem:[%s5294 + $0x4b] sm:$0xff]
        %v5602 = vld [vmem:[%s5294 + $0x53] sm:$0xff]
        %v5603 = vld [vmem:[%s5294 + $0x63] sm:$0xff]
        %v5604 = vld [vmem:[%s5294 + $0x6b] sm:$0xff]
        %v5605 = vld [vmem:[%s5294 + $0x7b] sm:$0xff]
        %v5606 = vld [vmem:[%s5294 + $0x83] sm:$0xff]
        %v5607 = vld [vmem:[%s5294 + $0x93] sm:$0xff]
        %v5608 = vld [vmem:[%s5294 + $0x9b] sm:$0xff]
        %v5609 = vld [vmem:[%s5294 + $0xab] sm:$0xff]
        %v5610 = vld [vmem:[%s5294 + $0xb3] sm:$0xff]
        %v5611 = vld [vmem:[%s5294 + $0xc3] sm:$0xff]
        %v5612 = vld [vmem:[%s5294 + $0xcb] sm:$0xff]
        %v5613 = vld [vmem:[%s5294 + $0xdb] sm:$0xff]
        %v5614 = vld [vmem:[%s5294 + $0xe3] sm:$0xff]
        %v5615 = vld [vmem:[%s5294 + $0xf3] sm:$0xff]
        %v5616 = vld [vmem:[%s5294 + $0xfb] sm:$0xff]
        %v5617 = vld [vmem:[%s5294 + $0x10b] sm:$0xff]
        %v5618 = vld [vmem:[%s5294 + $0x113] sm:$0xff]
        %v5619 = vld [vmem:[%s5294 + $0x123] sm:$0xff]
        %v5620 = vld [vmem:[%s5294 + $0x12b] sm:$0xff]
        %v5621 = vld [vmem:[%s5294 + $0x13b] sm:$0xff]
        %v5622 = vld [vmem:[%s5294 + $0x143] sm:$0xff]
        %v5623 = vld [vmem:[%s5294 + $0x153] sm:$0xff]
        %v5624 = vld [vmem:[%s5294 + $0x15b] sm:$0xff]
        %v5625 = vld [vmem:[%s5294 + $0x16b] sm:$0xff]
        %v5626 = vld [vmem:[%s5294 + $0x173] sm:$0xff]
        %v5627 = vlaneseq
        %v5628 = vshrl.u32 %v5627, 7
        %v5629 = vsub.s32 3, %v5628
        %v5630 = vrot.slane %v3293, %v5629
        %v5631 = vmul.f32 %v5595, %v5630
        %v5632 = vmul.f32 %v5596, %v5630
        %v5633 = vmul.f32 %v5597, %v5630
        %v5634 = vmul.f32 %v5598, %v5630
        %v5635 = vmul.f32 %v5599, %v5630
        %v5636 = vmul.f32 %v5600, %v5630
        %v5637 = vmul.f32 %v5601, %v5630
        %v5638 = vmul.f32 %v5602, %v5630
        %v5639 = vmul.f32 %v5603, %v5630
        %v5640 = vmul.f32 %v5604, %v5630
        %v5641 = vmul.f32 %v5605, %v5630
        %v5642 = vmul.f32 %v5606, %v5630
        %v5643 = vmul.f32 %v5607, %v5630
        %v5644 = vmul.f32 %v5608, %v5630
        %v5645 = vmul.f32 %v5609, %v5630
        %v5646 = vmul.f32 %v5610, %v5630
        %v5647 = vmul.f32 %v5611, %v5630
        %v5648 = vmul.f32 %v5612, %v5630
        %v5649 = vmul.f32 %v5613, %v5630
        %v5650 = vmul.f32 %v5614, %v5630
        %v5651 = vmul.f32 %v5615, %v5630
        %v5652 = vmul.f32 %v5616, %v5630
        %v5653 = vmul.f32 %v5617, %v5630
        %v5654 = vmul.f32 %v5618, %v5630
        %v5655 = vmul.f32 %v5619, %v5630
        %v5656 = vmul.f32 %v5620, %v5630
        %v5657 = vmul.f32 %v5621, %v5630
        %v5658 = vmul.f32 %v5622, %v5630
        %v5659 = vmul.f32 %v5623, %v5630
        %v5660 = vmul.f32 %v5624, %v5630
        %v5661 = vmul.f32 %v5625, %v5630
        %v5662 = vmul.f32 %v5626, %v5630
        %v5663 = vadd.f32 %v5563, %v5631
        %v5664 = vadd.f32 %v5564, %v5632
        %v5665 = vadd.f32 %v5565, %v5633
        %v5666 = vadd.f32 %v5566, %v5634
        %v5667 = vadd.f32 %v5567, %v5635
        %v5668 = vadd.f32 %v5568, %v5636
        %v5669 = vadd.f32 %v5569, %v5637
        %v5670 = vadd.f32 %v5570, %v5638
        %v5671 = vadd.f32 %v5571, %v5639
        %v5672 = vadd.f32 %v5572, %v5640
        %v5673 = vadd.f32 %v5573, %v5641
        %v5674 = vadd.f32 %v5574, %v5642
        %v5675 = vadd.f32 %v5575, %v5643
        %v5676 = vadd.f32 %v5576, %v5644
        %v5677 = vadd.f32 %v5577, %v5645
        %v5678 = vadd.f32 %v5578, %v5646
        %v5679 = vadd.f32 %v5579, %v5647
        %v5680 = vadd.f32 %v5580, %v5648
        %v5681 = vadd.f32 %v5581, %v5649
        %v5682 = vadd.f32 %v5582, %v5650
        %v5683 = vadd.f32 %v5583, %v5651
        %v5684 = vadd.f32 %v5584, %v5652
        %v5685 = vadd.f32 %v5585, %v5653
        %v5686 = vadd.f32 %v5586, %v5654
        %v5687 = vadd.f32 %v5587, %v5655
        %v5688 = vadd.f32 %v5588, %v5656
        %v5689 = vadd.f32 %v5589, %v5657
        %v5690 = vadd.f32 %v5590, %v5658
        %v5691 = vadd.f32 %v5591, %v5659
        %v5692 = vadd.f32 %v5592, %v5660
        %v5693 = vadd.f32 %v5593, %v5661
        %v5694 = vadd.f32 %v5594, %v5662
        %v5695 = vld [vmem:[%s5294 + $0x4] sm:$0xff]
        %v5696 = vld [vmem:[%s5294 + $0xc] sm:$0xff]
        %v5697 = vld [vmem:[%s5294 + $0x1c] sm:$0xff]
        %v5698 = vld [vmem:[%s5294 + $0x24] sm:$0xff]
        %v5699 = vld [vmem:[%s5294 + $0x34] sm:$0xff]
        %v5700 = vld [vmem:[%s5294 + $0x3c] sm:$0xff]
        %v5701 = vld [vmem:[%s5294 + $0x4c] sm:$0xff]
        %v5702 = vld [vmem:[%s5294 + $0x54] sm:$0xff]
        %v5703 = vld [vmem:[%s5294 + $0x64] sm:$0xff]
        %v5704 = vld [vmem:[%s5294 + $0x6c] sm:$0xff]
        %v5705 = vld [vmem:[%s5294 + $0x7c] sm:$0xff]
        %v5706 = vld [vmem:[%s5294 + $0x84] sm:$0xff]
        %v5707 = vld [vmem:[%s5294 + $0x94] sm:$0xff]
        %v5708 = vld [vmem:[%s5294 + $0x9c] sm:$0xff]
        %v5709 = vld [vmem:[%s5294 + $0xac] sm:$0xff]
        %v5710 = vld [vmem:[%s5294 + $0xb4] sm:$0xff]
        %v5711 = vld [vmem:[%s5294 + $0xc4] sm:$0xff]
        %v5712 = vld [vmem:[%s5294 + $0xcc] sm:$0xff]
        %v5713 = vld [vmem:[%s5294 + $0xdc] sm:$0xff]
        %v5714 = vld [vmem:[%s5294 + $0xe4] sm:$0xff]
        %v5715 = vld [vmem:[%s5294 + $0xf4] sm:$0xff]
        %v5716 = vld [vmem:[%s5294 + $0xfc] sm:$0xff]
        %v5717 = vld [vmem:[%s5294 + $0x10c] sm:$0xff]
        %v5718 = vld [vmem:[%s5294 + $0x114] sm:$0xff]
        %v5719 = vld [vmem:[%s5294 + $0x124] sm:$0xff]
        %v5720 = vld [vmem:[%s5294 + $0x12c] sm:$0xff]
        %v5721 = vld [vmem:[%s5294 + $0x13c] sm:$0xff]
        %v5722 = vld [vmem:[%s5294 + $0x144] sm:$0xff]
        %v5723 = vld [vmem:[%s5294 + $0x154] sm:$0xff]
        %v5724 = vld [vmem:[%s5294 + $0x15c] sm:$0xff]
        %v5725 = vld [vmem:[%s5294 + $0x16c] sm:$0xff]
        %v5726 = vld [vmem:[%s5294 + $0x174] sm:$0xff]
        %v5727 = vlaneseq
        %v5728 = vshrl.u32 %v5727, 7
        %v5729 = vsub.s32 4, %v5728
        %v5730 = vrot.slane %v3293, %v5729
        %v5731 = vmul.f32 %v5695, %v5730
        %v5732 = vmul.f32 %v5696, %v5730
        %v5733 = vmul.f32 %v5697, %v5730
        %v5734 = vmul.f32 %v5698, %v5730
        %v5735 = vmul.f32 %v5699, %v5730
        %v5736 = vmul.f32 %v5700, %v5730
        %v5737 = vmul.f32 %v5701, %v5730
        %v5738 = vmul.f32 %v5702, %v5730
        %v5739 = vmul.f32 %v5703, %v5730
        %v5740 = vmul.f32 %v5704, %v5730
        %v5741 = vmul.f32 %v5705, %v5730
        %v5742 = vmul.f32 %v5706, %v5730
        %v5743 = vmul.f32 %v5707, %v5730
        %v5744 = vmul.f32 %v5708, %v5730
        %v5745 = vmul.f32 %v5709, %v5730
        %v5746 = vmul.f32 %v5710, %v5730
        %v5747 = vmul.f32 %v5711, %v5730
        %v5748 = vmul.f32 %v5712, %v5730
        %v5749 = vmul.f32 %v5713, %v5730
        %v5750 = vmul.f32 %v5714, %v5730
        %v5751 = vmul.f32 %v5715, %v5730
        %v5752 = vmul.f32 %v5716, %v5730
        %v5753 = vmul.f32 %v5717, %v5730
        %v5754 = vmul.f32 %v5718, %v5730
        %v5755 = vmul.f32 %v5719, %v5730
        %v5756 = vmul.f32 %v5720, %v5730
        %v5757 = vmul.f32 %v5721, %v5730
        %v5758 = vmul.f32 %v5722, %v5730
        %v5759 = vmul.f32 %v5723, %v5730
        %v5760 = vmul.f32 %v5724, %v5730
        %v5761 = vmul.f32 %v5725, %v5730
        %v5762 = vmul.f32 %v5726, %v5730
        %v5763 = vadd.f32 %v5663, %v5731
        %v5764 = vadd.f32 %v5664, %v5732
        %v5765 = vadd.f32 %v5665, %v5733
        %v5766 = vadd.f32 %v5666, %v5734
        %v5767 = vadd.f32 %v5667, %v5735
        %v5768 = vadd.f32 %v5668, %v5736
        %v5769 = vadd.f32 %v5669, %v5737
        %v5770 = vadd.f32 %v5670, %v5738
        %v5771 = vadd.f32 %v5671, %v5739
        %v5772 = vadd.f32 %v5672, %v5740
        %v5773 = vadd.f32 %v5673, %v5741
        %v5774 = vadd.f32 %v5674, %v5742
        %v5775 = vadd.f32 %v5675, %v5743
        %v5776 = vadd.f32 %v5676, %v5744
        %v5777 = vadd.f32 %v5677, %v5745
        %v5778 = vadd.f32 %v5678, %v5746
        %v5779 = vadd.f32 %v5679, %v5747
        %v5780 = vadd.f32 %v5680, %v5748
        %v5781 = vadd.f32 %v5681, %v5749
        %v5782 = vadd.f32 %v5682, %v5750
        %v5783 = vadd.f32 %v5683, %v5751
        %v5784 = vadd.f32 %v5684, %v5752
        %v5785 = vadd.f32 %v5685, %v5753
        %v5786 = vadd.f32 %v5686, %v5754
        %v5787 = vadd.f32 %v5687, %v5755
        %v5788 = vadd.f32 %v5688, %v5756
        %v5789 = vadd.f32 %v5689, %v5757
        %v5790 = vadd.f32 %v5690, %v5758
        %v5791 = vadd.f32 %v5691, %v5759
        %v5792 = vadd.f32 %v5692, %v5760
        %v5793 = vadd.f32 %v5693, %v5761
        %v5794 = vadd.f32 %v5694, %v5762
        %v5795 = vmul.f32 %v5763, 0.5
        %v5796 = vmul.f32 %v5764, 0.5
        %v5797 = vmul.f32 %v5765, 0.5
        %v5798 = vmul.f32 %v5766, 0.5
        %v5799 = vmul.f32 %v5767, 0.5
        %v5800 = vmul.f32 %v5768, 0.5
        %v5801 = vmul.f32 %v5769, 0.5
        %v5802 = vmul.f32 %v5770, 0.5
        %v5803 = vmul.f32 %v5771, 0.5
        %v5804 = vmul.f32 %v5772, 0.5
        %v5805 = vmul.f32 %v5773, 0.5
        %v5806 = vmul.f32 %v5774, 0.5
        %v5807 = vmul.f32 %v5775, 0.5
        %v5808 = vmul.f32 %v5776, 0.5
        %v5809 = vmul.f32 %v5777, 0.5
        %v5810 = vmul.f32 %v5778, 0.5
        %v5811 = vmul.f32 %v5779, 0.5
        %v5812 = vmul.f32 %v5780, 0.5
        %v5813 = vmul.f32 %v5781, 0.5
        %v5814 = vmul.f32 %v5782, 0.5
        %v5815 = vmul.f32 %v5783, 0.5
        %v5816 = vmul.f32 %v5784, 0.5
        %v5817 = vmul.f32 %v5785, 0.5
        %v5818 = vmul.f32 %v5786, 0.5
        %v5819 = vmul.f32 %v5787, 0.5
        %v5820 = vmul.f32 %v5788, 0.5
        %v5821 = vmul.f32 %v5789, 0.5
        %v5822 = vmul.f32 %v5790, 0.5
        %v5823 = vmul.f32 %v5791, 0.5
        %v5824 = vmul.f32 %v5792, 0.5
        %v5825 = vmul.f32 %v5793, 0.5
        %v5826 = vmul.f32 %v5794, 0.5
        %v5827 = vmul.f32 %v5763, %v2200
        %v5828 = vmul.f32 %v5764, %v2200
        %v5829 = vmul.f32 %v5765, %v2200
        %v5830 = vmul.f32 %v5766, %v2200
        %v5831 = vmul.f32 %v5767, %v2200
        %v5832 = vmul.f32 %v5768, %v2200
        %v5833 = vmul.f32 %v5769, %v2200
        %v5834 = vmul.f32 %v5770, %v2200
        %v5835 = vmul.f32 %v5771, %v2200
        %v5836 = vmul.f32 %v5772, %v2200
        %v5837 = vmul.f32 %v5773, %v2200
        %v5838 = vmul.f32 %v5774, %v2200
        %v5839 = vmul.f32 %v5775, %v2200
        %v5840 = vmul.f32 %v5776, %v2200
        %v5841 = vmul.f32 %v5777, %v2200
        %v5842 = vmul.f32 %v5778, %v2200
        %v5843 = vmul.f32 %v5779, %v2200
        %v5844 = vmul.f32 %v5780, %v2200
        %v5845 = vmul.f32 %v5781, %v2200
        %v5846 = vmul.f32 %v5782, %v2200
        %v5847 = vmul.f32 %v5783, %v2200
        %v5848 = vmul.f32 %v5784, %v2200
        %v5849 = vmul.f32 %v5785, %v2200
        %v5850 = vmul.f32 %v5786, %v2200
        %v5851 = vmul.f32 %v5787, %v2200
        %v5852 = vmul.f32 %v5788, %v2200
        %v5853 = vmul.f32 %v5789, %v2200
        %v5854 = vmul.f32 %v5790, %v2200
        %v5855 = vmul.f32 %v5791, %v2200
        %v5856 = vmul.f32 %v5792, %v2200
        %v5857 = vmul.f32 %v5793, %v2200
        %v5858 = vmul.f32 %v5794, %v2200
        %vm5859 = vcmp.ge.f32.partialorder %v5827, 0.0
        %vm5860 = vcmp.ge.f32.partialorder %v5828, 0.0
        %vm5861 = vcmp.ge.f32.partialorder %v5829, 0.0
        %vm5862 = vcmp.ge.f32.partialorder %v5830, 0.0
        %vm5863 = vcmp.ge.f32.partialorder %v5831, 0.0
        %vm5864 = vcmp.ge.f32.partialorder %v5832, 0.0
        %vm5865 = vcmp.ge.f32.partialorder %v5833, 0.0
        %vm5866 = vcmp.ge.f32.partialorder %v5834, 0.0
        %vm5867 = vcmp.ge.f32.partialorder %v5835, 0.0
        %vm5868 = vcmp.ge.f32.partialorder %v5836, 0.0
        %vm5869 = vcmp.ge.f32.partialorder %v5837, 0.0
        %vm5870 = vcmp.ge.f32.partialorder %v5838, 0.0
        %vm5871 = vcmp.ge.f32.partialorder %v5839, 0.0
        %vm5872 = vcmp.ge.f32.partialorder %v5840, 0.0
        %vm5873 = vcmp.ge.f32.partialorder %v5841, 0.0
        %vm5874 = vcmp.ge.f32.partialorder %v5842, 0.0
        %vm5875 = vcmp.ge.f32.partialorder %v5843, 0.0
        %vm5876 = vcmp.ge.f32.partialorder %v5844, 0.0
        %vm5877 = vcmp.ge.f32.partialorder %v5845, 0.0
        %vm5878 = vcmp.ge.f32.partialorder %v5846, 0.0
        %vm5879 = vcmp.ge.f32.partialorder %v5847, 0.0
        %vm5880 = vcmp.ge.f32.partialorder %v5848, 0.0
        %vm5881 = vcmp.ge.f32.partialorder %v5849, 0.0
        %vm5882 = vcmp.ge.f32.partialorder %v5850, 0.0
        %vm5883 = vcmp.ge.f32.partialorder %v5851, 0.0
        %vm5884 = vcmp.ge.f32.partialorder %v5852, 0.0
        %vm5885 = vcmp.ge.f32.partialorder %v5853, 0.0
        %vm5886 = vcmp.ge.f32.partialorder %v5854, 0.0
        %vm5887 = vcmp.ge.f32.partialorder %v5855, 0.0
        %vm5888 = vcmp.ge.f32.partialorder %v5856, 0.0
        %vm5889 = vcmp.ge.f32.partialorder %v5857, 0.0
        %vm5890 = vcmp.ge.f32.partialorder %v5858, 0.0
        %v5891 = vsel %vm5859, 1.0, -1.0
        %v5892 = vsel %vm5860, 1.0, -1.0
        %v5893 = vsel %vm5861, 1.0, -1.0
        %v5894 = vsel %vm5862, 1.0, -1.0
        %v5895 = vsel %vm5863, 1.0, -1.0
        %v5896 = vsel %vm5864, 1.0, -1.0
        %v5897 = vsel %vm5865, 1.0, -1.0
        %v5898 = vsel %vm5866, 1.0, -1.0
        %v5899 = vsel %vm5867, 1.0, -1.0
        %v5900 = vsel %vm5868, 1.0, -1.0
        %v5901 = vsel %vm5869, 1.0, -1.0
        %v5902 = vsel %vm5870, 1.0, -1.0
        %v5903 = vsel %vm5871, 1.0, -1.0
        %v5904 = vsel %vm5872, 1.0, -1.0
        %v5905 = vsel %vm5873, 1.0, -1.0
        %v5906 = vsel %vm5874, 1.0, -1.0
        %v5907 = vsel %vm5875, 1.0, -1.0
        %v5908 = vsel %vm5876, 1.0, -1.0
        %v5909 = vsel %vm5877, 1.0, -1.0
        %v5910 = vsel %vm5878, 1.0, -1.0
        %v5911 = vsel %vm5879, 1.0, -1.0
        %v5912 = vsel %vm5880, 1.0, -1.0
        %v5913 = vsel %vm5881, 1.0, -1.0
        %v5914 = vsel %vm5882, 1.0, -1.0
        %v5915 = vsel %vm5883, 1.0, -1.0
        %v5916 = vsel %vm5884, 1.0, -1.0
        %v5917 = vsel %vm5885, 1.0, -1.0
        %v5918 = vsel %vm5886, 1.0, -1.0
        %v5919 = vsel %vm5887, 1.0, -1.0
        %v5920 = vsel %vm5888, 1.0, -1.0
        %v5921 = vsel %vm5889, 1.0, -1.0
        %v5922 = vsel %vm5890, 1.0, -1.0
        %v5923 = vand.u32 2147483647, %v5827
        %v5924 = vand.u32 2147483647, %v5828
        %v5925 = vand.u32 2147483647, %v5829
        %v5926 = vand.u32 2147483647, %v5830
        %v5927 = vand.u32 2147483647, %v5831
        %v5928 = vand.u32 2147483647, %v5832
        %v5929 = vand.u32 2147483647, %v5833
        %v5930 = vand.u32 2147483647, %v5834
        %v5931 = vand.u32 2147483647, %v5835
        %v5932 = vand.u32 2147483647, %v5836
        %v5933 = vand.u32 2147483647, %v5837
        %v5934 = vand.u32 2147483647, %v5838
        %v5935 = vand.u32 2147483647, %v5839
        %v5936 = vand.u32 2147483647, %v5840
        %v5937 = vand.u32 2147483647, %v5841
        %v5938 = vand.u32 2147483647, %v5842
        %v5939 = vand.u32 2147483647, %v5843
        %v5940 = vand.u32 2147483647, %v5844
        %v5941 = vand.u32 2147483647, %v5845
        %v5942 = vand.u32 2147483647, %v5846
        %v5943 = vand.u32 2147483647, %v5847
        %v5944 = vand.u32 2147483647, %v5848
        %v5945 = vand.u32 2147483647, %v5849
        %v5946 = vand.u32 2147483647, %v5850
        %v5947 = vand.u32 2147483647, %v5851
        %v5948 = vand.u32 2147483647, %v5852
        %v5949 = vand.u32 2147483647, %v5853
        %v5950 = vand.u32 2147483647, %v5854
        %v5951 = vand.u32 2147483647, %v5855
        %v5952 = vand.u32 2147483647, %v5856
        %v5953 = vand.u32 2147483647, %v5857
        %v5954 = vand.u32 2147483647, %v5858
        %v5955 = vmul.f32 %v5923, 0.3275911
        %v5956 = vmul.f32 %v5924, 0.3275911
        %v5957 = vmul.f32 %v5925, 0.3275911
        %v5958 = vmul.f32 %v5926, 0.3275911
        %v5959 = vmul.f32 %v5927, 0.3275911
        %v5960 = vmul.f32 %v5928, 0.3275911
        %v5961 = vmul.f32 %v5929, 0.3275911
        %v5962 = vmul.f32 %v5930, 0.3275911
        %v5963 = vmul.f32 %v5931, 0.3275911
        %v5964 = vmul.f32 %v5932, 0.3275911
        %v5965 = vmul.f32 %v5933, 0.3275911
        %v5966 = vmul.f32 %v5934, 0.3275911
        %v5967 = vmul.f32 %v5935, 0.3275911
        %v5968 = vmul.f32 %v5936, 0.3275911
        %v5969 = vmul.f32 %v5937, 0.3275911
        %v5970 = vmul.f32 %v5938, 0.3275911
        %v5971 = vmul.f32 %v5939, 0.3275911
        %v5972 = vmul.f32 %v5940, 0.3275911
        %v5973 = vmul.f32 %v5941, 0.3275911
        %v5974 = vmul.f32 %v5942, 0.3275911
        %v5975 = vmul.f32 %v5943, 0.3275911
        %v5976 = vmul.f32 %v5944, 0.3275911
        %v5977 = vmul.f32 %v5945, 0.3275911
        %v5978 = vmul.f32 %v5946, 0.3275911
        %v5979 = vmul.f32 %v5947, 0.3275911
        %v5980 = vmul.f32 %v5948, 0.3275911
        %v5981 = vmul.f32 %v5949, 0.3275911
        %v5982 = vmul.f32 %v5950, 0.3275911
        %v5983 = vmul.f32 %v5951, 0.3275911
        %v5984 = vmul.f32 %v5952, 0.3275911
        %v5985 = vmul.f32 %v5953, 0.3275911
        %v5986 = vmul.f32 %v5954, 0.3275911
        %v5987 = vadd.f32 %v5955, 1.0
        %v5988 = vadd.f32 %v5956, 1.0
        %v5989 = vadd.f32 %v5957, 1.0
        %v5990 = vadd.f32 %v5958, 1.0
        %v5991 = vadd.f32 %v5959, 1.0
        %v5992 = vadd.f32 %v5960, 1.0
        %v5993 = vadd.f32 %v5961, 1.0
        %v5994 = vadd.f32 %v5962, 1.0
        %v5995 = vadd.f32 %v5963, 1.0
        %v5996 = vadd.f32 %v5964, 1.0
        %v5997 = vadd.f32 %v5965, 1.0
        %v5998 = vadd.f32 %v5966, 1.0
        %v5999 = vadd.f32 %v5967, 1.0
        %v6000 = vadd.f32 %v5968, 1.0
        %v6001 = vadd.f32 %v5969, 1.0
        %v6002 = vadd.f32 %v5970, 1.0
        %v6003 = vadd.f32 %v5971, 1.0
        %v6004 = vadd.f32 %v5972, 1.0
        %v6005 = vadd.f32 %v5973, 1.0
        %v6006 = vadd.f32 %v5974, 1.0
        %v6007 = vadd.f32 %v5975, 1.0
        %v6008 = vadd.f32 %v5976, 1.0
        %v6009 = vadd.f32 %v5977, 1.0
        %v6010 = vadd.f32 %v5978, 1.0
        %v6011 = vadd.f32 %v5979, 1.0
        %v6012 = vadd.f32 %v5980, 1.0
        %v6013 = vadd.f32 %v5981, 1.0
        %v6014 = vadd.f32 %v5982, 1.0
        %v6015 = vadd.f32 %v5983, 1.0
        %v6016 = vadd.f32 %v5984, 1.0
        %v6017 = vadd.f32 %v5985, 1.0
        %v6018 = vadd.f32 %v5986, 1.0
        %v6019 = vrcp.pop %v5987
        %v6020 = vmul.f32 1.0, %v6019
        %v6021 = vrcp.pop %v5988
        %v6022 = vmul.f32 1.0, %v6021
        %v6023 = vrcp.pop %v5989
        %v6024 = vmul.f32 1.0, %v6023
        %v6025 = vrcp.pop %v5990
        %v6026 = vmul.f32 1.0, %v6025
        %v6027 = vrcp.pop %v5991
        %v6028 = vmul.f32 1.0, %v6027
        %v6029 = vrcp.pop %v5992
        %v6030 = vmul.f32 1.0, %v6029
        %v6031 = vrcp.pop %v5993
        %v6032 = vmul.f32 1.0, %v6031
        %v6033 = vrcp.pop %v5994
        %v6034 = vmul.f32 1.0, %v6033
        %v6035 = vrcp.pop %v5995
        %v6036 = vmul.f32 1.0, %v6035
        %v6037 = vrcp.pop %v5996
        %v6038 = vmul.f32 1.0, %v6037
        %v6039 = vrcp.pop %v5997
        %v6040 = vmul.f32 1.0, %v6039
        %v6041 = vrcp.pop %v5998
        %v6042 = vmul.f32 1.0, %v6041
        %v6043 = vrcp.pop %v5999
        %v6044 = vmul.f32 1.0, %v6043
        %v6045 = vrcp.pop %v6000
        %v6046 = vmul.f32 1.0, %v6045
        %v6047 = vrcp.pop %v6001
        %v6048 = vmul.f32 1.0, %v6047
        %v6049 = vrcp.pop %v6002
        %v6050 = vmul.f32 1.0, %v6049
        %v6051 = vrcp.pop %v6003
        %v6052 = vmul.f32 1.0, %v6051
        %v6053 = vrcp.pop %v6004
        %v6054 = vmul.f32 1.0, %v6053
        %v6055 = vrcp.pop %v6005
        %v6056 = vmul.f32 1.0, %v6055
        %v6057 = vrcp.pop %v6006
        %v6058 = vmul.f32 1.0, %v6057
        %v6059 = vrcp.pop %v6007
        %v6060 = vmul.f32 1.0, %v6059
        %v6061 = vrcp.pop %v6008
        %v6062 = vmul.f32 1.0, %v6061
        %v6063 = vrcp.pop %v6009
        %v6064 = vmul.f32 1.0, %v6063
        %v6065 = vrcp.pop %v6010
        %v6066 = vmul.f32 1.0, %v6065
        %v6067 = vrcp.pop %v6011
        %v6068 = vmul.f32 1.0, %v6067
        %v6069 = vrcp.pop %v6012
        %v6070 = vmul.f32 1.0, %v6069
        %v6071 = vrcp.pop %v6013
        %v6072 = vmul.f32 1.0, %v6071
        %v6073 = vrcp.pop %v6014
        %v6074 = vmul.f32 1.0, %v6073
        %v6075 = vrcp.pop %v6015
        %v6076 = vmul.f32 1.0, %v6075
        %v6077 = vrcp.pop %v6016
        %v6078 = vmul.f32 1.0, %v6077
        %v6079 = vrcp.pop %v6017
        %v6080 = vmul.f32 1.0, %v6079
        %v6081 = vrcp.pop %v6018
        %v6082 = vmul.f32 1.0, %v6081
        %v6083 = vmul.f32 %v6020, 1.0614054
        %v6084 = vmul.f32 %v6022, 1.0614054
        %v6085 = vmul.f32 %v6024, 1.0614054
        %v6086 = vmul.f32 %v6026, 1.0614054
        %v6087 = vmul.f32 %v6028, 1.0614054
        %v6088 = vmul.f32 %v6030, 1.0614054
        %v6089 = vmul.f32 %v6032, 1.0614054
        %v6090 = vmul.f32 %v6034, 1.0614054
        %v6091 = vmul.f32 %v6036, 1.0614054
        %v6092 = vmul.f32 %v6038, 1.0614054
        %v6093 = vmul.f32 %v6040, 1.0614054
        %v6094 = vmul.f32 %v6042, 1.0614054
        %v6095 = vmul.f32 %v6044, 1.0614054
        %v6096 = vmul.f32 %v6046, 1.0614054
        %v6097 = vmul.f32 %v6048, 1.0614054
        %v6098 = vmul.f32 %v6050, 1.0614054
        %v6099 = vmul.f32 %v6052, 1.0614054
        %v6100 = vmul.f32 %v6054, 1.0614054
        %v6101 = vmul.f32 %v6056, 1.0614054
        %v6102 = vmul.f32 %v6058, 1.0614054
        %v6103 = vmul.f32 %v6060, 1.0614054
        %v6104 = vmul.f32 %v6062, 1.0614054
        %v6105 = vmul.f32 %v6064, 1.0614054
        %v6106 = vmul.f32 %v6066, 1.0614054
        %v6107 = vmul.f32 %v6068, 1.0614054
        %v6108 = vmul.f32 %v6070, 1.0614054
        %v6109 = vmul.f32 %v6072, 1.0614054
        %v6110 = vmul.f32 %v6074, 1.0614054
        %v6111 = vmul.f32 %v6076, 1.0614054
        %v6112 = vmul.f32 %v6078, 1.0614054
        %v6113 = vmul.f32 %v6080, 1.0614054
        %v6114 = vmul.f32 %v6082, 1.0614054
        %v6115 = vadd.f32 %v6083, -1.4531521
        %v6116 = vadd.f32 %v6084, -1.4531521
        %v6117 = vadd.f32 %v6085, -1.4531521
        %v6118 = vadd.f32 %v6086, -1.4531521
        %v6119 = vadd.f32 %v6087, -1.4531521
        %v6120 = vadd.f32 %v6088, -1.4531521
        %v6121 = vadd.f32 %v6089, -1.4531521
        %v6122 = vadd.f32 %v6090, -1.4531521
        %v6123 = vadd.f32 %v6091, -1.4531521
        %v6124 = vadd.f32 %v6092, -1.4531521
        %v6125 = vadd.f32 %v6093, -1.4531521
        %v6126 = vadd.f32 %v6094, -1.4531521
        %v6127 = vadd.f32 %v6095, -1.4531521
        %v6128 = vadd.f32 %v6096, -1.4531521
        %v6129 = vadd.f32 %v6097, -1.4531521
        %v6130 = vadd.f32 %v6098, -1.4531521
        %v6131 = vadd.f32 %v6099, -1.4531521
        %v6132 = vadd.f32 %v6100, -1.4531521
        %v6133 = vadd.f32 %v6101, -1.4531521
        %v6134 = vadd.f32 %v6102, -1.4531521
        %v6135 = vadd.f32 %v6103, -1.4531521
        %v6136 = vadd.f32 %v6104, -1.4531521
        %v6137 = vadd.f32 %v6105, -1.4531521
        %v6138 = vadd.f32 %v6106, -1.4531521
        %v6139 = vadd.f32 %v6107, -1.4531521
        %v6140 = vadd.f32 %v6108, -1.4531521
        %v6141 = vadd.f32 %v6109, -1.4531521
        %v6142 = vadd.f32 %v6110, -1.4531521
        %v6143 = vadd.f32 %v6111, -1.4531521
        %v6144 = vadd.f32 %v6112, -1.4531521
        %v6145 = vadd.f32 %v6113, -1.4531521
        %v6146 = vadd.f32 %v6114, -1.4531521
        %v6147 = vmul.f32 %v6115, %v6020
        %v6148 = vmul.f32 %v6116, %v6022
        %v6149 = vmul.f32 %v6117, %v6024
        %v6150 = vmul.f32 %v6118, %v6026
        %v6151 = vmul.f32 %v6119, %v6028
        %v6152 = vmul.f32 %v6120, %v6030
        %v6153 = vmul.f32 %v6121, %v6032
        %v6154 = vmul.f32 %v6122, %v6034
        %v6155 = vmul.f32 %v6123, %v6036
        %v6156 = vmul.f32 %v6124, %v6038
        %v6157 = vmul.f32 %v6125, %v6040
        %v6158 = vmul.f32 %v6126, %v6042
        %v6159 = vmul.f32 %v6127, %v6044
        %v6160 = vmul.f32 %v6128, %v6046
        %v6161 = vmul.f32 %v6129, %v6048
        %v6162 = vmul.f32 %v6130, %v6050
        %v6163 = vmul.f32 %v6131, %v6052
        %v6164 = vmul.f32 %v6132, %v6054
        %v6165 = vmul.f32 %v6133, %v6056
        %v6166 = vmul.f32 %v6134, %v6058
        %v6167 = vmul.f32 %v6135, %v6060
        %v6168 = vmul.f32 %v6136, %v6062
        %v6169 = vmul.f32 %v6137, %v6064
        %v6170 = vmul.f32 %v6138, %v6066
        %v6171 = vmul.f32 %v6139, %v6068
        %v6172 = vmul.f32 %v6140, %v6070
        %v6173 = vmul.f32 %v6141, %v6072
        %v6174 = vmul.f32 %v6142, %v6074
        %v6175 = vmul.f32 %v6143, %v6076
        %v6176 = vmul.f32 %v6144, %v6078
        %v6177 = vmul.f32 %v6145, %v6080
        %v6178 = vmul.f32 %v6146, %v6082
        %v6179 = vadd.f32 %v6147, 1.4214138
        %v6180 = vadd.f32 %v6148, 1.4214138
        %v6181 = vadd.f32 %v6149, 1.4214138
        %v6182 = vadd.f32 %v6150, 1.4214138
        %v6183 = vadd.f32 %v6151, 1.4214138
        %v6184 = vadd.f32 %v6152, 1.4214138
        %v6185 = vadd.f32 %v6153, 1.4214138
        %v6186 = vadd.f32 %v6154, 1.4214138
        %v6187 = vadd.f32 %v6155, 1.4214138
        %v6188 = vadd.f32 %v6156, 1.4214138
        %v6189 = vadd.f32 %v6157, 1.4214138
        %v6190 = vadd.f32 %v6158, 1.4214138
        %v6191 = vadd.f32 %v6159, 1.4214138
        %v6192 = vadd.f32 %v6160, 1.4214138
        %v6193 = vadd.f32 %v6161, 1.4214138
        %v6194 = vadd.f32 %v6162, 1.4214138
        %v6195 = vadd.f32 %v6163, 1.4214138
        %v6196 = vadd.f32 %v6164, 1.4214138
        %v6197 = vadd.f32 %v6165, 1.4214138
        %v6198 = vadd.f32 %v6166, 1.4214138
        %v6199 = vadd.f32 %v6167, 1.4214138
        %v6200 = vadd.f32 %v6168, 1.4214138
        %v6201 = vadd.f32 %v6169, 1.4214138
        %v6202 = vadd.f32 %v6170, 1.4214138
        %v6203 = vadd.f32 %v6171, 1.4214138
        %v6204 = vadd.f32 %v6172, 1.4214138
        %v6205 = vadd.f32 %v6173, 1.4214138
        %v6206 = vadd.f32 %v6174, 1.4214138
        %v6207 = vadd.f32 %v6175, 1.4214138
        %v6208 = vadd.f32 %v6176, 1.4214138
        %v6209 = vadd.f32 %v6177, 1.4214138
        %v6210 = vadd.f32 %v6178, 1.4214138
        %v6211 = vmul.f32 %v6179, %v6020
        %v6212 = vmul.f32 %v6180, %v6022
        %v6213 = vmul.f32 %v6181, %v6024
        %v6214 = vmul.f32 %v6182, %v6026
        %v6215 = vmul.f32 %v6183, %v6028
        %v6216 = vmul.f32 %v6184, %v6030
        %v6217 = vmul.f32 %v6185, %v6032
        %v6218 = vmul.f32 %v6186, %v6034
        %v6219 = vmul.f32 %v6187, %v6036
        %v6220 = vmul.f32 %v6188, %v6038
        %v6221 = vmul.f32 %v6189, %v6040
        %v6222 = vmul.f32 %v6190, %v6042
        %v6223 = vmul.f32 %v6191, %v6044
        %v6224 = vmul.f32 %v6192, %v6046
        %v6225 = vmul.f32 %v6193, %v6048
        %v6226 = vmul.f32 %v6194, %v6050
        %v6227 = vmul.f32 %v6195, %v6052
        %v6228 = vmul.f32 %v6196, %v6054
        %v6229 = vmul.f32 %v6197, %v6056
        %v6230 = vmul.f32 %v6198, %v6058
        %v6231 = vmul.f32 %v6199, %v6060
        %v6232 = vmul.f32 %v6200, %v6062
        %v6233 = vmul.f32 %v6201, %v6064
        %v6234 = vmul.f32 %v6202, %v6066
        %v6235 = vmul.f32 %v6203, %v6068
        %v6236 = vmul.f32 %v6204, %v6070
        %v6237 = vmul.f32 %v6205, %v6072
        %v6238 = vmul.f32 %v6206, %v6074
        %v6239 = vmul.f32 %v6207, %v6076
        %v6240 = vmul.f32 %v6208, %v6078
        %v6241 = vmul.f32 %v6209, %v6080
        %v6242 = vmul.f32 %v6210, %v6082
        %v6243 = vadd.f32 %v6211, -0.28449672
        %v6244 = vadd.f32 %v6212, -0.28449672
        %v6245 = vadd.f32 %v6213, -0.28449672
        %v6246 = vadd.f32 %v6214, -0.28449672
        %v6247 = vadd.f32 %v6215, -0.28449672
        %v6248 = vadd.f32 %v6216, -0.28449672
        %v6249 = vadd.f32 %v6217, -0.28449672
        %v6250 = vadd.f32 %v6218, -0.28449672
        %v6251 = vadd.f32 %v6219, -0.28449672
        %v6252 = vadd.f32 %v6220, -0.28449672
        %v6253 = vadd.f32 %v6221, -0.28449672
        %v6254 = vadd.f32 %v6222, -0.28449672
        %v6255 = vadd.f32 %v6223, -0.28449672
        %v6256 = vadd.f32 %v6224, -0.28449672
        %v6257 = vadd.f32 %v6225, -0.28449672
        %v6258 = vadd.f32 %v6226, -0.28449672
        %v6259 = vadd.f32 %v6227, -0.28449672
        %v6260 = vadd.f32 %v6228, -0.28449672
        %v6261 = vadd.f32 %v6229, -0.28449672
        %v6262 = vadd.f32 %v6230, -0.28449672
        %v6263 = vadd.f32 %v6231, -0.28449672
        %v6264 = vadd.f32 %v6232, -0.28449672
        %v6265 = vadd.f32 %v6233, -0.28449672
        %v6266 = vadd.f32 %v6234, -0.28449672
        %v6267 = vadd.f32 %v6235, -0.28449672
        %v6268 = vadd.f32 %v6236, -0.28449672
        %v6269 = vadd.f32 %v6237, -0.28449672
        %v6270 = vadd.f32 %v6238, -0.28449672
        %v6271 = vadd.f32 %v6239, -0.28449672
        %v6272 = vadd.f32 %v6240, -0.28449672
        %v6273 = vadd.f32 %v6241, -0.28449672
        %v6274 = vadd.f32 %v6242, -0.28449672
        %v6275 = vmul.f32 %v6243, %v6020
        %v6276 = vmul.f32 %v6244, %v6022
        %v6277 = vmul.f32 %v6245, %v6024
        %v6278 = vmul.f32 %v6246, %v6026
        %v6279 = vmul.f32 %v6247, %v6028
        %v6280 = vmul.f32 %v6248, %v6030
        %v6281 = vmul.f32 %v6249, %v6032
        %v6282 = vmul.f32 %v6250, %v6034
        %v6283 = vmul.f32 %v6251, %v6036
        %v6284 = vmul.f32 %v6252, %v6038
        %v6285 = vmul.f32 %v6253, %v6040
        %v6286 = vmul.f32 %v6254, %v6042
        %v6287 = vmul.f32 %v6255, %v6044
        %v6288 = vmul.f32 %v6256, %v6046
        %v6289 = vmul.f32 %v6257, %v6048
        %v6290 = vmul.f32 %v6258, %v6050
        %v6291 = vmul.f32 %v6259, %v6052
        %v6292 = vmul.f32 %v6260, %v6054
        %v6293 = vmul.f32 %v6261, %v6056
        %v6294 = vmul.f32 %v6262, %v6058
        %v6295 = vmul.f32 %v6263, %v6060
        %v6296 = vmul.f32 %v6264, %v6062
        %v6297 = vmul.f32 %v6265, %v6064
        %v6298 = vmul.f32 %v6266, %v6066
        %v6299 = vmul.f32 %v6267, %v6068
        %v6300 = vmul.f32 %v6268, %v6070
        %v6301 = vmul.f32 %v6269, %v6072
        %v6302 = vmul.f32 %v6270, %v6074
        %v6303 = vmul.f32 %v6271, %v6076
        %v6304 = vmul.f32 %v6272, %v6078
        %v6305 = vmul.f32 %v6273, %v6080
        %v6306 = vmul.f32 %v6274, %v6082
        %v6307 = vadd.f32 %v6275, 0.2548296
        %v6308 = vadd.f32 %v6276, 0.2548296
        %v6309 = vadd.f32 %v6277, 0.2548296
        %v6310 = vadd.f32 %v6278, 0.2548296
        %v6311 = vadd.f32 %v6279, 0.2548296
        %v6312 = vadd.f32 %v6280, 0.2548296
        %v6313 = vadd.f32 %v6281, 0.2548296
        %v6314 = vadd.f32 %v6282, 0.2548296
        %v6315 = vadd.f32 %v6283, 0.2548296
        %v6316 = vadd.f32 %v6284, 0.2548296
        %v6317 = vadd.f32 %v6285, 0.2548296
        %v6318 = vadd.f32 %v6286, 0.2548296
        %v6319 = vadd.f32 %v6287, 0.2548296
        %v6320 = vadd.f32 %v6288, 0.2548296
        %v6321 = vadd.f32 %v6289, 0.2548296
        %v6322 = vadd.f32 %v6290, 0.2548296
        %v6323 = vadd.f32 %v6291, 0.2548296
        %v6324 = vadd.f32 %v6292, 0.2548296
        %v6325 = vadd.f32 %v6293, 0.2548296
        %v6326 = vadd.f32 %v6294, 0.2548296
        %v6327 = vadd.f32 %v6295, 0.2548296
        %v6328 = vadd.f32 %v6296, 0.2548296
        %v6329 = vadd.f32 %v6297, 0.2548296
        %v6330 = vadd.f32 %v6298, 0.2548296
        %v6331 = vadd.f32 %v6299, 0.2548296
        %v6332 = vadd.f32 %v6300, 0.2548296
        %v6333 = vadd.f32 %v6301, 0.2548296
        %v6334 = vadd.f32 %v6302, 0.2548296
        %v6335 = vadd.f32 %v6303, 0.2548296
        %v6336 = vadd.f32 %v6304, 0.2548296
        %v6337 = vadd.f32 %v6305, 0.2548296
        %v6338 = vadd.f32 %v6306, 0.2548296
        %v6339 = vmul.f32 %v6307, %v6020
        %v6340 = vmul.f32 %v6308, %v6022
        %v6341 = vmul.f32 %v6309, %v6024
        %v6342 = vmul.f32 %v6310, %v6026
        %v6343 = vmul.f32 %v6311, %v6028
        %v6344 = vmul.f32 %v6312, %v6030
        %v6345 = vmul.f32 %v6313, %v6032
        %v6346 = vmul.f32 %v6314, %v6034
        %v6347 = vmul.f32 %v6315, %v6036
        %v6348 = vmul.f32 %v6316, %v6038
        %v6349 = vmul.f32 %v6317, %v6040
        %v6350 = vmul.f32 %v6318, %v6042
        %v6351 = vmul.f32 %v6319, %v6044
        %v6352 = vmul.f32 %v6320, %v6046
        %v6353 = vmul.f32 %v6321, %v6048
        %v6354 = vmul.f32 %v6322, %v6050
        %v6355 = vmul.f32 %v6323, %v6052
        %v6356 = vmul.f32 %v6324, %v6054
        %v6357 = vmul.f32 %v6325, %v6056
        %v6358 = vmul.f32 %v6326, %v6058
        %v6359 = vmul.f32 %v6327, %v6060
        %v6360 = vmul.f32 %v6328, %v6062
        %v6361 = vmul.f32 %v6329, %v6064
        %v6362 = vmul.f32 %v6330, %v6066
        %v6363 = vmul.f32 %v6331, %v6068
        %v6364 = vmul.f32 %v6332, %v6070
        %v6365 = vmul.f32 %v6333, %v6072
        %v6366 = vmul.f32 %v6334, %v6074
        %v6367 = vmul.f32 %v6335, %v6076
        %v6368 = vmul.f32 %v6336, %v6078
        %v6369 = vmul.f32 %v6337, %v6080
        %v6370 = vmul.f32 %v6338, %v6082
        %v6371 = vsub.f32 0.0, %v5923
        %v6372 = vsub.f32 0.0, %v5924
        %v6373 = vsub.f32 0.0, %v5925
        %v6374 = vsub.f32 0.0, %v5926
        %v6375 = vsub.f32 0.0, %v5927
        %v6376 = vsub.f32 0.0, %v5928
        %v6377 = vsub.f32 0.0, %v5929
        %v6378 = vsub.f32 0.0, %v5930
        %v6379 = vsub.f32 0.0, %v5931
        %v6380 = vsub.f32 0.0, %v5932
        %v6381 = vsub.f32 0.0, %v5933
        %v6382 = vsub.f32 0.0, %v5934
        %v6383 = vsub.f32 0.0, %v5935
        %v6384 = vsub.f32 0.0, %v5936
        %v6385 = vsub.f32 0.0, %v5937
        %v6386 = vsub.f32 0.0, %v5938
        %v6387 = vsub.f32 0.0, %v5939
        %v6388 = vsub.f32 0.0, %v5940
        %v6389 = vsub.f32 0.0, %v5941
        %v6390 = vsub.f32 0.0, %v5942
        %v6391 = vsub.f32 0.0, %v5943
        %v6392 = vsub.f32 0.0, %v5944
        %v6393 = vsub.f32 0.0, %v5945
        %v6394 = vsub.f32 0.0, %v5946
        %v6395 = vsub.f32 0.0, %v5947
        %v6396 = vsub.f32 0.0, %v5948
        %v6397 = vsub.f32 0.0, %v5949
        %v6398 = vsub.f32 0.0, %v5950
        %v6399 = vsub.f32 0.0, %v5951
        %v6400 = vsub.f32 0.0, %v5952
        %v6401 = vsub.f32 0.0, %v5953
        %v6402 = vsub.f32 0.0, %v5954
        %v6403 = vmul.f32 %v6371, %v5923
        %v6404 = vmul.f32 %v6372, %v5924
        %v6405 = vmul.f32 %v6373, %v5925
        %v6406 = vmul.f32 %v6374, %v5926
        %v6407 = vmul.f32 %v6375, %v5927
        %v6408 = vmul.f32 %v6376, %v5928
        %v6409 = vmul.f32 %v6377, %v5929
        %v6410 = vmul.f32 %v6378, %v5930
        %v6411 = vmul.f32 %v6379, %v5931
        %v6412 = vmul.f32 %v6380, %v5932
        %v6413 = vmul.f32 %v6381, %v5933
        %v6414 = vmul.f32 %v6382, %v5934
        %v6415 = vmul.f32 %v6383, %v5935
        %v6416 = vmul.f32 %v6384, %v5936
        %v6417 = vmul.f32 %v6385, %v5937
        %v6418 = vmul.f32 %v6386, %v5938
        %v6419 = vmul.f32 %v6387, %v5939
        %v6420 = vmul.f32 %v6388, %v5940
        %v6421 = vmul.f32 %v6389, %v5941
        %v6422 = vmul.f32 %v6390, %v5942
        %v6423 = vmul.f32 %v6391, %v5943
        %v6424 = vmul.f32 %v6392, %v5944
        %v6425 = vmul.f32 %v6393, %v5945
        %v6426 = vmul.f32 %v6394, %v5946
        %v6427 = vmul.f32 %v6395, %v5947
        %v6428 = vmul.f32 %v6396, %v5948
        %v6429 = vmul.f32 %v6397, %v5949
        %v6430 = vmul.f32 %v6398, %v5950
        %v6431 = vmul.f32 %v6399, %v5951
        %v6432 = vmul.f32 %v6400, %v5952
        %v6433 = vmul.f32 %v6401, %v5953
        %v6434 = vmul.f32 %v6402, %v5954
        %v6435 = vmul.f32 %v6403, 1.442695
        %v6436 = vpow.pop %v6435
        %v6437 = vmul.f32 %v6404, 1.442695
        %v6438 = vpow.pop %v6437
        %v6439 = vmul.f32 %v6405, 1.442695
        %v6440 = vpow.pop %v6439
        %v6441 = vmul.f32 %v6406, 1.442695
        %v6442 = vpow.pop %v6441
        %v6443 = vmul.f32 %v6407, 1.442695
        %v6444 = vpow.pop %v6443
        %v6445 = vmul.f32 %v6408, 1.442695
        %v6446 = vpow.pop %v6445
        %v6447 = vmul.f32 %v6409, 1.442695
        %v6448 = vpow.pop %v6447
        %v6449 = vmul.f32 %v6410, 1.442695
        %v6450 = vpow.pop %v6449
        %v6451 = vmul.f32 %v6411, 1.442695
        %v6452 = vpow.pop %v6451
        %v6453 = vmul.f32 %v6412, 1.442695
        %v6454 = vpow.pop %v6453
        %v6455 = vmul.f32 %v6413, 1.442695
        %v6456 = vpow.pop %v6455
        %v6457 = vmul.f32 %v6414, 1.442695
        %v6458 = vpow.pop %v6457
        %v6459 = vmul.f32 %v6415, 1.442695
        %v6460 = vpow.pop %v6459
        %v6461 = vmul.f32 %v6416, 1.442695
        %v6462 = vpow.pop %v6461
        %v6463 = vmul.f32 %v6417, 1.442695
        %v6464 = vpow.pop %v6463
        %v6465 = vmul.f32 %v6418, 1.442695
        %v6466 = vpow.pop %v6465
        %v6467 = vmul.f32 %v6419, 1.442695
        %v6468 = vpow.pop %v6467
        %v6469 = vmul.f32 %v6420, 1.442695
        %v6470 = vpow.pop %v6469
        %v6471 = vmul.f32 %v6421, 1.442695
        %v6472 = vpow.pop %v6471
        %v6473 = vmul.f32 %v6422, 1.442695
        %v6474 = vpow.pop %v6473
        %v6475 = vmul.f32 %v6423, 1.442695
        %v6476 = vpow.pop %v6475
        %v6477 = vmul.f32 %v6424, 1.442695
        %v6478 = vpow.pop %v6477
        %v6479 = vmul.f32 %v6425, 1.442695
        %v6480 = vpow.pop %v6479
        %v6481 = vmul.f32 %v6426, 1.442695
        %v6482 = vpow.pop %v6481
        %v6483 = vmul.f32 %v6427, 1.442695
        %v6484 = vpow.pop %v6483
        %v6485 = vmul.f32 %v6428, 1.442695
        %v6486 = vpow.pop %v6485
        %v6487 = vmul.f32 %v6429, 1.442695
        %v6488 = vpow.pop %v6487
        %v6489 = vmul.f32 %v6430, 1.442695
        %v6490 = vpow.pop %v6489
        %v6491 = vmul.f32 %v6431, 1.442695
        %v6492 = vpow.pop %v6491
        %v6493 = vmul.f32 %v6432, 1.442695
        %v6494 = vpow.pop %v6493
        %v6495 = vmul.f32 %v6433, 1.442695
        %v6496 = vpow.pop %v6495
        %v6497 = vmul.f32 %v6434, 1.442695
        %v6498 = vpow.pop %v6497
        %v6499 = vmul.f32 %v6339, %v6436
        %v6500 = vmul.f32 %v6340, %v6438
        %v6501 = vmul.f32 %v6341, %v6440
        %v6502 = vmul.f32 %v6342, %v6442
        %v6503 = vmul.f32 %v6343, %v6444
        %v6504 = vmul.f32 %v6344, %v6446
        %v6505 = vmul.f32 %v6345, %v6448
        %v6506 = vmul.f32 %v6346, %v6450
        %v6507 = vmul.f32 %v6347, %v6452
        %v6508 = vmul.f32 %v6348, %v6454
        %v6509 = vmul.f32 %v6349, %v6456
        %v6510 = vmul.f32 %v6350, %v6458
        %v6511 = vmul.f32 %v6351, %v6460
        %v6512 = vmul.f32 %v6352, %v6462
        %v6513 = vmul.f32 %v6353, %v6464
        %v6514 = vmul.f32 %v6354, %v6466
        %v6515 = vmul.f32 %v6355, %v6468
        %v6516 = vmul.f32 %v6356, %v6470
        %v6517 = vmul.f32 %v6357, %v6472
        %v6518 = vmul.f32 %v6358, %v6474
        %v6519 = vmul.f32 %v6359, %v6476
        %v6520 = vmul.f32 %v6360, %v6478
        %v6521 = vmul.f32 %v6361, %v6480
        %v6522 = vmul.f32 %v6362, %v6482
        %v6523 = vmul.f32 %v6363, %v6484
        %v6524 = vmul.f32 %v6364, %v6486
        %v6525 = vmul.f32 %v6365, %v6488
        %v6526 = vmul.f32 %v6366, %v6490
        %v6527 = vmul.f32 %v6367, %v6492
        %v6528 = vmul.f32 %v6368, %v6494
        %v6529 = vmul.f32 %v6369, %v6496
        %v6530 = vmul.f32 %v6370, %v6498
        %v6531 = vsub.f32 1.0, %v6499
        %v6532 = vsub.f32 1.0, %v6500
        %v6533 = vsub.f32 1.0, %v6501
        %v6534 = vsub.f32 1.0, %v6502
        %v6535 = vsub.f32 1.0, %v6503
        %v6536 = vsub.f32 1.0, %v6504
        %v6537 = vsub.f32 1.0, %v6505
        %v6538 = vsub.f32 1.0, %v6506
        %v6539 = vsub.f32 1.0, %v6507
        %v6540 = vsub.f32 1.0, %v6508
        %v6541 = vsub.f32 1.0, %v6509
        %v6542 = vsub.f32 1.0, %v6510
        %v6543 = vsub.f32 1.0, %v6511
        %v6544 = vsub.f32 1.0, %v6512
        %v6545 = vsub.f32 1.0, %v6513
        %v6546 = vsub.f32 1.0, %v6514
        %v6547 = vsub.f32 1.0, %v6515
        %v6548 = vsub.f32 1.0, %v6516
        %v6549 = vsub.f32 1.0, %v6517
        %v6550 = vsub.f32 1.0, %v6518
        %v6551 = vsub.f32 1.0, %v6519
        %v6552 = vsub.f32 1.0, %v6520
        %v6553 = vsub.f32 1.0, %v6521
        %v6554 = vsub.f32 1.0, %v6522
        %v6555 = vsub.f32 1.0, %v6523
        %v6556 = vsub.f32 1.0, %v6524
        %v6557 = vsub.f32 1.0, %v6525
        %v6558 = vsub.f32 1.0, %v6526
        %v6559 = vsub.f32 1.0, %v6527
        %v6560 = vsub.f32 1.0, %v6528
        %v6561 = vsub.f32 1.0, %v6529
        %v6562 = vsub.f32 1.0, %v6530
        %v6563 = vmul.f32 %v5891, %v6531
        %v6564 = vmul.f32 %v5892, %v6532
        %v6565 = vmul.f32 %v5893, %v6533
        %v6566 = vmul.f32 %v5894, %v6534
        %v6567 = vmul.f32 %v5895, %v6535
        %v6568 = vmul.f32 %v5896, %v6536
        %v6569 = vmul.f32 %v5897, %v6537
        %v6570 = vmul.f32 %v5898, %v6538
        %v6571 = vmul.f32 %v5899, %v6539
        %v6572 = vmul.f32 %v5900, %v6540
        %v6573 = vmul.f32 %v5901, %v6541
        %v6574 = vmul.f32 %v5902, %v6542
        %v6575 = vmul.f32 %v5903, %v6543
        %v6576 = vmul.f32 %v5904, %v6544
        %v6577 = vmul.f32 %v5905, %v6545
        %v6578 = vmul.f32 %v5906, %v6546
        %v6579 = vmul.f32 %v5907, %v6547
        %v6580 = vmul.f32 %v5908, %v6548
        %v6581 = vmul.f32 %v5909, %v6549
        %v6582 = vmul.f32 %v5910, %v6550
        %v6583 = vmul.f32 %v5911, %v6551
        %v6584 = vmul.f32 %v5912, %v6552
        %v6585 = vmul.f32 %v5913, %v6553
        %v6586 = vmul.f32 %v5914, %v6554
        %v6587 = vmul.f32 %v5915, %v6555
        %v6588 = vmul.f32 %v5916, %v6556
        %v6589 = vmul.f32 %v5917, %v6557
        %v6590 = vmul.f32 %v5918, %v6558
        %v6591 = vmul.f32 %v5919, %v6559
        %v6592 = vmul.f32 %v5920, %v6560
        %v6593 = vmul.f32 %v5921, %v6561
        %v6594 = vmul.f32 %v5922, %v6562
        %v6595 = vadd.f32 %v6563, 1.0
        %v6596 = vadd.f32 %v6564, 1.0
        %v6597 = vadd.f32 %v6565, 1.0
        %v6598 = vadd.f32 %v6566, 1.0
        %v6599 = vadd.f32 %v6567, 1.0
        %v6600 = vadd.f32 %v6568, 1.0
        %v6601 = vadd.f32 %v6569, 1.0
        %v6602 = vadd.f32 %v6570, 1.0
        %v6603 = vadd.f32 %v6571, 1.0
        %v6604 = vadd.f32 %v6572, 1.0
        %v6605 = vadd.f32 %v6573, 1.0
        %v6606 = vadd.f32 %v6574, 1.0
        %v6607 = vadd.f32 %v6575, 1.0
        %v6608 = vadd.f32 %v6576, 1.0
        %v6609 = vadd.f32 %v6577, 1.0
        %v6610 = vadd.f32 %v6578, 1.0
        %v6611 = vadd.f32 %v6579, 1.0
        %v6612 = vadd.f32 %v6580, 1.0
        %v6613 = vadd.f32 %v6581, 1.0
        %v6614 = vadd.f32 %v6582, 1.0
        %v6615 = vadd.f32 %v6583, 1.0
        %v6616 = vadd.f32 %v6584, 1.0
        %v6617 = vadd.f32 %v6585, 1.0
        %v6618 = vadd.f32 %v6586, 1.0
        %v6619 = vadd.f32 %v6587, 1.0
        %v6620 = vadd.f32 %v6588, 1.0
        %v6621 = vadd.f32 %v6589, 1.0
        %v6622 = vadd.f32 %v6590, 1.0
        %v6623 = vadd.f32 %v6591, 1.0
        %v6624 = vadd.f32 %v6592, 1.0
        %v6625 = vadd.f32 %v6593, 1.0
        %v6626 = vadd.f32 %v6594, 1.0
        %v6627 = vmul.f32 %v5795, %v6595
        %v6628 = vmul.f32 %v5796, %v6596
        %v6629 = vmul.f32 %v5797, %v6597
        %v6630 = vmul.f32 %v5798, %v6598
        %v6631 = vmul.f32 %v5799, %v6599
        %v6632 = vmul.f32 %v5800, %v6600
        %v6633 = vmul.f32 %v5801, %v6601
        %v6634 = vmul.f32 %v5802, %v6602
        %v6635 = vmul.f32 %v5803, %v6603
        %v6636 = vmul.f32 %v5804, %v6604
        %v6637 = vmul.f32 %v5805, %v6605
        %v6638 = vmul.f32 %v5806, %v6606
        %v6639 = vmul.f32 %v5807, %v6607
        %v6640 = vmul.f32 %v5808, %v6608
        %v6641 = vmul.f32 %v5809, %v6609
        %v6642 = vmul.f32 %v5810, %v6610
        %v6643 = vmul.f32 %v5811, %v6611
        %v6644 = vmul.f32 %v5812, %v6612
        %v6645 = vmul.f32 %v5813, %v6613
        %v6646 = vmul.f32 %v5814, %v6614
        %v6647 = vmul.f32 %v5815, %v6615
        %v6648 = vmul.f32 %v5816, %v6616
        %v6649 = vmul.f32 %v5817, %v6617
        %v6650 = vmul.f32 %v5818, %v6618
        %v6651 = vmul.f32 %v5819, %v6619
        %v6652 = vmul.f32 %v5820, %v6620
        %v6653 = vmul.f32 %v5821, %v6621
        %v6654 = vmul.f32 %v5822, %v6622
        %v6655 = vmul.f32 %v5823, %v6623
        %v6656 = vmul.f32 %v5824, %v6624
        %v6657 = vmul.f32 %v5825, %v6625
        %v6658 = vmul.f32 %v5826, %v6626
        %6659 = vset.pattern.permute.xlu0 1
        %6660 = vperm.xlu0 %6659, %v1044
        %v6661 = vpop.permute.xlu0 %6660
        %6663 = vset.pattern.permute.xlu0 1
        %6664 = vperm.xlu0 %6663, %v1047
        %v6665 = vpop.permute.xlu0 %6664
        %6667 = vset.pattern.permute.xlu0 1
        %6668 = vperm.xlu0 %6667, %v1052
        %v6669 = vpop.permute.xlu0 %6668
        %6671 = vset.pattern.permute.xlu0 1
        %6672 = vperm.xlu0 %6671, %v1055
        %v6673 = vpop.permute.xlu0 %6672
        %6675 = vset.pattern.permute.xlu0 1
        %6676 = vperm.xlu0 %6675, %v1060
        %v6677 = vpop.permute.xlu0 %6676
        %6679 = vset.pattern.permute.xlu0 1
        %6680 = vperm.xlu0 %6679, %v1063
        %v6681 = vpop.permute.xlu0 %6680
        %6683 = vset.pattern.permute.xlu0 1
        %6684 = vperm.xlu0 %6683, %v1068
        %v6685 = vpop.permute.xlu0 %6684
        %6687 = vset.pattern.permute.xlu0 1
        %6688 = vperm.xlu0 %6687, %v1071
        %v6689 = vpop.permute.xlu0 %6688
        %6691 = vset.pattern.permute.xlu0 1
        %6692 = vperm.xlu0 %6691, %v1076
        %v6693 = vpop.permute.xlu0 %6692
        %6695 = vset.pattern.permute.xlu0 1
        %6696 = vperm.xlu0 %6695, %v1079
        %v6697 = vpop.permute.xlu0 %6696
        %6699 = vset.pattern.permute.xlu0 1
        %6700 = vperm.xlu0 %6699, %v1084
        %v6701 = vpop.permute.xlu0 %6700
        %6703 = vset.pattern.permute.xlu0 1
        %6704 = vperm.xlu0 %6703, %v1087
        %v6705 = vpop.permute.xlu0 %6704
        %6707 = vset.pattern.permute.xlu0 1
        %6708 = vperm.xlu0 %6707, %v1092
        %v6709 = vpop.permute.xlu0 %6708
        %6711 = vset.pattern.permute.xlu0 1
        %6712 = vperm.xlu0 %6711, %v1095
        %v6713 = vpop.permute.xlu0 %6712
        %6715 = vset.pattern.permute.xlu0 1
        %6716 = vperm.xlu0 %6715, %v1100
        %v6717 = vpop.permute.xlu0 %6716
        %6719 = vset.pattern.permute.xlu0 1
        %6720 = vperm.xlu0 %6719, %v1103
        %v6721 = vpop.permute.xlu0 %6720
        %6723 = vset.pattern.permute.xlu0 1
        %6724 = vperm.xlu0 %6723, %v1108
        %v6725 = vpop.permute.xlu0 %6724
        %6727 = vset.pattern.permute.xlu0 1
        %6728 = vperm.xlu0 %6727, %v1111
        %v6729 = vpop.permute.xlu0 %6728
        %6731 = vset.pattern.permute.xlu0 1
        %6732 = vperm.xlu0 %6731, %v1116
        %v6733 = vpop.permute.xlu0 %6732
        %6735 = vset.pattern.permute.xlu0 1
        %6736 = vperm.xlu0 %6735, %v1119
        %v6737 = vpop.permute.xlu0 %6736
        %6739 = vset.pattern.permute.xlu0 1
        %6740 = vperm.xlu0 %6739, %v1124
        %v6741 = vpop.permute.xlu0 %6740
        %6743 = vset.pattern.permute.xlu0 1
        %6744 = vperm.xlu0 %6743, %v1127
        %v6745 = vpop.permute.xlu0 %6744
        %6747 = vset.pattern.permute.xlu0 1
        %6748 = vperm.xlu0 %6747, %v1132
        %v6749 = vpop.permute.xlu0 %6748
        %6751 = vset.pattern.permute.xlu0 1
        %6752 = vperm.xlu0 %6751, %v1135
        %v6753 = vpop.permute.xlu0 %6752
        %6755 = vset.pattern.permute.xlu0 1
        %6756 = vperm.xlu0 %6755, %v1140
        %v6757 = vpop.permute.xlu0 %6756
        %6759 = vset.pattern.permute.xlu0 1
        %6760 = vperm.xlu0 %6759, %v1143
        %v6761 = vpop.permute.xlu0 %6760
        %6763 = vset.pattern.permute.xlu0 1
        %6764 = vperm.xlu0 %6763, %v1148
        %v6765 = vpop.permute.xlu0 %6764
        %6767 = vset.pattern.permute.xlu0 1
        %6768 = vperm.xlu0 %6767, %v1151
        %v6769 = vpop.permute.xlu0 %6768
        %6771 = vset.pattern.permute.xlu0 1
        %6772 = vperm.xlu0 %6771, %v1156
        %v6773 = vpop.permute.xlu0 %6772
        %6775 = vset.pattern.permute.xlu0 1
        %6776 = vperm.xlu0 %6775, %v1159
        %v6777 = vpop.permute.xlu0 %6776
        %6779 = vset.pattern.permute.xlu0 1
        %6780 = vperm.xlu0 %6779, %v1164
        %v6781 = vpop.permute.xlu0 %6780
        %6783 = vset.pattern.permute.xlu0 1
        %6784 = vperm.xlu0 %6783, %v1167
        %v6785 = vpop.permute.xlu0 %6784
        %v6787 = vmul.f32 %v6627, %v6661
        %v6788 = vmul.f32 %v6628, %v6665
        %v6789 = vmul.f32 %v6629, %v6669
        %v6790 = vmul.f32 %v6630, %v6673
        %v6791 = vmul.f32 %v6631, %v6677
        %v6792 = vmul.f32 %v6632, %v6681
        %v6793 = vmul.f32 %v6633, %v6685
        %v6794 = vmul.f32 %v6634, %v6689
        %v6795 = vmul.f32 %v6635, %v6693
        %v6796 = vmul.f32 %v6636, %v6697
        %v6797 = vmul.f32 %v6637, %v6701
        %v6798 = vmul.f32 %v6638, %v6705
        %v6799 = vmul.f32 %v6639, %v6709
        %v6800 = vmul.f32 %v6640, %v6713
        %v6801 = vmul.f32 %v6641, %v6717
        %v6802 = vmul.f32 %v6642, %v6721
        %v6803 = vmul.f32 %v6643, %v6725
        %v6804 = vmul.f32 %v6644, %v6729
        %v6805 = vmul.f32 %v6645, %v6733
        %v6806 = vmul.f32 %v6646, %v6737
        %v6807 = vmul.f32 %v6647, %v6741
        %v6808 = vmul.f32 %v6648, %v6745
        %v6809 = vmul.f32 %v6649, %v6749
        %v6810 = vmul.f32 %v6650, %v6753
        %v6811 = vmul.f32 %v6651, %v6757
        %v6812 = vmul.f32 %v6652, %v6761
        %v6813 = vmul.f32 %v6653, %v6765
        %v6814 = vmul.f32 %v6654, %v6769
        %v6815 = vmul.f32 %v6655, %v6773
        %v6816 = vmul.f32 %v6656, %v6777
        %v6817 = vmul.f32 %v6657, %v6781
        %v6818 = vmul.f32 %v6658, %v6785
        %v6819 = vadd.f32 %v3225, %v6787
        %v6820 = vadd.f32 %v3226, %v6788
        %v6821 = vadd.f32 %v3227, %v6789
        %v6822 = vadd.f32 %v3228, %v6790
        %v6823 = vadd.f32 %v3229, %v6791
        %v6824 = vadd.f32 %v3230, %v6792
        %v6825 = vadd.f32 %v3231, %v6793
        %v6826 = vadd.f32 %v3232, %v6794
        %v6827 = vadd.f32 %v3233, %v6795
        %v6828 = vadd.f32 %v3234, %v6796
        %v6829 = vadd.f32 %v3235, %v6797
        %v6830 = vadd.f32 %v3236, %v6798
        %v6831 = vadd.f32 %v3237, %v6799
        %v6832 = vadd.f32 %v3238, %v6800
        %v6833 = vadd.f32 %v3239, %v6801
        %v6834 = vadd.f32 %v3240, %v6802
        %v6835 = vadd.f32 %v3241, %v6803
        %v6836 = vadd.f32 %v3242, %v6804
        %v6837 = vadd.f32 %v3243, %v6805
        %v6838 = vadd.f32 %v3244, %v6806
        %v6839 = vadd.f32 %v3245, %v6807
        %v6840 = vadd.f32 %v3246, %v6808
        %v6841 = vadd.f32 %v3247, %v6809
        %v6842 = vadd.f32 %v3248, %v6810
        %v6843 = vadd.f32 %v3249, %v6811
        %v6844 = vadd.f32 %v3250, %v6812
        %v6845 = vadd.f32 %v3251, %v6813
        %v6846 = vadd.f32 %v3252, %v6814
        %v6847 = vadd.f32 %v3253, %v6815
        %v6848 = vadd.f32 %v3254, %v6816
        %v6849 = vadd.f32 %v3255, %v6817
        %v6850 = vadd.f32 %v3256, %v6818
        %v6851 = vadd.f32 %v6627, %v6628
        %v6852 = vadd.f32 %v6851, %v6629
        %v6853 = vadd.f32 %v6852, %v6630
        %v6854 = vadd.f32 %v6853, %v6631
        %v6855 = vadd.f32 %v6854, %v6632
        %v6856 = vadd.f32 %v6855, %v6633
        %v6857 = vadd.f32 %v6856, %v6634
        %v6858 = vadd.f32 %v6857, %v6635
        %v6859 = vadd.f32 %v6858, %v6636
        %v6860 = vadd.f32 %v6859, %v6637
        %v6861 = vadd.f32 %v6860, %v6638
        %v6862 = vadd.f32 %v6861, %v6639
        %v6863 = vadd.f32 %v6862, %v6640
        %v6864 = vadd.f32 %v6863, %v6641
        %v6865 = vadd.f32 %v6864, %v6642
        %v6866 = vadd.f32 %v6865, %v6643
        %v6867 = vadd.f32 %v6866, %v6644
        %v6868 = vadd.f32 %v6867, %v6645
        %v6869 = vadd.f32 %v6868, %v6646
        %v6870 = vadd.f32 %v6869, %v6647
        %v6871 = vadd.f32 %v6870, %v6648
        %v6872 = vadd.f32 %v6871, %v6649
        %v6873 = vadd.f32 %v6872, %v6650
        %v6874 = vadd.f32 %v6873, %v6651
        %v6875 = vadd.f32 %v6874, %v6652
        %v6876 = vadd.f32 %v6875, %v6653
        %v6877 = vadd.f32 %v6876, %v6654
        %v6878 = vadd.f32 %v6877, %v6655
        %v6879 = vadd.f32 %v6878, %v6656
        %v6880 = vadd.f32 %v6879, %v6657
        %v6881 = vadd.f32 %v6880, %v6658
        %v6882 = vrot.slane %v6881, 4
        %v6883 = vadd.f32 %v6881, %v6882
        %v6884 = vrot.slane %v6883, 2
        %v6885 = vadd.f32 %v6883, %v6884
        %v6886 = vrot.slane %v6885, 1
        %v6887 = vadd.f32 %v6885, %v6886
        %v6888 = vrcp.pop 256.0
        %v6889 = vmul.f32 %v6887, %v6888
        %v6890 = vmul.f32 %v6889, 0.5
        %v6891 = vmul.f32 %v6889, %v2200
        %vm6892 = vcmp.ge.f32.partialorder %v6891, 0.0
        %v6893 = vsel %vm6892, 1.0, -1.0
        %v6894 = vand.u32 2147483647, %v6891
        %v6895 = vmul.f32 %v6894, 0.3275911
        %v6896 = vadd.f32 %v6895, 1.0
        %v6897 = vrcp.pop %v6896
        %v6898 = vmul.f32 1.0, %v6897
        %v6899 = vmul.f32 %v6898, 1.0614054
        %v6900 = vadd.f32 %v6899, -1.4531521
        %v6901 = vmul.f32 %v6900, %v6898
        %v6902 = vadd.f32 %v6901, 1.4214138
        %v6903 = vmul.f32 %v6902, %v6898
        %v6904 = vadd.f32 %v6903, -0.28449672
        %v6905 = vmul.f32 %v6904, %v6898
        %v6906 = vadd.f32 %v6905, 0.2548296
        %v6907 = vmul.f32 %v6906, %v6898
        %v6908 = vsub.f32 0.0, %v6894
        %v6909 = vmul.f32 %v6908, %v6894
        %v6910 = vmul.f32 %v6909, 1.442695
        %v6911 = vpow.pop %v6910
        %v6912 = vmul.f32 %v6907, %v6911
        %v6913 = vsub.f32 1.0, %v6912
        %v6914 = vmul.f32 %v6893, %v6913
        %v6915 = vadd.f32 %v6914, 1.0
        %v6916 = vmul.f32 %v6890, %v6915
        %6917 = vset.pattern.permute.xlu0 2
        %6918 = vperm.xlu0 %6917, %v1044
        %v6919 = vpop.permute.xlu0 %6918
        %6921 = vset.pattern.permute.xlu0 2
        %6922 = vperm.xlu0 %6921, %v1047
        %v6923 = vpop.permute.xlu0 %6922
        %6925 = vset.pattern.permute.xlu0 2
        %6926 = vperm.xlu0 %6925, %v1052
        %v6927 = vpop.permute.xlu0 %6926
        %6929 = vset.pattern.permute.xlu0 2
        %6930 = vperm.xlu0 %6929, %v1055
        %v6931 = vpop.permute.xlu0 %6930
        %6933 = vset.pattern.permute.xlu0 2
        %6934 = vperm.xlu0 %6933, %v1060
        %v6935 = vpop.permute.xlu0 %6934
        %6937 = vset.pattern.permute.xlu0 2
        %6938 = vperm.xlu0 %6937, %v1063
        %v6939 = vpop.permute.xlu0 %6938
        %6941 = vset.pattern.permute.xlu0 2
        %6942 = vperm.xlu0 %6941, %v1068
        %v6943 = vpop.permute.xlu0 %6942
        %6945 = vset.pattern.permute.xlu0 2
        %6946 = vperm.xlu0 %6945, %v1071
        %v6947 = vpop.permute.xlu0 %6946
        %6949 = vset.pattern.permute.xlu0 2
        %6950 = vperm.xlu0 %6949, %v1076
        %v6951 = vpop.permute.xlu0 %6950
        %6953 = vset.pattern.permute.xlu0 2
        %6954 = vperm.xlu0 %6953, %v1079
        %v6955 = vpop.permute.xlu0 %6954
        %6957 = vset.pattern.permute.xlu0 2
        %6958 = vperm.xlu0 %6957, %v1084
        %v6959 = vpop.permute.xlu0 %6958
        %6961 = vset.pattern.permute.xlu0 2
        %6962 = vperm.xlu0 %6961, %v1087
        %v6963 = vpop.permute.xlu0 %6962
        %6965 = vset.pattern.permute.xlu0 2
        %6966 = vperm.xlu0 %6965, %v1092
        %v6967 = vpop.permute.xlu0 %6966
        %6969 = vset.pattern.permute.xlu0 2
        %6970 = vperm.xlu0 %6969, %v1095
        %v6971 = vpop.permute.xlu0 %6970
        %6973 = vset.pattern.permute.xlu0 2
        %6974 = vperm.xlu0 %6973, %v1100
        %v6975 = vpop.permute.xlu0 %6974
        %6977 = vset.pattern.permute.xlu0 2
        %6978 = vperm.xlu0 %6977, %v1103
        %v6979 = vpop.permute.xlu0 %6978
        %6981 = vset.pattern.permute.xlu0 2
        %6982 = vperm.xlu0 %6981, %v1108
        %v6983 = vpop.permute.xlu0 %6982
        %6985 = vset.pattern.permute.xlu0 2
        %6986 = vperm.xlu0 %6985, %v1111
        %v6987 = vpop.permute.xlu0 %6986
        %6989 = vset.pattern.permute.xlu0 2
        %6990 = vperm.xlu0 %6989, %v1116
        %v6991 = vpop.permute.xlu0 %6990
        %6993 = vset.pattern.permute.xlu0 2
        %6994 = vperm.xlu0 %6993, %v1119
        %v6995 = vpop.permute.xlu0 %6994
        %6997 = vset.pattern.permute.xlu0 2
        %6998 = vperm.xlu0 %6997, %v1124
        %v6999 = vpop.permute.xlu0 %6998
        %7001 = vset.pattern.permute.xlu0 2
        %7002 = vperm.xlu0 %7001, %v1127
        %v7003 = vpop.permute.xlu0 %7002
        %7005 = vset.pattern.permute.xlu0 2
        %7006 = vperm.xlu0 %7005, %v1132
        %v7007 = vpop.permute.xlu0 %7006
        %7009 = vset.pattern.permute.xlu0 2
        %7010 = vperm.xlu0 %7009, %v1135
        %v7011 = vpop.permute.xlu0 %7010
        %7013 = vset.pattern.permute.xlu0 2
        %7014 = vperm.xlu0 %7013, %v1140
        %v7015 = vpop.permute.xlu0 %7014
        %7017 = vset.pattern.permute.xlu0 2
        %7018 = vperm.xlu0 %7017, %v1143
        %v7019 = vpop.permute.xlu0 %7018
        %7021 = vset.pattern.permute.xlu0 2
        %7022 = vperm.xlu0 %7021, %v1148
        %v7023 = vpop.permute.xlu0 %7022
        %7025 = vset.pattern.permute.xlu0 2
        %7026 = vperm.xlu0 %7025, %v1151
        %v7027 = vpop.permute.xlu0 %7026
        %7029 = vset.pattern.permute.xlu0 2
        %7030 = vperm.xlu0 %7029, %v1156
        %v7031 = vpop.permute.xlu0 %7030
        %7033 = vset.pattern.permute.xlu0 2
        %7034 = vperm.xlu0 %7033, %v1159
        %v7035 = vpop.permute.xlu0 %7034
        %7037 = vset.pattern.permute.xlu0 2
        %7038 = vperm.xlu0 %7037, %v1164
        %v7039 = vpop.permute.xlu0 %7038
        %7041 = vset.pattern.permute.xlu0 2
        %7042 = vperm.xlu0 %7041, %v1167
        %v7043 = vpop.permute.xlu0 %7042
        %v7045 = vmul.f32 %v6916, %v6919
        %v7046 = vmul.f32 %v6916, %v6923
        %v7047 = vmul.f32 %v6916, %v6927
        %v7048 = vmul.f32 %v6916, %v6931
        %v7049 = vmul.f32 %v6916, %v6935
        %v7050 = vmul.f32 %v6916, %v6939
        %v7051 = vmul.f32 %v6916, %v6943
        %v7052 = vmul.f32 %v6916, %v6947
        %v7053 = vmul.f32 %v6916, %v6951
        %v7054 = vmul.f32 %v6916, %v6955
        %v7055 = vmul.f32 %v6916, %v6959
        %v7056 = vmul.f32 %v6916, %v6963
        %v7057 = vmul.f32 %v6916, %v6967
        %v7058 = vmul.f32 %v6916, %v6971
        %v7059 = vmul.f32 %v6916, %v6975
        %v7060 = vmul.f32 %v6916, %v6979
        %v7061 = vmul.f32 %v6916, %v6983
        %v7062 = vmul.f32 %v6916, %v6987
        %v7063 = vmul.f32 %v6916, %v6991
        %v7064 = vmul.f32 %v6916, %v6995
        %v7065 = vmul.f32 %v6916, %v6999
        %v7066 = vmul.f32 %v6916, %v7003
        %v7067 = vmul.f32 %v6916, %v7007
        %v7068 = vmul.f32 %v6916, %v7011
        %v7069 = vmul.f32 %v6916, %v7015
        %v7070 = vmul.f32 %v6916, %v7019
        %v7071 = vmul.f32 %v6916, %v7023
        %v7072 = vmul.f32 %v6916, %v7027
        %v7073 = vmul.f32 %v6916, %v7031
        %v7074 = vmul.f32 %v6916, %v7035
        %v7075 = vmul.f32 %v6916, %v7039
        %v7076 = vmul.f32 %v6916, %v7043
        %v7077 = vadd.f32 %v6819, %v7045
        %v7078 = vadd.f32 %v6820, %v7046
        %v7079 = vadd.f32 %v6821, %v7047
        %v7080 = vadd.f32 %v6822, %v7048
        %v7081 = vadd.f32 %v6823, %v7049
        %v7082 = vadd.f32 %v6824, %v7050
        %v7083 = vadd.f32 %v6825, %v7051
        %v7084 = vadd.f32 %v6826, %v7052
        %v7085 = vadd.f32 %v6827, %v7053
        %v7086 = vadd.f32 %v6828, %v7054
        %v7087 = vadd.f32 %v6829, %v7055
        %v7088 = vadd.f32 %v6830, %v7056
        %v7089 = vadd.f32 %v6831, %v7057
        %v7090 = vadd.f32 %v6832, %v7058
        %v7091 = vadd.f32 %v6833, %v7059
        %v7092 = vadd.f32 %v6834, %v7060
        %v7093 = vadd.f32 %v6835, %v7061
        %v7094 = vadd.f32 %v6836, %v7062
        %v7095 = vadd.f32 %v6837, %v7063
        %v7096 = vadd.f32 %v6838, %v7064
        %v7097 = vadd.f32 %v6839, %v7065
        %v7098 = vadd.f32 %v6840, %v7066
        %v7099 = vadd.f32 %v6841, %v7067
        %v7100 = vadd.f32 %v6842, %v7068
        %v7101 = vadd.f32 %v6843, %v7069
        %v7102 = vadd.f32 %v6844, %v7070
        %v7103 = vadd.f32 %v6845, %v7071
        %v7104 = vadd.f32 %v6846, %v7072
        %v7105 = vadd.f32 %v6847, %v7073
        %v7106 = vadd.f32 %v6848, %v7074
        %v7107 = vadd.f32 %v6849, %v7075
        %v7108 = vadd.f32 %v6850, %v7076
        %v7109 = vpack.c.bf16 %v7078, %v7077
        %v7110 = vpack.c.bf16 %v7080, %v7079
        %v7111 = vpack.c.bf16 %v7082, %v7081
        %v7112 = vpack.c.bf16 %v7084, %v7083
        %v7113 = vpack.c.bf16 %v7086, %v7085
        %v7114 = vpack.c.bf16 %v7088, %v7087
        %v7115 = vpack.c.bf16 %v7090, %v7089
        %v7116 = vpack.c.bf16 %v7092, %v7091
        %v7117 = vpack.c.bf16 %v7094, %v7093
        %v7118 = vpack.c.bf16 %v7096, %v7095
        %v7119 = vpack.c.bf16 %v7098, %v7097
        %v7120 = vpack.c.bf16 %v7100, %v7099
        %v7121 = vpack.c.bf16 %v7102, %v7101
        %v7122 = vpack.c.bf16 %v7104, %v7103
        %v7123 = vpack.c.bf16 %v7106, %v7105
        %v7124 = vpack.c.bf16 %v7108, %v7107
        %v7125 = vld [vmem:[%s7] sm:$0xf]
        %v7126 = vld [vmem:[%s7 + $0x4] sm:$0xf]
        %v7127 = vld [vmem:[%s7 + $0x8] sm:$0xf]
        %v7128 = vld [vmem:[%s7 + $0xc] sm:$0xf]
        %v7129 = vld [vmem:[%s7 + $0x10] sm:$0xf]
        %v7130 = vld [vmem:[%s7 + $0x14] sm:$0xf]
        %v7131 = vld [vmem:[%s7 + $0x18] sm:$0xf]
        %v7132 = vld [vmem:[%s7 + $0x1c] sm:$0xf]
        %v7133 = vld [vmem:[%s7 + $0x20] sm:$0xf]
        %v7134 = vld [vmem:[%s7 + $0x24] sm:$0xf]
        %v7135 = vld [vmem:[%s7 + $0x28] sm:$0xf]
        %v7136 = vld [vmem:[%s7 + $0x2c] sm:$0xf]
        %v7137 = vld [vmem:[%s7 + $0x30] sm:$0xf]
        %v7138 = vld [vmem:[%s7 + $0x34] sm:$0xf]
        %v7139 = vld [vmem:[%s7 + $0x38] sm:$0xf]
        %v7140 = vld [vmem:[%s7 + $0x3c] sm:$0xf]
        %v7141 = vld [vmem:[%s8] sm:$0x1]
        %v7143 = vlaneseq
        %v7144 = vshrl.u32 %v7143, 7
        %v7145 = vsub.s32 0, %v7144
        %v7146 = vrot.slane %v7141, %v7145
        %v7164 = vunpack.c.l.b16 %v7125
        %v7165 = vunpack.c.l.b16 %v7126
        %v7166 = vunpack.c.l.b16 %v7127
        %v7167 = vunpack.c.l.b16 %v7128
        %v7168 = vunpack.c.l.b16 %v7129
        %v7169 = vunpack.c.l.b16 %v7130
        %v7170 = vunpack.c.l.b16 %v7131
        %v7171 = vunpack.c.l.b16 %v7132
        %v7172 = vunpack.c.l.b16 %v7133
        %v7173 = vunpack.c.l.b16 %v7134
        %v7174 = vunpack.c.l.b16 %v7135
        %v7175 = vunpack.c.l.b16 %v7136
        %v7176 = vunpack.c.l.b16 %v7137
        %v7177 = vunpack.c.l.b16 %v7138
        %v7178 = vunpack.c.l.b16 %v7139
        %v7179 = vunpack.c.l.b16 %v7140
        %v7180 = vpack.c.b16 %v7165, %v7164
        %v7181 = vpack.c.b16 %v7167, %v7166
        %v7182 = vpack.c.b16 %v7169, %v7168
        %v7183 = vpack.c.b16 %v7171, %v7170
        %v7184 = vpack.c.b16 %v7173, %v7172
        %v7185 = vpack.c.b16 %v7175, %v7174
        %v7186 = vpack.c.b16 %v7177, %v7176
        %v7187 = vpack.c.b16 %v7179, %v7178
        %7196 = vmatprep.subr.bf16.mxu0 0
        %7197 = vmatpush1.bf16.msra.mxu0 %v7180
        %7198 = vmatprep.subr.bf16.mxu0 0
        %7199 = vmatpush1.bf16.msra.mxu0 %v7181
        %7200 = vmatprep.subr.bf16.mxu0 0
        %7201 = vmatpush1.bf16.msra.mxu0 %v7182
        %7202 = vmatprep.subr.bf16.mxu0 0
        %7203 = vmatpush1.bf16.msra.mxu0 %v7183
        %7204 = vmatprep.subr.bf16.mxu0 0
        %7205 = vmatpush1.bf16.msra.mxu0 %v7184
        %7206 = vmatprep.subr.bf16.mxu0 0
        %7207 = vmatpush1.bf16.msra.mxu0 %v7185
        %7208 = vmatprep.subr.bf16.mxu0 0
        %7209 = vmatpush1.bf16.msra.mxu0 %v7186
        %7210 = vmatprep.subr.bf16.mxu0 0
        %7211 = vmatpush1.bf16.msra.mxu0 %v7187
        %7212 = vmatprep.subr.bf16.mxu0 0
        %7213 = vmatpush1.bf16.msra.mxu0 0
        %7214 = vmatprep.subr.bf16.mxu0 0
        %7215 = vmatpush1.bf16.msra.mxu0 0
        %7216 = vmatprep.subr.bf16.mxu0 0
        %7217 = vmatpush1.bf16.msra.mxu0 0
        %7218 = vmatprep.subr.bf16.mxu0 0
        %7219 = vmatpush1.bf16.msra.mxu0 0
        %7220 = vmatprep.subr.bf16.mxu0 0
        %7221 = vmatpush1.bf16.msra.mxu0 0
        %7222 = vmatprep.subr.bf16.mxu0 0
        %7223 = vmatpush1.bf16.msra.mxu0 0
        %7224 = vmatprep.subr.bf16.mxu0 0
        %7225 = vmatpush1.bf16.msra.mxu0 0
        %7226 = vmatprep.subr.bf16.mxu0 0
        %7227 = vmatpush1.bf16.msra.mxu0 0
        %7228 = vmatprep.mubr.bf16.mxu0 0
        %7229 = vmatmul.mubr.bf16.gmra.mrb[0].mxu0 %v7109
        %v7230 = vpop.f32.mrb[0].mxu0
        %v7231 = vadd.f32 %v7146, %v7230
        %v7232 = vpop.f32.mrb[0].mxu0
        %v7233 = vpop.f32.mrb[0].mxu0
        %v7234 = vadd.f32 %v7146, %v7233
        %v7235 = vpop.f32.mrb[0].mxu0
        %7236 = vmatprep.mubr.bf16.mxu0 0
        %7237 = vmatmul.mubr.bf16.gmra.mrb[0].mxu0 %v7110
        %v7238 = vpop.f32.mrb[0].mxu0
        %v7239 = vadd.f32 %v7146, %v7238
        %v7240 = vpop.f32.mrb[0].mxu0
        %v7241 = vpop.f32.mrb[0].mxu0
        %v7242 = vadd.f32 %v7146, %v7241
        %v7243 = vpop.f32.mrb[0].mxu0
        %7244 = vmatprep.mubr.bf16.mxu0 0
        %7245 = vmatmul.mubr.bf16.gmra.mrb[0].mxu0 %v7111
        %v7246 = vpop.f32.mrb[0].mxu0
        %v7247 = vadd.f32 %v7146, %v7246
        %v7248 = vpop.f32.mrb[0].mxu0
        %v7249 = vpop.f32.mrb[0].mxu0
        %v7250 = vadd.f32 %v7146, %v7249
        %v7251 = vpop.f32.mrb[0].mxu0
        %7252 = vmatprep.mubr.bf16.mxu0 0
        %7253 = vmatmul.mubr.bf16.gmra.mrb[0].mxu0 %v7112
        %v7254 = vpop.f32.mrb[0].mxu0
        %v7255 = vadd.f32 %v7146, %v7254
        %v7256 = vpop.f32.mrb[0].mxu0
        %v7257 = vpop.f32.mrb[0].mxu0
        %v7258 = vadd.f32 %v7146, %v7257
        %v7259 = vpop.f32.mrb[0].mxu0
        %7260 = vmatprep.mubr.bf16.mxu0 0
        %7261 = vmatmul.mubr.bf16.gmra.mrb[0].mxu0 %v7113
        %v7262 = vpop.f32.mrb[0].mxu0
        %v7263 = vadd.f32 %v7146, %v7262
        %v7264 = vpop.f32.mrb[0].mxu0
        %v7265 = vpop.f32.mrb[0].mxu0
        %v7266 = vadd.f32 %v7146, %v7265
        %v7267 = vpop.f32.mrb[0].mxu0
        %7268 = vmatprep.mubr.bf16.mxu0 0
        %7269 = vmatmul.mubr.bf16.gmra.mrb[0].mxu0 %v7114
        %v7270 = vpop.f32.mrb[0].mxu0
        %v7271 = vadd.f32 %v7146, %v7270
        %v7272 = vpop.f32.mrb[0].mxu0
        %v7273 = vpop.f32.mrb[0].mxu0
        %v7274 = vadd.f32 %v7146, %v7273
        %v7275 = vpop.f32.mrb[0].mxu0
        %7276 = vmatprep.mubr.bf16.mxu0 0
        %7277 = vmatmul.mubr.bf16.gmra.mrb[0].mxu0 %v7115
        %v7278 = vpop.f32.mrb[0].mxu0
        %v7279 = vadd.f32 %v7146, %v7278
        %v7280 = vpop.f32.mrb[0].mxu0
        %v7281 = vpop.f32.mrb[0].mxu0
        %v7282 = vadd.f32 %v7146, %v7281
        %v7283 = vpop.f32.mrb[0].mxu0
        %7284 = vmatprep.mubr.bf16.mxu0 0
        %7285 = vmatmul.mubr.bf16.gmra.mrb[0].mxu0 %v7116
        %v7286 = vpop.f32.mrb[0].mxu0
        %v7287 = vadd.f32 %v7146, %v7286
        %v7288 = vpop.f32.mrb[0].mxu0
        %v7289 = vpop.f32.mrb[0].mxu0
        %v7290 = vadd.f32 %v7146, %v7289
        %v7291 = vpop.f32.mrb[0].mxu0
        %7292 = vmatprep.mubr.bf16.mxu0 0
        %7293 = vmatmul.mubr.bf16.gmra.mrb[0].mxu0 %v7117
        %v7294 = vpop.f32.mrb[0].mxu0
        %v7295 = vadd.f32 %v7146, %v7294
        %v7296 = vpop.f32.mrb[0].mxu0
        %v7297 = vpop.f32.mrb[0].mxu0
        %v7298 = vadd.f32 %v7146, %v7297
        %v7299 = vpop.f32.mrb[0].mxu0
        %7300 = vmatprep.mubr.bf16.mxu0 0
        %7301 = vmatmul.mubr.bf16.gmra.mrb[0].mxu0 %v7118
        %v7302 = vpop.f32.mrb[0].mxu0
        %v7303 = vadd.f32 %v7146, %v7302
        %v7304 = vpop.f32.mrb[0].mxu0
        %v7305 = vpop.f32.mrb[0].mxu0
        %v7306 = vadd.f32 %v7146, %v7305
        %v7307 = vpop.f32.mrb[0].mxu0
        %7308 = vmatprep.mubr.bf16.mxu0 0
        %7309 = vmatmul.mubr.bf16.gmra.mrb[0].mxu0 %v7119
        %v7310 = vpop.f32.mrb[0].mxu0
        %v7311 = vadd.f32 %v7146, %v7310
        %v7312 = vpop.f32.mrb[0].mxu0
        %v7313 = vpop.f32.mrb[0].mxu0
        %v7314 = vadd.f32 %v7146, %v7313
        %v7315 = vpop.f32.mrb[0].mxu0
        %7316 = vmatprep.mubr.bf16.mxu0 0
        %7317 = vmatmul.mubr.bf16.gmra.mrb[0].mxu0 %v7120
        %v7318 = vpop.f32.mrb[0].mxu0
        %v7319 = vadd.f32 %v7146, %v7318
        %v7320 = vpop.f32.mrb[0].mxu0
        %v7321 = vpop.f32.mrb[0].mxu0
        %v7322 = vadd.f32 %v7146, %v7321
        %v7323 = vpop.f32.mrb[0].mxu0
        %7324 = vmatprep.mubr.bf16.mxu0 0
        %7325 = vmatmul.mubr.bf16.gmra.mrb[0].mxu0 %v7121
        %v7326 = vpop.f32.mrb[0].mxu0
        %v7327 = vadd.f32 %v7146, %v7326
        %v7328 = vpop.f32.mrb[0].mxu0
        %v7329 = vpop.f32.mrb[0].mxu0
        %v7330 = vadd.f32 %v7146, %v7329
        %v7331 = vpop.f32.mrb[0].mxu0
        %7332 = vmatprep.mubr.bf16.mxu0 0
        %7333 = vmatmul.mubr.bf16.gmra.mrb[0].mxu0 %v7122
        %v7334 = vpop.f32.mrb[0].mxu0
        %v7335 = vadd.f32 %v7146, %v7334
        %v7336 = vpop.f32.mrb[0].mxu0
        %v7337 = vpop.f32.mrb[0].mxu0
        %v7338 = vadd.f32 %v7146, %v7337
        %v7339 = vpop.f32.mrb[0].mxu0
        %7340 = vmatprep.mubr.bf16.mxu0 0
        %7341 = vmatmul.mubr.bf16.gmra.mrb[0].mxu0 %v7123
        %v7342 = vpop.f32.mrb[0].mxu0
        %v7343 = vadd.f32 %v7146, %v7342
        %v7344 = vpop.f32.mrb[0].mxu0
        %v7345 = vpop.f32.mrb[0].mxu0
        %v7346 = vadd.f32 %v7146, %v7345
        %v7347 = vpop.f32.mrb[0].mxu0
        %7348 = vmatprep.mubr.bf16.mxu0 0
        %7349 = vmatmul.mubr.bf16.gmra.mrb[0].mxu0 %v7124
        %v7350 = vpop.f32.mrb[0].mxu0
        %v7351 = vadd.f32 %v7146, %v7350
        %v7352 = vpop.f32.mrb[0].mxu0
        %v7353 = vpop.f32.mrb[0].mxu0
        %v7354 = vadd.f32 %v7146, %v7353
        %v7355 = vpop.f32.mrb[0].mxu0
        %7356 = vdwg.mxu0
        %v7357 = vmul.f32 %v851, %v7231
        %v7358 = vmul.f32 %v855, %v7234
        %v7359 = vmul.f32 %v861, %v7239
        %v7360 = vmul.f32 %v865, %v7242
        %v7361 = vmul.f32 %v871, %v7247
        %v7362 = vmul.f32 %v875, %v7250
        %v7363 = vmul.f32 %v881, %v7255
        %v7364 = vmul.f32 %v885, %v7258
        %v7365 = vmul.f32 %v891, %v7263
        %v7366 = vmul.f32 %v895, %v7266
        %v7367 = vmul.f32 %v901, %v7271
        %v7368 = vmul.f32 %v905, %v7274
        %v7369 = vmul.f32 %v911, %v7279
        %v7370 = vmul.f32 %v915, %v7282
        %v7371 = vmul.f32 %v921, %v7287
        %v7372 = vmul.f32 %v925, %v7290
        %v7373 = vmul.f32 %v931, %v7295
        %v7374 = vmul.f32 %v935, %v7298
        %v7375 = vmul.f32 %v941, %v7303
        %v7376 = vmul.f32 %v945, %v7306
        %v7377 = vmul.f32 %v951, %v7311
        %v7378 = vmul.f32 %v955, %v7314
        %v7379 = vmul.f32 %v961, %v7319
        %v7380 = vmul.f32 %v965, %v7322
        %v7381 = vmul.f32 %v971, %v7327
        %v7382 = vmul.f32 %v975, %v7330
        %v7383 = vmul.f32 %v981, %v7335
        %v7384 = vmul.f32 %v985, %v7338
        %v7385 = vmul.f32 %v991, %v7343
        %v7386 = vmul.f32 %v995, %v7346
        %v7387 = vmul.f32 %v1001, %v7351
        %v7388 = vmul.f32 %v1005, %v7354
        %v7389 = vld [vmem:[%s9] sm:$0xf]
        %v7390 = vld [vmem:[%s9 + $0x4] sm:$0xf]
        %v7391 = vld [vmem:[%s9 + $0x8] sm:$0xf]
        %v7392 = vld [vmem:[%s9 + $0xc] sm:$0xf]
        %v7393 = vpack.c.bf16 %v7358, %v7357
        %v7394 = vpack.c.bf16 %v7360, %v7359
        %v7395 = vpack.c.bf16 %v7362, %v7361
        %v7396 = vpack.c.bf16 %v7364, %v7363
        %v7397 = vpack.c.bf16 %v7366, %v7365
        %v7398 = vpack.c.bf16 %v7368, %v7367
        %v7399 = vpack.c.bf16 %v7370, %v7369
        %v7400 = vpack.c.bf16 %v7372, %v7371
        %v7401 = vpack.c.bf16 %v7374, %v7373
        %v7402 = vpack.c.bf16 %v7376, %v7375
        %v7403 = vpack.c.bf16 %v7378, %v7377
        %v7404 = vpack.c.bf16 %v7380, %v7379
        %v7405 = vpack.c.bf16 %v7382, %v7381
        %v7406 = vpack.c.bf16 %v7384, %v7383
        %v7407 = vpack.c.bf16 %v7386, %v7385
        %v7408 = vpack.c.bf16 %v7388, %v7387
        %v7409 = vld [vmem:[%s10] sm:$0xff]
        %v7410 = vld [vmem:[%s10 + $0x8] sm:$0xff]
        %v7411 = vld [vmem:[%s10 + $0x10] sm:$0xff]
        %v7412 = vld [vmem:[%s10 + $0x18] sm:$0xff]
        %7414 = vset.pattern.permute.xlu0 0
        %7415 = vperm.xlu0 %7414, %v7409
        %v7416 = vpop.permute.xlu0 %7415
        %7419 = vset.pattern.permute.xlu0 0
        %7420 = vperm.xlu0 %7419, %v7410
        %v7421 = vpop.permute.xlu0 %7420
        %7424 = vset.pattern.permute.xlu0 0
        %7425 = vperm.xlu0 %7424, %v7411
        %v7426 = vpop.permute.xlu0 %7425
        %7429 = vset.pattern.permute.xlu0 0
        %7430 = vperm.xlu0 %7429, %v7412
        %v7431 = vpop.permute.xlu0 %7430
        %v7437 = vunpack.c.l.b16 %v7389
        %v7438 = vunpack.c.l.b16 %v7390
        %v7439 = vunpack.c.l.b16 %v7391
        %v7440 = vunpack.c.l.b16 %v7392
        %v7441 = vpack.c.b16 %v7438, %v7437
        %v7442 = vpack.c.b16 %v7440, %v7439
        %7445 = vmatprep.subr.bf16.mxu0 0
        %7446 = vmatpush1.bf16.xpose.msra.mxu0 %v7393
        %7447 = vmatprep.subr.bf16.mxu0 0
        %7448 = vmatpush1.bf16.xpose.msra.mxu0 %v7394
        %7449 = vmatprep.subr.bf16.mxu0 0
        %7450 = vmatpush1.bf16.xpose.msra.mxu0 %v7395
        %7451 = vmatprep.subr.bf16.mxu0 0
        %7452 = vmatpush1.bf16.xpose.msra.mxu0 %v7396
        %7453 = vmatprep.subr.bf16.mxu0 0
        %7454 = vmatpush1.bf16.xpose.msra.mxu0 %v7397
        %7455 = vmatprep.subr.bf16.mxu0 0
        %7456 = vmatpush1.bf16.xpose.msra.mxu0 %v7398
        %7457 = vmatprep.subr.bf16.mxu0 0
        %7458 = vmatpush1.bf16.xpose.msra.mxu0 %v7399
        %7459 = vmatprep.subr.bf16.mxu0 0
        %7460 = vmatpush1.bf16.xpose.msra.mxu0 %v7400
        %7461 = vmatprep.subr.bf16.mxu0 0
        %7462 = vmatpush1.bf16.xpose.msra.mxu0 %v7401
        %7463 = vmatprep.subr.bf16.mxu0 0
        %7464 = vmatpush1.bf16.xpose.msra.mxu0 %v7402
        %7465 = vmatprep.subr.bf16.mxu0 0
        %7466 = vmatpush1.bf16.xpose.msra.mxu0 %v7403
        %7467 = vmatprep.subr.bf16.mxu0 0
        %7468 = vmatpush1.bf16.xpose.msra.mxu0 %v7404
        %7469 = vmatprep.subr.bf16.mxu0 0
        %7470 = vmatpush1.bf16.xpose.msra.mxu0 %v7405
        %7471 = vmatprep.subr.bf16.mxu0 0
        %7472 = vmatpush1.bf16.xpose.msra.mxu0 %v7406
        %7473 = vmatprep.subr.bf16.mxu0 0
        %7474 = vmatpush1.bf16.xpose.msra.mxu0 %v7407
        %7475 = vmatprep.subr.bf16.mxu0 0
        %7476 = vmatpush1.bf16.xpose.msra.mxu0 %v7408
        %7477 = vmatprep.mubr.bf16.mxu0 0
        %7478 = vmatmul.mubr.bf16.gmra.mrb[0].mxu0 %v7441
        %v7479 = vpop.f32.mrb[0].mxu0
        %v7480 = vadd.f32 %v7416, %v7479
        %v7481 = vpop.f32.mrb[0].mxu0
        %v7482 = vadd.f32 %v7416, %v7481
        %v7483 = vpop.f32.mrb[0].mxu0
        %v7484 = vadd.f32 %v7421, %v7483
        %v7485 = vpop.f32.mrb[0].mxu0
        %v7486 = vadd.f32 %v7421, %v7485
        %7487 = vmatprep.mubr.bf16.mxu0 0
        %7488 = vmatmul.mubr.bf16.gmra.mrb[0].mxu0 %v7442
        %v7489 = vpop.f32.mrb[0].mxu0
        %v7490 = vadd.f32 %v7426, %v7489
        %v7491 = vpop.f32.mrb[0].mxu0
        %v7492 = vadd.f32 %v7426, %v7491
        %v7493 = vpop.f32.mrb[0].mxu0
        %v7494 = vadd.f32 %v7431, %v7493
        %v7495 = vpop.f32.mrb[0].mxu0
        %v7496 = vadd.f32 %v7431, %v7495
        %7497 = vdwg.mxu0
        %v7498 = vld [vmem:[%s13] sm:$0xff]
        %v7499 = vld [vmem:[%s13 + $0x8] sm:$0xff]
        %v7500 = vld [vmem:[%s13 + $0x10] sm:$0xff]
        %v7501 = vld [vmem:[%s13 + $0x18] sm:$0xff]
        %7503 = vset.pattern.permute.xlu0 0
        %7504 = vperm.xlu0 %7503, %v7498
        %v7505 = vpop.permute.xlu0 %7504
        %7508 = vset.pattern.permute.xlu0 0
        %7509 = vperm.xlu0 %7508, %v7499
        %v7510 = vpop.permute.xlu0 %7509
        %7513 = vset.pattern.permute.xlu0 0
        %7514 = vperm.xlu0 %7513, %v7500
        %v7515 = vpop.permute.xlu0 %7514
        %7518 = vset.pattern.permute.xlu0 0
        %7519 = vperm.xlu0 %7518, %v7501
        %v7520 = vpop.permute.xlu0 %7519
        %v7522 = vmul.f32 %v7505, %v7480
        %v7523 = vmul.f32 %v7505, %v7482
        %v7524 = vmul.f32 %v7510, %v7484
        %v7525 = vmul.f32 %v7510, %v7486
        %v7526 = vmul.f32 %v7515, %v7490
        %v7527 = vmul.f32 %v7515, %v7492
        %v7528 = vmul.f32 %v7520, %v7494
        %v7529 = vmul.f32 %v7520, %v7496
        %v7530 = vadd.f32 %v536, %v7522
        %v7531 = vadd.f32 %v537, %v7523
        %v7532 = vadd.f32 %v538, %v7524
        %v7533 = vadd.f32 %v539, %v7525
        %v7534 = vadd.f32 %v540, %v7526
        %v7535 = vadd.f32 %v541, %v7527
        %v7536 = vadd.f32 %v542, %v7528
        %v7537 = vadd.f32 %v543, %v7529
        %v7538 = vadd.f32 %v7530, %v7531
        %v7539 = vadd.f32 %v7538, %v7532
        %v7540 = vadd.f32 %v7539, %v7533
        %v7541 = vadd.f32 %v7540, %v7534
        %v7542 = vadd.f32 %v7541, %v7535
        %v7543 = vadd.f32 %v7542, %v7536
        %v7544 = vadd.f32 %v7543, %v7537
        %7545 = vadd.xlane.f32.xlu0 %v7544
        %v7546 = vpop.xlane.xlu0 %7545
        %v7547 = vrot.slane %v7546, 4
        %v7548 = vadd.f32 %v7546, %v7547
        %v7549 = vrot.slane %v7548, 2
        %v7550 = vadd.f32 %v7548, %v7549
        %v7551 = vrot.slane %v7550, 1
        %v7552 = vadd.f32 %v7550, %v7551
        %s7553 = vtos %v7552
        %v7554 = vmul.f32 %v7530, %v7530
        %v7555 = vmul.f32 %v7531, %v7531
        %v7556 = vmul.f32 %v7532, %v7532
        %v7557 = vmul.f32 %v7533, %v7533
        %v7558 = vmul.f32 %v7534, %v7534
        %v7559 = vmul.f32 %v7535, %v7535
        %v7560 = vmul.f32 %v7536, %v7536
        %v7561 = vmul.f32 %v7537, %v7537
        %v7562 = vadd.f32 %v7554, %v7555
        %v7563 = vadd.f32 %v7562, %v7556
        %v7564 = vadd.f32 %v7563, %v7557
        %v7565 = vadd.f32 %v7564, %v7558
        %v7566 = vadd.f32 %v7565, %v7559
        %v7567 = vadd.f32 %v7566, %v7560
        %v7568 = vadd.f32 %v7567, %v7561
        %7569 = vadd.xlane.f32.xlu0 %v7568
        %v7570 = vpop.xlane.xlu0 %7569
        %v7571 = vrot.slane %v7570, 4
        %v7572 = vadd.f32 %v7570, %v7571
        %v7573 = vrot.slane %v7572, 2
        %v7574 = vadd.f32 %v7572, %v7573
        %v7575 = vrot.slane %v7574, 1
        %v7576 = vadd.f32 %v7574, %v7575
        %s7577 = vtos %v7576
        %s7578 = smul.f32 %s7553, 0.00012207031
        %s7579 = smul.f32 %s7577, 0.00012207031
        %s7580 = smul.f32 %s7578, %s7578
        %s7581 = ssub.f32 %s7579, %s7580
        %v7582 = vstv %s7578
        %v7583 = vsub.f32 %v7530, %v7582
        %v7584 = vsub.f32 %v7531, %v7582
        %v7585 = vsub.f32 %v7532, %v7582
        %v7586 = vsub.f32 %v7533, %v7582
        %v7587 = vsub.f32 %v7534, %v7582
        %v7588 = vsub.f32 %v7535, %v7582
        %v7589 = vsub.f32 %v7536, %v7582
        %v7590 = vsub.f32 %v7537, %v7582
        %s7591 = sadd.f32 %s7581, 1e-05
        %v7592 = vstv %s7591
        %v7593 = vrsqrt.pop %v7592
        %s7594 = vtos %v7593
        %v7595 = vstv %s7594
        %v7596 = vmul.f32 %v7583, %v7595
        %v7597 = vmul.f32 %v7584, %v7595
        %v7598 = vmul.f32 %v7585, %v7595
        %v7599 = vmul.f32 %v7586, %v7595
        %v7600 = vmul.f32 %v7587, %v7595
        %v7601 = vmul.f32 %v7588, %v7595
        %v7602 = vmul.f32 %v7589, %v7595
        %v7603 = vmul.f32 %v7590, %v7595
        %v7604 = vld [vmem:[%s11] sm:$0xff]
        %v7605 = vld [vmem:[%s11 + $0x8] sm:$0xff]
        %v7606 = vld [vmem:[%s11 + $0x10] sm:$0xff]
        %v7607 = vld [vmem:[%s11 + $0x18] sm:$0xff]
        %7609 = vset.pattern.permute.xlu0 0
        %7610 = vperm.xlu0 %7609, %v7604
        %v7611 = vpop.permute.xlu0 %7610
        %7614 = vset.pattern.permute.xlu0 0
        %7615 = vperm.xlu0 %7614, %v7605
        %v7616 = vpop.permute.xlu0 %7615
        %7619 = vset.pattern.permute.xlu0 0
        %7620 = vperm.xlu0 %7619, %v7606
        %v7621 = vpop.permute.xlu0 %7620
        %7624 = vset.pattern.permute.xlu0 0
        %7625 = vperm.xlu0 %7624, %v7607
        %v7626 = vpop.permute.xlu0 %7625
        %v7628 = vmul.f32 %v7596, %v7611
        %v7629 = vmul.f32 %v7597, %v7611
        %v7630 = vmul.f32 %v7598, %v7616
        %v7631 = vmul.f32 %v7599, %v7616
        %v7632 = vmul.f32 %v7600, %v7621
        %v7633 = vmul.f32 %v7601, %v7621
        %v7634 = vmul.f32 %v7602, %v7626
        %v7635 = vmul.f32 %v7603, %v7626
        %v7636 = vld [vmem:[%s12] sm:$0xff]
        %v7637 = vld [vmem:[%s12 + $0x8] sm:$0xff]
        %v7638 = vld [vmem:[%s12 + $0x10] sm:$0xff]
        %v7639 = vld [vmem:[%s12 + $0x18] sm:$0xff]
        %7641 = vset.pattern.permute.xlu0 0
        %7642 = vperm.xlu0 %7641, %v7636
        %v7643 = vpop.permute.xlu0 %7642
        %7646 = vset.pattern.permute.xlu0 0
        %7647 = vperm.xlu0 %7646, %v7637
        %v7648 = vpop.permute.xlu0 %7647
        %7651 = vset.pattern.permute.xlu0 0
        %7652 = vperm.xlu0 %7651, %v7638
        %v7653 = vpop.permute.xlu0 %7652
        %7656 = vset.pattern.permute.xlu0 0
        %7657 = vperm.xlu0 %7656, %v7639
        %v7658 = vpop.permute.xlu0 %7657
        %v7660 = vadd.f32 %v7628, %v7643
        %v7661 = vadd.f32 %v7629, %v7643
        %v7662 = vadd.f32 %v7630, %v7648
        %v7663 = vadd.f32 %v7631, %v7648
        %v7664 = vadd.f32 %v7632, %v7653
        %v7665 = vadd.f32 %v7633, %v7653
        %v7666 = vadd.f32 %v7634, %v7658
        %v7667 = vadd.f32 %v7635, %v7658
        %v7668 = vld [vmem:[%s14] sm:$0xff]
        %v7669 = vld [vmem:[%s14 + $0x8] sm:$0xff]
        %v7670 = vld [vmem:[%s14 + $0x10] sm:$0xff]
        %v7671 = vld [vmem:[%s14 + $0x18] sm:$0xff]
        %7673 = vset.pattern.permute.xlu0 0
        %7674 = vperm.xlu0 %7673, %v7668
        %v7675 = vpop.permute.xlu0 %7674
        %7678 = vset.pattern.permute.xlu0 0
        %7679 = vperm.xlu0 %7678, %v7669
        %v7680 = vpop.permute.xlu0 %7679
        %7683 = vset.pattern.permute.xlu0 0
        %7684 = vperm.xlu0 %7683, %v7670
        %v7685 = vpop.permute.xlu0 %7684
        %7688 = vset.pattern.permute.xlu0 0
        %7689 = vperm.xlu0 %7688, %v7671
        %v7690 = vpop.permute.xlu0 %7689
        %v7692 = vmul.f32 %v7675, %v7660
        %v7693 = vmul.f32 %v7675, %v7661
        %v7694 = vmul.f32 %v7680, %v7662
        %v7695 = vmul.f32 %v7680, %v7663
        %v7696 = vmul.f32 %v7685, %v7664
        %v7697 = vmul.f32 %v7685, %v7665
        %v7698 = vmul.f32 %v7690, %v7666
        %v7699 = vmul.f32 %v7690, %v7667
        %v7700 = vadd.f32 %v7530, %v7692
        %v7701 = vadd.f32 %v7531, %v7693
        %v7702 = vadd.f32 %v7532, %v7694
        %v7703 = vadd.f32 %v7533, %v7695
        %v7704 = vadd.f32 %v7534, %v7696
        %v7705 = vadd.f32 %v7535, %v7697
        %v7706 = vadd.f32 %v7536, %v7698
        %v7707 = vadd.f32 %v7537, %v7699
        %7708 = vst [vmem:[%s529] sm:$0xff] %v7700
        %7709 = vst [vmem:[%s529 + $0x8] sm:$0xff] %v7701
        %7710 = vst [vmem:[%s529 + $0x10] sm:$0xff] %v7702
        %7711 = vst [vmem:[%s529 + $0x18] sm:$0xff] %v7703
        %7712 = vst [vmem:[%s529 + $0x20] sm:$0xff] %v7704
        %7713 = vst [vmem:[%s529 + $0x28] sm:$0xff] %v7705
        %7714 = vst [vmem:[%s529 + $0x30] sm:$0xff] %v7706
        %7715 = vst [vmem:[%s529 + $0x38] sm:$0xff] %v7707
        %s7716 = sand.u32 %s359, 1
        %s7717 = scalar_lea.sflag [#allocation5], %s7716
        %s7718 = sand.u32 %s359, 1
        %s7719 = smul.addr %s7718, 64
        %s7720 = scalar_lea.vmem [#allocation9], %s7719
        // Predicated region
        $region93: #{tpu_custom_call.1} parent=79 // pred_check
          %p7721 = pneg %p369
        $region94: #{tpu_custom_call.1} parent=79 // pred_check_branch
          %7723 = sbr.rel (%p7721) target = $region96
        $region95: #{tpu_custom_call.1} parent=79 // pred_region
          %s7725 = ssub.s32 1024, 1024
          %7726 = vsyncadd %s7717, %s7725
          %s7727 = smul.addr %s31, 8
          %s7728 = smul.addr %s7727, 128
          %s7729 = scalar_lea.hbm %s15, %s7728
          %s7730 = sshll.u32 %s7720, 4
          %s7731 = int_to_ptr.vmem [resolvable:$true] %s7730
          %7736 = dma.vmem_to_hbm [thread:$0]  %s7731, 1024, %s7729, %s7717, 256, 256, 16
        $region96: #{tpu_custom_call.1} parent=79 // pred_fallthru
          _
      $region80: #{tpu_custom_call.1} parent=5 // pred_fallthru
        _
      %p7737 = scmp.le.s32.totalorder 2, %s26
      // Predicated region
      $region97: #{tpu_custom_call.1} parent=5 // pred_check
        %p7738 = pneg %p7737
      $region98: #{tpu_custom_call.1} parent=5 // pred_check_branch
        %7740 = sbr.rel (%p7738) target = $region100
      $region99: #{tpu_custom_call.1} parent=5 // pred_region
        %s7741 = ssub.s32 %s26, 2
        // Predicated region
        $region101: #{tpu_custom_call.1} parent=99 // pred_check
          %p7742 = pneg %p375
        $region102: #{tpu_custom_call.1} parent=99 // pred_check_branch
          %7744 = sbr.rel (%p7742) target = $region104
        $region103: #{tpu_custom_call.1} parent=99 // pred_region
          %s7745 = sand.u32 %s360, 1
          %s7746 = scalar_lea.sflag [#allocation5], %s7745
          %s7747 = sand.u32 %s360, 1
          %s7748 = smul.addr %s7747, 64
          %s7749 = scalar_lea.vmem [#allocation9], %s7748
          %7750 = dma.done %s7746, 1024
        $region104: #{tpu_custom_call.1} parent=99 // pred_fallthru
          _
      $region100: #{tpu_custom_call.1} parent=5 // pred_fallthru
        _
    $region6: #{tpu_custom_call.1} parent=1 // loop_footer
      %s30 = sadd.s32 1, %s26
    $region7: #{tpu_custom_call.1} parent=1 // loop_footer_branch
      %25 = sbr.rel target = $region3
    $region8: #{tpu_custom_call.1} parent=1 // loop_exit
      _
    %7751 = vsyncpa [#allocation4], 1
    %s7752 = scalar_lea.sflag [#allocation4], 1
    %7753 = vsyncpa %s7752, 1
    %7754 = vsyncpa [#allocation7], 1
    %7755 = vsyncpa [#allocation5], 1
    %s7756 = scalar_lea.sflag [#allocation5], 1
    %7757 = vsyncpa %s7756, 1

</llo_original>
